<compile_context>
chip_gen: v7x
topology: tpu7x:2x2x1
jax: 0.10.0
libtpu: 0.0.40
codegen_flags: <defaults>
</compile_context>

<pallas_src>
import functools

import jax
import jax.numpy as jnp
from jax import lax
from jax.experimental import pallas as pl
from jax.experimental.pallas import tpu as pltpu

CIN, C1, C2 = 4, 8, 8     # conv1: 4 -> 8, conv2: 8 -> 8
CINP = 8                  # Cin zero-padded to 8 inside the kernel (MXU-friendly K)


# ----------------------------------------------------------------------------
# Fused kernel: conv1 -> relu -> maxpool(2,2) -> conv2 -> softmax(channels)
# ----------------------------------------------------------------------------
def _cnn_fused_kernel(x_ref, w1_ref, b1_ref, w2_ref, b2_ref, o_ref,
                      pad1_ref, h1_ref, hw_ref, pad2_ref,
                      *, N, H, W, Cin, CinP, C1_, C2_):
    H2, W2 = H // 2, W // 2
    M1 = N * H * W            # conv1 "rows" (spatial positions)
    M2 = N * H2 * W2          # conv2 "rows"

    # ---- stage 0: zero-pad input (spatial pad=1 AND channel pad Cin->CinP) in VMEM
    pad1_ref[...] = jnp.zeros_like(pad1_ref)
    pad1_ref[:, 1:H + 1, 1:W + 1, :Cin] = x_ref[...]

    # ---- stage 1: conv1 as 9 per-tap MXU matmuls (M1, CinP) x (CinP, C1), f32 acc
    acc1 = jnp.zeros((M1, C1_), dtype=jnp.float32)
    for kh in range(3):
        for kw in range(3):
            slab = pad1_ref[:, kh:kh + H, kw:kw + W, :].reshape(M1, CinP)
            acc1 = acc1 + jnp.dot(slab, w1_ref[kh * 3 + kw],
                                  preferred_element_type=jnp.float32)
    h1_ref[...] = jnp.maximum(acc1 + b1_ref[...], 0.0)       # bias + relu, (M1, C1)

    # ---- stage 2: maxpool 2x2, all VMEM-resident, via stride-2 reads
    # rows of h1_ref are ordered (n, h, w); W-neighbours are adjacent rows.
    wmax = jnp.maximum(h1_ref[pl.ds(0, M1 // 2, stride=2), :],
                       h1_ref[pl.ds(1, M1 // 2, stride=2), :])        # (N*H*W2, C1)
    hw_ref[...] = wmax.reshape(N * H, W2, C1_)                        # rows = (n, h)
    pooled = jnp.maximum(hw_ref[pl.ds(0, N * H2, stride=2), :, :],
                         hw_ref[pl.ds(1, N * H2, stride=2), :, :])    # (N*H2, W2, C1)

    # ---- stage 3: zero-pad pooled activations for conv2 (pad=1) in VMEM
    pad2_ref[...] = jnp.zeros_like(pad2_ref)
    pad2_ref[:, 1:H2 + 1, 1:W2 + 1, :] = pooled.reshape(N, H2, W2, C1_)

    # ---- stage 4: conv2 as 9 per-tap MXU matmuls (M2, C1) x (C1, C2), f32 acc
    acc2 = jnp.zeros((M2, C2_), dtype=jnp.float32)
    for kh in range(3):
        for kw in range(3):
            slab = pad2_ref[:, kh:kh + H2, kw:kw + W2, :].reshape(M2, C1_)
            acc2 = acc2 + jnp.dot(slab, w2_ref[kh * 3 + kw],
                                  preferred_element_type=jnp.float32)
    z = acc2 + b2_ref[...]                                            # (M2, C2)

    # ---- stage 5: softmax over channels; store lane-dense as (C2, M2) = (8, 128)
    m = jnp.max(z, axis=-1, keepdims=True)
    e = jnp.exp(z - m)
    s = jnp.sum(e, axis=-1, keepdims=True)
    sm = e * pl.reciprocal(s, approx=True)                            # EUP, not VALU div
    o_ref[...] = sm.T.astype(o_ref.dtype)                             # unmasked 128-lane store


# ----------------------------------------------------------------------------
# Wrapper
# ----------------------------------------------------------------------------
def _cnn_forward_impl(x_nchw, w1, b1, w2, b2):
    N, Cin, H, W = x_nchw.shape
    H2, W2 = H // 2, W // 2
    M2 = N * H2 * W2
    c1, c2 = w1.shape[-1], w2.shape[-1]

    x_nhwc = jnp.transpose(x_nchw, (0, 2, 3, 1))                      # NCHW -> NHWC (glue)
    # weight layout glue: (3,3,Cin,Cout) -> (9,Cin,Cout); zero-pad conv1's K to CINP
    w1p = jnp.pad(w1.reshape(9, Cin, c1), ((0, 0), (0, CINP - Cin), (0, 0)))
    w2r = w2.reshape(9, c1, c2)
    b1r = b1.reshape(1, c1)
    b2r = b2.reshape(1, c2)

    kernel = functools.partial(_cnn_fused_kernel, N=N, H=H, W=W,
                               Cin=Cin, CinP=CINP, C1_=c1, C2_=c2)
    out = pl.pallas_call(
        kernel,
        out_shape=jax.ShapeDtypeStruct((c2, M2), jnp.float32),        # (8, 128) lane-dense
        grid=(1,),
        in_specs=[
            pl.BlockSpec((N, H, W, Cin), lambda i: (0, 0, 0, 0)),
            pl.BlockSpec((9, CINP, c1), lambda i: (0, 0, 0)),
            pl.BlockSpec((1, c1), lambda i: (0, 0)),
            pl.BlockSpec((9, c1, c2), lambda i: (0, 0, 0)),
            pl.BlockSpec((1, c2), lambda i: (0, 0)),
        ],
        out_specs=pl.BlockSpec((c2, M2), lambda i: (0, 0)),
        scratch_shapes=[
            pltpu.VMEM((N, H + 2, W + 2, CINP), jnp.float32),         # padded input
            pltpu.VMEM((N * H * W, c1), jnp.float32),                 # conv1 + relu
            pltpu.VMEM((N * H, W2, c1), jnp.float32),                 # after W-direction max
            pltpu.VMEM((N, H2 + 2, W2 + 2, c1), jnp.float32),         # padded pooled acts
        ],
        compiler_params=pltpu.CompilerParams(
            dimension_semantics=("arbitrary",)),
    )(x_nhwc, w1p, b1r, w2r, b2r)

    # (C2, N*H2*W2) -> NCHW; tiny (1 KiB) layout op outside the kernel
    return jnp.transpose(out.reshape(c2, N, H2, W2), (1, 0, 2, 3))


@jax.jit
def cnn_forward(x_nchw, params):
    return _cnn_forward_impl(x_nchw, params["w1"], params["b1"],
                             params["w2"], params["b2"])


# ----------------------------------------------------------------------------
# Params + pure-JAX reference (correctness oracle)
# ----------------------------------------------------------------------------
def init_params(key):
    k1, k2, k3, k4 = jax.random.split(key, 4)
    w1 = jax.random.normal(k1, (3, 3, CIN, C1), jnp.float32) * 0.1    # HWIO
    b1 = jax.random.normal(k2, (C1,), jnp.float32) * 0.1
    w2 = jax.random.normal(k3, (3, 3, C1, C2), jnp.float32) * 0.1
    b2 = jax.random.normal(k4, (C2,), jnp.float32) * 0.1
    return dict(w1=w1, b1=b1, w2=w2, b2=b2)


def reference_forward(x_nchw, params):
    x = jnp.transpose(x_nchw, (0, 2, 3, 1))                           # NHWC
    dn1 = lax.conv_dimension_numbers(x.shape, params["w1"].shape,
                                     ("NHWC", "HWIO", "NHWC"))
    h = lax.conv_general_dilated(x, params["w1"], (1, 1), "SAME",
                                 dimension_numbers=dn1) + params["b1"]
    h = jnp.maximum(h, 0.0)
    h = lax.reduce_window(h, -jnp.inf, lax.max, (1, 2, 2, 1), (1, 2, 2, 1), "VALID")
    dn2 = lax.conv_dimension_numbers(h.shape, params["w2"].shape,
                                     ("NHWC", "HWIO", "NHWC"))
    h = lax.conv_general_dilated(h, params["w2"], (1, 1), "SAME",
                                 dimension_numbers=dn2) + params["b2"]
    h = jax.nn.softmax(h, axis=-1)
    return jnp.transpose(h, (0, 3, 1, 2))                             # NCHW


if __name__ == "__main__":
    key = jax.random.PRNGKey(0)
    kx, kp = jax.random.split(key)
    x = jax.random.normal(kx, (2, 4, 16, 16), jnp.float32)            # NCHW, like PyTorch
    params = init_params(kp)

    out = cnn_forward(x, params)
    out = jax.block_until_ready(out)

    assert out.shape == (2, 8, 8, 8), out.shape                       # (N, Cout, H/2, W/2)
    # softmax over dim=1 (channels) must sum to ~1 (approx reciprocal -> loose atol)
    chan_sums = jnp.sum(out, axis=1)
    assert bool(jnp.allclose(chan_sums, 1.0, atol=2e-2)), "softmax channel sums != 1"
    assert bool(jnp.all(jnp.isfinite(out)))

    ref = reference_forward(x, params)
    assert bool(jnp.allclose(out, ref, rtol=2e-2, atol=2e-2)), "mismatch vs XLA reference"

    print("KERNEL_OK")
</pallas_src>

<mosaic_0001>
module attributes {stable_mosaic.version = 11 : i64} {
  func.func @_cnn_fused_kernel(%arg0: i32, %arg1: memref<2x16x16x4xf32, #tpu.memory_space<vmem>>, %arg2: memref<9x8x8xf32, #tpu.memory_space<vmem>>, %arg3: memref<1x8xf32, #tpu.memory_space<vmem>>, %arg4: memref<9x8x8xf32, #tpu.memory_space<vmem>>, %arg5: memref<1x8xf32, #tpu.memory_space<vmem>>, %arg6: memref<8x128xf32, #tpu.memory_space<vmem>>, %arg7: memref<2x18x18x8xf32, #tpu.memory_space<vmem>>, %arg8: memref<512x8xf32, #tpu.memory_space<vmem>>, %arg9: memref<32x8x8xf32, #tpu.memory_space<vmem>>, %arg10: memref<2x10x10x8xf32, #tpu.memory_space<vmem>>) attributes {dimension_semantics = [#tpu.dimension_semantics<arbitrary>], iteration_bounds = array<i64: 1>, scalar_prefetch = 0 : i64, scratch_operands = 4 : i64, tpu.core_type = #tpu.core_type<tc>, window_params = [{pipeline_mode = #tpu.pipeline_mode<synchronous>, transform_indices = @transform_0, window_bounds = array<i64: 2, 16, 16, 4>}, {pipeline_mode = #tpu.pipeline_mode<synchronous>, transform_indices = @transform_1, window_bounds = array<i64: 9, 8, 8>}, {pipeline_mode = #tpu.pipeline_mode<synchronous>, transform_indices = @transform_2, window_bounds = array<i64: 1, 8>}, {pipeline_mode = #tpu.pipeline_mode<synchronous>, transform_indices = @transform_3, window_bounds = array<i64: 9, 8, 8>}, {pipeline_mode = #tpu.pipeline_mode<synchronous>, transform_indices = @transform_4, window_bounds = array<i64: 1, 8>}, {pipeline_mode = #tpu.pipeline_mode<synchronous>, transform_indices = @transform_5, window_bounds = array<i64: 8, 128>}]} {
    %cst = arith.constant 0.000000e+00 : f32
    %0 = vector.broadcast %cst : f32 to vector<2x18x18x8xf32>
    %c0 = arith.constant 0 : index
    %c0_0 = arith.constant 0 : index
    %c0_1 = arith.constant 0 : index
    %c0_2 = arith.constant 0 : index
    %1 = vector.load %arg7[%c0, %c0_0, %c0_1, %c0_2] : memref<2x18x18x8xf32, #tpu.memory_space<vmem>>, vector<2x18x18x8xf32>
    tpu.vector_store %arg7[%c0, %c0_0, %c0_1, %c0_2], %0 {strides = array<i32>} : memref<2x18x18x8xf32, #tpu.memory_space<vmem>>, vector<2x18x18x8xf32>,
    %c0_3 = arith.constant 0 : index
    %c0_4 = arith.constant 0 : index
    %c0_5 = arith.constant 0 : index
    %c0_6 = arith.constant 0 : index
    %2 = vector.load %arg1[%c0_3, %c0_4, %c0_5, %c0_6] : memref<2x16x16x4xf32, #tpu.memory_space<vmem>>, vector<2x16x16x4xf32>
    %c0_7 = arith.constant 0 : index
    %c1 = arith.constant 1 : index
    %c1_8 = arith.constant 1 : index
    %c0_9 = arith.constant 0 : index
    %3 = vector.load %arg7[%c0_7, %c1, %c1_8, %c0_9] : memref<2x18x18x8xf32, #tpu.memory_space<vmem>>, vector<2x16x16x4xf32>
    tpu.vector_store %arg7[%c0_7, %c1, %c1_8, %c0_9], %2 {strides = array<i32>} : memref<2x18x18x8xf32, #tpu.memory_space<vmem>>, vector<2x16x16x4xf32>,
    %cst_10 = arith.constant 0.000000e+00 : f32
    %4 = vector.broadcast %cst_10 : f32 to vector<512x8xf32>
    %c0_11 = arith.constant 0 : index
    %c0_12 = arith.constant 0 : index
    %c0_13 = arith.constant 0 : index
    %c0_14 = arith.constant 0 : index
    %5 = vector.load %arg7[%c0_11, %c0_12, %c0_13, %c0_14] : memref<2x18x18x8xf32, #tpu.memory_space<vmem>>, vector<2x16x16x8xf32>
    %6 = vector.shape_cast %5 : vector<2x16x16x8xf32> to vector<512x8xf32>
    %c0_15 = arith.constant 0 : index
    %c0_16 = arith.constant 0 : index
    %c0_17 = arith.constant 0 : index
    %7 = vector.load %arg2[%c0_15, %c0_16, %c0_17] : memref<9x8x8xf32, #tpu.memory_space<vmem>>, vector<1x8x8xf32>
    %8 = vector.shape_cast %7 : vector<1x8x8xf32> to vector<8x8xf32>
    %cst_18 = arith.constant dense<0.000000e+00> : vector<512x8xf32>
    %9 = tpu.matmul %6, %8, %cst_18 {dimension_numbers = #tpu.dot_dimension_numbers<[1], [0], [0], [1], [0, 0, 1, 1], [], []>} : vector<512x8xf32>, vector<8x8xf32>, vector<512x8xf32> -> vector<512x8xf32>
    %10 = arith.addf %4, %9 : vector<512x8xf32>
    %c0_19 = arith.constant 0 : index
    %c0_20 = arith.constant 0 : index
    %c1_21 = arith.constant 1 : index
    %c0_22 = arith.constant 0 : index
    %11 = vector.load %arg7[%c0_19, %c0_20, %c1_21, %c0_22] : memref<2x18x18x8xf32, #tpu.memory_space<vmem>>, vector<2x16x16x8xf32>
    %12 = vector.shape_cast %11 : vector<2x16x16x8xf32> to vector<512x8xf32>
    %c1_23 = arith.constant 1 : index
    %c0_24 = arith.constant 0 : index
    %c0_25 = arith.constant 0 : index
    %13 = vector.load %arg2[%c1_23, %c0_24, %c0_25] : memref<9x8x8xf32, #tpu.memory_space<vmem>>, vector<1x8x8xf32>
    %14 = vector.shape_cast %13 : vector<1x8x8xf32> to vector<8x8xf32>
    %cst_26 = arith.constant dense<0.000000e+00> : vector<512x8xf32>
    %15 = tpu.matmul %12, %14, %cst_26 {dimension_numbers = #tpu.dot_dimension_numbers<[1], [0], [0], [1], [0, 0, 1, 1], [], []>} : vector<512x8xf32>, vector<8x8xf32>, vector<512x8xf32> -> vector<512x8xf32>
    %16 = arith.addf %10, %15 : vector<512x8xf32>
    %c0_27 = arith.constant 0 : index
    %c0_28 = arith.constant 0 : index
    %c2 = arith.constant 2 : index
    %c0_29 = arith.constant 0 : index
    %17 = vector.load %arg7[%c0_27, %c0_28, %c2, %c0_29] : memref<2x18x18x8xf32, #tpu.memory_space<vmem>>, vector<2x16x16x8xf32>
    %18 = vector.shape_cast %17 : vector<2x16x16x8xf32> to vector<512x8xf32>
    %c2_30 = arith.constant 2 : index
    %c0_31 = arith.constant 0 : index
    %c0_32 = arith.constant 0 : index
    %19 = vector.load %arg2[%c2_30, %c0_31, %c0_32] : memref<9x8x8xf32, #tpu.memory_space<vmem>>, vector<1x8x8xf32>
    %20 = vector.shape_cast %19 : vector<1x8x8xf32> to vector<8x8xf32>
    %cst_33 = arith.constant dense<0.000000e+00> : vector<512x8xf32>
    %21 = tpu.matmul %18, %20, %cst_33 {dimension_numbers = #tpu.dot_dimension_numbers<[1], [0], [0], [1], [0, 0, 1, 1], [], []>} : vector<512x8xf32>, vector<8x8xf32>, vector<512x8xf32> -> vector<512x8xf32>
    %22 = arith.addf %16, %21 : vector<512x8xf32>
    %c0_34 = arith.constant 0 : index
    %c1_35 = arith.constant 1 : index
    %c0_36 = arith.constant 0 : index
    %c0_37 = arith.constant 0 : index
    %23 = vector.load %arg7[%c0_34, %c1_35, %c0_36, %c0_37] : memref<2x18x18x8xf32, #tpu.memory_space<vmem>>, vector<2x16x16x8xf32>
    %24 = vector.shape_cast %23 : vector<2x16x16x8xf32> to vector<512x8xf32>
    %c3 = arith.constant 3 : index
    %c0_38 = arith.constant 0 : index
    %c0_39 = arith.constant 0 : index
    %25 = vector.load %arg2[%c3, %c0_38, %c0_39] : memref<9x8x8xf32, #tpu.memory_space<vmem>>, vector<1x8x8xf32>
    %26 = vector.shape_cast %25 : vector<1x8x8xf32> to vector<8x8xf32>
    %cst_40 = arith.constant dense<0.000000e+00> : vector<512x8xf32>
    %27 = tpu.matmul %24, %26, %cst_40 {dimension_numbers = #tpu.dot_dimension_numbers<[1], [0], [0], [1], [0, 0, 1, 1], [], []>} : vector<512x8xf32>, vector<8x8xf32>, vector<512x8xf32> -> vector<512x8xf32>
    %28 = arith.addf %22, %27 : vector<512x8xf32>
    %c0_41 = arith.constant 0 : index
    %c1_42 = arith.constant 1 : index
    %c1_43 = arith.constant 1 : index
    %c0_44 = arith.constant 0 : index
    %29 = vector.load %arg7[%c0_41, %c1_42, %c1_43, %c0_44] : memref<2x18x18x8xf32, #tpu.memory_space<vmem>>, vector<2x16x16x8xf32>
    %30 = vector.shape_cast %29 : vector<2x16x16x8xf32> to vector<512x8xf32>
    %c4 = arith.constant 4 : index
    %c0_45 = arith.constant 0 : index
    %c0_46 = arith.constant 0 : index
    %31 = vector.load %arg2[%c4, %c0_45, %c0_46] : memref<9x8x8xf32, #tpu.memory_space<vmem>>, vector<1x8x8xf32>
    %32 = vector.shape_cast %31 : vector<1x8x8xf32> to vector<8x8xf32>
    %cst_47 = arith.constant dense<0.000000e+00> : vector<512x8xf32>
    %33 = tpu.matmul %30, %32, %cst_47 {dimension_numbers = #tpu.dot_dimension_numbers<[1], [0], [0], [1], [0, 0, 1, 1], [], []>} : vector<512x8xf32>, vector<8x8xf32>, vector<512x8xf32> -> vector<512x8xf32>
    %34 = arith.addf %28, %33 : vector<512x8xf32>
    %c0_48 = arith.constant 0 : index
    %c1_49 = arith.constant 1 : index
    %c2_50 = arith.constant 2 : index
    %c0_51 = arith.constant 0 : index
    %35 = vector.load %arg7[%c0_48, %c1_49, %c2_50, %c0_51] : memref<2x18x18x8xf32, #tpu.memory_space<vmem>>, vector<2x16x16x8xf32>
    %36 = vector.shape_cast %35 : vector<2x16x16x8xf32> to vector<512x8xf32>
    %c5 = arith.constant 5 : index
    %c0_52 = arith.constant 0 : index
    %c0_53 = arith.constant 0 : index
    %37 = vector.load %arg2[%c5, %c0_52, %c0_53] : memref<9x8x8xf32, #tpu.memory_space<vmem>>, vector<1x8x8xf32>
    %38 = vector.shape_cast %37 : vector<1x8x8xf32> to vector<8x8xf32>
    %cst_54 = arith.constant dense<0.000000e+00> : vector<512x8xf32>
    %39 = tpu.matmul %36, %38, %cst_54 {dimension_numbers = #tpu.dot_dimension_numbers<[1], [0], [0], [1], [0, 0, 1, 1], [], []>} : vector<512x8xf32>, vector<8x8xf32>, vector<512x8xf32> -> vector<512x8xf32>
    %40 = arith.addf %34, %39 : vector<512x8xf32>
    %c0_55 = arith.constant 0 : index
    %c2_56 = arith.constant 2 : index
    %c0_57 = arith.constant 0 : index
    %c0_58 = arith.constant 0 : index
    %41 = vector.load %arg7[%c0_55, %c2_56, %c0_57, %c0_58] : memref<2x18x18x8xf32, #tpu.memory_space<vmem>>, vector<2x16x16x8xf32>
    %42 = vector.shape_cast %41 : vector<2x16x16x8xf32> to vector<512x8xf32>
    %c6 = arith.constant 6 : index
    %c0_59 = arith.constant 0 : index
    %c0_60 = arith.constant 0 : index
    %43 = vector.load %arg2[%c6, %c0_59, %c0_60] : memref<9x8x8xf32, #tpu.memory_space<vmem>>, vector<1x8x8xf32>
    %44 = vector.shape_cast %43 : vector<1x8x8xf32> to vector<8x8xf32>
    %cst_61 = arith.constant dense<0.000000e+00> : vector<512x8xf32>
    %45 = tpu.matmul %42, %44, %cst_61 {dimension_numbers = #tpu.dot_dimension_numbers<[1], [0], [0], [1], [0, 0, 1, 1], [], []>} : vector<512x8xf32>, vector<8x8xf32>, vector<512x8xf32> -> vector<512x8xf32>
    %46 = arith.addf %40, %45 : vector<512x8xf32>
    %c0_62 = arith.constant 0 : index
    %c2_63 = arith.constant 2 : index
    %c1_64 = arith.constant 1 : index
    %c0_65 = arith.constant 0 : index
    %47 = vector.load %arg7[%c0_62, %c2_63, %c1_64, %c0_65] : memref<2x18x18x8xf32, #tpu.memory_space<vmem>>, vector<2x16x16x8xf32>
    %48 = vector.shape_cast %47 : vector<2x16x16x8xf32> to vector<512x8xf32>
    %c7 = arith.constant 7 : index
    %c0_66 = arith.constant 0 : index
    %c0_67 = arith.constant 0 : index
    %49 = vector.load %arg2[%c7, %c0_66, %c0_67] : memref<9x8x8xf32, #tpu.memory_space<vmem>>, vector<1x8x8xf32>
    %50 = vector.shape_cast %49 : vector<1x8x8xf32> to vector<8x8xf32>
    %cst_68 = arith.constant dense<0.000000e+00> : vector<512x8xf32>
    %51 = tpu.matmul %48, %50, %cst_68 {dimension_numbers = #tpu.dot_dimension_numbers<[1], [0], [0], [1], [0, 0, 1, 1], [], []>} : vector<512x8xf32>, vector<8x8xf32>, vector<512x8xf32> -> vector<512x8xf32>
    %52 = arith.addf %46, %51 : vector<512x8xf32>
    %c0_69 = arith.constant 0 : index
    %c2_70 = arith.constant 2 : index
    %c2_71 = arith.constant 2 : index
    %c0_72 = arith.constant 0 : index
    %53 = vector.load %arg7[%c0_69, %c2_70, %c2_71, %c0_72] : memref<2x18x18x8xf32, #tpu.memory_space<vmem>>, vector<2x16x16x8xf32>
    %54 = vector.shape_cast %53 : vector<2x16x16x8xf32> to vector<512x8xf32>
    %c8 = arith.constant 8 : index
    %c0_73 = arith.constant 0 : index
    %c0_74 = arith.constant 0 : index
    %55 = vector.load %arg2[%c8, %c0_73, %c0_74] : memref<9x8x8xf32, #tpu.memory_space<vmem>>, vector<1x8x8xf32>
    %56 = vector.shape_cast %55 : vector<1x8x8xf32> to vector<8x8xf32>
    %cst_75 = arith.constant dense<0.000000e+00> : vector<512x8xf32>
    %57 = tpu.matmul %54, %56, %cst_75 {dimension_numbers = #tpu.dot_dimension_numbers<[1], [0], [0], [1], [0, 0, 1, 1], [], []>} : vector<512x8xf32>, vector<8x8xf32>, vector<512x8xf32> -> vector<512x8xf32>
    %58 = arith.addf %52, %57 : vector<512x8xf32>
    %c0_76 = arith.constant 0 : index
    %c0_77 = arith.constant 0 : index
    %59 = vector.load %arg3[%c0_76, %c0_77] : memref<1x8xf32, #tpu.memory_space<vmem>>, vector<1x8xf32>
    %60 = vector.broadcast %59 : vector<1x8xf32> to vector<512x8xf32>
    %61 = arith.addf %58, %60 : vector<512x8xf32>
    %cst_78 = arith.constant 0.000000e+00 : f32
    %62 = vector.broadcast %cst_78 : f32 to vector<512x8xf32>
    %63 = arith.maximumf %61, %62 : vector<512x8xf32>
    %c0_79 = arith.constant 0 : index
    %c0_80 = arith.constant 0 : index
    %64 = vector.load %arg8[%c0_79, %c0_80] : memref<512x8xf32, #tpu.memory_space<vmem>>, vector<512x8xf32>
    tpu.vector_store %arg8[%c0_79, %c0_80], %63 {strides = array<i32>} : memref<512x8xf32, #tpu.memory_space<vmem>>, vector<512x8xf32>,
    %c0_81 = arith.constant 0 : index
    %c0_82 = arith.constant 0 : index
    %65 = tpu.strided_load %arg8[%c0_81, %c0_82] {strides = array<i32: 2, 1>} : memref<512x8xf32, #tpu.memory_space<vmem>>, vector<256x8xf32>
    %c1_83 = arith.constant 1 : index
    %c0_84 = arith.constant 0 : index
    %66 = tpu.strided_load %arg8[%c1_83, %c0_84] {strides = array<i32: 2, 1>} : memref<512x8xf32, #tpu.memory_space<vmem>>, vector<256x8xf32>
    %67 = arith.maximumf %65, %66 : vector<256x8xf32>
    %68 = vector.shape_cast %67 : vector<256x8xf32> to vector<32x8x8xf32>
    %c0_85 = arith.constant 0 : index
    %c0_86 = arith.constant 0 : index
    %c0_87 = arith.constant 0 : index
    %69 = vector.load %arg9[%c0_85, %c0_86, %c0_87] : memref<32x8x8xf32, #tpu.memory_space<vmem>>, vector<32x8x8xf32>
    tpu.vector_store %arg9[%c0_85, %c0_86, %c0_87], %68 {strides = array<i32>} : memref<32x8x8xf32, #tpu.memory_space<vmem>>, vector<32x8x8xf32>,
    %c0_88 = arith.constant 0 : index
    %c0_89 = arith.constant 0 : index
    %c0_90 = arith.constant 0 : index
    %70 = tpu.strided_load %arg9[%c0_88, %c0_89, %c0_90] {strides = array<i32: 2, 1, 1>} : memref<32x8x8xf32, #tpu.memory_space<vmem>>, vector<16x8x8xf32>
    %c1_91 = arith.constant 1 : index
    %c0_92 = arith.constant 0 : index
    %c0_93 = arith.constant 0 : index
    %71 = tpu.strided_load %arg9[%c1_91, %c0_92, %c0_93] {strides = array<i32: 2, 1, 1>} : memref<32x8x8xf32, #tpu.memory_space<vmem>>, vector<16x8x8xf32>
    %72 = arith.maximumf %70, %71 : vector<16x8x8xf32>
    %cst_94 = arith.constant 0.000000e+00 : f32
    %73 = vector.broadcast %cst_94 : f32 to vector<2x10x10x8xf32>
    %c0_95 = arith.constant 0 : index
    %c0_96 = arith.constant 0 : index
    %c0_97 = arith.constant 0 : index
    %c0_98 = arith.constant 0 : index
    %74 = vector.load %arg10[%c0_95, %c0_96, %c0_97, %c0_98] : memref<2x10x10x8xf32, #tpu.memory_space<vmem>>, vector<2x10x10x8xf32>
    tpu.vector_store %arg10[%c0_95, %c0_96, %c0_97, %c0_98], %73 {strides = array<i32>} : memref<2x10x10x8xf32, #tpu.memory_space<vmem>>, vector<2x10x10x8xf32>,
    %75 = vector.shape_cast %72 : vector<16x8x8xf32> to vector<2x8x8x8xf32>
    %c0_99 = arith.constant 0 : index
    %c1_100 = arith.constant 1 : index
    %c1_101 = arith.constant 1 : index
    %c0_102 = arith.constant 0 : index
    %76 = vector.load %arg10[%c0_99, %c1_100, %c1_101, %c0_102] : memref<2x10x10x8xf32, #tpu.memory_space<vmem>>, vector<2x8x8x8xf32>
    tpu.vector_store %arg10[%c0_99, %c1_100, %c1_101, %c0_102], %75 {strides = array<i32>} : memref<2x10x10x8xf32, #tpu.memory_space<vmem>>, vector<2x8x8x8xf32>,
    %cst_103 = arith.constant 0.000000e+00 : f32
    %77 = vector.broadcast %cst_103 : f32 to vector<128x8xf32>
    %c0_104 = arith.constant 0 : index
    %c0_105 = arith.constant 0 : index
    %c0_106 = arith.constant 0 : index
    %c0_107 = arith.constant 0 : index
    %78 = vector.load %arg10[%c0_104, %c0_105, %c0_106, %c0_107] : memref<2x10x10x8xf32, #tpu.memory_space<vmem>>, vector<2x8x8x8xf32>
    %79 = vector.shape_cast %78 : vector<2x8x8x8xf32> to vector<128x8xf32>
    %c0_108 = arith.constant 0 : index
    %c0_109 = arith.constant 0 : index
    %c0_110 = arith.constant 0 : index
    %80 = vector.load %arg4[%c0_108, %c0_109, %c0_110] : memref<9x8x8xf32, #tpu.memory_space<vmem>>, vector<1x8x8xf32>
    %81 = vector.shape_cast %80 : vector<1x8x8xf32> to vector<8x8xf32>
    %cst_111 = arith.constant dense<0.000000e+00> : vector<128x8xf32>
    %82 = tpu.matmul %79, %81, %cst_111 {dimension_numbers = #tpu.dot_dimension_numbers<[1], [0], [0], [1], [0, 0, 1, 1], [], []>} : vector<128x8xf32>, vector<8x8xf32>, vector<128x8xf32> -> vector<128x8xf32>
    %83 = arith.addf %77, %82 : vector<128x8xf32>
    %c0_112 = arith.constant 0 : index
    %c0_113 = arith.constant 0 : index
    %c1_114 = arith.constant 1 : index
    %c0_115 = arith.constant 0 : index
    %84 = vector.load %arg10[%c0_112, %c0_113, %c1_114, %c0_115] : memref<2x10x10x8xf32, #tpu.memory_space<vmem>>, vector<2x8x8x8xf32>
    %85 = vector.shape_cast %84 : vector<2x8x8x8xf32> to vector<128x8xf32>
    %c1_116 = arith.constant 1 : index
    %c0_117 = arith.constant 0 : index
    %c0_118 = arith.constant 0 : index
    %86 = vector.load %arg4[%c1_116, %c0_117, %c0_118] : memref<9x8x8xf32, #tpu.memory_space<vmem>>, vector<1x8x8xf32>
    %87 = vector.shape_cast %86 : vector<1x8x8xf32> to vector<8x8xf32>
    %cst_119 = arith.constant dense<0.000000e+00> : vector<128x8xf32>
    %88 = tpu.matmul %85, %87, %cst_119 {dimension_numbers = #tpu.dot_dimension_numbers<[1], [0], [0], [1], [0, 0, 1, 1], [], []>} : vector<128x8xf32>, vector<8x8xf32>, vector<128x8xf32> -> vector<128x8xf32>
    %89 = arith.addf %83, %88 : vector<128x8xf32>
    %c0_120 = arith.constant 0 : index
    %c0_121 = arith.constant 0 : index
    %c2_122 = arith.constant 2 : index
    %c0_123 = arith.constant 0 : index
    %90 = vector.load %arg10[%c0_120, %c0_121, %c2_122, %c0_123] : memref<2x10x10x8xf32, #tpu.memory_space<vmem>>, vector<2x8x8x8xf32>
    %91 = vector.shape_cast %90 : vector<2x8x8x8xf32> to vector<128x8xf32>
    %c2_124 = arith.constant 2 : index
    %c0_125 = arith.constant 0 : index
    %c0_126 = arith.constant 0 : index
    %92 = vector.load %arg4[%c2_124, %c0_125, %c0_126] : memref<9x8x8xf32, #tpu.memory_space<vmem>>, vector<1x8x8xf32>
    %93 = vector.shape_cast %92 : vector<1x8x8xf32> to vector<8x8xf32>
    %cst_127 = arith.constant dense<0.000000e+00> : vector<128x8xf32>
    %94 = tpu.matmul %91, %93, %cst_127 {dimension_numbers = #tpu.dot_dimension_numbers<[1], [0], [0], [1], [0, 0, 1, 1], [], []>} : vector<128x8xf32>, vector<8x8xf32>, vector<128x8xf32> -> vector<128x8xf32>
    %95 = arith.addf %89, %94 : vector<128x8xf32>
    %c0_128 = arith.constant 0 : index
    %c1_129 = arith.constant 1 : index
    %c0_130 = arith.constant 0 : index
    %c0_131 = arith.constant 0 : index
    %96 = vector.load %arg10[%c0_128, %c1_129, %c0_130, %c0_131] : memref<2x10x10x8xf32, #tpu.memory_space<vmem>>, vector<2x8x8x8xf32>
    %97 = vector.shape_cast %96 : vector<2x8x8x8xf32> to vector<128x8xf32>
    %c3_132 = arith.constant 3 : index
    %c0_133 = arith.constant 0 : index
    %c0_134 = arith.constant 0 : index
    %98 = vector.load %arg4[%c3_132, %c0_133, %c0_134] : memref<9x8x8xf32, #tpu.memory_space<vmem>>, vector<1x8x8xf32>
    %99 = vector.shape_cast %98 : vector<1x8x8xf32> to vector<8x8xf32>
    %cst_135 = arith.constant dense<0.000000e+00> : vector<128x8xf32>
    %100 = tpu.matmul %97, %99, %cst_135 {dimension_numbers = #tpu.dot_dimension_numbers<[1], [0], [0], [1], [0, 0, 1, 1], [], []>} : vector<128x8xf32>, vector<8x8xf32>, vector<128x8xf32> -> vector<128x8xf32>
    %101 = arith.addf %95, %100 : vector<128x8xf32>
    %c0_136 = arith.constant 0 : index
    %c1_137 = arith.constant 1 : index
    %c1_138 = arith.constant 1 : index
    %c0_139 = arith.constant 0 : index
    %102 = vector.load %arg10[%c0_136, %c1_137, %c1_138, %c0_139] : memref<2x10x10x8xf32, #tpu.memory_space<vmem>>, vector<2x8x8x8xf32>
    %103 = vector.shape_cast %102 : vector<2x8x8x8xf32> to vector<128x8xf32>
    %c4_140 = arith.constant 4 : index
    %c0_141 = arith.constant 0 : index
    %c0_142 = arith.constant 0 : index
    %104 = vector.load %arg4[%c4_140, %c0_141, %c0_142] : memref<9x8x8xf32, #tpu.memory_space<vmem>>, vector<1x8x8xf32>
    %105 = vector.shape_cast %104 : vector<1x8x8xf32> to vector<8x8xf32>
    %cst_143 = arith.constant dense<0.000000e+00> : vector<128x8xf32>
    %106 = tpu.matmul %103, %105, %cst_143 {dimension_numbers = #tpu.dot_dimension_numbers<[1], [0], [0], [1], [0, 0, 1, 1], [], []>} : vector<128x8xf32>, vector<8x8xf32>, vector<128x8xf32> -> vector<128x8xf32>
    %107 = arith.addf %101, %106 : vector<128x8xf32>
    %c0_144 = arith.constant 0 : index
    %c1_145 = arith.constant 1 : index
    %c2_146 = arith.constant 2 : index
    %c0_147 = arith.constant 0 : index
    %108 = vector.load %arg10[%c0_144, %c1_145, %c2_146, %c0_147] : memref<2x10x10x8xf32, #tpu.memory_space<vmem>>, vector<2x8x8x8xf32>
    %109 = vector.shape_cast %108 : vector<2x8x8x8xf32> to vector<128x8xf32>
    %c5_148 = arith.constant 5 : index
    %c0_149 = arith.constant 0 : index
    %c0_150 = arith.constant 0 : index
    %110 = vector.load %arg4[%c5_148, %c0_149, %c0_150] : memref<9x8x8xf32, #tpu.memory_space<vmem>>, vector<1x8x8xf32>
    %111 = vector.shape_cast %110 : vector<1x8x8xf32> to vector<8x8xf32>
    %cst_151 = arith.constant dense<0.000000e+00> : vector<128x8xf32>
    %112 = tpu.matmul %109, %111, %cst_151 {dimension_numbers = #tpu.dot_dimension_numbers<[1], [0], [0], [1], [0, 0, 1, 1], [], []>} : vector<128x8xf32>, vector<8x8xf32>, vector<128x8xf32> -> vector<128x8xf32>
    %113 = arith.addf %107, %112 : vector<128x8xf32>
    %c0_152 = arith.constant 0 : index
    %c2_153 = arith.constant 2 : index
    %c0_154 = arith.constant 0 : index
    %c0_155 = arith.constant 0 : index
    %114 = vector.load %arg10[%c0_152, %c2_153, %c0_154, %c0_155] : memref<2x10x10x8xf32, #tpu.memory_space<vmem>>, vector<2x8x8x8xf32>
    %115 = vector.shape_cast %114 : vector<2x8x8x8xf32> to vector<128x8xf32>
    %c6_156 = arith.constant 6 : index
    %c0_157 = arith.constant 0 : index
    %c0_158 = arith.constant 0 : index
    %116 = vector.load %arg4[%c6_156, %c0_157, %c0_158] : memref<9x8x8xf32, #tpu.memory_space<vmem>>, vector<1x8x8xf32>
    %117 = vector.shape_cast %116 : vector<1x8x8xf32> to vector<8x8xf32>
    %cst_159 = arith.constant dense<0.000000e+00> : vector<128x8xf32>
    %118 = tpu.matmul %115, %117, %cst_159 {dimension_numbers = #tpu.dot_dimension_numbers<[1], [0], [0], [1], [0, 0, 1, 1], [], []>} : vector<128x8xf32>, vector<8x8xf32>, vector<128x8xf32> -> vector<128x8xf32>
    %119 = arith.addf %113, %118 : vector<128x8xf32>
    %c0_160 = arith.constant 0 : index
    %c2_161 = arith.constant 2 : index
    %c1_162 = arith.constant 1 : index
    %c0_163 = arith.constant 0 : index
    %120 = vector.load %arg10[%c0_160, %c2_161, %c1_162, %c0_163] : memref<2x10x10x8xf32, #tpu.memory_space<vmem>>, vector<2x8x8x8xf32>
    %121 = vector.shape_cast %120 : vector<2x8x8x8xf32> to vector<128x8xf32>
    %c7_164 = arith.constant 7 : index
    %c0_165 = arith.constant 0 : index
    %c0_166 = arith.constant 0 : index
    %122 = vector.load %arg4[%c7_164, %c0_165, %c0_166] : memref<9x8x8xf32, #tpu.memory_space<vmem>>, vector<1x8x8xf32>
    %123 = vector.shape_cast %122 : vector<1x8x8xf32> to vector<8x8xf32>
    %cst_167 = arith.constant dense<0.000000e+00> : vector<128x8xf32>
    %124 = tpu.matmul %121, %123, %cst_167 {dimension_numbers = #tpu.dot_dimension_numbers<[1], [0], [0], [1], [0, 0, 1, 1], [], []>} : vector<128x8xf32>, vector<8x8xf32>, vector<128x8xf32> -> vector<128x8xf32>
    %125 = arith.addf %119, %124 : vector<128x8xf32>
    %c0_168 = arith.constant 0 : index
    %c2_169 = arith.constant 2 : index
    %c2_170 = arith.constant 2 : index
    %c0_171 = arith.constant 0 : index
    %126 = vector.load %arg10[%c0_168, %c2_169, %c2_170, %c0_171] : memref<2x10x10x8xf32, #tpu.memory_space<vmem>>, vector<2x8x8x8xf32>
    %127 = vector.shape_cast %126 : vector<2x8x8x8xf32> to vector<128x8xf32>
    %c8_172 = arith.constant 8 : index
    %c0_173 = arith.constant 0 : index
    %c0_174 = arith.constant 0 : index
    %128 = vector.load %arg4[%c8_172, %c0_173, %c0_174] : memref<9x8x8xf32, #tpu.memory_space<vmem>>, vector<1x8x8xf32>
    %129 = vector.shape_cast %128 : vector<1x8x8xf32> to vector<8x8xf32>
    %cst_175 = arith.constant dense<0.000000e+00> : vector<128x8xf32>
    %130 = tpu.matmul %127, %129, %cst_175 {dimension_numbers = #tpu.dot_dimension_numbers<[1], [0], [0], [1], [0, 0, 1, 1], [], []>} : vector<128x8xf32>, vector<8x8xf32>, vector<128x8xf32> -> vector<128x8xf32>
    %131 = arith.addf %125, %130 : vector<128x8xf32>
    %c0_176 = arith.constant 0 : index
    %c0_177 = arith.constant 0 : index
    %132 = vector.load %arg5[%c0_176, %c0_177] : memref<1x8xf32, #tpu.memory_space<vmem>>, vector<1x8xf32>
    %133 = vector.broadcast %132 : vector<1x8xf32> to vector<128x8xf32>
    %134 = arith.addf %131, %133 : vector<128x8xf32>
    %cst_178 = arith.constant dense<0xFF800000> : vector<128xf32>
    %135 = vector.multi_reduction <maximumf>, %134, %cst_178 [1] : vector<128x8xf32> to vector<128xf32>
    %136 = vector.shape_cast %135 : vector<128xf32> to vector<128x1xf32>
    %137 = vector.broadcast %136 : vector<128x1xf32> to vector<128x8xf32>
    %138 = arith.subf %134, %137 : vector<128x8xf32>
    %139 = math.exp %138 : vector<128x8xf32>
    %cst_179 = arith.constant dense<0.000000e+00> : vector<128xf32>
    %140 = vector.multi_reduction <add>, %139, %cst_179 [1] : vector<128x8xf32> to vector<128xf32>
    %141 = vector.shape_cast %140 : vector<128xf32> to vector<128x1xf32>
    %142 = tpu.reciprocal %141 {approx = true} : vector<128x1xf32> -> vector<128x1xf32>
    %143 = vector.broadcast %142 : vector<128x1xf32> to vector<128x8xf32>
    %144 = arith.mulf %139, %143 : vector<128x8xf32>
    %145 = tpu.transpose %144, [1, 0] : vector<128x8xf32> -> vector<8x128xf32>
    %c0_180 = arith.constant 0 : index
    %c0_181 = arith.constant 0 : index
    %146 = vector.load %arg6[%c0_180, %c0_181] : memref<8x128xf32, #tpu.memory_space<vmem>>, vector<8x128xf32>
    tpu.vector_store %arg6[%c0_180, %c0_181], %145 {strides = array<i32>} : memref<8x128xf32, #tpu.memory_space<vmem>>, vector<8x128xf32>,
    return
  }
  func.func @transform_0(%arg0: i32) -> (i32, i32, i32, i32) {
    %c0_i32 = arith.constant 0 : i32
    %c0_i32_0 = arith.constant 0 : i32
    %c0_i32_1 = arith.constant 0 : i32
    %c0_i32_2 = arith.constant 0 : i32
    %c0_i32_3 = arith.constant 0 : i32
    return %c0_i32, %c0_i32_0, %c0_i32_1, %c0_i32_2 : i32, i32, i32, i32
  }
  func.func @transform_1(%arg0: i32) -> (i32, i32, i32) {
    %c0_i32 = arith.constant 0 : i32
    %c0_i32_0 = arith.constant 0 : i32
    %c0_i32_1 = arith.constant 0 : i32
    %c0_i32_2 = arith.constant 0 : i32
    return %c0_i32, %c0_i32_0, %c0_i32_1 : i32, i32, i32
  }
  func.func @transform_2(%arg0: i32) -> (i32, i32) {
    %c0_i32 = arith.constant 0 : i32
    %c0_i32_0 = arith.constant 0 : i32
    %c0_i32_1 = arith.constant 0 : i32
    return %c0_i32, %c0_i32_0 : i32, i32
  }
  func.func @transform_3(%arg0: i32) -> (i32, i32, i32) {
    %c0_i32 = arith.constant 0 : i32
    %c0_i32_0 = arith.constant 0 : i32
    %c0_i32_1 = arith.constant 0 : i32
    %c0_i32_2 = arith.constant 0 : i32
    return %c0_i32, %c0_i32_0, %c0_i32_1 : i32, i32, i32
  }
  func.func @transform_4(%arg0: i32) -> (i32, i32) {
    %c0_i32 = arith.constant 0 : i32
    %c0_i32_0 = arith.constant 0 : i32
    %c0_i32_1 = arith.constant 0 : i32
    return %c0_i32, %c0_i32_0 : i32, i32
  }
  func.func @transform_5(%arg0: i32) -> (i32, i32) {
    %c0_i32 = arith.constant 0 : i32
    %c0_i32_0 = arith.constant 0 : i32
    %c0_i32_1 = arith.constant 0 : i32
    return %c0_i32, %c0_i32_0 : i32, i32
  }
}

</mosaic_0001>

<llo_original>
// kernel: cnn_forward.1
$region0: #{cnn_forward.1}
  #allocation0 [shape = 'u32[]', space=smem, size = 0x4, offset = 0x4, fixed_abs, tag = 'smem constant byte address 0x4 - core index']
  #allocation1 [shape = 'u32[144,128]{1,0:T(1,128)}', space=vmem, size = 0x12000, scoped, tag = 'internal scratch']
  #allocation2 [shape = 'f32[2,18,18,8]{3,2,1,0:T(8,128)}', space=vmem, size = 0x6c000, scoped, tag = 'scratch operand']
  #allocation3 [shape = 'f32[512,8]{1,0:T(8,128)}', space=vmem, size = 0x40000, scoped, tag = 'scratch operand']
  #allocation4 [shape = 'f32[32,8,8]{2,1,0:T(8,128)}', space=vmem, size = 0x20000, scoped, tag = 'scratch operand']
  #allocation5 [shape = 'f32[2,10,10,8]{3,2,1,0:T(8,128)}', space=vmem, size = 0x28000, scoped, tag = 'scratch operand']
  %s0 = inlined_call_operand.vmem [shape: f32[2,16,16,4], index: 0, kind: input, shape index: {}]
  %s1 = inlined_call_operand.vmem [shape: f32[9,8,8], index: 1, kind: input, shape index: {}]
  %s2 = inlined_call_operand.vmem [shape: f32[1,8], index: 2, kind: input, shape index: {}]
  %s3 = inlined_call_operand.vmem [shape: f32[9,8,8], index: 3, kind: input, shape index: {}]
  %s4 = inlined_call_operand.vmem [shape: f32[1,8], index: 4, kind: input, shape index: {}]
  %s5 = inlined_call_operand.vmem [shape: f32[8,128], index: 5, kind: output, shape index: {}]
  %s6 = sld [smem:[#allocation0]]
  $region30: #{cnn_forward.1} parent=0
    _
  %s8 = ssub.s32 1, %s6
  %s9 = scalar_select 0, %s8, %s6
  // Predicated region
  $region2: #{cnn_forward.1} parent=0 // pred_check
    _
  $region3: #{cnn_forward.1} parent=0 // pred_check_branch
    %11 = sbr.rel (0) target = $region5
  $region4: #{cnn_forward.1} parent=0 // pred_region
    _
  $region5: #{cnn_forward.1} parent=0 // pred_fallthru
    _
  // Predicated region
  $region6: #{cnn_forward.1} parent=0 // pred_check
    _
  $region7: #{cnn_forward.1} parent=0 // pred_check_branch
    %13 = sbr.rel (0) target = $region9
  $region8: #{cnn_forward.1} parent=0 // pred_region
    _
  $region9: #{cnn_forward.1} parent=0 // pred_fallthru
    _
  // Predicated region
  $region10: #{cnn_forward.1} parent=0 // pred_check
    _
  $region11: #{cnn_forward.1} parent=0 // pred_check_branch
    %15 = sbr.rel (0) target = $region13
  $region12: #{cnn_forward.1} parent=0 // pred_region
    _
  $region13: #{cnn_forward.1} parent=0 // pred_fallthru
    _
  // Predicated region
  $region14: #{cnn_forward.1} parent=0 // pred_check
    _
  $region15: #{cnn_forward.1} parent=0 // pred_check_branch
    %17 = sbr.rel (0) target = $region17
  $region16: #{cnn_forward.1} parent=0 // pred_region
    _
  $region17: #{cnn_forward.1} parent=0 // pred_fallthru
    _
  // Predicated region
  $region18: #{cnn_forward.1} parent=0 // pred_check
    _
  $region19: #{cnn_forward.1} parent=0 // pred_check_branch
    %19 = sbr.rel (0) target = $region21
  $region20: #{cnn_forward.1} parent=0 // pred_region
    _
  $region21: #{cnn_forward.1} parent=0 // pred_fallthru
    _
  %vm20 = vcmask 64512
  %21 = vst.msk [vmem:[#allocation2] sm:$0xff] %vm20, 0.0
  %22 = vst.msk [vmem:[#allocation2 + $0x8] sm:$0xff] %vm20, 0.0
  %vm23 = vcmask 58368
  %24 = vst.msk [vmem:[#allocation2 + $0x10] sm:$0x3] %vm23, 0.0
  %25 = vst.msk [vmem:[#allocation2 + $0x18] sm:$0xff] %vm20, 0.0
  %26 = vst.msk [vmem:[#allocation2 + $0x20] sm:$0xff] %vm20, 0.0
  %27 = vst.msk [vmem:[#allocation2 + $0x28] sm:$0x3] %vm23, 0.0
  %28 = vst.msk [vmem:[#allocation2 + $0x30] sm:$0xff] %vm20, 0.0
  %29 = vst.msk [vmem:[#allocation2 + $0x38] sm:$0xff] %vm20, 0.0
  %30 = vst.msk [vmem:[#allocation2 + $0x40] sm:$0x3] %vm23, 0.0
  %31 = vst.msk [vmem:[#allocation2 + $0x48] sm:$0xff] %vm20, 0.0
  %32 = vst.msk [vmem:[#allocation2 + $0x50] sm:$0xff] %vm20, 0.0
  %33 = vst.msk [vmem:[#allocation2 + $0x58] sm:$0x3] %vm23, 0.0
  %34 = vst.msk [vmem:[#allocation2 + $0x60] sm:$0xff] %vm20, 0.0
  %35 = vst.msk [vmem:[#allocation2 + $0x68] sm:$0xff] %vm20, 0.0
  %36 = vst.msk [vmem:[#allocation2 + $0x70] sm:$0x3] %vm23, 0.0
  %37 = vst.msk [vmem:[#allocation2 + $0x78] sm:$0xff] %vm20, 0.0
  %38 = vst.msk [vmem:[#allocation2 + $0x80] sm:$0xff] %vm20, 0.0
  %39 = vst.msk [vmem:[#allocation2 + $0x88] sm:$0x3] %vm23, 0.0
  %40 = vst.msk [vmem:[#allocation2 + $0x90] sm:$0xff] %vm20, 0.0
  %41 = vst.msk [vmem:[#allocation2 + $0x98] sm:$0xff] %vm20, 0.0
  %42 = vst.msk [vmem:[#allocation2 + $0xa0] sm:$0x3] %vm23, 0.0
  %43 = vst.msk [vmem:[#allocation2 + $0xa8] sm:$0xff] %vm20, 0.0
  %44 = vst.msk [vmem:[#allocation2 + $0xb0] sm:$0xff] %vm20, 0.0
  %45 = vst.msk [vmem:[#allocation2 + $0xb8] sm:$0x3] %vm23, 0.0
  %46 = vst.msk [vmem:[#allocation2 + $0xc0] sm:$0xff] %vm20, 0.0
  %47 = vst.msk [vmem:[#allocation2 + $0xc8] sm:$0xff] %vm20, 0.0
  %48 = vst.msk [vmem:[#allocation2 + $0xd0] sm:$0x3] %vm23, 0.0
  %49 = vst.msk [vmem:[#allocation2 + $0xd8] sm:$0xff] %vm20, 0.0
  %50 = vst.msk [vmem:[#allocation2 + $0xe0] sm:$0xff] %vm20, 0.0
  %51 = vst.msk [vmem:[#allocation2 + $0xe8] sm:$0x3] %vm23, 0.0
  %52 = vst.msk [vmem:[#allocation2 + $0xf0] sm:$0xff] %vm20, 0.0
  %53 = vst.msk [vmem:[#allocation2 + $0xf8] sm:$0xff] %vm20, 0.0
  %54 = vst.msk [vmem:[#allocation2 + $0x100] sm:$0x3] %vm23, 0.0
  %55 = vst.msk [vmem:[#allocation2 + $0x108] sm:$0xff] %vm20, 0.0
  %56 = vst.msk [vmem:[#allocation2 + $0x110] sm:$0xff] %vm20, 0.0
  %57 = vst.msk [vmem:[#allocation2 + $0x118] sm:$0x3] %vm23, 0.0
  %58 = vst.msk [vmem:[#allocation2 + $0x120] sm:$0xff] %vm20, 0.0
  %59 = vst.msk [vmem:[#allocation2 + $0x128] sm:$0xff] %vm20, 0.0
  %60 = vst.msk [vmem:[#allocation2 + $0x130] sm:$0x3] %vm23, 0.0
  %61 = vst.msk [vmem:[#allocation2 + $0x138] sm:$0xff] %vm20, 0.0
  %62 = vst.msk [vmem:[#allocation2 + $0x140] sm:$0xff] %vm20, 0.0
  %63 = vst.msk [vmem:[#allocation2 + $0x148] sm:$0x3] %vm23, 0.0
  %64 = vst.msk [vmem:[#allocation2 + $0x150] sm:$0xff] %vm20, 0.0
  %65 = vst.msk [vmem:[#allocation2 + $0x158] sm:$0xff] %vm20, 0.0
  %66 = vst.msk [vmem:[#allocation2 + $0x160] sm:$0x3] %vm23, 0.0
  %67 = vst.msk [vmem:[#allocation2 + $0x168] sm:$0xff] %vm20, 0.0
  %68 = vst.msk [vmem:[#allocation2 + $0x170] sm:$0xff] %vm20, 0.0
  %69 = vst.msk [vmem:[#allocation2 + $0x178] sm:$0x3] %vm23, 0.0
  %70 = vst.msk [vmem:[#allocation2 + $0x180] sm:$0xff] %vm20, 0.0
  %71 = vst.msk [vmem:[#allocation2 + $0x188] sm:$0xff] %vm20, 0.0
  %72 = vst.msk [vmem:[#allocation2 + $0x190] sm:$0x3] %vm23, 0.0
  %73 = vst.msk [vmem:[#allocation2 + $0x198] sm:$0xff] %vm20, 0.0
  %74 = vst.msk [vmem:[#allocation2 + $0x1a0] sm:$0xff] %vm20, 0.0
  %75 = vst.msk [vmem:[#allocation2 + $0x1a8] sm:$0x3] %vm23, 0.0
  %76 = vst.msk [vmem:[#allocation2 + $0x1b0] sm:$0xff] %vm20, 0.0
  %77 = vst.msk [vmem:[#allocation2 + $0x1b8] sm:$0xff] %vm20, 0.0
  %78 = vst.msk [vmem:[#allocation2 + $0x1c0] sm:$0x3] %vm23, 0.0
  %79 = vst.msk [vmem:[#allocation2 + $0x1c8] sm:$0xff] %vm20, 0.0
  %80 = vst.msk [vmem:[#allocation2 + $0x1d0] sm:$0xff] %vm20, 0.0
  %81 = vst.msk [vmem:[#allocation2 + $0x1d8] sm:$0x3] %vm23, 0.0
  %82 = vst.msk [vmem:[#allocation2 + $0x1e0] sm:$0xff] %vm20, 0.0
  %83 = vst.msk [vmem:[#allocation2 + $0x1e8] sm:$0xff] %vm20, 0.0
  %84 = vst.msk [vmem:[#allocation2 + $0x1f0] sm:$0x3] %vm23, 0.0
  %85 = vst.msk [vmem:[#allocation2 + $0x1f8] sm:$0xff] %vm20, 0.0
  %86 = vst.msk [vmem:[#allocation2 + $0x200] sm:$0xff] %vm20, 0.0
  %87 = vst.msk [vmem:[#allocation2 + $0x208] sm:$0x3] %vm23, 0.0
  %88 = vst.msk [vmem:[#allocation2 + $0x210] sm:$0xff] %vm20, 0.0
  %89 = vst.msk [vmem:[#allocation2 + $0x218] sm:$0xff] %vm20, 0.0
  %90 = vst.msk [vmem:[#allocation2 + $0x220] sm:$0x3] %vm23, 0.0
  %91 = vst.msk [vmem:[#allocation2 + $0x228] sm:$0xff] %vm20, 0.0
  %92 = vst.msk [vmem:[#allocation2 + $0x230] sm:$0xff] %vm20, 0.0
  %93 = vst.msk [vmem:[#allocation2 + $0x238] sm:$0x3] %vm23, 0.0
  %94 = vst.msk [vmem:[#allocation2 + $0x240] sm:$0xff] %vm20, 0.0
  %95 = vst.msk [vmem:[#allocation2 + $0x248] sm:$0xff] %vm20, 0.0
  %96 = vst.msk [vmem:[#allocation2 + $0x250] sm:$0x3] %vm23, 0.0
  %97 = vst.msk [vmem:[#allocation2 + $0x258] sm:$0xff] %vm20, 0.0
  %98 = vst.msk [vmem:[#allocation2 + $0x260] sm:$0xff] %vm20, 0.0
  %99 = vst.msk [vmem:[#allocation2 + $0x268] sm:$0x3] %vm23, 0.0
  %100 = vst.msk [vmem:[#allocation2 + $0x270] sm:$0xff] %vm20, 0.0
  %101 = vst.msk [vmem:[#allocation2 + $0x278] sm:$0xff] %vm20, 0.0
  %102 = vst.msk [vmem:[#allocation2 + $0x280] sm:$0x3] %vm23, 0.0
  %103 = vst.msk [vmem:[#allocation2 + $0x288] sm:$0xff] %vm20, 0.0
  %104 = vst.msk [vmem:[#allocation2 + $0x290] sm:$0xff] %vm20, 0.0
  %105 = vst.msk [vmem:[#allocation2 + $0x298] sm:$0x3] %vm23, 0.0
  %106 = vst.msk [vmem:[#allocation2 + $0x2a0] sm:$0xff] %vm20, 0.0
  %107 = vst.msk [vmem:[#allocation2 + $0x2a8] sm:$0xff] %vm20, 0.0
  %108 = vst.msk [vmem:[#allocation2 + $0x2b0] sm:$0x3] %vm23, 0.0
  %109 = vst.msk [vmem:[#allocation2 + $0x2b8] sm:$0xff] %vm20, 0.0
  %110 = vst.msk [vmem:[#allocation2 + $0x2c0] sm:$0xff] %vm20, 0.0
  %111 = vst.msk [vmem:[#allocation2 + $0x2c8] sm:$0x3] %vm23, 0.0
  %112 = vst.msk [vmem:[#allocation2 + $0x2d0] sm:$0xff] %vm20, 0.0
  %113 = vst.msk [vmem:[#allocation2 + $0x2d8] sm:$0xff] %vm20, 0.0
  %114 = vst.msk [vmem:[#allocation2 + $0x2e0] sm:$0x3] %vm23, 0.0
  %115 = vst.msk [vmem:[#allocation2 + $0x2e8] sm:$0xff] %vm20, 0.0
  %116 = vst.msk [vmem:[#allocation2 + $0x2f0] sm:$0xff] %vm20, 0.0
  %117 = vst.msk [vmem:[#allocation2 + $0x2f8] sm:$0x3] %vm23, 0.0
  %118 = vst.msk [vmem:[#allocation2 + $0x300] sm:$0xff] %vm20, 0.0
  %119 = vst.msk [vmem:[#allocation2 + $0x308] sm:$0xff] %vm20, 0.0
  %120 = vst.msk [vmem:[#allocation2 + $0x310] sm:$0x3] %vm23, 0.0
  %121 = vst.msk [vmem:[#allocation2 + $0x318] sm:$0xff] %vm20, 0.0
  %122 = vst.msk [vmem:[#allocation2 + $0x320] sm:$0xff] %vm20, 0.0
  %123 = vst.msk [vmem:[#allocation2 + $0x328] sm:$0x3] %vm23, 0.0
  %124 = vst.msk [vmem:[#allocation2 + $0x330] sm:$0xff] %vm20, 0.0
  %125 = vst.msk [vmem:[#allocation2 + $0x338] sm:$0xff] %vm20, 0.0
  %126 = vst.msk [vmem:[#allocation2 + $0x340] sm:$0x3] %vm23, 0.0
  %127 = vst.msk [vmem:[#allocation2 + $0x348] sm:$0xff] %vm20, 0.0
  %128 = vst.msk [vmem:[#allocation2 + $0x350] sm:$0xff] %vm20, 0.0
  %129 = vst.msk [vmem:[#allocation2 + $0x358] sm:$0x3] %vm23, 0.0
  %v130 = vld [vmem:[%s0] sm:$0xff]
  %v131 = vld [vmem:[%s0 + $0x8] sm:$0xff]
  %v132 = vld [vmem:[%s0 + $0x10] sm:$0xff]
  %v133 = vld [vmem:[%s0 + $0x18] sm:$0xff]
  %v134 = vld [vmem:[%s0 + $0x20] sm:$0xff]
  %v135 = vld [vmem:[%s0 + $0x28] sm:$0xff]
  %v136 = vld [vmem:[%s0 + $0x30] sm:$0xff]
  %v137 = vld [vmem:[%s0 + $0x38] sm:$0xff]
  %v138 = vld [vmem:[%s0 + $0x40] sm:$0xff]
  %v139 = vld [vmem:[%s0 + $0x48] sm:$0xff]
  %v140 = vld [vmem:[%s0 + $0x50] sm:$0xff]
  %v141 = vld [vmem:[%s0 + $0x58] sm:$0xff]
  %v142 = vld [vmem:[%s0 + $0x60] sm:$0xff]
  %v143 = vld [vmem:[%s0 + $0x68] sm:$0xff]
  %v144 = vld [vmem:[%s0 + $0x70] sm:$0xff]
  %v145 = vld [vmem:[%s0 + $0x78] sm:$0xff]
  %v146 = vld [vmem:[%s0 + $0x80] sm:$0xff]
  %v147 = vld [vmem:[%s0 + $0x88] sm:$0xff]
  %v148 = vld [vmem:[%s0 + $0x90] sm:$0xff]
  %v149 = vld [vmem:[%s0 + $0x98] sm:$0xff]
  %v150 = vld [vmem:[%s0 + $0xa0] sm:$0xff]
  %v151 = vld [vmem:[%s0 + $0xa8] sm:$0xff]
  %v152 = vld [vmem:[%s0 + $0xb0] sm:$0xff]
  %v153 = vld [vmem:[%s0 + $0xb8] sm:$0xff]
  %v154 = vld [vmem:[%s0 + $0xc0] sm:$0xff]
  %v155 = vld [vmem:[%s0 + $0xc8] sm:$0xff]
  %v156 = vld [vmem:[%s0 + $0xd0] sm:$0xff]
  %v157 = vld [vmem:[%s0 + $0xd8] sm:$0xff]
  %v158 = vld [vmem:[%s0 + $0xe0] sm:$0xff]
  %v159 = vld [vmem:[%s0 + $0xe8] sm:$0xff]
  %v160 = vld [vmem:[%s0 + $0xf0] sm:$0xff]
  %v161 = vld [vmem:[%s0 + $0xf8] sm:$0xff]
  %v162 = vld [vmem:[%s0 + $0x100] sm:$0xff]
  %v163 = vld [vmem:[%s0 + $0x108] sm:$0xff]
  %v164 = vld [vmem:[%s0 + $0x110] sm:$0xff]
  %v165 = vld [vmem:[%s0 + $0x118] sm:$0xff]
  %v166 = vld [vmem:[%s0 + $0x120] sm:$0xff]
  %v167 = vld [vmem:[%s0 + $0x128] sm:$0xff]
  %v168 = vld [vmem:[%s0 + $0x130] sm:$0xff]
  %v169 = vld [vmem:[%s0 + $0x138] sm:$0xff]
  %v170 = vld [vmem:[%s0 + $0x140] sm:$0xff]
  %v171 = vld [vmem:[%s0 + $0x148] sm:$0xff]
  %v172 = vld [vmem:[%s0 + $0x150] sm:$0xff]
  %v173 = vld [vmem:[%s0 + $0x158] sm:$0xff]
  %v174 = vld [vmem:[%s0 + $0x160] sm:$0xff]
  %v175 = vld [vmem:[%s0 + $0x168] sm:$0xff]
  %v176 = vld [vmem:[%s0 + $0x170] sm:$0xff]
  %v177 = vld [vmem:[%s0 + $0x178] sm:$0xff]
  %v178 = vld [vmem:[%s0 + $0x180] sm:$0xff]
  %v179 = vld [vmem:[%s0 + $0x188] sm:$0xff]
  %v180 = vld [vmem:[%s0 + $0x190] sm:$0xff]
  %v181 = vld [vmem:[%s0 + $0x198] sm:$0xff]
  %v182 = vld [vmem:[%s0 + $0x1a0] sm:$0xff]
  %v183 = vld [vmem:[%s0 + $0x1a8] sm:$0xff]
  %v184 = vld [vmem:[%s0 + $0x1b0] sm:$0xff]
  %v185 = vld [vmem:[%s0 + $0x1b8] sm:$0xff]
  %v186 = vld [vmem:[%s0 + $0x1c0] sm:$0xff]
  %v187 = vld [vmem:[%s0 + $0x1c8] sm:$0xff]
  %v188 = vld [vmem:[%s0 + $0x1d0] sm:$0xff]
  %v189 = vld [vmem:[%s0 + $0x1d8] sm:$0xff]
  %v190 = vld [vmem:[%s0 + $0x1e0] sm:$0xff]
  %v191 = vld [vmem:[%s0 + $0x1e8] sm:$0xff]
  %v192 = vld [vmem:[%s0 + $0x1f0] sm:$0xff]
  %v193 = vld [vmem:[%s0 + $0x1f8] sm:$0xff]
  %s194 = scalar_lea.vmem [#allocation2], 24
  %vm195 = vcmask 31744
  %196 = vst.msk [vmem:[%s194 + $0x1] sm:$0xff] %vm195, %v130
  %197 = vst.msk [vmem:[%s194 + $0x9] sm:$0xff] %vm195, %v131
  %198 = vst.msk [vmem:[%s194 + $0x19] sm:$0xff] %vm195, %v132
  %199 = vst.msk [vmem:[%s194 + $0x21] sm:$0xff] %vm195, %v133
  %200 = vst.msk [vmem:[%s194 + $0x31] sm:$0xff] %vm195, %v134
  %201 = vst.msk [vmem:[%s194 + $0x39] sm:$0xff] %vm195, %v135
  %202 = vst.msk [vmem:[%s194 + $0x49] sm:$0xff] %vm195, %v136
  %203 = vst.msk [vmem:[%s194 + $0x51] sm:$0xff] %vm195, %v137
  %204 = vst.msk [vmem:[%s194 + $0x61] sm:$0xff] %vm195, %v138
  %205 = vst.msk [vmem:[%s194 + $0x69] sm:$0xff] %vm195, %v139
  %206 = vst.msk [vmem:[%s194 + $0x79] sm:$0xff] %vm195, %v140
  %207 = vst.msk [vmem:[%s194 + $0x81] sm:$0xff] %vm195, %v141
  %208 = vst.msk [vmem:[%s194 + $0x91] sm:$0xff] %vm195, %v142
  %209 = vst.msk [vmem:[%s194 + $0x99] sm:$0xff] %vm195, %v143
  %210 = vst.msk [vmem:[%s194 + $0xa9] sm:$0xff] %vm195, %v144
  %211 = vst.msk [vmem:[%s194 + $0xb1] sm:$0xff] %vm195, %v145
  %212 = vst.msk [vmem:[%s194 + $0xc1] sm:$0xff] %vm195, %v146
  %213 = vst.msk [vmem:[%s194 + $0xc9] sm:$0xff] %vm195, %v147
  %214 = vst.msk [vmem:[%s194 + $0xd9] sm:$0xff] %vm195, %v148
  %215 = vst.msk [vmem:[%s194 + $0xe1] sm:$0xff] %vm195, %v149
  %216 = vst.msk [vmem:[%s194 + $0xf1] sm:$0xff] %vm195, %v150
  %217 = vst.msk [vmem:[%s194 + $0xf9] sm:$0xff] %vm195, %v151
  %218 = vst.msk [vmem:[%s194 + $0x109] sm:$0xff] %vm195, %v152
  %219 = vst.msk [vmem:[%s194 + $0x111] sm:$0xff] %vm195, %v153
  %220 = vst.msk [vmem:[%s194 + $0x121] sm:$0xff] %vm195, %v154
  %221 = vst.msk [vmem:[%s194 + $0x129] sm:$0xff] %vm195, %v155
  %222 = vst.msk [vmem:[%s194 + $0x139] sm:$0xff] %vm195, %v156
  %223 = vst.msk [vmem:[%s194 + $0x141] sm:$0xff] %vm195, %v157
  %224 = vst.msk [vmem:[%s194 + $0x151] sm:$0xff] %vm195, %v158
  %225 = vst.msk [vmem:[%s194 + $0x159] sm:$0xff] %vm195, %v159
  %226 = vst.msk [vmem:[%s194 + $0x169] sm:$0xff] %vm195, %v160
  %227 = vst.msk [vmem:[%s194 + $0x171] sm:$0xff] %vm195, %v161
  %228 = vst.msk [vmem:[%s194 + $0x1b1] sm:$0xff] %vm195, %v162
  %229 = vst.msk [vmem:[%s194 + $0x1b9] sm:$0xff] %vm195, %v163
  %230 = vst.msk [vmem:[%s194 + $0x1c9] sm:$0xff] %vm195, %v164
  %231 = vst.msk [vmem:[%s194 + $0x1d1] sm:$0xff] %vm195, %v165
  %232 = vst.msk [vmem:[%s194 + $0x1e1] sm:$0xff] %vm195, %v166
  %233 = vst.msk [vmem:[%s194 + $0x1e9] sm:$0xff] %vm195, %v167
  %234 = vst.msk [vmem:[%s194 + $0x1f9] sm:$0xff] %vm195, %v168
  %235 = vst.msk [vmem:[%s194 + $0x201] sm:$0xff] %vm195, %v169
  %236 = vst.msk [vmem:[%s194 + $0x211] sm:$0xff] %vm195, %v170
  %237 = vst.msk [vmem:[%s194 + $0x219] sm:$0xff] %vm195, %v171
  %238 = vst.msk [vmem:[%s194 + $0x229] sm:$0xff] %vm195, %v172
  %239 = vst.msk [vmem:[%s194 + $0x231] sm:$0xff] %vm195, %v173
  %240 = vst.msk [vmem:[%s194 + $0x241] sm:$0xff] %vm195, %v174
  %241 = vst.msk [vmem:[%s194 + $0x249] sm:$0xff] %vm195, %v175
  %242 = vst.msk [vmem:[%s194 + $0x259] sm:$0xff] %vm195, %v176
  %243 = vst.msk [vmem:[%s194 + $0x261] sm:$0xff] %vm195, %v177
  %244 = vst.msk [vmem:[%s194 + $0x271] sm:$0xff] %vm195, %v178
  %245 = vst.msk [vmem:[%s194 + $0x279] sm:$0xff] %vm195, %v179
  %246 = vst.msk [vmem:[%s194 + $0x289] sm:$0xff] %vm195, %v180
  %247 = vst.msk [vmem:[%s194 + $0x291] sm:$0xff] %vm195, %v181
  %248 = vst.msk [vmem:[%s194 + $0x2a1] sm:$0xff] %vm195, %v182
  %249 = vst.msk [vmem:[%s194 + $0x2a9] sm:$0xff] %vm195, %v183
  %250 = vst.msk [vmem:[%s194 + $0x2b9] sm:$0xff] %vm195, %v184
  %251 = vst.msk [vmem:[%s194 + $0x2c1] sm:$0xff] %vm195, %v185
  %252 = vst.msk [vmem:[%s194 + $0x2d1] sm:$0xff] %vm195, %v186
  %253 = vst.msk [vmem:[%s194 + $0x2d9] sm:$0xff] %vm195, %v187
  %254 = vst.msk [vmem:[%s194 + $0x2e9] sm:$0xff] %vm195, %v188
  %255 = vst.msk [vmem:[%s194 + $0x2f1] sm:$0xff] %vm195, %v189
  %256 = vst.msk [vmem:[%s194 + $0x301] sm:$0xff] %vm195, %v190
  %257 = vst.msk [vmem:[%s194 + $0x309] sm:$0xff] %vm195, %v191
  %258 = vst.msk [vmem:[%s194 + $0x319] sm:$0xff] %vm195, %v192
  %259 = vst.msk [vmem:[%s194 + $0x321] sm:$0xff] %vm195, %v193
  %v260 = vld [vmem:[#allocation2] sm:$0xff]
  %v261 = vld [vmem:[#allocation2 + $0x8] sm:$0xff]
  %v262 = vld [vmem:[#allocation2 + $0x18] sm:$0xff]
  %v263 = vld [vmem:[#allocation2 + $0x20] sm:$0xff]
  %v264 = vld [vmem:[#allocation2 + $0x30] sm:$0xff]
  %v265 = vld [vmem:[#allocation2 + $0x38] sm:$0xff]
  %v266 = vld [vmem:[#allocation2 + $0x48] sm:$0xff]
  %v267 = vld [vmem:[#allocation2 + $0x50] sm:$0xff]
  %v268 = vld [vmem:[#allocation2 + $0x60] sm:$0xff]
  %v269 = vld [vmem:[#allocation2 + $0x68] sm:$0xff]
  %v270 = vld [vmem:[#allocation2 + $0x78] sm:$0xff]
  %v271 = vld [vmem:[#allocation2 + $0x80] sm:$0xff]
  %v272 = vld [vmem:[#allocation2 + $0x90] sm:$0xff]
  %v273 = vld [vmem:[#allocation2 + $0x98] sm:$0xff]
  %v274 = vld [vmem:[#allocation2 + $0xa8] sm:$0xff]
  %v275 = vld [vmem:[#allocation2 + $0xb0] sm:$0xff]
  %v276 = vld [vmem:[#allocation2 + $0xc0] sm:$0xff]
  %v277 = vld [vmem:[#allocation2 + $0xc8] sm:$0xff]
  %v278 = vld [vmem:[#allocation2 + $0xd8] sm:$0xff]
  %v279 = vld [vmem:[#allocation2 + $0xe0] sm:$0xff]
  %v280 = vld [vmem:[#allocation2 + $0xf0] sm:$0xff]
  %v281 = vld [vmem:[#allocation2 + $0xf8] sm:$0xff]
  %v282 = vld [vmem:[#allocation2 + $0x108] sm:$0xff]
  %v283 = vld [vmem:[#allocation2 + $0x110] sm:$0xff]
  %v284 = vld [vmem:[#allocation2 + $0x120] sm:$0xff]
  %v285 = vld [vmem:[#allocation2 + $0x128] sm:$0xff]
  %v286 = vld [vmem:[#allocation2 + $0x138] sm:$0xff]
  %v287 = vld [vmem:[#allocation2 + $0x140] sm:$0xff]
  %v288 = vld [vmem:[#allocation2 + $0x150] sm:$0xff]
  %v289 = vld [vmem:[#allocation2 + $0x158] sm:$0xff]
  %v290 = vld [vmem:[#allocation2 + $0x168] sm:$0xff]
  %v291 = vld [vmem:[#allocation2 + $0x170] sm:$0xff]
  %v292 = vld [vmem:[#allocation2 + $0x1b0] sm:$0xff]
  %v293 = vld [vmem:[#allocation2 + $0x1b8] sm:$0xff]
  %v294 = vld [vmem:[#allocation2 + $0x1c8] sm:$0xff]
  %v295 = vld [vmem:[#allocation2 + $0x1d0] sm:$0xff]
  %v296 = vld [vmem:[#allocation2 + $0x1e0] sm:$0xff]
  %v297 = vld [vmem:[#allocation2 + $0x1e8] sm:$0xff]
  %v298 = vld [vmem:[#allocation2 + $0x1f8] sm:$0xff]
  %v299 = vld [vmem:[#allocation2 + $0x200] sm:$0xff]
  %v300 = vld [vmem:[#allocation2 + $0x210] sm:$0xff]
  %v301 = vld [vmem:[#allocation2 + $0x218] sm:$0xff]
  %v302 = vld [vmem:[#allocation2 + $0x228] sm:$0xff]
  %v303 = vld [vmem:[#allocation2 + $0x230] sm:$0xff]
  %v304 = vld [vmem:[#allocation2 + $0x240] sm:$0xff]
  %v305 = vld [vmem:[#allocation2 + $0x248] sm:$0xff]
  %v306 = vld [vmem:[#allocation2 + $0x258] sm:$0xff]
  %v307 = vld [vmem:[#allocation2 + $0x260] sm:$0xff]
  %v308 = vld [vmem:[#allocation2 + $0x270] sm:$0xff]
  %v309 = vld [vmem:[#allocation2 + $0x278] sm:$0xff]
  %v310 = vld [vmem:[#allocation2 + $0x288] sm:$0xff]
  %v311 = vld [vmem:[#allocation2 + $0x290] sm:$0xff]
  %v312 = vld [vmem:[#allocation2 + $0x2a0] sm:$0xff]
  %v313 = vld [vmem:[#allocation2 + $0x2a8] sm:$0xff]
  %v314 = vld [vmem:[#allocation2 + $0x2b8] sm:$0xff]
  %v315 = vld [vmem:[#allocation2 + $0x2c0] sm:$0xff]
  %v316 = vld [vmem:[#allocation2 + $0x2d0] sm:$0xff]
  %v317 = vld [vmem:[#allocation2 + $0x2d8] sm:$0xff]
  %v318 = vld [vmem:[#allocation2 + $0x2e8] sm:$0xff]
  %v319 = vld [vmem:[#allocation2 + $0x2f0] sm:$0xff]
  %v320 = vld [vmem:[#allocation2 + $0x300] sm:$0xff]
  %v321 = vld [vmem:[#allocation2 + $0x308] sm:$0xff]
  %v322 = vld [vmem:[#allocation2 + $0x318] sm:$0xff]
  %v323 = vld [vmem:[#allocation2 + $0x320] sm:$0xff]
  %v324 = vld [vmem:[%s1] sm:$0xff]
  %v325 = vld [vmem:[#allocation2 + $0x1] sm:$0xff]
  %v326 = vld [vmem:[#allocation2 + $0x9] sm:$0xff]
  %v327 = vld [vmem:[#allocation2 + $0x19] sm:$0xff]
  %v328 = vld [vmem:[#allocation2 + $0x21] sm:$0xff]
  %v329 = vld [vmem:[#allocation2 + $0x31] sm:$0xff]
  %v330 = vld [vmem:[#allocation2 + $0x39] sm:$0xff]
  %v331 = vld [vmem:[#allocation2 + $0x49] sm:$0xff]
  %v332 = vld [vmem:[#allocation2 + $0x51] sm:$0xff]
  %v333 = vld [vmem:[#allocation2 + $0x61] sm:$0xff]
  %v334 = vld [vmem:[#allocation2 + $0x69] sm:$0xff]
  %v335 = vld [vmem:[#allocation2 + $0x79] sm:$0xff]
  %v336 = vld [vmem:[#allocation2 + $0x81] sm:$0xff]
  %v337 = vld [vmem:[#allocation2 + $0x91] sm:$0xff]
  %v338 = vld [vmem:[#allocation2 + $0x99] sm:$0xff]
  %v339 = vld [vmem:[#allocation2 + $0xa9] sm:$0xff]
  %v340 = vld [vmem:[#allocation2 + $0xb1] sm:$0xff]
  %v341 = vld [vmem:[#allocation2 + $0xc1] sm:$0xff]
  %v342 = vld [vmem:[#allocation2 + $0xc9] sm:$0xff]
  %v343 = vld [vmem:[#allocation2 + $0xd9] sm:$0xff]
  %v344 = vld [vmem:[#allocation2 + $0xe1] sm:$0xff]
  %v345 = vld [vmem:[#allocation2 + $0xf1] sm:$0xff]
  %v346 = vld [vmem:[#allocation2 + $0xf9] sm:$0xff]
  %v347 = vld [vmem:[#allocation2 + $0x109] sm:$0xff]
  %v348 = vld [vmem:[#allocation2 + $0x111] sm:$0xff]
  %v349 = vld [vmem:[#allocation2 + $0x121] sm:$0xff]
  %v350 = vld [vmem:[#allocation2 + $0x129] sm:$0xff]
  %v351 = vld [vmem:[#allocation2 + $0x139] sm:$0xff]
  %v352 = vld [vmem:[#allocation2 + $0x141] sm:$0xff]
  %v353 = vld [vmem:[#allocation2 + $0x151] sm:$0xff]
  %v354 = vld [vmem:[#allocation2 + $0x159] sm:$0xff]
  %v355 = vld [vmem:[#allocation2 + $0x169] sm:$0xff]
  %v356 = vld [vmem:[#allocation2 + $0x171] sm:$0xff]
  %v357 = vld [vmem:[#allocation2 + $0x1b1] sm:$0xff]
  %v358 = vld [vmem:[#allocation2 + $0x1b9] sm:$0xff]
  %v359 = vld [vmem:[#allocation2 + $0x1c9] sm:$0xff]
  %v360 = vld [vmem:[#allocation2 + $0x1d1] sm:$0xff]
  %v361 = vld [vmem:[#allocation2 + $0x1e1] sm:$0xff]
  %v362 = vld [vmem:[#allocation2 + $0x1e9] sm:$0xff]
  %v363 = vld [vmem:[#allocation2 + $0x1f9] sm:$0xff]
  %v364 = vld [vmem:[#allocation2 + $0x201] sm:$0xff]
  %v365 = vld [vmem:[#allocation2 + $0x211] sm:$0xff]
  %v366 = vld [vmem:[#allocation2 + $0x219] sm:$0xff]
  %v367 = vld [vmem:[#allocation2 + $0x229] sm:$0xff]
  %v368 = vld [vmem:[#allocation2 + $0x231] sm:$0xff]
  %v369 = vld [vmem:[#allocation2 + $0x241] sm:$0xff]
  %v370 = vld [vmem:[#allocation2 + $0x249] sm:$0xff]
  %v371 = vld [vmem:[#allocation2 + $0x259] sm:$0xff]
  %v372 = vld [vmem:[#allocation2 + $0x261] sm:$0xff]
  %v373 = vld [vmem:[#allocation2 + $0x271] sm:$0xff]
  %v374 = vld [vmem:[#allocation2 + $0x279] sm:$0xff]
  %v375 = vld [vmem:[#allocation2 + $0x289] sm:$0xff]
  %v376 = vld [vmem:[#allocation2 + $0x291] sm:$0xff]
  %v377 = vld [vmem:[#allocation2 + $0x2a1] sm:$0xff]
  %v378 = vld [vmem:[#allocation2 + $0x2a9] sm:$0xff]
  %v379 = vld [vmem:[#allocation2 + $0x2b9] sm:$0xff]
  %v380 = vld [vmem:[#allocation2 + $0x2c1] sm:$0xff]
  %v381 = vld [vmem:[#allocation2 + $0x2d1] sm:$0xff]
  %v382 = vld [vmem:[#allocation2 + $0x2d9] sm:$0xff]
  %v383 = vld [vmem:[#allocation2 + $0x2e9] sm:$0xff]
  %v384 = vld [vmem:[#allocation2 + $0x2f1] sm:$0xff]
  %v385 = vld [vmem:[#allocation2 + $0x301] sm:$0xff]
  %v386 = vld [vmem:[#allocation2 + $0x309] sm:$0xff]
  %v387 = vld [vmem:[#allocation2 + $0x319] sm:$0xff]
  %v388 = vld [vmem:[#allocation2 + $0x321] sm:$0xff]
  %s389 = scalar_lea.vmem %s1, 8
  %v390 = vld [vmem:[%s389] sm:$0xff]
  %v392 = vsel %vm20, %v325, 0
  %v395 = vsel %vm20, %v326, 0
  %v398 = vsel %vm20, %v327, 0
  %v401 = vsel %vm20, %v328, 0
  %v404 = vsel %vm20, %v329, 0
  %v407 = vsel %vm20, %v330, 0
  %v410 = vsel %vm20, %v331, 0
  %v413 = vsel %vm20, %v332, 0
  %v416 = vsel %vm20, %v333, 0
  %v419 = vsel %vm20, %v334, 0
  %v422 = vsel %vm20, %v335, 0
  %v425 = vsel %vm20, %v336, 0
  %v428 = vsel %vm20, %v337, 0
  %v431 = vsel %vm20, %v338, 0
  %v434 = vsel %vm20, %v339, 0
  %v437 = vsel %vm20, %v340, 0
  %v440 = vsel %vm20, %v341, 0
  %v443 = vsel %vm20, %v342, 0
  %v446 = vsel %vm20, %v343, 0
  %v449 = vsel %vm20, %v344, 0
  %v452 = vsel %vm20, %v345, 0
  %v455 = vsel %vm20, %v346, 0
  %v458 = vsel %vm20, %v347, 0
  %v461 = vsel %vm20, %v348, 0
  %v464 = vsel %vm20, %v349, 0
  %v467 = vsel %vm20, %v350, 0
  %v470 = vsel %vm20, %v351, 0
  %v473 = vsel %vm20, %v352, 0
  %v476 = vsel %vm20, %v353, 0
  %v479 = vsel %vm20, %v354, 0
  %v482 = vsel %vm20, %v355, 0
  %v485 = vsel %vm20, %v356, 0
  %v488 = vsel %vm20, %v357, 0
  %v491 = vsel %vm20, %v358, 0
  %v494 = vsel %vm20, %v359, 0
  %v497 = vsel %vm20, %v360, 0
  %v500 = vsel %vm20, %v361, 0
  %v503 = vsel %vm20, %v362, 0
  %v506 = vsel %vm20, %v363, 0
  %v509 = vsel %vm20, %v364, 0
  %v512 = vsel %vm20, %v365, 0
  %v515 = vsel %vm20, %v366, 0
  %v518 = vsel %vm20, %v367, 0
  %v521 = vsel %vm20, %v368, 0
  %v524 = vsel %vm20, %v369, 0
  %v527 = vsel %vm20, %v370, 0
  %v530 = vsel %vm20, %v371, 0
  %v533 = vsel %vm20, %v372, 0
  %v536 = vsel %vm20, %v373, 0
  %v539 = vsel %vm20, %v374, 0
  %v542 = vsel %vm20, %v375, 0
  %v545 = vsel %vm20, %v376, 0
  %v548 = vsel %vm20, %v377, 0
  %v551 = vsel %vm20, %v378, 0
  %v554 = vsel %vm20, %v379, 0
  %v557 = vsel %vm20, %v380, 0
  %v560 = vsel %vm20, %v381, 0
  %v563 = vsel %vm20, %v382, 0
  %v566 = vsel %vm20, %v383, 0
  %v569 = vsel %vm20, %v384, 0
  %v572 = vsel %vm20, %v385, 0
  %v575 = vsel %vm20, %v386, 0
  %v578 = vsel %vm20, %v387, 0
  %v581 = vsel %vm20, %v388, 0
  %583 = vmatprep.subr.mxu0 0.0
  %584 = vmatpush1.msra.mxu0 %v390
  %585 = vmatprep.subr.mxu0 0.0
  %586 = vmatpush1.msra.mxu0 0.0
  %587 = vmatprep.subr.mxu0 0.0
  %588 = vmatpush1.msra.mxu0 0.0
  %589 = vmatprep.subr.mxu0 0.0
  %590 = vmatpush1.msra.mxu0 0.0
  %591 = vmatprep.subr.mxu0 0.0
  %592 = vmatpush1.msra.mxu0 0.0
  %593 = vmatprep.subr.mxu0 0.0
  %594 = vmatpush1.msra.mxu0 0.0
  %595 = vmatprep.subr.mxu0 0.0
  %596 = vmatpush1.msra.mxu0 0.0
  %597 = vmatprep.subr.mxu0 0.0
  %598 = vmatpush1.msra.mxu0 0.0
  %599 = vmatprep.subr.mxu0 0.0
  %600 = vmatpush1.msra.mxu0 0.0
  %601 = vmatprep.subr.mxu0 0.0
  %602 = vmatpush1.msra.mxu0 0.0
  %603 = vmatprep.subr.mxu0 0.0
  %604 = vmatpush1.msra.mxu0 0.0
  %605 = vmatprep.subr.mxu0 0.0
  %606 = vmatpush1.msra.mxu0 0.0
  %607 = vmatprep.subr.mxu0 0.0
  %608 = vmatpush1.msra.mxu0 0.0
  %609 = vmatprep.subr.mxu0 0.0
  %610 = vmatpush1.msra.mxu0 0.0
  %611 = vmatprep.subr.mxu0 0.0
  %612 = vmatpush1.msra.mxu0 0.0
  %613 = vmatprep.subr.mxu0 0.0
  %614 = vmatpush1.msra.mxu0 0.0
  %615 = vmatprep.subr.mxu0 0.0
  %616 = vmatpush1.msra.mxu0 0.0
  %617 = vmatprep.subr.mxu0 0.0
  %618 = vmatpush1.msra.mxu0 0.0
  %619 = vmatprep.subr.mxu0 0.0
  %620 = vmatpush1.msra.mxu0 0.0
  %621 = vmatprep.subr.mxu0 0.0
  %622 = vmatpush1.msra.mxu0 0.0
  %623 = vmatprep.subr.mxu0 0.0
  %624 = vmatpush1.msra.mxu0 0.0
  %625 = vmatprep.subr.mxu0 0.0
  %626 = vmatpush1.msra.mxu0 0.0
  %627 = vmatprep.subr.mxu0 0.0
  %628 = vmatpush1.msra.mxu0 0.0
  %629 = vmatprep.subr.mxu0 0.0
  %630 = vmatpush1.msra.mxu0 0.0
  %631 = vmatprep.subr.mxu0 0.0
  %632 = vmatpush1.msra.mxu0 0.0
  %633 = vmatprep.subr.mxu0 0.0
  %634 = vmatpush1.msra.mxu0 0.0
  %635 = vmatprep.subr.mxu0 0.0
  %636 = vmatpush1.msra.mxu0 0.0
  %637 = vmatprep.subr.mxu0 0.0
  %638 = vmatpush1.msra.mxu0 0.0
  %639 = vmatprep.subr.mxu0 0.0
  %640 = vmatpush1.msra.mxu0 0.0
  %641 = vmatprep.subr.mxu0 0.0
  %642 = vmatpush1.msra.mxu0 0.0
  %643 = vmatprep.subr.mxu0 0.0
  %644 = vmatpush1.msra.mxu0 0.0
  %645 = vmatprep.subr.mxu0 0.0
  %646 = vmatpush1.msra.mxu0 0.0
  %647 = vmatprep.mubr.f32.mxu0 0.0
  %648 = vmatmul.mubr.f32.gmra.mrb[0].mxu0 %v392
  %v649 = vpop.f32.mrb[0].mxu0
  %v650 = vadd.f32 0.0, %v649
  %v651 = vpop.f32.mrb[0].mxu0
  %652 = vmatprep.mubr.f32.mxu0 0.0
  %653 = vmatmul.mubr.f32.gmra.mrb[0].mxu0 %v395
  %v654 = vpop.f32.mrb[0].mxu0
  %v655 = vadd.f32 0.0, %v654
  %v656 = vpop.f32.mrb[0].mxu0
  %657 = vmatprep.mubr.f32.mxu0 0.0
  %658 = vmatmul.mubr.f32.gmra.mrb[0].mxu0 %v398
  %v659 = vpop.f32.mrb[0].mxu0
  %v660 = vadd.f32 0.0, %v659
  %v661 = vpop.f32.mrb[0].mxu0
  %662 = vmatprep.mubr.f32.mxu0 0.0
  %663 = vmatmul.mubr.f32.gmra.mrb[0].mxu0 %v401
  %v664 = vpop.f32.mrb[0].mxu0
  %v665 = vadd.f32 0.0, %v664
  %v666 = vpop.f32.mrb[0].mxu0
  %667 = vmatprep.mubr.f32.mxu0 0.0
  %668 = vmatmul.mubr.f32.gmra.mrb[0].mxu0 %v404
  %v669 = vpop.f32.mrb[0].mxu0
  %v670 = vadd.f32 0.0, %v669
  %v671 = vpop.f32.mrb[0].mxu0
  %672 = vmatprep.mubr.f32.mxu0 0.0
  %673 = vmatmul.mubr.f32.gmra.mrb[0].mxu0 %v407
  %v674 = vpop.f32.mrb[0].mxu0
  %v675 = vadd.f32 0.0, %v674
  %v676 = vpop.f32.mrb[0].mxu0
  %677 = vmatprep.mubr.f32.mxu0 0.0
  %678 = vmatmul.mubr.f32.gmra.mrb[0].mxu0 %v410
  %v679 = vpop.f32.mrb[0].mxu0
  %v680 = vadd.f32 0.0, %v679
  %v681 = vpop.f32.mrb[0].mxu0
  %682 = vmatprep.mubr.f32.mxu0 0.0
  %683 = vmatmul.mubr.f32.gmra.mrb[0].mxu0 %v413
  %v684 = vpop.f32.mrb[0].mxu0
  %v685 = vadd.f32 0.0, %v684
  %v686 = vpop.f32.mrb[0].mxu0
  %687 = vmatprep.mubr.f32.mxu0 0.0
  %688 = vmatmul.mubr.f32.gmra.mrb[0].mxu0 %v416
  %v689 = vpop.f32.mrb[0].mxu0
  %v690 = vadd.f32 0.0, %v689
  %v691 = vpop.f32.mrb[0].mxu0
  %692 = vmatprep.mubr.f32.mxu0 0.0
  %693 = vmatmul.mubr.f32.gmra.mrb[0].mxu0 %v419
  %v694 = vpop.f32.mrb[0].mxu0
  %v695 = vadd.f32 0.0, %v694
  %v696 = vpop.f32.mrb[0].mxu0
  %697 = vmatprep.mubr.f32.mxu0 0.0
  %698 = vmatmul.mubr.f32.gmra.mrb[0].mxu0 %v422
  %v699 = vpop.f32.mrb[0].mxu0
  %v700 = vadd.f32 0.0, %v699
  %v701 = vpop.f32.mrb[0].mxu0
  %702 = vmatprep.mubr.f32.mxu0 0.0
  %703 = vmatmul.mubr.f32.gmra.mrb[0].mxu0 %v425
  %v704 = vpop.f32.mrb[0].mxu0
  %v705 = vadd.f32 0.0, %v704
  %v706 = vpop.f32.mrb[0].mxu0
  %707 = vmatprep.mubr.f32.mxu0 0.0
  %708 = vmatmul.mubr.f32.gmra.mrb[0].mxu0 %v428
  %v709 = vpop.f32.mrb[0].mxu0
  %v710 = vadd.f32 0.0, %v709
  %v711 = vpop.f32.mrb[0].mxu0
  %712 = vmatprep.mubr.f32.mxu0 0.0
  %713 = vmatmul.mubr.f32.gmra.mrb[0].mxu0 %v431
  %v714 = vpop.f32.mrb[0].mxu0
  %v715 = vadd.f32 0.0, %v714
  %v716 = vpop.f32.mrb[0].mxu0
  %717 = vmatprep.mubr.f32.mxu0 0.0
  %718 = vmatmul.mubr.f32.gmra.mrb[0].mxu0 %v434
  %v719 = vpop.f32.mrb[0].mxu0
  %v720 = vadd.f32 0.0, %v719
  %v721 = vpop.f32.mrb[0].mxu0
  %722 = vmatprep.mubr.f32.mxu0 0.0
  %723 = vmatmul.mubr.f32.gmra.mrb[0].mxu0 %v437
  %v724 = vpop.f32.mrb[0].mxu0
  %v725 = vadd.f32 0.0, %v724
  %v726 = vpop.f32.mrb[0].mxu0
  %727 = vmatprep.mubr.f32.mxu0 0.0
  %728 = vmatmul.mubr.f32.gmra.mrb[0].mxu0 %v440
  %v729 = vpop.f32.mrb[0].mxu0
  %v730 = vadd.f32 0.0, %v729
  %v731 = vpop.f32.mrb[0].mxu0
  %732 = vmatprep.mubr.f32.mxu0 0.0
  %733 = vmatmul.mubr.f32.gmra.mrb[0].mxu0 %v443
  %v734 = vpop.f32.mrb[0].mxu0
  %v735 = vadd.f32 0.0, %v734
  %v736 = vpop.f32.mrb[0].mxu0
  %737 = vmatprep.mubr.f32.mxu0 0.0
  %738 = vmatmul.mubr.f32.gmra.mrb[0].mxu0 %v446
  %v739 = vpop.f32.mrb[0].mxu0
  %v740 = vadd.f32 0.0, %v739
  %v741 = vpop.f32.mrb[0].mxu0
  %742 = vmatprep.mubr.f32.mxu0 0.0
  %743 = vmatmul.mubr.f32.gmra.mrb[0].mxu0 %v449
  %v744 = vpop.f32.mrb[0].mxu0
  %v745 = vadd.f32 0.0, %v744
  %v746 = vpop.f32.mrb[0].mxu0
  %747 = vmatprep.mubr.f32.mxu0 0.0
  %748 = vmatmul.mubr.f32.gmra.mrb[0].mxu0 %v452
  %v749 = vpop.f32.mrb[0].mxu0
  %v750 = vadd.f32 0.0, %v749
  %v751 = vpop.f32.mrb[0].mxu0
  %752 = vmatprep.mubr.f32.mxu0 0.0
  %753 = vmatmul.mubr.f32.gmra.mrb[0].mxu0 %v455
  %v754 = vpop.f32.mrb[0].mxu0
  %v755 = vadd.f32 0.0, %v754
  %v756 = vpop.f32.mrb[0].mxu0
  %757 = vmatprep.mubr.f32.mxu0 0.0
  %758 = vmatmul.mubr.f32.gmra.mrb[0].mxu0 %v458
  %v759 = vpop.f32.mrb[0].mxu0
  %v760 = vadd.f32 0.0, %v759
  %v761 = vpop.f32.mrb[0].mxu0
  %762 = vmatprep.mubr.f32.mxu0 0.0
  %763 = vmatmul.mubr.f32.gmra.mrb[0].mxu0 %v461
  %v764 = vpop.f32.mrb[0].mxu0
  %v765 = vadd.f32 0.0, %v764
  %v766 = vpop.f32.mrb[0].mxu0
  %767 = vmatprep.mubr.f32.mxu0 0.0
  %768 = vmatmul.mubr.f32.gmra.mrb[0].mxu0 %v464
  %v769 = vpop.f32.mrb[0].mxu0
  %v770 = vadd.f32 0.0, %v769
  %v771 = vpop.f32.mrb[0].mxu0
  %772 = vmatprep.mubr.f32.mxu0 0.0
  %773 = vmatmul.mubr.f32.gmra.mrb[0].mxu0 %v467
  %v774 = vpop.f32.mrb[0].mxu0
  %v775 = vadd.f32 0.0, %v774
  %v776 = vpop.f32.mrb[0].mxu0
  %777 = vmatprep.mubr.f32.mxu0 0.0
  %778 = vmatmul.mubr.f32.gmra.mrb[0].mxu0 %v470
  %v779 = vpop.f32.mrb[0].mxu0
  %v780 = vadd.f32 0.0, %v779
  %v781 = vpop.f32.mrb[0].mxu0
  %782 = vmatprep.mubr.f32.mxu0 0.0
  %783 = vmatmul.mubr.f32.gmra.mrb[0].mxu0 %v473
  %v784 = vpop.f32.mrb[0].mxu0
  %v785 = vadd.f32 0.0, %v784
  %v786 = vpop.f32.mrb[0].mxu0
  %787 = vmatprep.mubr.f32.mxu0 0.0
  %788 = vmatmul.mubr.f32.gmra.mrb[0].mxu0 %v476
  %v789 = vpop.f32.mrb[0].mxu0
  %v790 = vadd.f32 0.0, %v789
  %v791 = vpop.f32.mrb[0].mxu0
  %792 = vmatprep.mubr.f32.mxu0 0.0
  %793 = vmatmul.mubr.f32.gmra.mrb[0].mxu0 %v479
  %v794 = vpop.f32.mrb[0].mxu0
  %v795 = vadd.f32 0.0, %v794
  %v796 = vpop.f32.mrb[0].mxu0
  %797 = vmatprep.mubr.f32.mxu0 0.0
  %798 = vmatmul.mubr.f32.gmra.mrb[0].mxu0 %v482
  %v799 = vpop.f32.mrb[0].mxu0
  %v800 = vadd.f32 0.0, %v799
  %v801 = vpop.f32.mrb[0].mxu0
  %802 = vmatprep.mubr.f32.mxu0 0.0
  %803 = vmatmul.mubr.f32.gmra.mrb[0].mxu0 %v485
  %v804 = vpop.f32.mrb[0].mxu0
  %v805 = vadd.f32 0.0, %v804
  %v806 = vpop.f32.mrb[0].mxu0
  %807 = vmatprep.mubr.f32.mxu0 0.0
  %808 = vmatmul.mubr.f32.gmra.mrb[0].mxu0 %v488
  %v809 = vpop.f32.mrb[0].mxu0
  %v810 = vadd.f32 0.0, %v809
  %v811 = vpop.f32.mrb[0].mxu0
  %812 = vmatprep.mubr.f32.mxu0 0.0
  %813 = vmatmul.mubr.f32.gmra.mrb[0].mxu0 %v491
  %v814 = vpop.f32.mrb[0].mxu0
  %v815 = vadd.f32 0.0, %v814
  %v816 = vpop.f32.mrb[0].mxu0
  %817 = vmatprep.mubr.f32.mxu0 0.0
  %818 = vmatmul.mubr.f32.gmra.mrb[0].mxu0 %v494
  %v819 = vpop.f32.mrb[0].mxu0
  %v820 = vadd.f32 0.0, %v819
  %v821 = vpop.f32.mrb[0].mxu0
  %822 = vmatprep.mubr.f32.mxu0 0.0
  %823 = vmatmul.mubr.f32.gmra.mrb[0].mxu0 %v497
  %v824 = vpop.f32.mrb[0].mxu0
  %v825 = vadd.f32 0.0, %v824
  %v826 = vpop.f32.mrb[0].mxu0
  %827 = vmatprep.mubr.f32.mxu0 0.0
  %828 = vmatmul.mubr.f32.gmra.mrb[0].mxu0 %v500
  %v829 = vpop.f32.mrb[0].mxu0
  %v830 = vadd.f32 0.0, %v829
  %v831 = vpop.f32.mrb[0].mxu0
  %832 = vmatprep.mubr.f32.mxu0 0.0
  %833 = vmatmul.mubr.f32.gmra.mrb[0].mxu0 %v503
  %v834 = vpop.f32.mrb[0].mxu0
  %v835 = vadd.f32 0.0, %v834
  %v836 = vpop.f32.mrb[0].mxu0
  %837 = vmatprep.mubr.f32.mxu0 0.0
  %838 = vmatmul.mubr.f32.gmra.mrb[0].mxu0 %v506
  %v839 = vpop.f32.mrb[0].mxu0
  %v840 = vadd.f32 0.0, %v839
  %v841 = vpop.f32.mrb[0].mxu0
  %842 = vmatprep.mubr.f32.mxu0 0.0
  %843 = vmatmul.mubr.f32.gmra.mrb[0].mxu0 %v509
  %v844 = vpop.f32.mrb[0].mxu0
  %v845 = vadd.f32 0.0, %v844
  %v846 = vpop.f32.mrb[0].mxu0
  %847 = vmatprep.mubr.f32.mxu0 0.0
  %848 = vmatmul.mubr.f32.gmra.mrb[0].mxu0 %v512
  %v849 = vpop.f32.mrb[0].mxu0
  %v850 = vadd.f32 0.0, %v849
  %v851 = vpop.f32.mrb[0].mxu0
  %852 = vmatprep.mubr.f32.mxu0 0.0
  %853 = vmatmul.mubr.f32.gmra.mrb[0].mxu0 %v515
  %v854 = vpop.f32.mrb[0].mxu0
  %v855 = vadd.f32 0.0, %v854
  %v856 = vpop.f32.mrb[0].mxu0
  %857 = vmatprep.mubr.f32.mxu0 0.0
  %858 = vmatmul.mubr.f32.gmra.mrb[0].mxu0 %v518
  %v859 = vpop.f32.mrb[0].mxu0
  %v860 = vadd.f32 0.0, %v859
  %v861 = vpop.f32.mrb[0].mxu0
  %862 = vmatprep.mubr.f32.mxu0 0.0
  %863 = vmatmul.mubr.f32.gmra.mrb[0].mxu0 %v521
  %v864 = vpop.f32.mrb[0].mxu0
  %v865 = vadd.f32 0.0, %v864
  %v866 = vpop.f32.mrb[0].mxu0
  %867 = vmatprep.mubr.f32.mxu0 0.0
  %868 = vmatmul.mubr.f32.gmra.mrb[0].mxu0 %v524
  %v869 = vpop.f32.mrb[0].mxu0
  %v870 = vadd.f32 0.0, %v869
  %v871 = vpop.f32.mrb[0].mxu0
  %872 = vmatprep.mubr.f32.mxu0 0.0
  %873 = vmatmul.mubr.f32.gmra.mrb[0].mxu0 %v527
  %v874 = vpop.f32.mrb[0].mxu0
  %v875 = vadd.f32 0.0, %v874
  %v876 = vpop.f32.mrb[0].mxu0
  %877 = vmatprep.mubr.f32.mxu0 0.0
  %878 = vmatmul.mubr.f32.gmra.mrb[0].mxu0 %v530
  %v879 = vpop.f32.mrb[0].mxu0
  %v880 = vadd.f32 0.0, %v879
  %v881 = vpop.f32.mrb[0].mxu0
  %882 = vmatprep.mubr.f32.mxu0 0.0
  %883 = vmatmul.mubr.f32.gmra.mrb[0].mxu0 %v533
  %v884 = vpop.f32.mrb[0].mxu0
  %v885 = vadd.f32 0.0, %v884
  %v886 = vpop.f32.mrb[0].mxu0
  %887 = vmatprep.mubr.f32.mxu0 0.0
  %888 = vmatmul.mubr.f32.gmra.mrb[0].mxu0 %v536
  %v889 = vpop.f32.mrb[0].mxu0
  %v890 = vadd.f32 0.0, %v889
  %v891 = vpop.f32.mrb[0].mxu0
  %892 = vmatprep.mubr.f32.mxu0 0.0
  %893 = vmatmul.mubr.f32.gmra.mrb[0].mxu0 %v539
  %v894 = vpop.f32.mrb[0].mxu0
  %v895 = vadd.f32 0.0, %v894
  %v896 = vpop.f32.mrb[0].mxu0
  %897 = vmatprep.mubr.f32.mxu0 0.0
  %898 = vmatmul.mubr.f32.gmra.mrb[0].mxu0 %v542
  %v899 = vpop.f32.mrb[0].mxu0
  %v900 = vadd.f32 0.0, %v899
  %v901 = vpop.f32.mrb[0].mxu0
  %902 = vmatprep.mubr.f32.mxu0 0.0
  %903 = vmatmul.mubr.f32.gmra.mrb[0].mxu0 %v545
  %v904 = vpop.f32.mrb[0].mxu0
  %v905 = vadd.f32 0.0, %v904
  %v906 = vpop.f32.mrb[0].mxu0
  %907 = vmatprep.mubr.f32.mxu0 0.0
  %908 = vmatmul.mubr.f32.gmra.mrb[0].mxu0 %v548
  %v909 = vpop.f32.mrb[0].mxu0
  %v910 = vadd.f32 0.0, %v909
  %v911 = vpop.f32.mrb[0].mxu0
  %912 = vmatprep.mubr.f32.mxu0 0.0
  %913 = vmatmul.mubr.f32.gmra.mrb[0].mxu0 %v551
  %v914 = vpop.f32.mrb[0].mxu0
  %v915 = vadd.f32 0.0, %v914
  %v916 = vpop.f32.mrb[0].mxu0
  %917 = vmatprep.mubr.f32.mxu0 0.0
  %918 = vmatmul.mubr.f32.gmra.mrb[0].mxu0 %v554
  %v919 = vpop.f32.mrb[0].mxu0
  %v920 = vadd.f32 0.0, %v919
  %v921 = vpop.f32.mrb[0].mxu0
  %922 = vmatprep.mubr.f32.mxu0 0.0
  %923 = vmatmul.mubr.f32.gmra.mrb[0].mxu0 %v557
  %v924 = vpop.f32.mrb[0].mxu0
  %v925 = vadd.f32 0.0, %v924
  %v926 = vpop.f32.mrb[0].mxu0
  %927 = vmatprep.mubr.f32.mxu0 0.0
  %928 = vmatmul.mubr.f32.gmra.mrb[0].mxu0 %v560
  %v929 = vpop.f32.mrb[0].mxu0
  %v930 = vadd.f32 0.0, %v929
  %v931 = vpop.f32.mrb[0].mxu0
  %932 = vmatprep.mubr.f32.mxu0 0.0
  %933 = vmatmul.mubr.f32.gmra.mrb[0].mxu0 %v563
  %v934 = vpop.f32.mrb[0].mxu0
  %v935 = vadd.f32 0.0, %v934
  %v936 = vpop.f32.mrb[0].mxu0
  %937 = vmatprep.mubr.f32.mxu0 0.0
  %938 = vmatmul.mubr.f32.gmra.mrb[0].mxu0 %v566
  %v939 = vpop.f32.mrb[0].mxu0
  %v940 = vadd.f32 0.0, %v939
  %v941 = vpop.f32.mrb[0].mxu0
  %942 = vmatprep.mubr.f32.mxu0 0.0
  %943 = vmatmul.mubr.f32.gmra.mrb[0].mxu0 %v569
  %v944 = vpop.f32.mrb[0].mxu0
  %v945 = vadd.f32 0.0, %v944
  %v946 = vpop.f32.mrb[0].mxu0
  %947 = vmatprep.mubr.f32.mxu0 0.0
  %948 = vmatmul.mubr.f32.gmra.mrb[0].mxu0 %v572
  %v949 = vpop.f32.mrb[0].mxu0
  %v950 = vadd.f32 0.0, %v949
  %v951 = vpop.f32.mrb[0].mxu0
  %952 = vmatprep.mubr.f32.mxu0 0.0
  %953 = vmatmul.mubr.f32.gmra.mrb[0].mxu0 %v575
  %v954 = vpop.f32.mrb[0].mxu0
  %v955 = vadd.f32 0.0, %v954
  %v956 = vpop.f32.mrb[0].mxu0
  %957 = vmatprep.mubr.f32.mxu0 0.0
  %958 = vmatmul.mubr.f32.gmra.mrb[0].mxu0 %v578
  %v959 = vpop.f32.mrb[0].mxu0
  %v960 = vadd.f32 0.0, %v959
  %v961 = vpop.f32.mrb[0].mxu0
  %962 = vmatprep.mubr.f32.mxu0 0.0
  %963 = vmatmul.mubr.f32.gmra.mrb[0].mxu0 %v581
  %v964 = vpop.f32.mrb[0].mxu0
  %v965 = vadd.f32 0.0, %v964
  %v966 = vpop.f32.mrb[0].mxu0
  %967 = vdwg.mxu0
  %v969 = vsel %vm20, %v260, 0
  %v972 = vsel %vm20, %v261, 0
  %v975 = vsel %vm20, %v262, 0
  %v978 = vsel %vm20, %v263, 0
  %v981 = vsel %vm20, %v264, 0
  %v984 = vsel %vm20, %v265, 0
  %v987 = vsel %vm20, %v266, 0
  %v990 = vsel %vm20, %v267, 0
  %v993 = vsel %vm20, %v268, 0
  %v996 = vsel %vm20, %v269, 0
  %v999 = vsel %vm20, %v270, 0
  %v1002 = vsel %vm20, %v271, 0
  %v1005 = vsel %vm20, %v272, 0
  %v1008 = vsel %vm20, %v273, 0
  %v1011 = vsel %vm20, %v274, 0
  %v1014 = vsel %vm20, %v275, 0
  %v1017 = vsel %vm20, %v276, 0
  %v1020 = vsel %vm20, %v277, 0
  %v1023 = vsel %vm20, %v278, 0
  %v1026 = vsel %vm20, %v279, 0
  %v1029 = vsel %vm20, %v280, 0
  %v1032 = vsel %vm20, %v281, 0
  %v1035 = vsel %vm20, %v282, 0
  %v1038 = vsel %vm20, %v283, 0
  %v1041 = vsel %vm20, %v284, 0
  %v1044 = vsel %vm20, %v285, 0
  %v1047 = vsel %vm20, %v286, 0
  %v1050 = vsel %vm20, %v287, 0
  %v1053 = vsel %vm20, %v288, 0
  %v1056 = vsel %vm20, %v289, 0
  %v1059 = vsel %vm20, %v290, 0
  %v1062 = vsel %vm20, %v291, 0
  %v1065 = vsel %vm20, %v292, 0
  %v1068 = vsel %vm20, %v293, 0
  %v1071 = vsel %vm20, %v294, 0
  %v1074 = vsel %vm20, %v295, 0
  %v1077 = vsel %vm20, %v296, 0
  %v1080 = vsel %vm20, %v297, 0
  %v1083 = vsel %vm20, %v298, 0
  %v1086 = vsel %vm20, %v299, 0
  %v1089 = vsel %vm20, %v300, 0
  %v1092 = vsel %vm20, %v301, 0
  %v1095 = vsel %vm20, %v302, 0
  %v1098 = vsel %vm20, %v303, 0
  %v1101 = vsel %vm20, %v304, 0
  %v1104 = vsel %vm20, %v305, 0
  %v1107 = vsel %vm20, %v306, 0
  %v1110 = vsel %vm20, %v307, 0
  %v1113 = vsel %vm20, %v308, 0
  %v1116 = vsel %vm20, %v309, 0
  %v1119 = vsel %vm20, %v310, 0
  %v1122 = vsel %vm20, %v311, 0
  %v1125 = vsel %vm20, %v312, 0
  %v1128 = vsel %vm20, %v313, 0
  %v1131 = vsel %vm20, %v314, 0
  %v1134 = vsel %vm20, %v315, 0
  %v1137 = vsel %vm20, %v316, 0
  %v1140 = vsel %vm20, %v317, 0
  %v1143 = vsel %vm20, %v318, 0
  %v1146 = vsel %vm20, %v319, 0
  %v1149 = vsel %vm20, %v320, 0
  %v1152 = vsel %vm20, %v321, 0
  %v1155 = vsel %vm20, %v322, 0
  %v1158 = vsel %vm20, %v323, 0
  %1160 = vmatprep.subr.mxu0 0.0
  %1161 = vmatpush1.msra.mxu0 %v324
  %1162 = vmatprep.subr.mxu0 0.0
  %1163 = vmatpush1.msra.mxu0 0.0
  %1164 = vmatprep.subr.mxu0 0.0
  %1165 = vmatpush1.msra.mxu0 0.0
  %1166 = vmatprep.subr.mxu0 0.0
  %1167 = vmatpush1.msra.mxu0 0.0
  %1168 = vmatprep.subr.mxu0 0.0
  %1169 = vmatpush1.msra.mxu0 0.0
  %1170 = vmatprep.subr.mxu0 0.0
  %1171 = vmatpush1.msra.mxu0 0.0
  %1172 = vmatprep.subr.mxu0 0.0
  %1173 = vmatpush1.msra.mxu0 0.0
  %1174 = vmatprep.subr.mxu0 0.0
  %1175 = vmatpush1.msra.mxu0 0.0
  %1176 = vmatprep.subr.mxu0 0.0
  %1177 = vmatpush1.msra.mxu0 0.0
  %1178 = vmatprep.subr.mxu0 0.0
  %1179 = vmatpush1.msra.mxu0 0.0
  %1180 = vmatprep.subr.mxu0 0.0
  %1181 = vmatpush1.msra.mxu0 0.0
  %1182 = vmatprep.subr.mxu0 0.0
  %1183 = vmatpush1.msra.mxu0 0.0
  %1184 = vmatprep.subr.mxu0 0.0
  %1185 = vmatpush1.msra.mxu0 0.0
  %1186 = vmatprep.subr.mxu0 0.0
  %1187 = vmatpush1.msra.mxu0 0.0
  %1188 = vmatprep.subr.mxu0 0.0
  %1189 = vmatpush1.msra.mxu0 0.0
  %1190 = vmatprep.subr.mxu0 0.0
  %1191 = vmatpush1.msra.mxu0 0.0
  %1192 = vmatprep.subr.mxu0 0.0
  %1193 = vmatpush1.msra.mxu0 0.0
  %1194 = vmatprep.subr.mxu0 0.0
  %1195 = vmatpush1.msra.mxu0 0.0
  %1196 = vmatprep.subr.mxu0 0.0
  %1197 = vmatpush1.msra.mxu0 0.0
  %1198 = vmatprep.subr.mxu0 0.0
  %1199 = vmatpush1.msra.mxu0 0.0
  %1200 = vmatprep.subr.mxu0 0.0
  %1201 = vmatpush1.msra.mxu0 0.0
  %1202 = vmatprep.subr.mxu0 0.0
  %1203 = vmatpush1.msra.mxu0 0.0
  %1204 = vmatprep.subr.mxu0 0.0
  %1205 = vmatpush1.msra.mxu0 0.0
  %1206 = vmatprep.subr.mxu0 0.0
  %1207 = vmatpush1.msra.mxu0 0.0
  %1208 = vmatprep.subr.mxu0 0.0
  %1209 = vmatpush1.msra.mxu0 0.0
  %1210 = vmatprep.subr.mxu0 0.0
  %1211 = vmatpush1.msra.mxu0 0.0
  %1212 = vmatprep.subr.mxu0 0.0
  %1213 = vmatpush1.msra.mxu0 0.0
  %1214 = vmatprep.subr.mxu0 0.0
  %1215 = vmatpush1.msra.mxu0 0.0
  %1216 = vmatprep.subr.mxu0 0.0
  %1217 = vmatpush1.msra.mxu0 0.0
  %1218 = vmatprep.subr.mxu0 0.0
  %1219 = vmatpush1.msra.mxu0 0.0
  %1220 = vmatprep.subr.mxu0 0.0
  %1221 = vmatpush1.msra.mxu0 0.0
  %1222 = vmatprep.subr.mxu0 0.0
  %1223 = vmatpush1.msra.mxu0 0.0
  %1224 = vmatprep.mubr.f32.mxu0 0.0
  %1225 = vmatmul.mubr.f32.gmra.mrb[0].mxu0 %v969
  %v1226 = vpop.f32.mrb[0].mxu0
  %v1227 = vadd.f32 %v650, %v1226
  %v1228 = vpop.f32.mrb[0].mxu0
  %1229 = vmatprep.mubr.f32.mxu0 0.0
  %1230 = vmatmul.mubr.f32.gmra.mrb[0].mxu0 %v972
  %v1231 = vpop.f32.mrb[0].mxu0
  %v1232 = vadd.f32 %v655, %v1231
  %v1233 = vpop.f32.mrb[0].mxu0
  %1234 = vmatprep.mubr.f32.mxu0 0.0
  %1235 = vmatmul.mubr.f32.gmra.mrb[0].mxu0 %v975
  %v1236 = vpop.f32.mrb[0].mxu0
  %v1237 = vadd.f32 %v660, %v1236
  %v1238 = vpop.f32.mrb[0].mxu0
  %1239 = vmatprep.mubr.f32.mxu0 0.0
  %1240 = vmatmul.mubr.f32.gmra.mrb[0].mxu0 %v978
  %v1241 = vpop.f32.mrb[0].mxu0
  %v1242 = vadd.f32 %v665, %v1241
  %v1243 = vpop.f32.mrb[0].mxu0
  %1244 = vmatprep.mubr.f32.mxu0 0.0
  %1245 = vmatmul.mubr.f32.gmra.mrb[0].mxu0 %v981
  %v1246 = vpop.f32.mrb[0].mxu0
  %v1247 = vadd.f32 %v670, %v1246
  %v1248 = vpop.f32.mrb[0].mxu0
  %1249 = vmatprep.mubr.f32.mxu0 0.0
  %1250 = vmatmul.mubr.f32.gmra.mrb[0].mxu0 %v984
  %v1251 = vpop.f32.mrb[0].mxu0
  %v1252 = vadd.f32 %v675, %v1251
  %v1253 = vpop.f32.mrb[0].mxu0
  %1254 = vmatprep.mubr.f32.mxu0 0.0
  %1255 = vmatmul.mubr.f32.gmra.mrb[0].mxu0 %v987
  %v1256 = vpop.f32.mrb[0].mxu0
  %v1257 = vadd.f32 %v680, %v1256
  %v1258 = vpop.f32.mrb[0].mxu0
  %1259 = vmatprep.mubr.f32.mxu0 0.0
  %1260 = vmatmul.mubr.f32.gmra.mrb[0].mxu0 %v990
  %v1261 = vpop.f32.mrb[0].mxu0
  %v1262 = vadd.f32 %v685, %v1261
  %v1263 = vpop.f32.mrb[0].mxu0
  %1264 = vmatprep.mubr.f32.mxu0 0.0
  %1265 = vmatmul.mubr.f32.gmra.mrb[0].mxu0 %v993
  %v1266 = vpop.f32.mrb[0].mxu0
  %v1267 = vadd.f32 %v690, %v1266
  %v1268 = vpop.f32.mrb[0].mxu0
  %1269 = vmatprep.mubr.f32.mxu0 0.0
  %1270 = vmatmul.mubr.f32.gmra.mrb[0].mxu0 %v996
  %v1271 = vpop.f32.mrb[0].mxu0
  %v1272 = vadd.f32 %v695, %v1271
  %v1273 = vpop.f32.mrb[0].mxu0
  %1274 = vmatprep.mubr.f32.mxu0 0.0
  %1275 = vmatmul.mubr.f32.gmra.mrb[0].mxu0 %v999
  %v1276 = vpop.f32.mrb[0].mxu0
  %v1277 = vadd.f32 %v700, %v1276
  %v1278 = vpop.f32.mrb[0].mxu0
  %1279 = vmatprep.mubr.f32.mxu0 0.0
  %1280 = vmatmul.mubr.f32.gmra.mrb[0].mxu0 %v1002
  %v1281 = vpop.f32.mrb[0].mxu0
  %v1282 = vadd.f32 %v705, %v1281
  %v1283 = vpop.f32.mrb[0].mxu0
  %1284 = vmatprep.mubr.f32.mxu0 0.0
  %1285 = vmatmul.mubr.f32.gmra.mrb[0].mxu0 %v1005
  %v1286 = vpop.f32.mrb[0].mxu0
  %v1287 = vadd.f32 %v710, %v1286
  %v1288 = vpop.f32.mrb[0].mxu0
  %1289 = vmatprep.mubr.f32.mxu0 0.0
  %1290 = vmatmul.mubr.f32.gmra.mrb[0].mxu0 %v1008
  %v1291 = vpop.f32.mrb[0].mxu0
  %v1292 = vadd.f32 %v715, %v1291
  %v1293 = vpop.f32.mrb[0].mxu0
  %1294 = vmatprep.mubr.f32.mxu0 0.0
  %1295 = vmatmul.mubr.f32.gmra.mrb[0].mxu0 %v1011
  %v1296 = vpop.f32.mrb[0].mxu0
  %v1297 = vadd.f32 %v720, %v1296
  %v1298 = vpop.f32.mrb[0].mxu0
  %1299 = vmatprep.mubr.f32.mxu0 0.0
  %1300 = vmatmul.mubr.f32.gmra.mrb[0].mxu0 %v1014
  %v1301 = vpop.f32.mrb[0].mxu0
  %v1302 = vadd.f32 %v725, %v1301
  %v1303 = vpop.f32.mrb[0].mxu0
  %1304 = vmatprep.mubr.f32.mxu0 0.0
  %1305 = vmatmul.mubr.f32.gmra.mrb[0].mxu0 %v1017
  %v1306 = vpop.f32.mrb[0].mxu0
  %v1307 = vadd.f32 %v730, %v1306
  %v1308 = vpop.f32.mrb[0].mxu0
  %1309 = vmatprep.mubr.f32.mxu0 0.0
  %1310 = vmatmul.mubr.f32.gmra.mrb[0].mxu0 %v1020
  %v1311 = vpop.f32.mrb[0].mxu0
  %v1312 = vadd.f32 %v735, %v1311
  %v1313 = vpop.f32.mrb[0].mxu0
  %1314 = vmatprep.mubr.f32.mxu0 0.0
  %1315 = vmatmul.mubr.f32.gmra.mrb[0].mxu0 %v1023
  %v1316 = vpop.f32.mrb[0].mxu0
  %v1317 = vadd.f32 %v740, %v1316
  %v1318 = vpop.f32.mrb[0].mxu0
  %1319 = vmatprep.mubr.f32.mxu0 0.0
  %1320 = vmatmul.mubr.f32.gmra.mrb[0].mxu0 %v1026
  %v1321 = vpop.f32.mrb[0].mxu0
  %v1322 = vadd.f32 %v745, %v1321
  %v1323 = vpop.f32.mrb[0].mxu0
  %1324 = vmatprep.mubr.f32.mxu0 0.0
  %1325 = vmatmul.mubr.f32.gmra.mrb[0].mxu0 %v1029
  %v1326 = vpop.f32.mrb[0].mxu0
  %v1327 = vadd.f32 %v750, %v1326
  %v1328 = vpop.f32.mrb[0].mxu0
  %1329 = vmatprep.mubr.f32.mxu0 0.0
  %1330 = vmatmul.mubr.f32.gmra.mrb[0].mxu0 %v1032
  %v1331 = vpop.f32.mrb[0].mxu0
  %v1332 = vadd.f32 %v755, %v1331
  %v1333 = vpop.f32.mrb[0].mxu0
  %1334 = vmatprep.mubr.f32.mxu0 0.0
  %1335 = vmatmul.mubr.f32.gmra.mrb[0].mxu0 %v1035
  %v1336 = vpop.f32.mrb[0].mxu0
  %v1337 = vadd.f32 %v760, %v1336
  %v1338 = vpop.f32.mrb[0].mxu0
  %1339 = vmatprep.mubr.f32.mxu0 0.0
  %1340 = vmatmul.mubr.f32.gmra.mrb[0].mxu0 %v1038
  %v1341 = vpop.f32.mrb[0].mxu0
  %v1342 = vadd.f32 %v765, %v1341
  %v1343 = vpop.f32.mrb[0].mxu0
  %1344 = vmatprep.mubr.f32.mxu0 0.0
  %1345 = vmatmul.mubr.f32.gmra.mrb[0].mxu0 %v1041
  %v1346 = vpop.f32.mrb[0].mxu0
  %v1347 = vadd.f32 %v770, %v1346
  %v1348 = vpop.f32.mrb[0].mxu0
  %1349 = vmatprep.mubr.f32.mxu0 0.0
  %1350 = vmatmul.mubr.f32.gmra.mrb[0].mxu0 %v1044
  %v1351 = vpop.f32.mrb[0].mxu0
  %v1352 = vadd.f32 %v775, %v1351
  %v1353 = vpop.f32.mrb[0].mxu0
  %1354 = vmatprep.mubr.f32.mxu0 0.0
  %1355 = vmatmul.mubr.f32.gmra.mrb[0].mxu0 %v1047
  %v1356 = vpop.f32.mrb[0].mxu0
  %v1357 = vadd.f32 %v780, %v1356
  %v1358 = vpop.f32.mrb[0].mxu0
  %1359 = vmatprep.mubr.f32.mxu0 0.0
  %1360 = vmatmul.mubr.f32.gmra.mrb[0].mxu0 %v1050
  %v1361 = vpop.f32.mrb[0].mxu0
  %v1362 = vadd.f32 %v785, %v1361
  %v1363 = vpop.f32.mrb[0].mxu0
  %1364 = vmatprep.mubr.f32.mxu0 0.0
  %1365 = vmatmul.mubr.f32.gmra.mrb[0].mxu0 %v1053
  %v1366 = vpop.f32.mrb[0].mxu0
  %v1367 = vadd.f32 %v790, %v1366
  %v1368 = vpop.f32.mrb[0].mxu0
  %1369 = vmatprep.mubr.f32.mxu0 0.0
  %1370 = vmatmul.mubr.f32.gmra.mrb[0].mxu0 %v1056
  %v1371 = vpop.f32.mrb[0].mxu0
  %v1372 = vadd.f32 %v795, %v1371
  %v1373 = vpop.f32.mrb[0].mxu0
  %1374 = vmatprep.mubr.f32.mxu0 0.0
  %1375 = vmatmul.mubr.f32.gmra.mrb[0].mxu0 %v1059
  %v1376 = vpop.f32.mrb[0].mxu0
  %v1377 = vadd.f32 %v800, %v1376
  %v1378 = vpop.f32.mrb[0].mxu0
  %1379 = vmatprep.mubr.f32.mxu0 0.0
  %1380 = vmatmul.mubr.f32.gmra.mrb[0].mxu0 %v1062
  %v1381 = vpop.f32.mrb[0].mxu0
  %v1382 = vadd.f32 %v805, %v1381
  %v1383 = vpop.f32.mrb[0].mxu0
  %1384 = vmatprep.mubr.f32.mxu0 0.0
  %1385 = vmatmul.mubr.f32.gmra.mrb[0].mxu0 %v1065
  %v1386 = vpop.f32.mrb[0].mxu0
  %v1387 = vadd.f32 %v810, %v1386
  %v1388 = vpop.f32.mrb[0].mxu0
  %1389 = vmatprep.mubr.f32.mxu0 0.0
  %1390 = vmatmul.mubr.f32.gmra.mrb[0].mxu0 %v1068
  %v1391 = vpop.f32.mrb[0].mxu0
  %v1392 = vadd.f32 %v815, %v1391
  %v1393 = vpop.f32.mrb[0].mxu0
  %1394 = vmatprep.mubr.f32.mxu0 0.0
  %1395 = vmatmul.mubr.f32.gmra.mrb[0].mxu0 %v1071
  %v1396 = vpop.f32.mrb[0].mxu0
  %v1397 = vadd.f32 %v820, %v1396
  %v1398 = vpop.f32.mrb[0].mxu0
  %1399 = vmatprep.mubr.f32.mxu0 0.0
  %1400 = vmatmul.mubr.f32.gmra.mrb[0].mxu0 %v1074
  %v1401 = vpop.f32.mrb[0].mxu0
  %v1402 = vadd.f32 %v825, %v1401
  %v1403 = vpop.f32.mrb[0].mxu0
  %1404 = vmatprep.mubr.f32.mxu0 0.0
  %1405 = vmatmul.mubr.f32.gmra.mrb[0].mxu0 %v1077
  %v1406 = vpop.f32.mrb[0].mxu0
  %v1407 = vadd.f32 %v830, %v1406
  %v1408 = vpop.f32.mrb[0].mxu0
  %1409 = vmatprep.mubr.f32.mxu0 0.0
  %1410 = vmatmul.mubr.f32.gmra.mrb[0].mxu0 %v1080
  %v1411 = vpop.f32.mrb[0].mxu0
  %v1412 = vadd.f32 %v835, %v1411
  %v1413 = vpop.f32.mrb[0].mxu0
  %1414 = vmatprep.mubr.f32.mxu0 0.0
  %1415 = vmatmul.mubr.f32.gmra.mrb[0].mxu0 %v1083
  %v1416 = vpop.f32.mrb[0].mxu0
  %v1417 = vadd.f32 %v840, %v1416
  %v1418 = vpop.f32.mrb[0].mxu0
  %1419 = vmatprep.mubr.f32.mxu0 0.0
  %1420 = vmatmul.mubr.f32.gmra.mrb[0].mxu0 %v1086
  %v1421 = vpop.f32.mrb[0].mxu0
  %v1422 = vadd.f32 %v845, %v1421
  %v1423 = vpop.f32.mrb[0].mxu0
  %1424 = vmatprep.mubr.f32.mxu0 0.0
  %1425 = vmatmul.mubr.f32.gmra.mrb[0].mxu0 %v1089
  %v1426 = vpop.f32.mrb[0].mxu0
  %v1427 = vadd.f32 %v850, %v1426
  %v1428 = vpop.f32.mrb[0].mxu0
  %1429 = vmatprep.mubr.f32.mxu0 0.0
  %1430 = vmatmul.mubr.f32.gmra.mrb[0].mxu0 %v1092
  %v1431 = vpop.f32.mrb[0].mxu0
  %v1432 = vadd.f32 %v855, %v1431
  %v1433 = vpop.f32.mrb[0].mxu0
  %1434 = vmatprep.mubr.f32.mxu0 0.0
  %1435 = vmatmul.mubr.f32.gmra.mrb[0].mxu0 %v1095
  %v1436 = vpop.f32.mrb[0].mxu0
  %v1437 = vadd.f32 %v860, %v1436
  %v1438 = vpop.f32.mrb[0].mxu0
  %1439 = vmatprep.mubr.f32.mxu0 0.0
  %1440 = vmatmul.mubr.f32.gmra.mrb[0].mxu0 %v1098
  %v1441 = vpop.f32.mrb[0].mxu0
  %v1442 = vadd.f32 %v865, %v1441
  %v1443 = vpop.f32.mrb[0].mxu0
  %1444 = vmatprep.mubr.f32.mxu0 0.0
  %1445 = vmatmul.mubr.f32.gmra.mrb[0].mxu0 %v1101
  %v1446 = vpop.f32.mrb[0].mxu0
  %v1447 = vadd.f32 %v870, %v1446
  %v1448 = vpop.f32.mrb[0].mxu0
  %1449 = vmatprep.mubr.f32.mxu0 0.0
  %1450 = vmatmul.mubr.f32.gmra.mrb[0].mxu0 %v1104
  %v1451 = vpop.f32.mrb[0].mxu0
  %v1452 = vadd.f32 %v875, %v1451
  %v1453 = vpop.f32.mrb[0].mxu0
  %1454 = vmatprep.mubr.f32.mxu0 0.0
  %1455 = vmatmul.mubr.f32.gmra.mrb[0].mxu0 %v1107
  %v1456 = vpop.f32.mrb[0].mxu0
  %v1457 = vadd.f32 %v880, %v1456
  %v1458 = vpop.f32.mrb[0].mxu0
  %1459 = vmatprep.mubr.f32.mxu0 0.0
  %1460 = vmatmul.mubr.f32.gmra.mrb[0].mxu0 %v1110
  %v1461 = vpop.f32.mrb[0].mxu0
  %v1462 = vadd.f32 %v885, %v1461
  %v1463 = vpop.f32.mrb[0].mxu0
  %1464 = vmatprep.mubr.f32.mxu0 0.0
  %1465 = vmatmul.mubr.f32.gmra.mrb[0].mxu0 %v1113
  %v1466 = vpop.f32.mrb[0].mxu0
  %v1467 = vadd.f32 %v890, %v1466
  %v1468 = vpop.f32.mrb[0].mxu0
  %1469 = vmatprep.mubr.f32.mxu0 0.0
  %1470 = vmatmul.mubr.f32.gmra.mrb[0].mxu0 %v1116
  %v1471 = vpop.f32.mrb[0].mxu0
  %v1472 = vadd.f32 %v895, %v1471
  %v1473 = vpop.f32.mrb[0].mxu0
  %1474 = vmatprep.mubr.f32.mxu0 0.0
  %1475 = vmatmul.mubr.f32.gmra.mrb[0].mxu0 %v1119
  %v1476 = vpop.f32.mrb[0].mxu0
  %v1477 = vadd.f32 %v900, %v1476
  %v1478 = vpop.f32.mrb[0].mxu0
  %1479 = vmatprep.mubr.f32.mxu0 0.0
  %1480 = vmatmul.mubr.f32.gmra.mrb[0].mxu0 %v1122
  %v1481 = vpop.f32.mrb[0].mxu0
  %v1482 = vadd.f32 %v905, %v1481
  %v1483 = vpop.f32.mrb[0].mxu0
  %1484 = vmatprep.mubr.f32.mxu0 0.0
  %1485 = vmatmul.mubr.f32.gmra.mrb[0].mxu0 %v1125
  %v1486 = vpop.f32.mrb[0].mxu0
  %v1487 = vadd.f32 %v910, %v1486
  %v1488 = vpop.f32.mrb[0].mxu0
  %1489 = vmatprep.mubr.f32.mxu0 0.0
  %1490 = vmatmul.mubr.f32.gmra.mrb[0].mxu0 %v1128
  %v1491 = vpop.f32.mrb[0].mxu0
  %v1492 = vadd.f32 %v915, %v1491
  %v1493 = vpop.f32.mrb[0].mxu0
  %1494 = vmatprep.mubr.f32.mxu0 0.0
  %1495 = vmatmul.mubr.f32.gmra.mrb[0].mxu0 %v1131
  %v1496 = vpop.f32.mrb[0].mxu0
  %v1497 = vadd.f32 %v920, %v1496
  %v1498 = vpop.f32.mrb[0].mxu0
  %1499 = vmatprep.mubr.f32.mxu0 0.0
  %1500 = vmatmul.mubr.f32.gmra.mrb[0].mxu0 %v1134
  %v1501 = vpop.f32.mrb[0].mxu0
  %v1502 = vadd.f32 %v925, %v1501
  %v1503 = vpop.f32.mrb[0].mxu0
  %1504 = vmatprep.mubr.f32.mxu0 0.0
  %1505 = vmatmul.mubr.f32.gmra.mrb[0].mxu0 %v1137
  %v1506 = vpop.f32.mrb[0].mxu0
  %v1507 = vadd.f32 %v930, %v1506
  %v1508 = vpop.f32.mrb[0].mxu0
  %1509 = vmatprep.mubr.f32.mxu0 0.0
  %1510 = vmatmul.mubr.f32.gmra.mrb[0].mxu0 %v1140
  %v1511 = vpop.f32.mrb[0].mxu0
  %v1512 = vadd.f32 %v935, %v1511
  %v1513 = vpop.f32.mrb[0].mxu0
  %1514 = vmatprep.mubr.f32.mxu0 0.0
  %1515 = vmatmul.mubr.f32.gmra.mrb[0].mxu0 %v1143
  %v1516 = vpop.f32.mrb[0].mxu0
  %v1517 = vadd.f32 %v940, %v1516
  %v1518 = vpop.f32.mrb[0].mxu0
  %1519 = vmatprep.mubr.f32.mxu0 0.0
  %1520 = vmatmul.mubr.f32.gmra.mrb[0].mxu0 %v1146
  %v1521 = vpop.f32.mrb[0].mxu0
  %v1522 = vadd.f32 %v945, %v1521
  %v1523 = vpop.f32.mrb[0].mxu0
  %1524 = vmatprep.mubr.f32.mxu0 0.0
  %1525 = vmatmul.mubr.f32.gmra.mrb[0].mxu0 %v1149
  %v1526 = vpop.f32.mrb[0].mxu0
  %v1527 = vadd.f32 %v950, %v1526
  %v1528 = vpop.f32.mrb[0].mxu0
  %1529 = vmatprep.mubr.f32.mxu0 0.0
  %1530 = vmatmul.mubr.f32.gmra.mrb[0].mxu0 %v1152
  %v1531 = vpop.f32.mrb[0].mxu0
  %v1532 = vadd.f32 %v955, %v1531
  %v1533 = vpop.f32.mrb[0].mxu0
  %1534 = vmatprep.mubr.f32.mxu0 0.0
  %1535 = vmatmul.mubr.f32.gmra.mrb[0].mxu0 %v1155
  %v1536 = vpop.f32.mrb[0].mxu0
  %v1537 = vadd.f32 %v960, %v1536
  %v1538 = vpop.f32.mrb[0].mxu0
  %1539 = vmatprep.mubr.f32.mxu0 0.0
  %1540 = vmatmul.mubr.f32.gmra.mrb[0].mxu0 %v1158
  %v1541 = vpop.f32.mrb[0].mxu0
  %v1542 = vadd.f32 %v965, %v1541
  %v1543 = vpop.f32.mrb[0].mxu0
  %1544 = vdwg.mxu0
  %v1545 = vld [vmem:[#allocation2 + $0x2] sm:$0xff]
  %v1546 = vld [vmem:[#allocation2 + $0xa] sm:$0xff]
  %v1547 = vld [vmem:[#allocation2 + $0x1a] sm:$0xff]
  %v1548 = vld [vmem:[#allocation2 + $0x22] sm:$0xff]
  %v1549 = vld [vmem:[#allocation2 + $0x32] sm:$0xff]
  %v1550 = vld [vmem:[#allocation2 + $0x3a] sm:$0xff]
  %v1551 = vld [vmem:[#allocation2 + $0x4a] sm:$0xff]
  %v1552 = vld [vmem:[#allocation2 + $0x52] sm:$0xff]
  %v1553 = vld [vmem:[#allocation2 + $0x62] sm:$0xff]
  %v1554 = vld [vmem:[#allocation2 + $0x6a] sm:$0xff]
  %v1555 = vld [vmem:[#allocation2 + $0x7a] sm:$0xff]
  %v1556 = vld [vmem:[#allocation2 + $0x82] sm:$0xff]
  %v1557 = vld [vmem:[#allocation2 + $0x92] sm:$0xff]
  %v1558 = vld [vmem:[#allocation2 + $0x9a] sm:$0xff]
  %v1559 = vld [vmem:[#allocation2 + $0xaa] sm:$0xff]
  %v1560 = vld [vmem:[#allocation2 + $0xb2] sm:$0xff]
  %v1561 = vld [vmem:[#allocation2 + $0xc2] sm:$0xff]
  %v1562 = vld [vmem:[#allocation2 + $0xca] sm:$0xff]
  %v1563 = vld [vmem:[#allocation2 + $0xda] sm:$0xff]
  %v1564 = vld [vmem:[#allocation2 + $0xe2] sm:$0xff]
  %v1565 = vld [vmem:[#allocation2 + $0xf2] sm:$0xff]
  %v1566 = vld [vmem:[#allocation2 + $0xfa] sm:$0xff]
  %v1567 = vld [vmem:[#allocation2 + $0x10a] sm:$0xff]
  %v1568 = vld [vmem:[#allocation2 + $0x112] sm:$0xff]
  %v1569 = vld [vmem:[#allocation2 + $0x122] sm:$0xff]
  %v1570 = vld [vmem:[#allocation2 + $0x12a] sm:$0xff]
  %v1571 = vld [vmem:[#allocation2 + $0x13a] sm:$0xff]
  %v1572 = vld [vmem:[#allocation2 + $0x142] sm:$0xff]
  %v1573 = vld [vmem:[#allocation2 + $0x152] sm:$0xff]
  %v1574 = vld [vmem:[#allocation2 + $0x15a] sm:$0xff]
  %v1575 = vld [vmem:[#allocation2 + $0x16a] sm:$0xff]
  %v1576 = vld [vmem:[#allocation2 + $0x172] sm:$0xff]
  %v1577 = vld [vmem:[#allocation2 + $0x1b2] sm:$0xff]
  %v1578 = vld [vmem:[#allocation2 + $0x1ba] sm:$0xff]
  %v1579 = vld [vmem:[#allocation2 + $0x1ca] sm:$0xff]
  %v1580 = vld [vmem:[#allocation2 + $0x1d2] sm:$0xff]
  %v1581 = vld [vmem:[#allocation2 + $0x1e2] sm:$0xff]
  %v1582 = vld [vmem:[#allocation2 + $0x1ea] sm:$0xff]
  %v1583 = vld [vmem:[#allocation2 + $0x1fa] sm:$0xff]
  %v1584 = vld [vmem:[#allocation2 + $0x202] sm:$0xff]
  %v1585 = vld [vmem:[#allocation2 + $0x212] sm:$0xff]
  %v1586 = vld [vmem:[#allocation2 + $0x21a] sm:$0xff]
  %v1587 = vld [vmem:[#allocation2 + $0x22a] sm:$0xff]
  %v1588 = vld [vmem:[#allocation2 + $0x232] sm:$0xff]
  %v1589 = vld [vmem:[#allocation2 + $0x242] sm:$0xff]
  %v1590 = vld [vmem:[#allocation2 + $0x24a] sm:$0xff]
  %v1591 = vld [vmem:[#allocation2 + $0x25a] sm:$0xff]
  %v1592 = vld [vmem:[#allocation2 + $0x262] sm:$0xff]
  %v1593 = vld [vmem:[#allocation2 + $0x272] sm:$0xff]
  %v1594 = vld [vmem:[#allocation2 + $0x27a] sm:$0xff]
  %v1595 = vld [vmem:[#allocation2 + $0x28a] sm:$0xff]
  %v1596 = vld [vmem:[#allocation2 + $0x292] sm:$0xff]
  %v1597 = vld [vmem:[#allocation2 + $0x2a2] sm:$0xff]
  %v1598 = vld [vmem:[#allocation2 + $0x2aa] sm:$0xff]
  %v1599 = vld [vmem:[#allocation2 + $0x2ba] sm:$0xff]
  %v1600 = vld [vmem:[#allocation2 + $0x2c2] sm:$0xff]
  %v1601 = vld [vmem:[#allocation2 + $0x2d2] sm:$0xff]
  %v1602 = vld [vmem:[#allocation2 + $0x2da] sm:$0xff]
  %v1603 = vld [vmem:[#allocation2 + $0x2ea] sm:$0xff]
  %v1604 = vld [vmem:[#allocation2 + $0x2f2] sm:$0xff]
  %v1605 = vld [vmem:[#allocation2 + $0x302] sm:$0xff]
  %v1606 = vld [vmem:[#allocation2 + $0x30a] sm:$0xff]
  %v1607 = vld [vmem:[#allocation2 + $0x31a] sm:$0xff]
  %v1608 = vld [vmem:[#allocation2 + $0x322] sm:$0xff]
  %s1609 = scalar_lea.vmem %s1, 16
  %v1610 = vld [vmem:[%s1609] sm:$0xff]
  %v1612 = vsel %vm20, %v1545, 0
  %v1615 = vsel %vm20, %v1546, 0
  %v1618 = vsel %vm20, %v1547, 0
  %v1621 = vsel %vm20, %v1548, 0
  %v1624 = vsel %vm20, %v1549, 0
  %v1627 = vsel %vm20, %v1550, 0
  %v1630 = vsel %vm20, %v1551, 0
  %v1633 = vsel %vm20, %v1552, 0
  %v1636 = vsel %vm20, %v1553, 0
  %v1639 = vsel %vm20, %v1554, 0
  %v1642 = vsel %vm20, %v1555, 0
  %v1645 = vsel %vm20, %v1556, 0
  %v1648 = vsel %vm20, %v1557, 0
  %v1651 = vsel %vm20, %v1558, 0
  %v1654 = vsel %vm20, %v1559, 0
  %v1657 = vsel %vm20, %v1560, 0
  %v1660 = vsel %vm20, %v1561, 0
  %v1663 = vsel %vm20, %v1562, 0
  %v1666 = vsel %vm20, %v1563, 0
  %v1669 = vsel %vm20, %v1564, 0
  %v1672 = vsel %vm20, %v1565, 0
  %v1675 = vsel %vm20, %v1566, 0
  %v1678 = vsel %vm20, %v1567, 0
  %v1681 = vsel %vm20, %v1568, 0
  %v1684 = vsel %vm20, %v1569, 0
  %v1687 = vsel %vm20, %v1570, 0
  %v1690 = vsel %vm20, %v1571, 0
  %v1693 = vsel %vm20, %v1572, 0
  %v1696 = vsel %vm20, %v1573, 0
  %v1699 = vsel %vm20, %v1574, 0
  %v1702 = vsel %vm20, %v1575, 0
  %v1705 = vsel %vm20, %v1576, 0
  %v1708 = vsel %vm20, %v1577, 0
  %v1711 = vsel %vm20, %v1578, 0
  %v1714 = vsel %vm20, %v1579, 0
  %v1717 = vsel %vm20, %v1580, 0
  %v1720 = vsel %vm20, %v1581, 0
  %v1723 = vsel %vm20, %v1582, 0
  %v1726 = vsel %vm20, %v1583, 0
  %v1729 = vsel %vm20, %v1584, 0
  %v1732 = vsel %vm20, %v1585, 0
  %v1735 = vsel %vm20, %v1586, 0
  %v1738 = vsel %vm20, %v1587, 0
  %v1741 = vsel %vm20, %v1588, 0
  %v1744 = vsel %vm20, %v1589, 0
  %v1747 = vsel %vm20, %v1590, 0
  %v1750 = vsel %vm20, %v1591, 0
  %v1753 = vsel %vm20, %v1592, 0
  %v1756 = vsel %vm20, %v1593, 0
  %v1759 = vsel %vm20, %v1594, 0
  %v1762 = vsel %vm20, %v1595, 0
  %v1765 = vsel %vm20, %v1596, 0
  %v1768 = vsel %vm20, %v1597, 0
  %v1771 = vsel %vm20, %v1598, 0
  %v1774 = vsel %vm20, %v1599, 0
  %v1777 = vsel %vm20, %v1600, 0
  %v1780 = vsel %vm20, %v1601, 0
  %v1783 = vsel %vm20, %v1602, 0
  %v1786 = vsel %vm20, %v1603, 0
  %v1789 = vsel %vm20, %v1604, 0
  %v1792 = vsel %vm20, %v1605, 0
  %v1795 = vsel %vm20, %v1606, 0
  %v1798 = vsel %vm20, %v1607, 0
  %v1801 = vsel %vm20, %v1608, 0
  %1803 = vmatprep.subr.mxu0 0.0
  %1804 = vmatpush1.msra.mxu0 %v1610
  %1805 = vmatprep.subr.mxu0 0.0
  %1806 = vmatpush1.msra.mxu0 0.0
  %1807 = vmatprep.subr.mxu0 0.0
  %1808 = vmatpush1.msra.mxu0 0.0
  %1809 = vmatprep.subr.mxu0 0.0
  %1810 = vmatpush1.msra.mxu0 0.0
  %1811 = vmatprep.subr.mxu0 0.0
  %1812 = vmatpush1.msra.mxu0 0.0
  %1813 = vmatprep.subr.mxu0 0.0
  %1814 = vmatpush1.msra.mxu0 0.0
  %1815 = vmatprep.subr.mxu0 0.0
  %1816 = vmatpush1.msra.mxu0 0.0
  %1817 = vmatprep.subr.mxu0 0.0
  %1818 = vmatpush1.msra.mxu0 0.0
  %1819 = vmatprep.subr.mxu0 0.0
  %1820 = vmatpush1.msra.mxu0 0.0
  %1821 = vmatprep.subr.mxu0 0.0
  %1822 = vmatpush1.msra.mxu0 0.0
  %1823 = vmatprep.subr.mxu0 0.0
  %1824 = vmatpush1.msra.mxu0 0.0
  %1825 = vmatprep.subr.mxu0 0.0
  %1826 = vmatpush1.msra.mxu0 0.0
  %1827 = vmatprep.subr.mxu0 0.0
  %1828 = vmatpush1.msra.mxu0 0.0
  %1829 = vmatprep.subr.mxu0 0.0
  %1830 = vmatpush1.msra.mxu0 0.0
  %1831 = vmatprep.subr.mxu0 0.0
  %1832 = vmatpush1.msra.mxu0 0.0
  %1833 = vmatprep.subr.mxu0 0.0
  %1834 = vmatpush1.msra.mxu0 0.0
  %1835 = vmatprep.subr.mxu0 0.0
  %1836 = vmatpush1.msra.mxu0 0.0
  %1837 = vmatprep.subr.mxu0 0.0
  %1838 = vmatpush1.msra.mxu0 0.0
  %1839 = vmatprep.subr.mxu0 0.0
  %1840 = vmatpush1.msra.mxu0 0.0
  %1841 = vmatprep.subr.mxu0 0.0
  %1842 = vmatpush1.msra.mxu0 0.0
  %1843 = vmatprep.subr.mxu0 0.0
  %1844 = vmatpush1.msra.mxu0 0.0
  %1845 = vmatprep.subr.mxu0 0.0
  %1846 = vmatpush1.msra.mxu0 0.0
  %1847 = vmatprep.subr.mxu0 0.0
  %1848 = vmatpush1.msra.mxu0 0.0
  %1849 = vmatprep.subr.mxu0 0.0
  %1850 = vmatpush1.msra.mxu0 0.0
  %1851 = vmatprep.subr.mxu0 0.0
  %1852 = vmatpush1.msra.mxu0 0.0
  %1853 = vmatprep.subr.mxu0 0.0
  %1854 = vmatpush1.msra.mxu0 0.0
  %1855 = vmatprep.subr.mxu0 0.0
  %1856 = vmatpush1.msra.mxu0 0.0
  %1857 = vmatprep.subr.mxu0 0.0
  %1858 = vmatpush1.msra.mxu0 0.0
  %1859 = vmatprep.subr.mxu0 0.0
  %1860 = vmatpush1.msra.mxu0 0.0
  %1861 = vmatprep.subr.mxu0 0.0
  %1862 = vmatpush1.msra.mxu0 0.0
  %1863 = vmatprep.subr.mxu0 0.0
  %1864 = vmatpush1.msra.mxu0 0.0
  %1865 = vmatprep.subr.mxu0 0.0
  %1866 = vmatpush1.msra.mxu0 0.0
  %1867 = vmatprep.mubr.f32.mxu0 0.0
  %1868 = vmatmul.mubr.f32.gmra.mrb[0].mxu0 %v1612
  %v1869 = vpop.f32.mrb[0].mxu0
  %v1870 = vadd.f32 0.0, %v1869
  %v1871 = vpop.f32.mrb[0].mxu0
  %1872 = vmatprep.mubr.f32.mxu0 0.0
  %1873 = vmatmul.mubr.f32.gmra.mrb[0].mxu0 %v1615
  %v1874 = vpop.f32.mrb[0].mxu0
  %v1875 = vadd.f32 0.0, %v1874
  %v1876 = vpop.f32.mrb[0].mxu0
  %1877 = vmatprep.mubr.f32.mxu0 0.0
  %1878 = vmatmul.mubr.f32.gmra.mrb[0].mxu0 %v1618
  %v1879 = vpop.f32.mrb[0].mxu0
  %v1880 = vadd.f32 0.0, %v1879
  %v1881 = vpop.f32.mrb[0].mxu0
  %1882 = vmatprep.mubr.f32.mxu0 0.0
  %1883 = vmatmul.mubr.f32.gmra.mrb[0].mxu0 %v1621
  %v1884 = vpop.f32.mrb[0].mxu0
  %v1885 = vadd.f32 0.0, %v1884
  %v1886 = vpop.f32.mrb[0].mxu0
  %1887 = vmatprep.mubr.f32.mxu0 0.0
  %1888 = vmatmul.mubr.f32.gmra.mrb[0].mxu0 %v1624
  %v1889 = vpop.f32.mrb[0].mxu0
  %v1890 = vadd.f32 0.0, %v1889
  %v1891 = vpop.f32.mrb[0].mxu0
  %1892 = vmatprep.mubr.f32.mxu0 0.0
  %1893 = vmatmul.mubr.f32.gmra.mrb[0].mxu0 %v1627
  %v1894 = vpop.f32.mrb[0].mxu0
  %v1895 = vadd.f32 0.0, %v1894
  %v1896 = vpop.f32.mrb[0].mxu0
  %1897 = vmatprep.mubr.f32.mxu0 0.0
  %1898 = vmatmul.mubr.f32.gmra.mrb[0].mxu0 %v1630
  %v1899 = vpop.f32.mrb[0].mxu0
  %v1900 = vadd.f32 0.0, %v1899
  %v1901 = vpop.f32.mrb[0].mxu0
  %1902 = vmatprep.mubr.f32.mxu0 0.0
  %1903 = vmatmul.mubr.f32.gmra.mrb[0].mxu0 %v1633
  %v1904 = vpop.f32.mrb[0].mxu0
  %v1905 = vadd.f32 0.0, %v1904
  %v1906 = vpop.f32.mrb[0].mxu0
  %1907 = vmatprep.mubr.f32.mxu0 0.0
  %1908 = vmatmul.mubr.f32.gmra.mrb[0].mxu0 %v1636
  %v1909 = vpop.f32.mrb[0].mxu0
  %v1910 = vadd.f32 0.0, %v1909
  %v1911 = vpop.f32.mrb[0].mxu0
  %1912 = vmatprep.mubr.f32.mxu0 0.0
  %1913 = vmatmul.mubr.f32.gmra.mrb[0].mxu0 %v1639
  %v1914 = vpop.f32.mrb[0].mxu0
  %v1915 = vadd.f32 0.0, %v1914
  %v1916 = vpop.f32.mrb[0].mxu0
  %1917 = vmatprep.mubr.f32.mxu0 0.0
  %1918 = vmatmul.mubr.f32.gmra.mrb[0].mxu0 %v1642
  %v1919 = vpop.f32.mrb[0].mxu0
  %v1920 = vadd.f32 0.0, %v1919
  %v1921 = vpop.f32.mrb[0].mxu0
  %1922 = vmatprep.mubr.f32.mxu0 0.0
  %1923 = vmatmul.mubr.f32.gmra.mrb[0].mxu0 %v1645
  %v1924 = vpop.f32.mrb[0].mxu0
  %v1925 = vadd.f32 0.0, %v1924
  %v1926 = vpop.f32.mrb[0].mxu0
  %1927 = vmatprep.mubr.f32.mxu0 0.0
  %1928 = vmatmul.mubr.f32.gmra.mrb[0].mxu0 %v1648
  %v1929 = vpop.f32.mrb[0].mxu0
  %v1930 = vadd.f32 0.0, %v1929
  %v1931 = vpop.f32.mrb[0].mxu0
  %1932 = vmatprep.mubr.f32.mxu0 0.0
  %1933 = vmatmul.mubr.f32.gmra.mrb[0].mxu0 %v1651
  %v1934 = vpop.f32.mrb[0].mxu0
  %v1935 = vadd.f32 0.0, %v1934
  %v1936 = vpop.f32.mrb[0].mxu0
  %1937 = vmatprep.mubr.f32.mxu0 0.0
  %1938 = vmatmul.mubr.f32.gmra.mrb[0].mxu0 %v1654
  %v1939 = vpop.f32.mrb[0].mxu0
  %v1940 = vadd.f32 0.0, %v1939
  %v1941 = vpop.f32.mrb[0].mxu0
  %1942 = vmatprep.mubr.f32.mxu0 0.0
  %1943 = vmatmul.mubr.f32.gmra.mrb[0].mxu0 %v1657
  %v1944 = vpop.f32.mrb[0].mxu0
  %v1945 = vadd.f32 0.0, %v1944
  %v1946 = vpop.f32.mrb[0].mxu0
  %1947 = vmatprep.mubr.f32.mxu0 0.0
  %1948 = vmatmul.mubr.f32.gmra.mrb[0].mxu0 %v1660
  %v1949 = vpop.f32.mrb[0].mxu0
  %v1950 = vadd.f32 0.0, %v1949
  %v1951 = vpop.f32.mrb[0].mxu0
  %1952 = vmatprep.mubr.f32.mxu0 0.0
  %1953 = vmatmul.mubr.f32.gmra.mrb[0].mxu0 %v1663
  %v1954 = vpop.f32.mrb[0].mxu0
  %v1955 = vadd.f32 0.0, %v1954
  %v1956 = vpop.f32.mrb[0].mxu0
  %1957 = vmatprep.mubr.f32.mxu0 0.0
  %1958 = vmatmul.mubr.f32.gmra.mrb[0].mxu0 %v1666
  %v1959 = vpop.f32.mrb[0].mxu0
  %v1960 = vadd.f32 0.0, %v1959
  %v1961 = vpop.f32.mrb[0].mxu0
  %1962 = vmatprep.mubr.f32.mxu0 0.0
  %1963 = vmatmul.mubr.f32.gmra.mrb[0].mxu0 %v1669
  %v1964 = vpop.f32.mrb[0].mxu0
  %v1965 = vadd.f32 0.0, %v1964
  %v1966 = vpop.f32.mrb[0].mxu0
  %1967 = vmatprep.mubr.f32.mxu0 0.0
  %1968 = vmatmul.mubr.f32.gmra.mrb[0].mxu0 %v1672
  %v1969 = vpop.f32.mrb[0].mxu0
  %v1970 = vadd.f32 0.0, %v1969
  %v1971 = vpop.f32.mrb[0].mxu0
  %1972 = vmatprep.mubr.f32.mxu0 0.0
  %1973 = vmatmul.mubr.f32.gmra.mrb[0].mxu0 %v1675
  %v1974 = vpop.f32.mrb[0].mxu0
  %v1975 = vadd.f32 0.0, %v1974
  %v1976 = vpop.f32.mrb[0].mxu0
  %1977 = vmatprep.mubr.f32.mxu0 0.0
  %1978 = vmatmul.mubr.f32.gmra.mrb[0].mxu0 %v1678
  %v1979 = vpop.f32.mrb[0].mxu0
  %v1980 = vadd.f32 0.0, %v1979
  %v1981 = vpop.f32.mrb[0].mxu0
  %1982 = vmatprep.mubr.f32.mxu0 0.0
  %1983 = vmatmul.mubr.f32.gmra.mrb[0].mxu0 %v1681
  %v1984 = vpop.f32.mrb[0].mxu0
  %v1985 = vadd.f32 0.0, %v1984
  %v1986 = vpop.f32.mrb[0].mxu0
  %1987 = vmatprep.mubr.f32.mxu0 0.0
  %1988 = vmatmul.mubr.f32.gmra.mrb[0].mxu0 %v1684
  %v1989 = vpop.f32.mrb[0].mxu0
  %v1990 = vadd.f32 0.0, %v1989
  %v1991 = vpop.f32.mrb[0].mxu0
  %1992 = vmatprep.mubr.f32.mxu0 0.0
  %1993 = vmatmul.mubr.f32.gmra.mrb[0].mxu0 %v1687
  %v1994 = vpop.f32.mrb[0].mxu0
  %v1995 = vadd.f32 0.0, %v1994
  %v1996 = vpop.f32.mrb[0].mxu0
  %1997 = vmatprep.mubr.f32.mxu0 0.0
  %1998 = vmatmul.mubr.f32.gmra.mrb[0].mxu0 %v1690
  %v1999 = vpop.f32.mrb[0].mxu0
  %v2000 = vadd.f32 0.0, %v1999
  %v2001 = vpop.f32.mrb[0].mxu0
  %2002 = vmatprep.mubr.f32.mxu0 0.0
  %2003 = vmatmul.mubr.f32.gmra.mrb[0].mxu0 %v1693
  %v2004 = vpop.f32.mrb[0].mxu0
  %v2005 = vadd.f32 0.0, %v2004
  %v2006 = vpop.f32.mrb[0].mxu0
  %2007 = vmatprep.mubr.f32.mxu0 0.0
  %2008 = vmatmul.mubr.f32.gmra.mrb[0].mxu0 %v1696
  %v2009 = vpop.f32.mrb[0].mxu0
  %v2010 = vadd.f32 0.0, %v2009
  %v2011 = vpop.f32.mrb[0].mxu0
  %2012 = vmatprep.mubr.f32.mxu0 0.0
  %2013 = vmatmul.mubr.f32.gmra.mrb[0].mxu0 %v1699
  %v2014 = vpop.f32.mrb[0].mxu0
  %v2015 = vadd.f32 0.0, %v2014
  %v2016 = vpop.f32.mrb[0].mxu0
  %2017 = vmatprep.mubr.f32.mxu0 0.0
  %2018 = vmatmul.mubr.f32.gmra.mrb[0].mxu0 %v1702
  %v2019 = vpop.f32.mrb[0].mxu0
  %v2020 = vadd.f32 0.0, %v2019
  %v2021 = vpop.f32.mrb[0].mxu0
  %2022 = vmatprep.mubr.f32.mxu0 0.0
  %2023 = vmatmul.mubr.f32.gmra.mrb[0].mxu0 %v1705
  %v2024 = vpop.f32.mrb[0].mxu0
  %v2025 = vadd.f32 0.0, %v2024
  %v2026 = vpop.f32.mrb[0].mxu0
  %2027 = vmatprep.mubr.f32.mxu0 0.0
  %2028 = vmatmul.mubr.f32.gmra.mrb[0].mxu0 %v1708
  %v2029 = vpop.f32.mrb[0].mxu0
  %v2030 = vadd.f32 0.0, %v2029
  %v2031 = vpop.f32.mrb[0].mxu0
  %2032 = vmatprep.mubr.f32.mxu0 0.0
  %2033 = vmatmul.mubr.f32.gmra.mrb[0].mxu0 %v1711
  %v2034 = vpop.f32.mrb[0].mxu0
  %v2035 = vadd.f32 0.0, %v2034
  %v2036 = vpop.f32.mrb[0].mxu0
  %2037 = vmatprep.mubr.f32.mxu0 0.0
  %2038 = vmatmul.mubr.f32.gmra.mrb[0].mxu0 %v1714
  %v2039 = vpop.f32.mrb[0].mxu0
  %v2040 = vadd.f32 0.0, %v2039
  %v2041 = vpop.f32.mrb[0].mxu0
  %2042 = vmatprep.mubr.f32.mxu0 0.0
  %2043 = vmatmul.mubr.f32.gmra.mrb[0].mxu0 %v1717
  %v2044 = vpop.f32.mrb[0].mxu0
  %v2045 = vadd.f32 0.0, %v2044
  %v2046 = vpop.f32.mrb[0].mxu0
  %2047 = vmatprep.mubr.f32.mxu0 0.0
  %2048 = vmatmul.mubr.f32.gmra.mrb[0].mxu0 %v1720
  %v2049 = vpop.f32.mrb[0].mxu0
  %v2050 = vadd.f32 0.0, %v2049
  %v2051 = vpop.f32.mrb[0].mxu0
  %2052 = vmatprep.mubr.f32.mxu0 0.0
  %2053 = vmatmul.mubr.f32.gmra.mrb[0].mxu0 %v1723
  %v2054 = vpop.f32.mrb[0].mxu0
  %v2055 = vadd.f32 0.0, %v2054
  %v2056 = vpop.f32.mrb[0].mxu0
  %2057 = vmatprep.mubr.f32.mxu0 0.0
  %2058 = vmatmul.mubr.f32.gmra.mrb[0].mxu0 %v1726
  %v2059 = vpop.f32.mrb[0].mxu0
  %v2060 = vadd.f32 0.0, %v2059
  %v2061 = vpop.f32.mrb[0].mxu0
  %2062 = vmatprep.mubr.f32.mxu0 0.0
  %2063 = vmatmul.mubr.f32.gmra.mrb[0].mxu0 %v1729
  %v2064 = vpop.f32.mrb[0].mxu0
  %v2065 = vadd.f32 0.0, %v2064
  %v2066 = vpop.f32.mrb[0].mxu0
  %2067 = vmatprep.mubr.f32.mxu0 0.0
  %2068 = vmatmul.mubr.f32.gmra.mrb[0].mxu0 %v1732
  %v2069 = vpop.f32.mrb[0].mxu0
  %v2070 = vadd.f32 0.0, %v2069
  %v2071 = vpop.f32.mrb[0].mxu0
  %2072 = vmatprep.mubr.f32.mxu0 0.0
  %2073 = vmatmul.mubr.f32.gmra.mrb[0].mxu0 %v1735
  %v2074 = vpop.f32.mrb[0].mxu0
  %v2075 = vadd.f32 0.0, %v2074
  %v2076 = vpop.f32.mrb[0].mxu0
  %2077 = vmatprep.mubr.f32.mxu0 0.0
  %2078 = vmatmul.mubr.f32.gmra.mrb[0].mxu0 %v1738
  %v2079 = vpop.f32.mrb[0].mxu0
  %v2080 = vadd.f32 0.0, %v2079
  %v2081 = vpop.f32.mrb[0].mxu0
  %2082 = vmatprep.mubr.f32.mxu0 0.0
  %2083 = vmatmul.mubr.f32.gmra.mrb[0].mxu0 %v1741
  %v2084 = vpop.f32.mrb[0].mxu0
  %v2085 = vadd.f32 0.0, %v2084
  %v2086 = vpop.f32.mrb[0].mxu0
  %2087 = vmatprep.mubr.f32.mxu0 0.0
  %2088 = vmatmul.mubr.f32.gmra.mrb[0].mxu0 %v1744
  %v2089 = vpop.f32.mrb[0].mxu0
  %v2090 = vadd.f32 0.0, %v2089
  %v2091 = vpop.f32.mrb[0].mxu0
  %2092 = vmatprep.mubr.f32.mxu0 0.0
  %2093 = vmatmul.mubr.f32.gmra.mrb[0].mxu0 %v1747
  %v2094 = vpop.f32.mrb[0].mxu0
  %v2095 = vadd.f32 0.0, %v2094
  %v2096 = vpop.f32.mrb[0].mxu0
  %2097 = vmatprep.mubr.f32.mxu0 0.0
  %2098 = vmatmul.mubr.f32.gmra.mrb[0].mxu0 %v1750
  %v2099 = vpop.f32.mrb[0].mxu0
  %v2100 = vadd.f32 0.0, %v2099
  %v2101 = vpop.f32.mrb[0].mxu0
  %2102 = vmatprep.mubr.f32.mxu0 0.0
  %2103 = vmatmul.mubr.f32.gmra.mrb[0].mxu0 %v1753
  %v2104 = vpop.f32.mrb[0].mxu0
  %v2105 = vadd.f32 0.0, %v2104
  %v2106 = vpop.f32.mrb[0].mxu0
  %2107 = vmatprep.mubr.f32.mxu0 0.0
  %2108 = vmatmul.mubr.f32.gmra.mrb[0].mxu0 %v1756
  %v2109 = vpop.f32.mrb[0].mxu0
  %v2110 = vadd.f32 0.0, %v2109
  %v2111 = vpop.f32.mrb[0].mxu0
  %2112 = vmatprep.mubr.f32.mxu0 0.0
  %2113 = vmatmul.mubr.f32.gmra.mrb[0].mxu0 %v1759
  %v2114 = vpop.f32.mrb[0].mxu0
  %v2115 = vadd.f32 0.0, %v2114
  %v2116 = vpop.f32.mrb[0].mxu0
  %2117 = vmatprep.mubr.f32.mxu0 0.0
  %2118 = vmatmul.mubr.f32.gmra.mrb[0].mxu0 %v1762
  %v2119 = vpop.f32.mrb[0].mxu0
  %v2120 = vadd.f32 0.0, %v2119
  %v2121 = vpop.f32.mrb[0].mxu0
  %2122 = vmatprep.mubr.f32.mxu0 0.0
  %2123 = vmatmul.mubr.f32.gmra.mrb[0].mxu0 %v1765
  %v2124 = vpop.f32.mrb[0].mxu0
  %v2125 = vadd.f32 0.0, %v2124
  %v2126 = vpop.f32.mrb[0].mxu0
  %2127 = vmatprep.mubr.f32.mxu0 0.0
  %2128 = vmatmul.mubr.f32.gmra.mrb[0].mxu0 %v1768
  %v2129 = vpop.f32.mrb[0].mxu0
  %v2130 = vadd.f32 0.0, %v2129
  %v2131 = vpop.f32.mrb[0].mxu0
  %2132 = vmatprep.mubr.f32.mxu0 0.0
  %2133 = vmatmul.mubr.f32.gmra.mrb[0].mxu0 %v1771
  %v2134 = vpop.f32.mrb[0].mxu0
  %v2135 = vadd.f32 0.0, %v2134
  %v2136 = vpop.f32.mrb[0].mxu0
  %2137 = vmatprep.mubr.f32.mxu0 0.0
  %2138 = vmatmul.mubr.f32.gmra.mrb[0].mxu0 %v1774
  %v2139 = vpop.f32.mrb[0].mxu0
  %v2140 = vadd.f32 0.0, %v2139
  %v2141 = vpop.f32.mrb[0].mxu0
  %2142 = vmatprep.mubr.f32.mxu0 0.0
  %2143 = vmatmul.mubr.f32.gmra.mrb[0].mxu0 %v1777
  %v2144 = vpop.f32.mrb[0].mxu0
  %v2145 = vadd.f32 0.0, %v2144
  %v2146 = vpop.f32.mrb[0].mxu0
  %2147 = vmatprep.mubr.f32.mxu0 0.0
  %2148 = vmatmul.mubr.f32.gmra.mrb[0].mxu0 %v1780
  %v2149 = vpop.f32.mrb[0].mxu0
  %v2150 = vadd.f32 0.0, %v2149
  %v2151 = vpop.f32.mrb[0].mxu0
  %2152 = vmatprep.mubr.f32.mxu0 0.0
  %2153 = vmatmul.mubr.f32.gmra.mrb[0].mxu0 %v1783
  %v2154 = vpop.f32.mrb[0].mxu0
  %v2155 = vadd.f32 0.0, %v2154
  %v2156 = vpop.f32.mrb[0].mxu0
  %2157 = vmatprep.mubr.f32.mxu0 0.0
  %2158 = vmatmul.mubr.f32.gmra.mrb[0].mxu0 %v1786
  %v2159 = vpop.f32.mrb[0].mxu0
  %v2160 = vadd.f32 0.0, %v2159
  %v2161 = vpop.f32.mrb[0].mxu0
  %2162 = vmatprep.mubr.f32.mxu0 0.0
  %2163 = vmatmul.mubr.f32.gmra.mrb[0].mxu0 %v1789
  %v2164 = vpop.f32.mrb[0].mxu0
  %v2165 = vadd.f32 0.0, %v2164
  %v2166 = vpop.f32.mrb[0].mxu0
  %2167 = vmatprep.mubr.f32.mxu0 0.0
  %2168 = vmatmul.mubr.f32.gmra.mrb[0].mxu0 %v1792
  %v2169 = vpop.f32.mrb[0].mxu0
  %v2170 = vadd.f32 0.0, %v2169
  %v2171 = vpop.f32.mrb[0].mxu0
  %2172 = vmatprep.mubr.f32.mxu0 0.0
  %2173 = vmatmul.mubr.f32.gmra.mrb[0].mxu0 %v1795
  %v2174 = vpop.f32.mrb[0].mxu0
  %v2175 = vadd.f32 0.0, %v2174
  %v2176 = vpop.f32.mrb[0].mxu0
  %2177 = vmatprep.mubr.f32.mxu0 0.0
  %2178 = vmatmul.mubr.f32.gmra.mrb[0].mxu0 %v1798
  %v2179 = vpop.f32.mrb[0].mxu0
  %v2180 = vadd.f32 0.0, %v2179
  %v2181 = vpop.f32.mrb[0].mxu0
  %2182 = vmatprep.mubr.f32.mxu0 0.0
  %2183 = vmatmul.mubr.f32.gmra.mrb[0].mxu0 %v1801
  %v2184 = vpop.f32.mrb[0].mxu0
  %v2185 = vadd.f32 0.0, %v2184
  %v2186 = vpop.f32.mrb[0].mxu0
  %2187 = vdwg.mxu0
  %v2188 = vadd.f32 %v1227, %v1870
  %v2189 = vadd.f32 %v1232, %v1875
  %v2190 = vadd.f32 %v1237, %v1880
  %v2191 = vadd.f32 %v1242, %v1885
  %v2192 = vadd.f32 %v1247, %v1890
  %v2193 = vadd.f32 %v1252, %v1895
  %v2194 = vadd.f32 %v1257, %v1900
  %v2195 = vadd.f32 %v1262, %v1905
  %v2196 = vadd.f32 %v1267, %v1910
  %v2197 = vadd.f32 %v1272, %v1915
  %v2198 = vadd.f32 %v1277, %v1920
  %v2199 = vadd.f32 %v1282, %v1925
  %v2200 = vadd.f32 %v1287, %v1930
  %v2201 = vadd.f32 %v1292, %v1935
  %v2202 = vadd.f32 %v1297, %v1940
  %v2203 = vadd.f32 %v1302, %v1945
  %v2204 = vadd.f32 %v1307, %v1950
  %v2205 = vadd.f32 %v1312, %v1955
  %v2206 = vadd.f32 %v1317, %v1960
  %v2207 = vadd.f32 %v1322, %v1965
  %v2208 = vadd.f32 %v1327, %v1970
  %v2209 = vadd.f32 %v1332, %v1975
  %v2210 = vadd.f32 %v1337, %v1980
  %v2211 = vadd.f32 %v1342, %v1985
  %v2212 = vadd.f32 %v1347, %v1990
  %v2213 = vadd.f32 %v1352, %v1995
  %v2214 = vadd.f32 %v1357, %v2000
  %v2215 = vadd.f32 %v1362, %v2005
  %v2216 = vadd.f32 %v1367, %v2010
  %v2217 = vadd.f32 %v1372, %v2015
  %v2218 = vadd.f32 %v1377, %v2020
  %v2219 = vadd.f32 %v1382, %v2025
  %v2220 = vadd.f32 %v1387, %v2030
  %v2221 = vadd.f32 %v1392, %v2035
  %v2222 = vadd.f32 %v1397, %v2040
  %v2223 = vadd.f32 %v1402, %v2045
  %v2224 = vadd.f32 %v1407, %v2050
  %v2225 = vadd.f32 %v1412, %v2055
  %v2226 = vadd.f32 %v1417, %v2060
  %v2227 = vadd.f32 %v1422, %v2065
  %v2228 = vadd.f32 %v1427, %v2070
  %v2229 = vadd.f32 %v1432, %v2075
  %v2230 = vadd.f32 %v1437, %v2080
  %v2231 = vadd.f32 %v1442, %v2085
  %v2232 = vadd.f32 %v1447, %v2090
  %v2233 = vadd.f32 %v1452, %v2095
  %v2234 = vadd.f32 %v1457, %v2100
  %v2235 = vadd.f32 %v1462, %v2105
  %v2236 = vadd.f32 %v1467, %v2110
  %v2237 = vadd.f32 %v1472, %v2115
  %v2238 = vadd.f32 %v1477, %v2120
  %v2239 = vadd.f32 %v1482, %v2125
  %v2240 = vadd.f32 %v1487, %v2130
  %v2241 = vadd.f32 %v1492, %v2135
  %v2242 = vadd.f32 %v1497, %v2140
  %v2243 = vadd.f32 %v1502, %v2145
  %v2244 = vadd.f32 %v1507, %v2150
  %v2245 = vadd.f32 %v1512, %v2155
  %v2246 = vadd.f32 %v1517, %v2160
  %v2247 = vadd.f32 %v1522, %v2165
  %v2248 = vadd.f32 %v1527, %v2170
  %v2249 = vadd.f32 %v1532, %v2175
  %v2250 = vadd.f32 %v1537, %v2180
  %v2251 = vadd.f32 %v1542, %v2185
  %v2252 = vld [vmem:[%s194] sm:$0xff]
  %v2253 = vld [vmem:[%s194 + $0x8] sm:$0xff]
  %v2254 = vld [vmem:[%s194 + $0x18] sm:$0xff]
  %v2255 = vld [vmem:[%s194 + $0x20] sm:$0xff]
  %v2256 = vld [vmem:[%s194 + $0x30] sm:$0xff]
  %v2257 = vld [vmem:[%s194 + $0x38] sm:$0xff]
  %v2258 = vld [vmem:[%s194 + $0x48] sm:$0xff]
  %v2259 = vld [vmem:[%s194 + $0x50] sm:$0xff]
  %v2260 = vld [vmem:[%s194 + $0x60] sm:$0xff]
  %v2261 = vld [vmem:[%s194 + $0x68] sm:$0xff]
  %v2262 = vld [vmem:[%s194 + $0x78] sm:$0xff]
  %v2263 = vld [vmem:[%s194 + $0x80] sm:$0xff]
  %v2264 = vld [vmem:[%s194 + $0x90] sm:$0xff]
  %v2265 = vld [vmem:[%s194 + $0x98] sm:$0xff]
  %v2266 = vld [vmem:[%s194 + $0xa8] sm:$0xff]
  %v2267 = vld [vmem:[%s194 + $0xb0] sm:$0xff]
  %v2268 = vld [vmem:[%s194 + $0xc0] sm:$0xff]
  %v2269 = vld [vmem:[%s194 + $0xc8] sm:$0xff]
  %v2270 = vld [vmem:[%s194 + $0xd8] sm:$0xff]
  %v2271 = vld [vmem:[%s194 + $0xe0] sm:$0xff]
  %v2272 = vld [vmem:[%s194 + $0xf0] sm:$0xff]
  %v2273 = vld [vmem:[%s194 + $0xf8] sm:$0xff]
  %v2274 = vld [vmem:[%s194 + $0x108] sm:$0xff]
  %v2275 = vld [vmem:[%s194 + $0x110] sm:$0xff]
  %v2276 = vld [vmem:[%s194 + $0x120] sm:$0xff]
  %v2277 = vld [vmem:[%s194 + $0x128] sm:$0xff]
  %v2278 = vld [vmem:[%s194 + $0x138] sm:$0xff]
  %v2279 = vld [vmem:[%s194 + $0x140] sm:$0xff]
  %v2280 = vld [vmem:[%s194 + $0x150] sm:$0xff]
  %v2281 = vld [vmem:[%s194 + $0x158] sm:$0xff]
  %v2282 = vld [vmem:[%s194 + $0x168] sm:$0xff]
  %v2283 = vld [vmem:[%s194 + $0x170] sm:$0xff]
  %v2284 = vld [vmem:[%s194 + $0x1b0] sm:$0xff]
  %v2285 = vld [vmem:[%s194 + $0x1b8] sm:$0xff]
  %v2286 = vld [vmem:[%s194 + $0x1c8] sm:$0xff]
  %v2287 = vld [vmem:[%s194 + $0x1d0] sm:$0xff]
  %v2288 = vld [vmem:[%s194 + $0x1e0] sm:$0xff]
  %v2289 = vld [vmem:[%s194 + $0x1e8] sm:$0xff]
  %v2290 = vld [vmem:[%s194 + $0x1f8] sm:$0xff]
  %v2291 = vld [vmem:[%s194 + $0x200] sm:$0xff]
  %v2292 = vld [vmem:[%s194 + $0x210] sm:$0xff]
  %v2293 = vld [vmem:[%s194 + $0x218] sm:$0xff]
  %v2294 = vld [vmem:[%s194 + $0x228] sm:$0xff]
  %v2295 = vld [vmem:[%s194 + $0x230] sm:$0xff]
  %v2296 = vld [vmem:[%s194 + $0x240] sm:$0xff]
  %v2297 = vld [vmem:[%s194 + $0x248] sm:$0xff]
  %v2298 = vld [vmem:[%s194 + $0x258] sm:$0xff]
  %v2299 = vld [vmem:[%s194 + $0x260] sm:$0xff]
  %v2300 = vld [vmem:[%s194 + $0x270] sm:$0xff]
  %v2301 = vld [vmem:[%s194 + $0x278] sm:$0xff]
  %v2302 = vld [vmem:[%s194 + $0x288] sm:$0xff]
  %v2303 = vld [vmem:[%s194 + $0x290] sm:$0xff]
  %v2304 = vld [vmem:[%s194 + $0x2a0] sm:$0xff]
  %v2305 = vld [vmem:[%s194 + $0x2a8] sm:$0xff]
  %v2306 = vld [vmem:[%s194 + $0x2b8] sm:$0xff]
  %v2307 = vld [vmem:[%s194 + $0x2c0] sm:$0xff]
  %v2308 = vld [vmem:[%s194 + $0x2d0] sm:$0xff]
  %v2309 = vld [vmem:[%s194 + $0x2d8] sm:$0xff]
  %v2310 = vld [vmem:[%s194 + $0x2e8] sm:$0xff]
  %v2311 = vld [vmem:[%s194 + $0x2f0] sm:$0xff]
  %v2312 = vld [vmem:[%s194 + $0x300] sm:$0xff]
  %v2313 = vld [vmem:[%s194 + $0x308] sm:$0xff]
  %v2314 = vld [vmem:[%s194 + $0x318] sm:$0xff]
  %v2315 = vld [vmem:[%s194 + $0x320] sm:$0xff]
  %s2316 = scalar_lea.vmem %s1, 24
  %v2317 = vld [vmem:[%s2316] sm:$0xff]
  %v2319 = vsel %vm20, %v2252, 0
  %v2322 = vsel %vm20, %v2253, 0
  %v2325 = vsel %vm20, %v2254, 0
  %v2328 = vsel %vm20, %v2255, 0
  %v2331 = vsel %vm20, %v2256, 0
  %v2334 = vsel %vm20, %v2257, 0
  %v2337 = vsel %vm20, %v2258, 0
  %v2340 = vsel %vm20, %v2259, 0
  %v2343 = vsel %vm20, %v2260, 0
  %v2346 = vsel %vm20, %v2261, 0
  %v2349 = vsel %vm20, %v2262, 0
  %v2352 = vsel %vm20, %v2263, 0
  %v2355 = vsel %vm20, %v2264, 0
  %v2358 = vsel %vm20, %v2265, 0
  %v2361 = vsel %vm20, %v2266, 0
  %v2364 = vsel %vm20, %v2267, 0
  %v2367 = vsel %vm20, %v2268, 0
  %v2370 = vsel %vm20, %v2269, 0
  %v2373 = vsel %vm20, %v2270, 0
  %v2376 = vsel %vm20, %v2271, 0
  %v2379 = vsel %vm20, %v2272, 0
  %v2382 = vsel %vm20, %v2273, 0
  %v2385 = vsel %vm20, %v2274, 0
  %v2388 = vsel %vm20, %v2275, 0
  %v2391 = vsel %vm20, %v2276, 0
  %v2394 = vsel %vm20, %v2277, 0
  %v2397 = vsel %vm20, %v2278, 0
  %v2400 = vsel %vm20, %v2279, 0
  %v2403 = vsel %vm20, %v2280, 0
  %v2406 = vsel %vm20, %v2281, 0
  %v2409 = vsel %vm20, %v2282, 0
  %v2412 = vsel %vm20, %v2283, 0
  %v2415 = vsel %vm20, %v2284, 0
  %v2418 = vsel %vm20, %v2285, 0
  %v2421 = vsel %vm20, %v2286, 0
  %v2424 = vsel %vm20, %v2287, 0
  %v2427 = vsel %vm20, %v2288, 0
  %v2430 = vsel %vm20, %v2289, 0
  %v2433 = vsel %vm20, %v2290, 0
  %v2436 = vsel %vm20, %v2291, 0
  %v2439 = vsel %vm20, %v2292, 0
  %v2442 = vsel %vm20, %v2293, 0
  %v2445 = vsel %vm20, %v2294, 0
  %v2448 = vsel %vm20, %v2295, 0
  %v2451 = vsel %vm20, %v2296, 0
  %v2454 = vsel %vm20, %v2297, 0
  %v2457 = vsel %vm20, %v2298, 0
  %v2460 = vsel %vm20, %v2299, 0
  %v2463 = vsel %vm20, %v2300, 0
  %v2466 = vsel %vm20, %v2301, 0
  %v2469 = vsel %vm20, %v2302, 0
  %v2472 = vsel %vm20, %v2303, 0
  %v2475 = vsel %vm20, %v2304, 0
  %v2478 = vsel %vm20, %v2305, 0
  %v2481 = vsel %vm20, %v2306, 0
  %v2484 = vsel %vm20, %v2307, 0
  %v2487 = vsel %vm20, %v2308, 0
  %v2490 = vsel %vm20, %v2309, 0
  %v2493 = vsel %vm20, %v2310, 0
  %v2496 = vsel %vm20, %v2311, 0
  %v2499 = vsel %vm20, %v2312, 0
  %v2502 = vsel %vm20, %v2313, 0
  %v2505 = vsel %vm20, %v2314, 0
  %v2508 = vsel %vm20, %v2315, 0
  %2510 = vmatprep.subr.mxu0 0.0
  %2511 = vmatpush1.msra.mxu0 %v2317
  %2512 = vmatprep.subr.mxu0 0.0
  %2513 = vmatpush1.msra.mxu0 0.0
  %2514 = vmatprep.subr.mxu0 0.0
  %2515 = vmatpush1.msra.mxu0 0.0
  %2516 = vmatprep.subr.mxu0 0.0
  %2517 = vmatpush1.msra.mxu0 0.0
  %2518 = vmatprep.subr.mxu0 0.0
  %2519 = vmatpush1.msra.mxu0 0.0
  %2520 = vmatprep.subr.mxu0 0.0
  %2521 = vmatpush1.msra.mxu0 0.0
  %2522 = vmatprep.subr.mxu0 0.0
  %2523 = vmatpush1.msra.mxu0 0.0
  %2524 = vmatprep.subr.mxu0 0.0
  %2525 = vmatpush1.msra.mxu0 0.0
  %2526 = vmatprep.subr.mxu0 0.0
  %2527 = vmatpush1.msra.mxu0 0.0
  %2528 = vmatprep.subr.mxu0 0.0
  %2529 = vmatpush1.msra.mxu0 0.0
  %2530 = vmatprep.subr.mxu0 0.0
  %2531 = vmatpush1.msra.mxu0 0.0
  %2532 = vmatprep.subr.mxu0 0.0
  %2533 = vmatpush1.msra.mxu0 0.0
  %2534 = vmatprep.subr.mxu0 0.0
  %2535 = vmatpush1.msra.mxu0 0.0
  %2536 = vmatprep.subr.mxu0 0.0
  %2537 = vmatpush1.msra.mxu0 0.0
  %2538 = vmatprep.subr.mxu0 0.0
  %2539 = vmatpush1.msra.mxu0 0.0
  %2540 = vmatprep.subr.mxu0 0.0
  %2541 = vmatpush1.msra.mxu0 0.0
  %2542 = vmatprep.subr.mxu0 0.0
  %2543 = vmatpush1.msra.mxu0 0.0
  %2544 = vmatprep.subr.mxu0 0.0
  %2545 = vmatpush1.msra.mxu0 0.0
  %2546 = vmatprep.subr.mxu0 0.0
  %2547 = vmatpush1.msra.mxu0 0.0
  %2548 = vmatprep.subr.mxu0 0.0
  %2549 = vmatpush1.msra.mxu0 0.0
  %2550 = vmatprep.subr.mxu0 0.0
  %2551 = vmatpush1.msra.mxu0 0.0
  %2552 = vmatprep.subr.mxu0 0.0
  %2553 = vmatpush1.msra.mxu0 0.0
  %2554 = vmatprep.subr.mxu0 0.0
  %2555 = vmatpush1.msra.mxu0 0.0
  %2556 = vmatprep.subr.mxu0 0.0
  %2557 = vmatpush1.msra.mxu0 0.0
  %2558 = vmatprep.subr.mxu0 0.0
  %2559 = vmatpush1.msra.mxu0 0.0
  %2560 = vmatprep.subr.mxu0 0.0
  %2561 = vmatpush1.msra.mxu0 0.0
  %2562 = vmatprep.subr.mxu0 0.0
  %2563 = vmatpush1.msra.mxu0 0.0
  %2564 = vmatprep.subr.mxu0 0.0
  %2565 = vmatpush1.msra.mxu0 0.0
  %2566 = vmatprep.subr.mxu0 0.0
  %2567 = vmatpush1.msra.mxu0 0.0
  %2568 = vmatprep.subr.mxu0 0.0
  %2569 = vmatpush1.msra.mxu0 0.0
  %2570 = vmatprep.subr.mxu0 0.0
  %2571 = vmatpush1.msra.mxu0 0.0
  %2572 = vmatprep.subr.mxu0 0.0
  %2573 = vmatpush1.msra.mxu0 0.0
  %2574 = vmatprep.mubr.f32.mxu0 0.0
  %2575 = vmatmul.mubr.f32.gmra.mrb[0].mxu0 %v2319
  %v2576 = vpop.f32.mrb[0].mxu0
  %v2577 = vadd.f32 0.0, %v2576
  %v2578 = vpop.f32.mrb[0].mxu0
  %2579 = vmatprep.mubr.f32.mxu0 0.0
  %2580 = vmatmul.mubr.f32.gmra.mrb[0].mxu0 %v2322
  %v2581 = vpop.f32.mrb[0].mxu0
  %v2582 = vadd.f32 0.0, %v2581
  %v2583 = vpop.f32.mrb[0].mxu0
  %2584 = vmatprep.mubr.f32.mxu0 0.0
  %2585 = vmatmul.mubr.f32.gmra.mrb[0].mxu0 %v2325
  %v2586 = vpop.f32.mrb[0].mxu0
  %v2587 = vadd.f32 0.0, %v2586
  %v2588 = vpop.f32.mrb[0].mxu0
  %2589 = vmatprep.mubr.f32.mxu0 0.0
  %2590 = vmatmul.mubr.f32.gmra.mrb[0].mxu0 %v2328
  %v2591 = vpop.f32.mrb[0].mxu0
  %v2592 = vadd.f32 0.0, %v2591
  %v2593 = vpop.f32.mrb[0].mxu0
  %2594 = vmatprep.mubr.f32.mxu0 0.0
  %2595 = vmatmul.mubr.f32.gmra.mrb[0].mxu0 %v2331
  %v2596 = vpop.f32.mrb[0].mxu0
  %v2597 = vadd.f32 0.0, %v2596
  %v2598 = vpop.f32.mrb[0].mxu0
  %2599 = vmatprep.mubr.f32.mxu0 0.0
  %2600 = vmatmul.mubr.f32.gmra.mrb[0].mxu0 %v2334
  %v2601 = vpop.f32.mrb[0].mxu0
  %v2602 = vadd.f32 0.0, %v2601
  %v2603 = vpop.f32.mrb[0].mxu0
  %2604 = vmatprep.mubr.f32.mxu0 0.0
  %2605 = vmatmul.mubr.f32.gmra.mrb[0].mxu0 %v2337
  %v2606 = vpop.f32.mrb[0].mxu0
  %v2607 = vadd.f32 0.0, %v2606
  %v2608 = vpop.f32.mrb[0].mxu0
  %2609 = vmatprep.mubr.f32.mxu0 0.0
  %2610 = vmatmul.mubr.f32.gmra.mrb[0].mxu0 %v2340
  %v2611 = vpop.f32.mrb[0].mxu0
  %v2612 = vadd.f32 0.0, %v2611
  %v2613 = vpop.f32.mrb[0].mxu0
  %2614 = vmatprep.mubr.f32.mxu0 0.0
  %2615 = vmatmul.mubr.f32.gmra.mrb[0].mxu0 %v2343
  %v2616 = vpop.f32.mrb[0].mxu0
  %v2617 = vadd.f32 0.0, %v2616
  %v2618 = vpop.f32.mrb[0].mxu0
  %2619 = vmatprep.mubr.f32.mxu0 0.0
  %2620 = vmatmul.mubr.f32.gmra.mrb[0].mxu0 %v2346
  %v2621 = vpop.f32.mrb[0].mxu0
  %v2622 = vadd.f32 0.0, %v2621
  %v2623 = vpop.f32.mrb[0].mxu0
  %2624 = vmatprep.mubr.f32.mxu0 0.0
  %2625 = vmatmul.mubr.f32.gmra.mrb[0].mxu0 %v2349
  %v2626 = vpop.f32.mrb[0].mxu0
  %v2627 = vadd.f32 0.0, %v2626
  %v2628 = vpop.f32.mrb[0].mxu0
  %2629 = vmatprep.mubr.f32.mxu0 0.0
  %2630 = vmatmul.mubr.f32.gmra.mrb[0].mxu0 %v2352
  %v2631 = vpop.f32.mrb[0].mxu0
  %v2632 = vadd.f32 0.0, %v2631
  %v2633 = vpop.f32.mrb[0].mxu0
  %2634 = vmatprep.mubr.f32.mxu0 0.0
  %2635 = vmatmul.mubr.f32.gmra.mrb[0].mxu0 %v2355
  %v2636 = vpop.f32.mrb[0].mxu0
  %v2637 = vadd.f32 0.0, %v2636
  %v2638 = vpop.f32.mrb[0].mxu0
  %2639 = vmatprep.mubr.f32.mxu0 0.0
  %2640 = vmatmul.mubr.f32.gmra.mrb[0].mxu0 %v2358
  %v2641 = vpop.f32.mrb[0].mxu0
  %v2642 = vadd.f32 0.0, %v2641
  %v2643 = vpop.f32.mrb[0].mxu0
  %2644 = vmatprep.mubr.f32.mxu0 0.0
  %2645 = vmatmul.mubr.f32.gmra.mrb[0].mxu0 %v2361
  %v2646 = vpop.f32.mrb[0].mxu0
  %v2647 = vadd.f32 0.0, %v2646
  %v2648 = vpop.f32.mrb[0].mxu0
  %2649 = vmatprep.mubr.f32.mxu0 0.0
  %2650 = vmatmul.mubr.f32.gmra.mrb[0].mxu0 %v2364
  %v2651 = vpop.f32.mrb[0].mxu0
  %v2652 = vadd.f32 0.0, %v2651
  %v2653 = vpop.f32.mrb[0].mxu0
  %2654 = vmatprep.mubr.f32.mxu0 0.0
  %2655 = vmatmul.mubr.f32.gmra.mrb[0].mxu0 %v2367
  %v2656 = vpop.f32.mrb[0].mxu0
  %v2657 = vadd.f32 0.0, %v2656
  %v2658 = vpop.f32.mrb[0].mxu0
  %2659 = vmatprep.mubr.f32.mxu0 0.0
  %2660 = vmatmul.mubr.f32.gmra.mrb[0].mxu0 %v2370
  %v2661 = vpop.f32.mrb[0].mxu0
  %v2662 = vadd.f32 0.0, %v2661
  %v2663 = vpop.f32.mrb[0].mxu0
  %2664 = vmatprep.mubr.f32.mxu0 0.0
  %2665 = vmatmul.mubr.f32.gmra.mrb[0].mxu0 %v2373
  %v2666 = vpop.f32.mrb[0].mxu0
  %v2667 = vadd.f32 0.0, %v2666
  %v2668 = vpop.f32.mrb[0].mxu0
  %2669 = vmatprep.mubr.f32.mxu0 0.0
  %2670 = vmatmul.mubr.f32.gmra.mrb[0].mxu0 %v2376
  %v2671 = vpop.f32.mrb[0].mxu0
  %v2672 = vadd.f32 0.0, %v2671
  %v2673 = vpop.f32.mrb[0].mxu0
  %2674 = vmatprep.mubr.f32.mxu0 0.0
  %2675 = vmatmul.mubr.f32.gmra.mrb[0].mxu0 %v2379
  %v2676 = vpop.f32.mrb[0].mxu0
  %v2677 = vadd.f32 0.0, %v2676
  %v2678 = vpop.f32.mrb[0].mxu0
  %2679 = vmatprep.mubr.f32.mxu0 0.0
  %2680 = vmatmul.mubr.f32.gmra.mrb[0].mxu0 %v2382
  %v2681 = vpop.f32.mrb[0].mxu0
  %v2682 = vadd.f32 0.0, %v2681
  %v2683 = vpop.f32.mrb[0].mxu0
  %2684 = vmatprep.mubr.f32.mxu0 0.0
  %2685 = vmatmul.mubr.f32.gmra.mrb[0].mxu0 %v2385
  %v2686 = vpop.f32.mrb[0].mxu0
  %v2687 = vadd.f32 0.0, %v2686
  %v2688 = vpop.f32.mrb[0].mxu0
  %2689 = vmatprep.mubr.f32.mxu0 0.0
  %2690 = vmatmul.mubr.f32.gmra.mrb[0].mxu0 %v2388
  %v2691 = vpop.f32.mrb[0].mxu0
  %v2692 = vadd.f32 0.0, %v2691
  %v2693 = vpop.f32.mrb[0].mxu0
  %2694 = vmatprep.mubr.f32.mxu0 0.0
  %2695 = vmatmul.mubr.f32.gmra.mrb[0].mxu0 %v2391
  %v2696 = vpop.f32.mrb[0].mxu0
  %v2697 = vadd.f32 0.0, %v2696
  %v2698 = vpop.f32.mrb[0].mxu0
  %2699 = vmatprep.mubr.f32.mxu0 0.0
  %2700 = vmatmul.mubr.f32.gmra.mrb[0].mxu0 %v2394
  %v2701 = vpop.f32.mrb[0].mxu0
  %v2702 = vadd.f32 0.0, %v2701
  %v2703 = vpop.f32.mrb[0].mxu0
  %2704 = vmatprep.mubr.f32.mxu0 0.0
  %2705 = vmatmul.mubr.f32.gmra.mrb[0].mxu0 %v2397
  %v2706 = vpop.f32.mrb[0].mxu0
  %v2707 = vadd.f32 0.0, %v2706
  %v2708 = vpop.f32.mrb[0].mxu0
  %2709 = vmatprep.mubr.f32.mxu0 0.0
  %2710 = vmatmul.mubr.f32.gmra.mrb[0].mxu0 %v2400
  %v2711 = vpop.f32.mrb[0].mxu0
  %v2712 = vadd.f32 0.0, %v2711
  %v2713 = vpop.f32.mrb[0].mxu0
  %2714 = vmatprep.mubr.f32.mxu0 0.0
  %2715 = vmatmul.mubr.f32.gmra.mrb[0].mxu0 %v2403
  %v2716 = vpop.f32.mrb[0].mxu0
  %v2717 = vadd.f32 0.0, %v2716
  %v2718 = vpop.f32.mrb[0].mxu0
  %2719 = vmatprep.mubr.f32.mxu0 0.0
  %2720 = vmatmul.mubr.f32.gmra.mrb[0].mxu0 %v2406
  %v2721 = vpop.f32.mrb[0].mxu0
  %v2722 = vadd.f32 0.0, %v2721
  %v2723 = vpop.f32.mrb[0].mxu0
  %2724 = vmatprep.mubr.f32.mxu0 0.0
  %2725 = vmatmul.mubr.f32.gmra.mrb[0].mxu0 %v2409
  %v2726 = vpop.f32.mrb[0].mxu0
  %v2727 = vadd.f32 0.0, %v2726
  %v2728 = vpop.f32.mrb[0].mxu0
  %2729 = vmatprep.mubr.f32.mxu0 0.0
  %2730 = vmatmul.mubr.f32.gmra.mrb[0].mxu0 %v2412
  %v2731 = vpop.f32.mrb[0].mxu0
  %v2732 = vadd.f32 0.0, %v2731
  %v2733 = vpop.f32.mrb[0].mxu0
  %2734 = vmatprep.mubr.f32.mxu0 0.0
  %2735 = vmatmul.mubr.f32.gmra.mrb[0].mxu0 %v2415
  %v2736 = vpop.f32.mrb[0].mxu0
  %v2737 = vadd.f32 0.0, %v2736
  %v2738 = vpop.f32.mrb[0].mxu0
  %2739 = vmatprep.mubr.f32.mxu0 0.0
  %2740 = vmatmul.mubr.f32.gmra.mrb[0].mxu0 %v2418
  %v2741 = vpop.f32.mrb[0].mxu0
  %v2742 = vadd.f32 0.0, %v2741
  %v2743 = vpop.f32.mrb[0].mxu0
  %2744 = vmatprep.mubr.f32.mxu0 0.0
  %2745 = vmatmul.mubr.f32.gmra.mrb[0].mxu0 %v2421
  %v2746 = vpop.f32.mrb[0].mxu0
  %v2747 = vadd.f32 0.0, %v2746
  %v2748 = vpop.f32.mrb[0].mxu0
  %2749 = vmatprep.mubr.f32.mxu0 0.0
  %2750 = vmatmul.mubr.f32.gmra.mrb[0].mxu0 %v2424
  %v2751 = vpop.f32.mrb[0].mxu0
  %v2752 = vadd.f32 0.0, %v2751
  %v2753 = vpop.f32.mrb[0].mxu0
  %2754 = vmatprep.mubr.f32.mxu0 0.0
  %2755 = vmatmul.mubr.f32.gmra.mrb[0].mxu0 %v2427
  %v2756 = vpop.f32.mrb[0].mxu0
  %v2757 = vadd.f32 0.0, %v2756
  %v2758 = vpop.f32.mrb[0].mxu0
  %2759 = vmatprep.mubr.f32.mxu0 0.0
  %2760 = vmatmul.mubr.f32.gmra.mrb[0].mxu0 %v2430
  %v2761 = vpop.f32.mrb[0].mxu0
  %v2762 = vadd.f32 0.0, %v2761
  %v2763 = vpop.f32.mrb[0].mxu0
  %2764 = vmatprep.mubr.f32.mxu0 0.0
  %2765 = vmatmul.mubr.f32.gmra.mrb[0].mxu0 %v2433
  %v2766 = vpop.f32.mrb[0].mxu0
  %v2767 = vadd.f32 0.0, %v2766
  %v2768 = vpop.f32.mrb[0].mxu0
  %2769 = vmatprep.mubr.f32.mxu0 0.0
  %2770 = vmatmul.mubr.f32.gmra.mrb[0].mxu0 %v2436
  %v2771 = vpop.f32.mrb[0].mxu0
  %v2772 = vadd.f32 0.0, %v2771
  %v2773 = vpop.f32.mrb[0].mxu0
  %2774 = vmatprep.mubr.f32.mxu0 0.0
  %2775 = vmatmul.mubr.f32.gmra.mrb[0].mxu0 %v2439
  %v2776 = vpop.f32.mrb[0].mxu0
  %v2777 = vadd.f32 0.0, %v2776
  %v2778 = vpop.f32.mrb[0].mxu0
  %2779 = vmatprep.mubr.f32.mxu0 0.0
  %2780 = vmatmul.mubr.f32.gmra.mrb[0].mxu0 %v2442
  %v2781 = vpop.f32.mrb[0].mxu0
  %v2782 = vadd.f32 0.0, %v2781
  %v2783 = vpop.f32.mrb[0].mxu0
  %2784 = vmatprep.mubr.f32.mxu0 0.0
  %2785 = vmatmul.mubr.f32.gmra.mrb[0].mxu0 %v2445
  %v2786 = vpop.f32.mrb[0].mxu0
  %v2787 = vadd.f32 0.0, %v2786
  %v2788 = vpop.f32.mrb[0].mxu0
  %2789 = vmatprep.mubr.f32.mxu0 0.0
  %2790 = vmatmul.mubr.f32.gmra.mrb[0].mxu0 %v2448
  %v2791 = vpop.f32.mrb[0].mxu0
  %v2792 = vadd.f32 0.0, %v2791
  %v2793 = vpop.f32.mrb[0].mxu0
  %2794 = vmatprep.mubr.f32.mxu0 0.0
  %2795 = vmatmul.mubr.f32.gmra.mrb[0].mxu0 %v2451
  %v2796 = vpop.f32.mrb[0].mxu0
  %v2797 = vadd.f32 0.0, %v2796
  %v2798 = vpop.f32.mrb[0].mxu0
  %2799 = vmatprep.mubr.f32.mxu0 0.0
  %2800 = vmatmul.mubr.f32.gmra.mrb[0].mxu0 %v2454
  %v2801 = vpop.f32.mrb[0].mxu0
  %v2802 = vadd.f32 0.0, %v2801
  %v2803 = vpop.f32.mrb[0].mxu0
  %2804 = vmatprep.mubr.f32.mxu0 0.0
  %2805 = vmatmul.mubr.f32.gmra.mrb[0].mxu0 %v2457
  %v2806 = vpop.f32.mrb[0].mxu0
  %v2807 = vadd.f32 0.0, %v2806
  %v2808 = vpop.f32.mrb[0].mxu0
  %2809 = vmatprep.mubr.f32.mxu0 0.0
  %2810 = vmatmul.mubr.f32.gmra.mrb[0].mxu0 %v2460
  %v2811 = vpop.f32.mrb[0].mxu0
  %v2812 = vadd.f32 0.0, %v2811
  %v2813 = vpop.f32.mrb[0].mxu0
  %2814 = vmatprep.mubr.f32.mxu0 0.0
  %2815 = vmatmul.mubr.f32.gmra.mrb[0].mxu0 %v2463
  %v2816 = vpop.f32.mrb[0].mxu0
  %v2817 = vadd.f32 0.0, %v2816
  %v2818 = vpop.f32.mrb[0].mxu0
  %2819 = vmatprep.mubr.f32.mxu0 0.0
  %2820 = vmatmul.mubr.f32.gmra.mrb[0].mxu0 %v2466
  %v2821 = vpop.f32.mrb[0].mxu0
  %v2822 = vadd.f32 0.0, %v2821
  %v2823 = vpop.f32.mrb[0].mxu0
  %2824 = vmatprep.mubr.f32.mxu0 0.0
  %2825 = vmatmul.mubr.f32.gmra.mrb[0].mxu0 %v2469
  %v2826 = vpop.f32.mrb[0].mxu0
  %v2827 = vadd.f32 0.0, %v2826
  %v2828 = vpop.f32.mrb[0].mxu0
  %2829 = vmatprep.mubr.f32.mxu0 0.0
  %2830 = vmatmul.mubr.f32.gmra.mrb[0].mxu0 %v2472
  %v2831 = vpop.f32.mrb[0].mxu0
  %v2832 = vadd.f32 0.0, %v2831
  %v2833 = vpop.f32.mrb[0].mxu0
  %2834 = vmatprep.mubr.f32.mxu0 0.0
  %2835 = vmatmul.mubr.f32.gmra.mrb[0].mxu0 %v2475
  %v2836 = vpop.f32.mrb[0].mxu0
  %v2837 = vadd.f32 0.0, %v2836
  %v2838 = vpop.f32.mrb[0].mxu0
  %2839 = vmatprep.mubr.f32.mxu0 0.0
  %2840 = vmatmul.mubr.f32.gmra.mrb[0].mxu0 %v2478
  %v2841 = vpop.f32.mrb[0].mxu0
  %v2842 = vadd.f32 0.0, %v2841
  %v2843 = vpop.f32.mrb[0].mxu0
  %2844 = vmatprep.mubr.f32.mxu0 0.0
  %2845 = vmatmul.mubr.f32.gmra.mrb[0].mxu0 %v2481
  %v2846 = vpop.f32.mrb[0].mxu0
  %v2847 = vadd.f32 0.0, %v2846
  %v2848 = vpop.f32.mrb[0].mxu0
  %2849 = vmatprep.mubr.f32.mxu0 0.0
  %2850 = vmatmul.mubr.f32.gmra.mrb[0].mxu0 %v2484
  %v2851 = vpop.f32.mrb[0].mxu0
  %v2852 = vadd.f32 0.0, %v2851
  %v2853 = vpop.f32.mrb[0].mxu0
  %2854 = vmatprep.mubr.f32.mxu0 0.0
  %2855 = vmatmul.mubr.f32.gmra.mrb[0].mxu0 %v2487
  %v2856 = vpop.f32.mrb[0].mxu0
  %v2857 = vadd.f32 0.0, %v2856
  %v2858 = vpop.f32.mrb[0].mxu0
  %2859 = vmatprep.mubr.f32.mxu0 0.0
  %2860 = vmatmul.mubr.f32.gmra.mrb[0].mxu0 %v2490
  %v2861 = vpop.f32.mrb[0].mxu0
  %v2862 = vadd.f32 0.0, %v2861
  %v2863 = vpop.f32.mrb[0].mxu0
  %2864 = vmatprep.mubr.f32.mxu0 0.0
  %2865 = vmatmul.mubr.f32.gmra.mrb[0].mxu0 %v2493
  %v2866 = vpop.f32.mrb[0].mxu0
  %v2867 = vadd.f32 0.0, %v2866
  %v2868 = vpop.f32.mrb[0].mxu0
  %2869 = vmatprep.mubr.f32.mxu0 0.0
  %2870 = vmatmul.mubr.f32.gmra.mrb[0].mxu0 %v2496
  %v2871 = vpop.f32.mrb[0].mxu0
  %v2872 = vadd.f32 0.0, %v2871
  %v2873 = vpop.f32.mrb[0].mxu0
  %2874 = vmatprep.mubr.f32.mxu0 0.0
  %2875 = vmatmul.mubr.f32.gmra.mrb[0].mxu0 %v2499
  %v2876 = vpop.f32.mrb[0].mxu0
  %v2877 = vadd.f32 0.0, %v2876
  %v2878 = vpop.f32.mrb[0].mxu0
  %2879 = vmatprep.mubr.f32.mxu0 0.0
  %2880 = vmatmul.mubr.f32.gmra.mrb[0].mxu0 %v2502
  %v2881 = vpop.f32.mrb[0].mxu0
  %v2882 = vadd.f32 0.0, %v2881
  %v2883 = vpop.f32.mrb[0].mxu0
  %2884 = vmatprep.mubr.f32.mxu0 0.0
  %2885 = vmatmul.mubr.f32.gmra.mrb[0].mxu0 %v2505
  %v2886 = vpop.f32.mrb[0].mxu0
  %v2887 = vadd.f32 0.0, %v2886
  %v2888 = vpop.f32.mrb[0].mxu0
  %2889 = vmatprep.mubr.f32.mxu0 0.0
  %2890 = vmatmul.mubr.f32.gmra.mrb[0].mxu0 %v2508
  %v2891 = vpop.f32.mrb[0].mxu0
  %v2892 = vadd.f32 0.0, %v2891
  %v2893 = vpop.f32.mrb[0].mxu0
  %2894 = vdwg.mxu0
  %v2895 = vadd.f32 %v2188, %v2577
  %v2896 = vadd.f32 %v2189, %v2582
  %v2897 = vadd.f32 %v2190, %v2587
  %v2898 = vadd.f32 %v2191, %v2592
  %v2899 = vadd.f32 %v2192, %v2597
  %v2900 = vadd.f32 %v2193, %v2602
  %v2901 = vadd.f32 %v2194, %v2607
  %v2902 = vadd.f32 %v2195, %v2612
  %v2903 = vadd.f32 %v2196, %v2617
  %v2904 = vadd.f32 %v2197, %v2622
  %v2905 = vadd.f32 %v2198, %v2627
  %v2906 = vadd.f32 %v2199, %v2632
  %v2907 = vadd.f32 %v2200, %v2637
  %v2908 = vadd.f32 %v2201, %v2642
  %v2909 = vadd.f32 %v2202, %v2647
  %v2910 = vadd.f32 %v2203, %v2652
  %v2911 = vadd.f32 %v2204, %v2657
  %v2912 = vadd.f32 %v2205, %v2662
  %v2913 = vadd.f32 %v2206, %v2667
  %v2914 = vadd.f32 %v2207, %v2672
  %v2915 = vadd.f32 %v2208, %v2677
  %v2916 = vadd.f32 %v2209, %v2682
  %v2917 = vadd.f32 %v2210, %v2687
  %v2918 = vadd.f32 %v2211, %v2692
  %v2919 = vadd.f32 %v2212, %v2697
  %v2920 = vadd.f32 %v2213, %v2702
  %v2921 = vadd.f32 %v2214, %v2707
  %v2922 = vadd.f32 %v2215, %v2712
  %v2923 = vadd.f32 %v2216, %v2717
  %v2924 = vadd.f32 %v2217, %v2722
  %v2925 = vadd.f32 %v2218, %v2727
  %v2926 = vadd.f32 %v2219, %v2732
  %v2927 = vadd.f32 %v2220, %v2737
  %v2928 = vadd.f32 %v2221, %v2742
  %v2929 = vadd.f32 %v2222, %v2747
  %v2930 = vadd.f32 %v2223, %v2752
  %v2931 = vadd.f32 %v2224, %v2757
  %v2932 = vadd.f32 %v2225, %v2762
  %v2933 = vadd.f32 %v2226, %v2767
  %v2934 = vadd.f32 %v2227, %v2772
  %v2935 = vadd.f32 %v2228, %v2777
  %v2936 = vadd.f32 %v2229, %v2782
  %v2937 = vadd.f32 %v2230, %v2787
  %v2938 = vadd.f32 %v2231, %v2792
  %v2939 = vadd.f32 %v2232, %v2797
  %v2940 = vadd.f32 %v2233, %v2802
  %v2941 = vadd.f32 %v2234, %v2807
  %v2942 = vadd.f32 %v2235, %v2812
  %v2943 = vadd.f32 %v2236, %v2817
  %v2944 = vadd.f32 %v2237, %v2822
  %v2945 = vadd.f32 %v2238, %v2827
  %v2946 = vadd.f32 %v2239, %v2832
  %v2947 = vadd.f32 %v2240, %v2837
  %v2948 = vadd.f32 %v2241, %v2842
  %v2949 = vadd.f32 %v2242, %v2847
  %v2950 = vadd.f32 %v2243, %v2852
  %v2951 = vadd.f32 %v2244, %v2857
  %v2952 = vadd.f32 %v2245, %v2862
  %v2953 = vadd.f32 %v2246, %v2867
  %v2954 = vadd.f32 %v2247, %v2872
  %v2955 = vadd.f32 %v2248, %v2877
  %v2956 = vadd.f32 %v2249, %v2882
  %v2957 = vadd.f32 %v2250, %v2887
  %v2958 = vadd.f32 %v2251, %v2892
  %v2959 = vld [vmem:[%s194 + $0x1] sm:$0xff]
  %v2960 = vld [vmem:[%s194 + $0x9] sm:$0xff]
  %v2961 = vld [vmem:[%s194 + $0x19] sm:$0xff]
  %v2962 = vld [vmem:[%s194 + $0x21] sm:$0xff]
  %v2963 = vld [vmem:[%s194 + $0x31] sm:$0xff]
  %v2964 = vld [vmem:[%s194 + $0x39] sm:$0xff]
  %v2965 = vld [vmem:[%s194 + $0x49] sm:$0xff]
  %v2966 = vld [vmem:[%s194 + $0x51] sm:$0xff]
  %v2967 = vld [vmem:[%s194 + $0x61] sm:$0xff]
  %v2968 = vld [vmem:[%s194 + $0x69] sm:$0xff]
  %v2969 = vld [vmem:[%s194 + $0x79] sm:$0xff]
  %v2970 = vld [vmem:[%s194 + $0x81] sm:$0xff]
  %v2971 = vld [vmem:[%s194 + $0x91] sm:$0xff]
  %v2972 = vld [vmem:[%s194 + $0x99] sm:$0xff]
  %v2973 = vld [vmem:[%s194 + $0xa9] sm:$0xff]
  %v2974 = vld [vmem:[%s194 + $0xb1] sm:$0xff]
  %v2975 = vld [vmem:[%s194 + $0xc1] sm:$0xff]
  %v2976 = vld [vmem:[%s194 + $0xc9] sm:$0xff]
  %v2977 = vld [vmem:[%s194 + $0xd9] sm:$0xff]
  %v2978 = vld [vmem:[%s194 + $0xe1] sm:$0xff]
  %v2979 = vld [vmem:[%s194 + $0xf1] sm:$0xff]
  %v2980 = vld [vmem:[%s194 + $0xf9] sm:$0xff]
  %v2981 = vld [vmem:[%s194 + $0x109] sm:$0xff]
  %v2982 = vld [vmem:[%s194 + $0x111] sm:$0xff]
  %v2983 = vld [vmem:[%s194 + $0x121] sm:$0xff]
  %v2984 = vld [vmem:[%s194 + $0x129] sm:$0xff]
  %v2985 = vld [vmem:[%s194 + $0x139] sm:$0xff]
  %v2986 = vld [vmem:[%s194 + $0x141] sm:$0xff]
  %v2987 = vld [vmem:[%s194 + $0x151] sm:$0xff]
  %v2988 = vld [vmem:[%s194 + $0x159] sm:$0xff]
  %v2989 = vld [vmem:[%s194 + $0x169] sm:$0xff]
  %v2990 = vld [vmem:[%s194 + $0x171] sm:$0xff]
  %v2991 = vld [vmem:[%s194 + $0x1b1] sm:$0xff]
  %v2992 = vld [vmem:[%s194 + $0x1b9] sm:$0xff]
  %v2993 = vld [vmem:[%s194 + $0x1c9] sm:$0xff]
  %v2994 = vld [vmem:[%s194 + $0x1d1] sm:$0xff]
  %v2995 = vld [vmem:[%s194 + $0x1e1] sm:$0xff]
  %v2996 = vld [vmem:[%s194 + $0x1e9] sm:$0xff]
  %v2997 = vld [vmem:[%s194 + $0x1f9] sm:$0xff]
  %v2998 = vld [vmem:[%s194 + $0x201] sm:$0xff]
  %v2999 = vld [vmem:[%s194 + $0x211] sm:$0xff]
  %v3000 = vld [vmem:[%s194 + $0x219] sm:$0xff]
  %v3001 = vld [vmem:[%s194 + $0x229] sm:$0xff]
  %v3002 = vld [vmem:[%s194 + $0x231] sm:$0xff]
  %v3003 = vld [vmem:[%s194 + $0x241] sm:$0xff]
  %v3004 = vld [vmem:[%s194 + $0x249] sm:$0xff]
  %v3005 = vld [vmem:[%s194 + $0x259] sm:$0xff]
  %v3006 = vld [vmem:[%s194 + $0x261] sm:$0xff]
  %v3007 = vld [vmem:[%s194 + $0x271] sm:$0xff]
  %v3008 = vld [vmem:[%s194 + $0x279] sm:$0xff]
  %v3009 = vld [vmem:[%s194 + $0x289] sm:$0xff]
  %v3010 = vld [vmem:[%s194 + $0x291] sm:$0xff]
  %v3011 = vld [vmem:[%s194 + $0x2a1] sm:$0xff]
  %v3012 = vld [vmem:[%s194 + $0x2a9] sm:$0xff]
  %v3013 = vld [vmem:[%s194 + $0x2b9] sm:$0xff]
  %v3014 = vld [vmem:[%s194 + $0x2c1] sm:$0xff]
  %v3015 = vld [vmem:[%s194 + $0x2d1] sm:$0xff]
  %v3016 = vld [vmem:[%s194 + $0x2d9] sm:$0xff]
  %v3017 = vld [vmem:[%s194 + $0x2e9] sm:$0xff]
  %v3018 = vld [vmem:[%s194 + $0x2f1] sm:$0xff]
  %v3019 = vld [vmem:[%s194 + $0x301] sm:$0xff]
  %v3020 = vld [vmem:[%s194 + $0x309] sm:$0xff]
  %v3021 = vld [vmem:[%s194 + $0x319] sm:$0xff]
  %v3022 = vld [vmem:[%s194 + $0x321] sm:$0xff]
  %s3023 = scalar_lea.vmem %s1, 32
  %v3024 = vld [vmem:[%s3023] sm:$0xff]
  %v3026 = vsel %vm20, %v2959, 0
  %v3029 = vsel %vm20, %v2960, 0
  %v3032 = vsel %vm20, %v2961, 0
  %v3035 = vsel %vm20, %v2962, 0
  %v3038 = vsel %vm20, %v2963, 0
  %v3041 = vsel %vm20, %v2964, 0
  %v3044 = vsel %vm20, %v2965, 0
  %v3047 = vsel %vm20, %v2966, 0
  %v3050 = vsel %vm20, %v2967, 0
  %v3053 = vsel %vm20, %v2968, 0
  %v3056 = vsel %vm20, %v2969, 0
  %v3059 = vsel %vm20, %v2970, 0
  %v3062 = vsel %vm20, %v2971, 0
  %v3065 = vsel %vm20, %v2972, 0
  %v3068 = vsel %vm20, %v2973, 0
  %v3071 = vsel %vm20, %v2974, 0
  %v3074 = vsel %vm20, %v2975, 0
  %v3077 = vsel %vm20, %v2976, 0
  %v3080 = vsel %vm20, %v2977, 0
  %v3083 = vsel %vm20, %v2978, 0
  %v3086 = vsel %vm20, %v2979, 0
  %v3089 = vsel %vm20, %v2980, 0
  %v3092 = vsel %vm20, %v2981, 0
  %v3095 = vsel %vm20, %v2982, 0
  %v3098 = vsel %vm20, %v2983, 0
  %v3101 = vsel %vm20, %v2984, 0
  %v3104 = vsel %vm20, %v2985, 0
  %v3107 = vsel %vm20, %v2986, 0
  %v3110 = vsel %vm20, %v2987, 0
  %v3113 = vsel %vm20, %v2988, 0
  %v3116 = vsel %vm20, %v2989, 0
  %v3119 = vsel %vm20, %v2990, 0
  %v3122 = vsel %vm20, %v2991, 0
  %v3125 = vsel %vm20, %v2992, 0
  %v3128 = vsel %vm20, %v2993, 0
  %v3131 = vsel %vm20, %v2994, 0
  %v3134 = vsel %vm20, %v2995, 0
  %v3137 = vsel %vm20, %v2996, 0
  %v3140 = vsel %vm20, %v2997, 0
  %v3143 = vsel %vm20, %v2998, 0
  %v3146 = vsel %vm20, %v2999, 0
  %v3149 = vsel %vm20, %v3000, 0
  %v3152 = vsel %vm20, %v3001, 0
  %v3155 = vsel %vm20, %v3002, 0
  %v3158 = vsel %vm20, %v3003, 0
  %v3161 = vsel %vm20, %v3004, 0
  %v3164 = vsel %vm20, %v3005, 0
  %v3167 = vsel %vm20, %v3006, 0
  %v3170 = vsel %vm20, %v3007, 0
  %v3173 = vsel %vm20, %v3008, 0
  %v3176 = vsel %vm20, %v3009, 0
  %v3179 = vsel %vm20, %v3010, 0
  %v3182 = vsel %vm20, %v3011, 0
  %v3185 = vsel %vm20, %v3012, 0
  %v3188 = vsel %vm20, %v3013, 0
  %v3191 = vsel %vm20, %v3014, 0
  %v3194 = vsel %vm20, %v3015, 0
  %v3197 = vsel %vm20, %v3016, 0
  %v3200 = vsel %vm20, %v3017, 0
  %v3203 = vsel %vm20, %v3018, 0
  %v3206 = vsel %vm20, %v3019, 0
  %v3209 = vsel %vm20, %v3020, 0
  %v3212 = vsel %vm20, %v3021, 0
  %v3215 = vsel %vm20, %v3022, 0
  %3217 = vmatprep.subr.mxu0 0.0
  %3218 = vmatpush1.msra.mxu0 %v3024
  %3219 = vmatprep.subr.mxu0 0.0
  %3220 = vmatpush1.msra.mxu0 0.0
  %3221 = vmatprep.subr.mxu0 0.0
  %3222 = vmatpush1.msra.mxu0 0.0
  %3223 = vmatprep.subr.mxu0 0.0
  %3224 = vmatpush1.msra.mxu0 0.0
  %3225 = vmatprep.subr.mxu0 0.0
  %3226 = vmatpush1.msra.mxu0 0.0
  %3227 = vmatprep.subr.mxu0 0.0
  %3228 = vmatpush1.msra.mxu0 0.0
  %3229 = vmatprep.subr.mxu0 0.0
  %3230 = vmatpush1.msra.mxu0 0.0
  %3231 = vmatprep.subr.mxu0 0.0
  %3232 = vmatpush1.msra.mxu0 0.0
  %3233 = vmatprep.subr.mxu0 0.0
  %3234 = vmatpush1.msra.mxu0 0.0
  %3235 = vmatprep.subr.mxu0 0.0
  %3236 = vmatpush1.msra.mxu0 0.0
  %3237 = vmatprep.subr.mxu0 0.0
  %3238 = vmatpush1.msra.mxu0 0.0
  %3239 = vmatprep.subr.mxu0 0.0
  %3240 = vmatpush1.msra.mxu0 0.0
  %3241 = vmatprep.subr.mxu0 0.0
  %3242 = vmatpush1.msra.mxu0 0.0
  %3243 = vmatprep.subr.mxu0 0.0
  %3244 = vmatpush1.msra.mxu0 0.0
  %3245 = vmatprep.subr.mxu0 0.0
  %3246 = vmatpush1.msra.mxu0 0.0
  %3247 = vmatprep.subr.mxu0 0.0
  %3248 = vmatpush1.msra.mxu0 0.0
  %3249 = vmatprep.subr.mxu0 0.0
  %3250 = vmatpush1.msra.mxu0 0.0
  %3251 = vmatprep.subr.mxu0 0.0
  %3252 = vmatpush1.msra.mxu0 0.0
  %3253 = vmatprep.subr.mxu0 0.0
  %3254 = vmatpush1.msra.mxu0 0.0
  %3255 = vmatprep.subr.mxu0 0.0
  %3256 = vmatpush1.msra.mxu0 0.0
  %3257 = vmatprep.subr.mxu0 0.0
  %3258 = vmatpush1.msra.mxu0 0.0
  %3259 = vmatprep.subr.mxu0 0.0
  %3260 = vmatpush1.msra.mxu0 0.0
  %3261 = vmatprep.subr.mxu0 0.0
  %3262 = vmatpush1.msra.mxu0 0.0
  %3263 = vmatprep.subr.mxu0 0.0
  %3264 = vmatpush1.msra.mxu0 0.0
  %3265 = vmatprep.subr.mxu0 0.0
  %3266 = vmatpush1.msra.mxu0 0.0
  %3267 = vmatprep.subr.mxu0 0.0
  %3268 = vmatpush1.msra.mxu0 0.0
  %3269 = vmatprep.subr.mxu0 0.0
  %3270 = vmatpush1.msra.mxu0 0.0
  %3271 = vmatprep.subr.mxu0 0.0
  %3272 = vmatpush1.msra.mxu0 0.0
  %3273 = vmatprep.subr.mxu0 0.0
  %3274 = vmatpush1.msra.mxu0 0.0
  %3275 = vmatprep.subr.mxu0 0.0
  %3276 = vmatpush1.msra.mxu0 0.0
  %3277 = vmatprep.subr.mxu0 0.0
  %3278 = vmatpush1.msra.mxu0 0.0
  %3279 = vmatprep.subr.mxu0 0.0
  %3280 = vmatpush1.msra.mxu0 0.0
  %3281 = vmatprep.mubr.f32.mxu0 0.0
  %3282 = vmatmul.mubr.f32.gmra.mrb[0].mxu0 %v3026
  %v3283 = vpop.f32.mrb[0].mxu0
  %v3284 = vadd.f32 0.0, %v3283
  %v3285 = vpop.f32.mrb[0].mxu0
  %3286 = vmatprep.mubr.f32.mxu0 0.0
  %3287 = vmatmul.mubr.f32.gmra.mrb[0].mxu0 %v3029
  %v3288 = vpop.f32.mrb[0].mxu0
  %v3289 = vadd.f32 0.0, %v3288
  %v3290 = vpop.f32.mrb[0].mxu0
  %3291 = vmatprep.mubr.f32.mxu0 0.0
  %3292 = vmatmul.mubr.f32.gmra.mrb[0].mxu0 %v3032
  %v3293 = vpop.f32.mrb[0].mxu0
  %v3294 = vadd.f32 0.0, %v3293
  %v3295 = vpop.f32.mrb[0].mxu0
  %3296 = vmatprep.mubr.f32.mxu0 0.0
  %3297 = vmatmul.mubr.f32.gmra.mrb[0].mxu0 %v3035
  %v3298 = vpop.f32.mrb[0].mxu0
  %v3299 = vadd.f32 0.0, %v3298
  %v3300 = vpop.f32.mrb[0].mxu0
  %3301 = vmatprep.mubr.f32.mxu0 0.0
  %3302 = vmatmul.mubr.f32.gmra.mrb[0].mxu0 %v3038
  %v3303 = vpop.f32.mrb[0].mxu0
  %v3304 = vadd.f32 0.0, %v3303
  %v3305 = vpop.f32.mrb[0].mxu0
  %3306 = vmatprep.mubr.f32.mxu0 0.0
  %3307 = vmatmul.mubr.f32.gmra.mrb[0].mxu0 %v3041
  %v3308 = vpop.f32.mrb[0].mxu0
  %v3309 = vadd.f32 0.0, %v3308
  %v3310 = vpop.f32.mrb[0].mxu0
  %3311 = vmatprep.mubr.f32.mxu0 0.0
  %3312 = vmatmul.mubr.f32.gmra.mrb[0].mxu0 %v3044
  %v3313 = vpop.f32.mrb[0].mxu0
  %v3314 = vadd.f32 0.0, %v3313
  %v3315 = vpop.f32.mrb[0].mxu0
  %3316 = vmatprep.mubr.f32.mxu0 0.0
  %3317 = vmatmul.mubr.f32.gmra.mrb[0].mxu0 %v3047
  %v3318 = vpop.f32.mrb[0].mxu0
  %v3319 = vadd.f32 0.0, %v3318
  %v3320 = vpop.f32.mrb[0].mxu0
  %3321 = vmatprep.mubr.f32.mxu0 0.0
  %3322 = vmatmul.mubr.f32.gmra.mrb[0].mxu0 %v3050
  %v3323 = vpop.f32.mrb[0].mxu0
  %v3324 = vadd.f32 0.0, %v3323
  %v3325 = vpop.f32.mrb[0].mxu0
  %3326 = vmatprep.mubr.f32.mxu0 0.0
  %3327 = vmatmul.mubr.f32.gmra.mrb[0].mxu0 %v3053
  %v3328 = vpop.f32.mrb[0].mxu0
  %v3329 = vadd.f32 0.0, %v3328
  %v3330 = vpop.f32.mrb[0].mxu0
  %3331 = vmatprep.mubr.f32.mxu0 0.0
  %3332 = vmatmul.mubr.f32.gmra.mrb[0].mxu0 %v3056
  %v3333 = vpop.f32.mrb[0].mxu0
  %v3334 = vadd.f32 0.0, %v3333
  %v3335 = vpop.f32.mrb[0].mxu0
  %3336 = vmatprep.mubr.f32.mxu0 0.0
  %3337 = vmatmul.mubr.f32.gmra.mrb[0].mxu0 %v3059
  %v3338 = vpop.f32.mrb[0].mxu0
  %v3339 = vadd.f32 0.0, %v3338
  %v3340 = vpop.f32.mrb[0].mxu0
  %3341 = vmatprep.mubr.f32.mxu0 0.0
  %3342 = vmatmul.mubr.f32.gmra.mrb[0].mxu0 %v3062
  %v3343 = vpop.f32.mrb[0].mxu0
  %v3344 = vadd.f32 0.0, %v3343
  %v3345 = vpop.f32.mrb[0].mxu0
  %3346 = vmatprep.mubr.f32.mxu0 0.0
  %3347 = vmatmul.mubr.f32.gmra.mrb[0].mxu0 %v3065
  %v3348 = vpop.f32.mrb[0].mxu0
  %v3349 = vadd.f32 0.0, %v3348
  %v3350 = vpop.f32.mrb[0].mxu0
  %3351 = vmatprep.mubr.f32.mxu0 0.0
  %3352 = vmatmul.mubr.f32.gmra.mrb[0].mxu0 %v3068
  %v3353 = vpop.f32.mrb[0].mxu0
  %v3354 = vadd.f32 0.0, %v3353
  %v3355 = vpop.f32.mrb[0].mxu0
  %3356 = vmatprep.mubr.f32.mxu0 0.0
  %3357 = vmatmul.mubr.f32.gmra.mrb[0].mxu0 %v3071
  %v3358 = vpop.f32.mrb[0].mxu0
  %v3359 = vadd.f32 0.0, %v3358
  %v3360 = vpop.f32.mrb[0].mxu0
  %3361 = vmatprep.mubr.f32.mxu0 0.0
  %3362 = vmatmul.mubr.f32.gmra.mrb[0].mxu0 %v3074
  %v3363 = vpop.f32.mrb[0].mxu0
  %v3364 = vadd.f32 0.0, %v3363
  %v3365 = vpop.f32.mrb[0].mxu0
  %3366 = vmatprep.mubr.f32.mxu0 0.0
  %3367 = vmatmul.mubr.f32.gmra.mrb[0].mxu0 %v3077
  %v3368 = vpop.f32.mrb[0].mxu0
  %v3369 = vadd.f32 0.0, %v3368
  %v3370 = vpop.f32.mrb[0].mxu0
  %3371 = vmatprep.mubr.f32.mxu0 0.0
  %3372 = vmatmul.mubr.f32.gmra.mrb[0].mxu0 %v3080
  %v3373 = vpop.f32.mrb[0].mxu0
  %v3374 = vadd.f32 0.0, %v3373
  %v3375 = vpop.f32.mrb[0].mxu0
  %3376 = vmatprep.mubr.f32.mxu0 0.0
  %3377 = vmatmul.mubr.f32.gmra.mrb[0].mxu0 %v3083
  %v3378 = vpop.f32.mrb[0].mxu0
  %v3379 = vadd.f32 0.0, %v3378
  %v3380 = vpop.f32.mrb[0].mxu0
  %3381 = vmatprep.mubr.f32.mxu0 0.0
  %3382 = vmatmul.mubr.f32.gmra.mrb[0].mxu0 %v3086
  %v3383 = vpop.f32.mrb[0].mxu0
  %v3384 = vadd.f32 0.0, %v3383
  %v3385 = vpop.f32.mrb[0].mxu0
  %3386 = vmatprep.mubr.f32.mxu0 0.0
  %3387 = vmatmul.mubr.f32.gmra.mrb[0].mxu0 %v3089
  %v3388 = vpop.f32.mrb[0].mxu0
  %v3389 = vadd.f32 0.0, %v3388
  %v3390 = vpop.f32.mrb[0].mxu0
  %3391 = vmatprep.mubr.f32.mxu0 0.0
  %3392 = vmatmul.mubr.f32.gmra.mrb[0].mxu0 %v3092
  %v3393 = vpop.f32.mrb[0].mxu0
  %v3394 = vadd.f32 0.0, %v3393
  %v3395 = vpop.f32.mrb[0].mxu0
  %3396 = vmatprep.mubr.f32.mxu0 0.0
  %3397 = vmatmul.mubr.f32.gmra.mrb[0].mxu0 %v3095
  %v3398 = vpop.f32.mrb[0].mxu0
  %v3399 = vadd.f32 0.0, %v3398
  %v3400 = vpop.f32.mrb[0].mxu0
  %3401 = vmatprep.mubr.f32.mxu0 0.0
  %3402 = vmatmul.mubr.f32.gmra.mrb[0].mxu0 %v3098
  %v3403 = vpop.f32.mrb[0].mxu0
  %v3404 = vadd.f32 0.0, %v3403
  %v3405 = vpop.f32.mrb[0].mxu0
  %3406 = vmatprep.mubr.f32.mxu0 0.0
  %3407 = vmatmul.mubr.f32.gmra.mrb[0].mxu0 %v3101
  %v3408 = vpop.f32.mrb[0].mxu0
  %v3409 = vadd.f32 0.0, %v3408
  %v3410 = vpop.f32.mrb[0].mxu0
  %3411 = vmatprep.mubr.f32.mxu0 0.0
  %3412 = vmatmul.mubr.f32.gmra.mrb[0].mxu0 %v3104
  %v3413 = vpop.f32.mrb[0].mxu0
  %v3414 = vadd.f32 0.0, %v3413
  %v3415 = vpop.f32.mrb[0].mxu0
  %3416 = vmatprep.mubr.f32.mxu0 0.0
  %3417 = vmatmul.mubr.f32.gmra.mrb[0].mxu0 %v3107
  %v3418 = vpop.f32.mrb[0].mxu0
  %v3419 = vadd.f32 0.0, %v3418
  %v3420 = vpop.f32.mrb[0].mxu0
  %3421 = vmatprep.mubr.f32.mxu0 0.0
  %3422 = vmatmul.mubr.f32.gmra.mrb[0].mxu0 %v3110
  %v3423 = vpop.f32.mrb[0].mxu0
  %v3424 = vadd.f32 0.0, %v3423
  %v3425 = vpop.f32.mrb[0].mxu0
  %3426 = vmatprep.mubr.f32.mxu0 0.0
  %3427 = vmatmul.mubr.f32.gmra.mrb[0].mxu0 %v3113
  %v3428 = vpop.f32.mrb[0].mxu0
  %v3429 = vadd.f32 0.0, %v3428
  %v3430 = vpop.f32.mrb[0].mxu0
  %3431 = vmatprep.mubr.f32.mxu0 0.0
  %3432 = vmatmul.mubr.f32.gmra.mrb[0].mxu0 %v3116
  %v3433 = vpop.f32.mrb[0].mxu0
  %v3434 = vadd.f32 0.0, %v3433
  %v3435 = vpop.f32.mrb[0].mxu0
  %3436 = vmatprep.mubr.f32.mxu0 0.0
  %3437 = vmatmul.mubr.f32.gmra.mrb[0].mxu0 %v3119
  %v3438 = vpop.f32.mrb[0].mxu0
  %v3439 = vadd.f32 0.0, %v3438
  %v3440 = vpop.f32.mrb[0].mxu0
  %3441 = vmatprep.mubr.f32.mxu0 0.0
  %3442 = vmatmul.mubr.f32.gmra.mrb[0].mxu0 %v3122
  %v3443 = vpop.f32.mrb[0].mxu0
  %v3444 = vadd.f32 0.0, %v3443
  %v3445 = vpop.f32.mrb[0].mxu0
  %3446 = vmatprep.mubr.f32.mxu0 0.0
  %3447 = vmatmul.mubr.f32.gmra.mrb[0].mxu0 %v3125
  %v3448 = vpop.f32.mrb[0].mxu0
  %v3449 = vadd.f32 0.0, %v3448
  %v3450 = vpop.f32.mrb[0].mxu0
  %3451 = vmatprep.mubr.f32.mxu0 0.0
  %3452 = vmatmul.mubr.f32.gmra.mrb[0].mxu0 %v3128
  %v3453 = vpop.f32.mrb[0].mxu0
  %v3454 = vadd.f32 0.0, %v3453
  %v3455 = vpop.f32.mrb[0].mxu0
  %3456 = vmatprep.mubr.f32.mxu0 0.0
  %3457 = vmatmul.mubr.f32.gmra.mrb[0].mxu0 %v3131
  %v3458 = vpop.f32.mrb[0].mxu0
  %v3459 = vadd.f32 0.0, %v3458
  %v3460 = vpop.f32.mrb[0].mxu0
  %3461 = vmatprep.mubr.f32.mxu0 0.0
  %3462 = vmatmul.mubr.f32.gmra.mrb[0].mxu0 %v3134
  %v3463 = vpop.f32.mrb[0].mxu0
  %v3464 = vadd.f32 0.0, %v3463
  %v3465 = vpop.f32.mrb[0].mxu0
  %3466 = vmatprep.mubr.f32.mxu0 0.0
  %3467 = vmatmul.mubr.f32.gmra.mrb[0].mxu0 %v3137
  %v3468 = vpop.f32.mrb[0].mxu0
  %v3469 = vadd.f32 0.0, %v3468
  %v3470 = vpop.f32.mrb[0].mxu0
  %3471 = vmatprep.mubr.f32.mxu0 0.0
  %3472 = vmatmul.mubr.f32.gmra.mrb[0].mxu0 %v3140
  %v3473 = vpop.f32.mrb[0].mxu0
  %v3474 = vadd.f32 0.0, %v3473
  %v3475 = vpop.f32.mrb[0].mxu0
  %3476 = vmatprep.mubr.f32.mxu0 0.0
  %3477 = vmatmul.mubr.f32.gmra.mrb[0].mxu0 %v3143
  %v3478 = vpop.f32.mrb[0].mxu0
  %v3479 = vadd.f32 0.0, %v3478
  %v3480 = vpop.f32.mrb[0].mxu0
  %3481 = vmatprep.mubr.f32.mxu0 0.0
  %3482 = vmatmul.mubr.f32.gmra.mrb[0].mxu0 %v3146
  %v3483 = vpop.f32.mrb[0].mxu0
  %v3484 = vadd.f32 0.0, %v3483
  %v3485 = vpop.f32.mrb[0].mxu0
  %3486 = vmatprep.mubr.f32.mxu0 0.0
  %3487 = vmatmul.mubr.f32.gmra.mrb[0].mxu0 %v3149
  %v3488 = vpop.f32.mrb[0].mxu0
  %v3489 = vadd.f32 0.0, %v3488
  %v3490 = vpop.f32.mrb[0].mxu0
  %3491 = vmatprep.mubr.f32.mxu0 0.0
  %3492 = vmatmul.mubr.f32.gmra.mrb[0].mxu0 %v3152
  %v3493 = vpop.f32.mrb[0].mxu0
  %v3494 = vadd.f32 0.0, %v3493
  %v3495 = vpop.f32.mrb[0].mxu0
  %3496 = vmatprep.mubr.f32.mxu0 0.0
  %3497 = vmatmul.mubr.f32.gmra.mrb[0].mxu0 %v3155
  %v3498 = vpop.f32.mrb[0].mxu0
  %v3499 = vadd.f32 0.0, %v3498
  %v3500 = vpop.f32.mrb[0].mxu0
  %3501 = vmatprep.mubr.f32.mxu0 0.0
  %3502 = vmatmul.mubr.f32.gmra.mrb[0].mxu0 %v3158
  %v3503 = vpop.f32.mrb[0].mxu0
  %v3504 = vadd.f32 0.0, %v3503
  %v3505 = vpop.f32.mrb[0].mxu0
  %3506 = vmatprep.mubr.f32.mxu0 0.0
  %3507 = vmatmul.mubr.f32.gmra.mrb[0].mxu0 %v3161
  %v3508 = vpop.f32.mrb[0].mxu0
  %v3509 = vadd.f32 0.0, %v3508
  %v3510 = vpop.f32.mrb[0].mxu0
  %3511 = vmatprep.mubr.f32.mxu0 0.0
  %3512 = vmatmul.mubr.f32.gmra.mrb[0].mxu0 %v3164
  %v3513 = vpop.f32.mrb[0].mxu0
  %v3514 = vadd.f32 0.0, %v3513
  %v3515 = vpop.f32.mrb[0].mxu0
  %3516 = vmatprep.mubr.f32.mxu0 0.0
  %3517 = vmatmul.mubr.f32.gmra.mrb[0].mxu0 %v3167
  %v3518 = vpop.f32.mrb[0].mxu0
  %v3519 = vadd.f32 0.0, %v3518
  %v3520 = vpop.f32.mrb[0].mxu0
  %3521 = vmatprep.mubr.f32.mxu0 0.0
  %3522 = vmatmul.mubr.f32.gmra.mrb[0].mxu0 %v3170
  %v3523 = vpop.f32.mrb[0].mxu0
  %v3524 = vadd.f32 0.0, %v3523
  %v3525 = vpop.f32.mrb[0].mxu0
  %3526 = vmatprep.mubr.f32.mxu0 0.0
  %3527 = vmatmul.mubr.f32.gmra.mrb[0].mxu0 %v3173
  %v3528 = vpop.f32.mrb[0].mxu0
  %v3529 = vadd.f32 0.0, %v3528
  %v3530 = vpop.f32.mrb[0].mxu0
  %3531 = vmatprep.mubr.f32.mxu0 0.0
  %3532 = vmatmul.mubr.f32.gmra.mrb[0].mxu0 %v3176
  %v3533 = vpop.f32.mrb[0].mxu0
  %v3534 = vadd.f32 0.0, %v3533
  %v3535 = vpop.f32.mrb[0].mxu0
  %3536 = vmatprep.mubr.f32.mxu0 0.0
  %3537 = vmatmul.mubr.f32.gmra.mrb[0].mxu0 %v3179
  %v3538 = vpop.f32.mrb[0].mxu0
  %v3539 = vadd.f32 0.0, %v3538
  %v3540 = vpop.f32.mrb[0].mxu0
  %3541 = vmatprep.mubr.f32.mxu0 0.0
  %3542 = vmatmul.mubr.f32.gmra.mrb[0].mxu0 %v3182
  %v3543 = vpop.f32.mrb[0].mxu0
  %v3544 = vadd.f32 0.0, %v3543
  %v3545 = vpop.f32.mrb[0].mxu0
  %3546 = vmatprep.mubr.f32.mxu0 0.0
  %3547 = vmatmul.mubr.f32.gmra.mrb[0].mxu0 %v3185
  %v3548 = vpop.f32.mrb[0].mxu0
  %v3549 = vadd.f32 0.0, %v3548
  %v3550 = vpop.f32.mrb[0].mxu0
  %3551 = vmatprep.mubr.f32.mxu0 0.0
  %3552 = vmatmul.mubr.f32.gmra.mrb[0].mxu0 %v3188
  %v3553 = vpop.f32.mrb[0].mxu0
  %v3554 = vadd.f32 0.0, %v3553
  %v3555 = vpop.f32.mrb[0].mxu0
  %3556 = vmatprep.mubr.f32.mxu0 0.0
  %3557 = vmatmul.mubr.f32.gmra.mrb[0].mxu0 %v3191
  %v3558 = vpop.f32.mrb[0].mxu0
  %v3559 = vadd.f32 0.0, %v3558
  %v3560 = vpop.f32.mrb[0].mxu0
  %3561 = vmatprep.mubr.f32.mxu0 0.0
  %3562 = vmatmul.mubr.f32.gmra.mrb[0].mxu0 %v3194
  %v3563 = vpop.f32.mrb[0].mxu0
  %v3564 = vadd.f32 0.0, %v3563
  %v3565 = vpop.f32.mrb[0].mxu0
  %3566 = vmatprep.mubr.f32.mxu0 0.0
  %3567 = vmatmul.mubr.f32.gmra.mrb[0].mxu0 %v3197
  %v3568 = vpop.f32.mrb[0].mxu0
  %v3569 = vadd.f32 0.0, %v3568
  %v3570 = vpop.f32.mrb[0].mxu0
  %3571 = vmatprep.mubr.f32.mxu0 0.0
  %3572 = vmatmul.mubr.f32.gmra.mrb[0].mxu0 %v3200
  %v3573 = vpop.f32.mrb[0].mxu0
  %v3574 = vadd.f32 0.0, %v3573
  %v3575 = vpop.f32.mrb[0].mxu0
  %3576 = vmatprep.mubr.f32.mxu0 0.0
  %3577 = vmatmul.mubr.f32.gmra.mrb[0].mxu0 %v3203
  %v3578 = vpop.f32.mrb[0].mxu0
  %v3579 = vadd.f32 0.0, %v3578
  %v3580 = vpop.f32.mrb[0].mxu0
  %3581 = vmatprep.mubr.f32.mxu0 0.0
  %3582 = vmatmul.mubr.f32.gmra.mrb[0].mxu0 %v3206
  %v3583 = vpop.f32.mrb[0].mxu0
  %v3584 = vadd.f32 0.0, %v3583
  %v3585 = vpop.f32.mrb[0].mxu0
  %3586 = vmatprep.mubr.f32.mxu0 0.0
  %3587 = vmatmul.mubr.f32.gmra.mrb[0].mxu0 %v3209
  %v3588 = vpop.f32.mrb[0].mxu0
  %v3589 = vadd.f32 0.0, %v3588
  %v3590 = vpop.f32.mrb[0].mxu0
  %3591 = vmatprep.mubr.f32.mxu0 0.0
  %3592 = vmatmul.mubr.f32.gmra.mrb[0].mxu0 %v3212
  %v3593 = vpop.f32.mrb[0].mxu0
  %v3594 = vadd.f32 0.0, %v3593
  %v3595 = vpop.f32.mrb[0].mxu0
  %3596 = vmatprep.mubr.f32.mxu0 0.0
  %3597 = vmatmul.mubr.f32.gmra.mrb[0].mxu0 %v3215
  %v3598 = vpop.f32.mrb[0].mxu0
  %v3599 = vadd.f32 0.0, %v3598
  %v3600 = vpop.f32.mrb[0].mxu0
  %3601 = vdwg.mxu0
  %v3602 = vadd.f32 %v2895, %v3284
  %v3603 = vadd.f32 %v2896, %v3289
  %v3604 = vadd.f32 %v2897, %v3294
  %v3605 = vadd.f32 %v2898, %v3299
  %v3606 = vadd.f32 %v2899, %v3304
  %v3607 = vadd.f32 %v2900, %v3309
  %v3608 = vadd.f32 %v2901, %v3314
  %v3609 = vadd.f32 %v2902, %v3319
  %v3610 = vadd.f32 %v2903, %v3324
  %v3611 = vadd.f32 %v2904, %v3329
  %v3612 = vadd.f32 %v2905, %v3334
  %v3613 = vadd.f32 %v2906, %v3339
  %v3614 = vadd.f32 %v2907, %v3344
  %v3615 = vadd.f32 %v2908, %v3349
  %v3616 = vadd.f32 %v2909, %v3354
  %v3617 = vadd.f32 %v2910, %v3359
  %v3618 = vadd.f32 %v2911, %v3364
  %v3619 = vadd.f32 %v2912, %v3369
  %v3620 = vadd.f32 %v2913, %v3374
  %v3621 = vadd.f32 %v2914, %v3379
  %v3622 = vadd.f32 %v2915, %v3384
  %v3623 = vadd.f32 %v2916, %v3389
  %v3624 = vadd.f32 %v2917, %v3394
  %v3625 = vadd.f32 %v2918, %v3399
  %v3626 = vadd.f32 %v2919, %v3404
  %v3627 = vadd.f32 %v2920, %v3409
  %v3628 = vadd.f32 %v2921, %v3414
  %v3629 = vadd.f32 %v2922, %v3419
  %v3630 = vadd.f32 %v2923, %v3424
  %v3631 = vadd.f32 %v2924, %v3429
  %v3632 = vadd.f32 %v2925, %v3434
  %v3633 = vadd.f32 %v2926, %v3439
  %v3634 = vadd.f32 %v2927, %v3444
  %v3635 = vadd.f32 %v2928, %v3449
  %v3636 = vadd.f32 %v2929, %v3454
  %v3637 = vadd.f32 %v2930, %v3459
  %v3638 = vadd.f32 %v2931, %v3464
  %v3639 = vadd.f32 %v2932, %v3469
  %v3640 = vadd.f32 %v2933, %v3474
  %v3641 = vadd.f32 %v2934, %v3479
  %v3642 = vadd.f32 %v2935, %v3484
  %v3643 = vadd.f32 %v2936, %v3489
  %v3644 = vadd.f32 %v2937, %v3494
  %v3645 = vadd.f32 %v2938, %v3499
  %v3646 = vadd.f32 %v2939, %v3504
  %v3647 = vadd.f32 %v2940, %v3509
  %v3648 = vadd.f32 %v2941, %v3514
  %v3649 = vadd.f32 %v2942, %v3519
  %v3650 = vadd.f32 %v2943, %v3524
  %v3651 = vadd.f32 %v2944, %v3529
  %v3652 = vadd.f32 %v2945, %v3534
  %v3653 = vadd.f32 %v2946, %v3539
  %v3654 = vadd.f32 %v2947, %v3544
  %v3655 = vadd.f32 %v2948, %v3549
  %v3656 = vadd.f32 %v2949, %v3554
  %v3657 = vadd.f32 %v2950, %v3559
  %v3658 = vadd.f32 %v2951, %v3564
  %v3659 = vadd.f32 %v2952, %v3569
  %v3660 = vadd.f32 %v2953, %v3574
  %v3661 = vadd.f32 %v2954, %v3579
  %v3662 = vadd.f32 %v2955, %v3584
  %v3663 = vadd.f32 %v2956, %v3589
  %v3664 = vadd.f32 %v2957, %v3594
  %v3665 = vadd.f32 %v2958, %v3599
  %v3666 = vld [vmem:[%s194 + $0x2] sm:$0xff]
  %v3667 = vld [vmem:[%s194 + $0xa] sm:$0xff]
  %v3668 = vld [vmem:[%s194 + $0x1a] sm:$0xff]
  %v3669 = vld [vmem:[%s194 + $0x22] sm:$0xff]
  %v3670 = vld [vmem:[%s194 + $0x32] sm:$0xff]
  %v3671 = vld [vmem:[%s194 + $0x3a] sm:$0xff]
  %v3672 = vld [vmem:[%s194 + $0x4a] sm:$0xff]
  %v3673 = vld [vmem:[%s194 + $0x52] sm:$0xff]
  %v3674 = vld [vmem:[%s194 + $0x62] sm:$0xff]
  %v3675 = vld [vmem:[%s194 + $0x6a] sm:$0xff]
  %v3676 = vld [vmem:[%s194 + $0x7a] sm:$0xff]
  %v3677 = vld [vmem:[%s194 + $0x82] sm:$0xff]
  %v3678 = vld [vmem:[%s194 + $0x92] sm:$0xff]
  %v3679 = vld [vmem:[%s194 + $0x9a] sm:$0xff]
  %v3680 = vld [vmem:[%s194 + $0xaa] sm:$0xff]
  %v3681 = vld [vmem:[%s194 + $0xb2] sm:$0xff]
  %v3682 = vld [vmem:[%s194 + $0xc2] sm:$0xff]
  %v3683 = vld [vmem:[%s194 + $0xca] sm:$0xff]
  %v3684 = vld [vmem:[%s194 + $0xda] sm:$0xff]
  %v3685 = vld [vmem:[%s194 + $0xe2] sm:$0xff]
  %v3686 = vld [vmem:[%s194 + $0xf2] sm:$0xff]
  %v3687 = vld [vmem:[%s194 + $0xfa] sm:$0xff]
  %v3688 = vld [vmem:[%s194 + $0x10a] sm:$0xff]
  %v3689 = vld [vmem:[%s194 + $0x112] sm:$0xff]
  %v3690 = vld [vmem:[%s194 + $0x122] sm:$0xff]
  %v3691 = vld [vmem:[%s194 + $0x12a] sm:$0xff]
  %v3692 = vld [vmem:[%s194 + $0x13a] sm:$0xff]
  %v3693 = vld [vmem:[%s194 + $0x142] sm:$0xff]
  %v3694 = vld [vmem:[%s194 + $0x152] sm:$0xff]
  %v3695 = vld [vmem:[%s194 + $0x15a] sm:$0xff]
  %v3696 = vld [vmem:[%s194 + $0x16a] sm:$0xff]
  %v3697 = vld [vmem:[%s194 + $0x172] sm:$0xff]
  %v3698 = vld [vmem:[%s194 + $0x1b2] sm:$0xff]
  %v3699 = vld [vmem:[%s194 + $0x1ba] sm:$0xff]
  %v3700 = vld [vmem:[%s194 + $0x1ca] sm:$0xff]
  %v3701 = vld [vmem:[%s194 + $0x1d2] sm:$0xff]
  %v3702 = vld [vmem:[%s194 + $0x1e2] sm:$0xff]
  %v3703 = vld [vmem:[%s194 + $0x1ea] sm:$0xff]
  %v3704 = vld [vmem:[%s194 + $0x1fa] sm:$0xff]
  %v3705 = vld [vmem:[%s194 + $0x202] sm:$0xff]
  %v3706 = vld [vmem:[%s194 + $0x212] sm:$0xff]
  %v3707 = vld [vmem:[%s194 + $0x21a] sm:$0xff]
  %v3708 = vld [vmem:[%s194 + $0x22a] sm:$0xff]
  %v3709 = vld [vmem:[%s194 + $0x232] sm:$0xff]
  %v3710 = vld [vmem:[%s194 + $0x242] sm:$0xff]
  %v3711 = vld [vmem:[%s194 + $0x24a] sm:$0xff]
  %v3712 = vld [vmem:[%s194 + $0x25a] sm:$0xff]
  %v3713 = vld [vmem:[%s194 + $0x262] sm:$0xff]
  %v3714 = vld [vmem:[%s194 + $0x272] sm:$0xff]
  %v3715 = vld [vmem:[%s194 + $0x27a] sm:$0xff]
  %v3716 = vld [vmem:[%s194 + $0x28a] sm:$0xff]
  %v3717 = vld [vmem:[%s194 + $0x292] sm:$0xff]
  %v3718 = vld [vmem:[%s194 + $0x2a2] sm:$0xff]
  %v3719 = vld [vmem:[%s194 + $0x2aa] sm:$0xff]
  %v3720 = vld [vmem:[%s194 + $0x2ba] sm:$0xff]
  %v3721 = vld [vmem:[%s194 + $0x2c2] sm:$0xff]
  %v3722 = vld [vmem:[%s194 + $0x2d2] sm:$0xff]
  %v3723 = vld [vmem:[%s194 + $0x2da] sm:$0xff]
  %v3724 = vld [vmem:[%s194 + $0x2ea] sm:$0xff]
  %v3725 = vld [vmem:[%s194 + $0x2f2] sm:$0xff]
  %v3726 = vld [vmem:[%s194 + $0x302] sm:$0xff]
  %v3727 = vld [vmem:[%s194 + $0x30a] sm:$0xff]
  %v3728 = vld [vmem:[%s194 + $0x31a] sm:$0xff]
  %v3729 = vld [vmem:[%s194 + $0x322] sm:$0xff]
  %s3730 = scalar_lea.vmem %s1, 40
  %v3731 = vld [vmem:[%s3730] sm:$0xff]
  %v3733 = vsel %vm20, %v3666, 0
  %v3736 = vsel %vm20, %v3667, 0
  %v3739 = vsel %vm20, %v3668, 0
  %v3742 = vsel %vm20, %v3669, 0
  %v3745 = vsel %vm20, %v3670, 0
  %v3748 = vsel %vm20, %v3671, 0
  %v3751 = vsel %vm20, %v3672, 0
  %v3754 = vsel %vm20, %v3673, 0
  %v3757 = vsel %vm20, %v3674, 0
  %v3760 = vsel %vm20, %v3675, 0
  %v3763 = vsel %vm20, %v3676, 0
  %v3766 = vsel %vm20, %v3677, 0
  %v3769 = vsel %vm20, %v3678, 0
  %v3772 = vsel %vm20, %v3679, 0
  %v3775 = vsel %vm20, %v3680, 0
  %v3778 = vsel %vm20, %v3681, 0
  %v3781 = vsel %vm20, %v3682, 0
  %v3784 = vsel %vm20, %v3683, 0
  %v3787 = vsel %vm20, %v3684, 0
  %v3790 = vsel %vm20, %v3685, 0
  %v3793 = vsel %vm20, %v3686, 0
  %v3796 = vsel %vm20, %v3687, 0
  %v3799 = vsel %vm20, %v3688, 0
  %v3802 = vsel %vm20, %v3689, 0
  %v3805 = vsel %vm20, %v3690, 0
  %v3808 = vsel %vm20, %v3691, 0
  %v3811 = vsel %vm20, %v3692, 0
  %v3814 = vsel %vm20, %v3693, 0
  %v3817 = vsel %vm20, %v3694, 0
  %v3820 = vsel %vm20, %v3695, 0
  %v3823 = vsel %vm20, %v3696, 0
  %v3826 = vsel %vm20, %v3697, 0
  %v3829 = vsel %vm20, %v3698, 0
  %v3832 = vsel %vm20, %v3699, 0
  %v3835 = vsel %vm20, %v3700, 0
  %v3838 = vsel %vm20, %v3701, 0
  %v3841 = vsel %vm20, %v3702, 0
  %v3844 = vsel %vm20, %v3703, 0
  %v3847 = vsel %vm20, %v3704, 0
  %v3850 = vsel %vm20, %v3705, 0
  %v3853 = vsel %vm20, %v3706, 0
  %v3856 = vsel %vm20, %v3707, 0
  %v3859 = vsel %vm20, %v3708, 0
  %v3862 = vsel %vm20, %v3709, 0
  %v3865 = vsel %vm20, %v3710, 0
  %v3868 = vsel %vm20, %v3711, 0
  %v3871 = vsel %vm20, %v3712, 0
  %v3874 = vsel %vm20, %v3713, 0
  %v3877 = vsel %vm20, %v3714, 0
  %v3880 = vsel %vm20, %v3715, 0
  %v3883 = vsel %vm20, %v3716, 0
  %v3886 = vsel %vm20, %v3717, 0
  %v3889 = vsel %vm20, %v3718, 0
  %v3892 = vsel %vm20, %v3719, 0
  %v3895 = vsel %vm20, %v3720, 0
  %v3898 = vsel %vm20, %v3721, 0
  %v3901 = vsel %vm20, %v3722, 0
  %v3904 = vsel %vm20, %v3723, 0
  %v3907 = vsel %vm20, %v3724, 0
  %v3910 = vsel %vm20, %v3725, 0
  %v3913 = vsel %vm20, %v3726, 0
  %v3916 = vsel %vm20, %v3727, 0
  %v3919 = vsel %vm20, %v3728, 0
  %v3922 = vsel %vm20, %v3729, 0
  %3924 = vmatprep.subr.mxu0 0.0
  %3925 = vmatpush1.msra.mxu0 %v3731
  %3926 = vmatprep.subr.mxu0 0.0
  %3927 = vmatpush1.msra.mxu0 0.0
  %3928 = vmatprep.subr.mxu0 0.0
  %3929 = vmatpush1.msra.mxu0 0.0
  %3930 = vmatprep.subr.mxu0 0.0
  %3931 = vmatpush1.msra.mxu0 0.0
  %3932 = vmatprep.subr.mxu0 0.0
  %3933 = vmatpush1.msra.mxu0 0.0
  %3934 = vmatprep.subr.mxu0 0.0
  %3935 = vmatpush1.msra.mxu0 0.0
  %3936 = vmatprep.subr.mxu0 0.0
  %3937 = vmatpush1.msra.mxu0 0.0
  %3938 = vmatprep.subr.mxu0 0.0
  %3939 = vmatpush1.msra.mxu0 0.0
  %3940 = vmatprep.subr.mxu0 0.0
  %3941 = vmatpush1.msra.mxu0 0.0
  %3942 = vmatprep.subr.mxu0 0.0
  %3943 = vmatpush1.msra.mxu0 0.0
  %3944 = vmatprep.subr.mxu0 0.0
  %3945 = vmatpush1.msra.mxu0 0.0
  %3946 = vmatprep.subr.mxu0 0.0
  %3947 = vmatpush1.msra.mxu0 0.0
  %3948 = vmatprep.subr.mxu0 0.0
  %3949 = vmatpush1.msra.mxu0 0.0
  %3950 = vmatprep.subr.mxu0 0.0
  %3951 = vmatpush1.msra.mxu0 0.0
  %3952 = vmatprep.subr.mxu0 0.0
  %3953 = vmatpush1.msra.mxu0 0.0
  %3954 = vmatprep.subr.mxu0 0.0
  %3955 = vmatpush1.msra.mxu0 0.0
  %3956 = vmatprep.subr.mxu0 0.0
  %3957 = vmatpush1.msra.mxu0 0.0
  %3958 = vmatprep.subr.mxu0 0.0
  %3959 = vmatpush1.msra.mxu0 0.0
  %3960 = vmatprep.subr.mxu0 0.0
  %3961 = vmatpush1.msra.mxu0 0.0
  %3962 = vmatprep.subr.mxu0 0.0
  %3963 = vmatpush1.msra.mxu0 0.0
  %3964 = vmatprep.subr.mxu0 0.0
  %3965 = vmatpush1.msra.mxu0 0.0
  %3966 = vmatprep.subr.mxu0 0.0
  %3967 = vmatpush1.msra.mxu0 0.0
  %3968 = vmatprep.subr.mxu0 0.0
  %3969 = vmatpush1.msra.mxu0 0.0
  %3970 = vmatprep.subr.mxu0 0.0
  %3971 = vmatpush1.msra.mxu0 0.0
  %3972 = vmatprep.subr.mxu0 0.0
  %3973 = vmatpush1.msra.mxu0 0.0
  %3974 = vmatprep.subr.mxu0 0.0
  %3975 = vmatpush1.msra.mxu0 0.0
  %3976 = vmatprep.subr.mxu0 0.0
  %3977 = vmatpush1.msra.mxu0 0.0
  %3978 = vmatprep.subr.mxu0 0.0
  %3979 = vmatpush1.msra.mxu0 0.0
  %3980 = vmatprep.subr.mxu0 0.0
  %3981 = vmatpush1.msra.mxu0 0.0
  %3982 = vmatprep.subr.mxu0 0.0
  %3983 = vmatpush1.msra.mxu0 0.0
  %3984 = vmatprep.subr.mxu0 0.0
  %3985 = vmatpush1.msra.mxu0 0.0
  %3986 = vmatprep.subr.mxu0 0.0
  %3987 = vmatpush1.msra.mxu0 0.0
  %3988 = vmatprep.mubr.f32.mxu0 0.0
  %3989 = vmatmul.mubr.f32.gmra.mrb[0].mxu0 %v3733
  %v3990 = vpop.f32.mrb[0].mxu0
  %v3991 = vadd.f32 0.0, %v3990
  %v3992 = vpop.f32.mrb[0].mxu0
  %3993 = vmatprep.mubr.f32.mxu0 0.0
  %3994 = vmatmul.mubr.f32.gmra.mrb[0].mxu0 %v3736
  %v3995 = vpop.f32.mrb[0].mxu0
  %v3996 = vadd.f32 0.0, %v3995
  %v3997 = vpop.f32.mrb[0].mxu0
  %3998 = vmatprep.mubr.f32.mxu0 0.0
  %3999 = vmatmul.mubr.f32.gmra.mrb[0].mxu0 %v3739
  %v4000 = vpop.f32.mrb[0].mxu0
  %v4001 = vadd.f32 0.0, %v4000
  %v4002 = vpop.f32.mrb[0].mxu0
  %4003 = vmatprep.mubr.f32.mxu0 0.0
  %4004 = vmatmul.mubr.f32.gmra.mrb[0].mxu0 %v3742
  %v4005 = vpop.f32.mrb[0].mxu0
  %v4006 = vadd.f32 0.0, %v4005
  %v4007 = vpop.f32.mrb[0].mxu0
  %4008 = vmatprep.mubr.f32.mxu0 0.0
  %4009 = vmatmul.mubr.f32.gmra.mrb[0].mxu0 %v3745
  %v4010 = vpop.f32.mrb[0].mxu0
  %v4011 = vadd.f32 0.0, %v4010
  %v4012 = vpop.f32.mrb[0].mxu0
  %4013 = vmatprep.mubr.f32.mxu0 0.0
  %4014 = vmatmul.mubr.f32.gmra.mrb[0].mxu0 %v3748
  %v4015 = vpop.f32.mrb[0].mxu0
  %v4016 = vadd.f32 0.0, %v4015
  %v4017 = vpop.f32.mrb[0].mxu0
  %4018 = vmatprep.mubr.f32.mxu0 0.0
  %4019 = vmatmul.mubr.f32.gmra.mrb[0].mxu0 %v3751
  %v4020 = vpop.f32.mrb[0].mxu0
  %v4021 = vadd.f32 0.0, %v4020
  %v4022 = vpop.f32.mrb[0].mxu0
  %4023 = vmatprep.mubr.f32.mxu0 0.0
  %4024 = vmatmul.mubr.f32.gmra.mrb[0].mxu0 %v3754
  %v4025 = vpop.f32.mrb[0].mxu0
  %v4026 = vadd.f32 0.0, %v4025
  %v4027 = vpop.f32.mrb[0].mxu0
  %4028 = vmatprep.mubr.f32.mxu0 0.0
  %4029 = vmatmul.mubr.f32.gmra.mrb[0].mxu0 %v3757
  %v4030 = vpop.f32.mrb[0].mxu0
  %v4031 = vadd.f32 0.0, %v4030
  %v4032 = vpop.f32.mrb[0].mxu0
  %4033 = vmatprep.mubr.f32.mxu0 0.0
  %4034 = vmatmul.mubr.f32.gmra.mrb[0].mxu0 %v3760
  %v4035 = vpop.f32.mrb[0].mxu0
  %v4036 = vadd.f32 0.0, %v4035
  %v4037 = vpop.f32.mrb[0].mxu0
  %4038 = vmatprep.mubr.f32.mxu0 0.0
  %4039 = vmatmul.mubr.f32.gmra.mrb[0].mxu0 %v3763
  %v4040 = vpop.f32.mrb[0].mxu0
  %v4041 = vadd.f32 0.0, %v4040
  %v4042 = vpop.f32.mrb[0].mxu0
  %4043 = vmatprep.mubr.f32.mxu0 0.0
  %4044 = vmatmul.mubr.f32.gmra.mrb[0].mxu0 %v3766
  %v4045 = vpop.f32.mrb[0].mxu0
  %v4046 = vadd.f32 0.0, %v4045
  %v4047 = vpop.f32.mrb[0].mxu0
  %4048 = vmatprep.mubr.f32.mxu0 0.0
  %4049 = vmatmul.mubr.f32.gmra.mrb[0].mxu0 %v3769
  %v4050 = vpop.f32.mrb[0].mxu0
  %v4051 = vadd.f32 0.0, %v4050
  %v4052 = vpop.f32.mrb[0].mxu0
  %4053 = vmatprep.mubr.f32.mxu0 0.0
  %4054 = vmatmul.mubr.f32.gmra.mrb[0].mxu0 %v3772
  %v4055 = vpop.f32.mrb[0].mxu0
  %v4056 = vadd.f32 0.0, %v4055
  %v4057 = vpop.f32.mrb[0].mxu0
  %4058 = vmatprep.mubr.f32.mxu0 0.0
  %4059 = vmatmul.mubr.f32.gmra.mrb[0].mxu0 %v3775
  %v4060 = vpop.f32.mrb[0].mxu0
  %v4061 = vadd.f32 0.0, %v4060
  %v4062 = vpop.f32.mrb[0].mxu0
  %4063 = vmatprep.mubr.f32.mxu0 0.0
  %4064 = vmatmul.mubr.f32.gmra.mrb[0].mxu0 %v3778
  %v4065 = vpop.f32.mrb[0].mxu0
  %v4066 = vadd.f32 0.0, %v4065
  %v4067 = vpop.f32.mrb[0].mxu0
  %4068 = vmatprep.mubr.f32.mxu0 0.0
  %4069 = vmatmul.mubr.f32.gmra.mrb[0].mxu0 %v3781
  %v4070 = vpop.f32.mrb[0].mxu0
  %v4071 = vadd.f32 0.0, %v4070
  %v4072 = vpop.f32.mrb[0].mxu0
  %4073 = vmatprep.mubr.f32.mxu0 0.0
  %4074 = vmatmul.mubr.f32.gmra.mrb[0].mxu0 %v3784
  %v4075 = vpop.f32.mrb[0].mxu0
  %v4076 = vadd.f32 0.0, %v4075
  %v4077 = vpop.f32.mrb[0].mxu0
  %4078 = vmatprep.mubr.f32.mxu0 0.0
  %4079 = vmatmul.mubr.f32.gmra.mrb[0].mxu0 %v3787
  %v4080 = vpop.f32.mrb[0].mxu0
  %v4081 = vadd.f32 0.0, %v4080
  %v4082 = vpop.f32.mrb[0].mxu0
  %4083 = vmatprep.mubr.f32.mxu0 0.0
  %4084 = vmatmul.mubr.f32.gmra.mrb[0].mxu0 %v3790
  %v4085 = vpop.f32.mrb[0].mxu0
  %v4086 = vadd.f32 0.0, %v4085
  %v4087 = vpop.f32.mrb[0].mxu0
  %4088 = vmatprep.mubr.f32.mxu0 0.0
  %4089 = vmatmul.mubr.f32.gmra.mrb[0].mxu0 %v3793
  %v4090 = vpop.f32.mrb[0].mxu0
  %v4091 = vadd.f32 0.0, %v4090
  %v4092 = vpop.f32.mrb[0].mxu0
  %4093 = vmatprep.mubr.f32.mxu0 0.0
  %4094 = vmatmul.mubr.f32.gmra.mrb[0].mxu0 %v3796
  %v4095 = vpop.f32.mrb[0].mxu0
  %v4096 = vadd.f32 0.0, %v4095
  %v4097 = vpop.f32.mrb[0].mxu0
  %4098 = vmatprep.mubr.f32.mxu0 0.0
  %4099 = vmatmul.mubr.f32.gmra.mrb[0].mxu0 %v3799
  %v4100 = vpop.f32.mrb[0].mxu0
  %v4101 = vadd.f32 0.0, %v4100
  %v4102 = vpop.f32.mrb[0].mxu0
  %4103 = vmatprep.mubr.f32.mxu0 0.0
  %4104 = vmatmul.mubr.f32.gmra.mrb[0].mxu0 %v3802
  %v4105 = vpop.f32.mrb[0].mxu0
  %v4106 = vadd.f32 0.0, %v4105
  %v4107 = vpop.f32.mrb[0].mxu0
  %4108 = vmatprep.mubr.f32.mxu0 0.0
  %4109 = vmatmul.mubr.f32.gmra.mrb[0].mxu0 %v3805
  %v4110 = vpop.f32.mrb[0].mxu0
  %v4111 = vadd.f32 0.0, %v4110
  %v4112 = vpop.f32.mrb[0].mxu0
  %4113 = vmatprep.mubr.f32.mxu0 0.0
  %4114 = vmatmul.mubr.f32.gmra.mrb[0].mxu0 %v3808
  %v4115 = vpop.f32.mrb[0].mxu0
  %v4116 = vadd.f32 0.0, %v4115
  %v4117 = vpop.f32.mrb[0].mxu0
  %4118 = vmatprep.mubr.f32.mxu0 0.0
  %4119 = vmatmul.mubr.f32.gmra.mrb[0].mxu0 %v3811
  %v4120 = vpop.f32.mrb[0].mxu0
  %v4121 = vadd.f32 0.0, %v4120
  %v4122 = vpop.f32.mrb[0].mxu0
  %4123 = vmatprep.mubr.f32.mxu0 0.0
  %4124 = vmatmul.mubr.f32.gmra.mrb[0].mxu0 %v3814
  %v4125 = vpop.f32.mrb[0].mxu0
  %v4126 = vadd.f32 0.0, %v4125
  %v4127 = vpop.f32.mrb[0].mxu0
  %4128 = vmatprep.mubr.f32.mxu0 0.0
  %4129 = vmatmul.mubr.f32.gmra.mrb[0].mxu0 %v3817
  %v4130 = vpop.f32.mrb[0].mxu0
  %v4131 = vadd.f32 0.0, %v4130
  %v4132 = vpop.f32.mrb[0].mxu0
  %4133 = vmatprep.mubr.f32.mxu0 0.0
  %4134 = vmatmul.mubr.f32.gmra.mrb[0].mxu0 %v3820
  %v4135 = vpop.f32.mrb[0].mxu0
  %v4136 = vadd.f32 0.0, %v4135
  %v4137 = vpop.f32.mrb[0].mxu0
  %4138 = vmatprep.mubr.f32.mxu0 0.0
  %4139 = vmatmul.mubr.f32.gmra.mrb[0].mxu0 %v3823
  %v4140 = vpop.f32.mrb[0].mxu0
  %v4141 = vadd.f32 0.0, %v4140
  %v4142 = vpop.f32.mrb[0].mxu0
  %4143 = vmatprep.mubr.f32.mxu0 0.0
  %4144 = vmatmul.mubr.f32.gmra.mrb[0].mxu0 %v3826
  %v4145 = vpop.f32.mrb[0].mxu0
  %v4146 = vadd.f32 0.0, %v4145
  %v4147 = vpop.f32.mrb[0].mxu0
  %4148 = vmatprep.mubr.f32.mxu0 0.0
  %4149 = vmatmul.mubr.f32.gmra.mrb[0].mxu0 %v3829
  %v4150 = vpop.f32.mrb[0].mxu0
  %v4151 = vadd.f32 0.0, %v4150
  %v4152 = vpop.f32.mrb[0].mxu0
  %4153 = vmatprep.mubr.f32.mxu0 0.0
  %4154 = vmatmul.mubr.f32.gmra.mrb[0].mxu0 %v3832
  %v4155 = vpop.f32.mrb[0].mxu0
  %v4156 = vadd.f32 0.0, %v4155
  %v4157 = vpop.f32.mrb[0].mxu0
  %4158 = vmatprep.mubr.f32.mxu0 0.0
  %4159 = vmatmul.mubr.f32.gmra.mrb[0].mxu0 %v3835
  %v4160 = vpop.f32.mrb[0].mxu0
  %v4161 = vadd.f32 0.0, %v4160
  %v4162 = vpop.f32.mrb[0].mxu0
  %4163 = vmatprep.mubr.f32.mxu0 0.0
  %4164 = vmatmul.mubr.f32.gmra.mrb[0].mxu0 %v3838
  %v4165 = vpop.f32.mrb[0].mxu0
  %v4166 = vadd.f32 0.0, %v4165
  %v4167 = vpop.f32.mrb[0].mxu0
  %4168 = vmatprep.mubr.f32.mxu0 0.0
  %4169 = vmatmul.mubr.f32.gmra.mrb[0].mxu0 %v3841
  %v4170 = vpop.f32.mrb[0].mxu0
  %v4171 = vadd.f32 0.0, %v4170
  %v4172 = vpop.f32.mrb[0].mxu0
  %4173 = vmatprep.mubr.f32.mxu0 0.0
  %4174 = vmatmul.mubr.f32.gmra.mrb[0].mxu0 %v3844
  %v4175 = vpop.f32.mrb[0].mxu0
  %v4176 = vadd.f32 0.0, %v4175
  %v4177 = vpop.f32.mrb[0].mxu0
  %4178 = vmatprep.mubr.f32.mxu0 0.0
  %4179 = vmatmul.mubr.f32.gmra.mrb[0].mxu0 %v3847
  %v4180 = vpop.f32.mrb[0].mxu0
  %v4181 = vadd.f32 0.0, %v4180
  %v4182 = vpop.f32.mrb[0].mxu0
  %4183 = vmatprep.mubr.f32.mxu0 0.0
  %4184 = vmatmul.mubr.f32.gmra.mrb[0].mxu0 %v3850
  %v4185 = vpop.f32.mrb[0].mxu0
  %v4186 = vadd.f32 0.0, %v4185
  %v4187 = vpop.f32.mrb[0].mxu0
  %4188 = vmatprep.mubr.f32.mxu0 0.0
  %4189 = vmatmul.mubr.f32.gmra.mrb[0].mxu0 %v3853
  %v4190 = vpop.f32.mrb[0].mxu0
  %v4191 = vadd.f32 0.0, %v4190
  %v4192 = vpop.f32.mrb[0].mxu0
  %4193 = vmatprep.mubr.f32.mxu0 0.0
  %4194 = vmatmul.mubr.f32.gmra.mrb[0].mxu0 %v3856
  %v4195 = vpop.f32.mrb[0].mxu0
  %v4196 = vadd.f32 0.0, %v4195
  %v4197 = vpop.f32.mrb[0].mxu0
  %4198 = vmatprep.mubr.f32.mxu0 0.0
  %4199 = vmatmul.mubr.f32.gmra.mrb[0].mxu0 %v3859
  %v4200 = vpop.f32.mrb[0].mxu0
  %v4201 = vadd.f32 0.0, %v4200
  %v4202 = vpop.f32.mrb[0].mxu0
  %4203 = vmatprep.mubr.f32.mxu0 0.0
  %4204 = vmatmul.mubr.f32.gmra.mrb[0].mxu0 %v3862
  %v4205 = vpop.f32.mrb[0].mxu0
  %v4206 = vadd.f32 0.0, %v4205
  %v4207 = vpop.f32.mrb[0].mxu0
  %4208 = vmatprep.mubr.f32.mxu0 0.0
  %4209 = vmatmul.mubr.f32.gmra.mrb[0].mxu0 %v3865
  %v4210 = vpop.f32.mrb[0].mxu0
  %v4211 = vadd.f32 0.0, %v4210
  %v4212 = vpop.f32.mrb[0].mxu0
  %4213 = vmatprep.mubr.f32.mxu0 0.0
  %4214 = vmatmul.mubr.f32.gmra.mrb[0].mxu0 %v3868
  %v4215 = vpop.f32.mrb[0].mxu0
  %v4216 = vadd.f32 0.0, %v4215
  %v4217 = vpop.f32.mrb[0].mxu0
  %4218 = vmatprep.mubr.f32.mxu0 0.0
  %4219 = vmatmul.mubr.f32.gmra.mrb[0].mxu0 %v3871
  %v4220 = vpop.f32.mrb[0].mxu0
  %v4221 = vadd.f32 0.0, %v4220
  %v4222 = vpop.f32.mrb[0].mxu0
  %4223 = vmatprep.mubr.f32.mxu0 0.0
  %4224 = vmatmul.mubr.f32.gmra.mrb[0].mxu0 %v3874
  %v4225 = vpop.f32.mrb[0].mxu0
  %v4226 = vadd.f32 0.0, %v4225
  %v4227 = vpop.f32.mrb[0].mxu0
  %4228 = vmatprep.mubr.f32.mxu0 0.0
  %4229 = vmatmul.mubr.f32.gmra.mrb[0].mxu0 %v3877
  %v4230 = vpop.f32.mrb[0].mxu0
  %v4231 = vadd.f32 0.0, %v4230
  %v4232 = vpop.f32.mrb[0].mxu0
  %4233 = vmatprep.mubr.f32.mxu0 0.0
  %4234 = vmatmul.mubr.f32.gmra.mrb[0].mxu0 %v3880
  %v4235 = vpop.f32.mrb[0].mxu0
  %v4236 = vadd.f32 0.0, %v4235
  %v4237 = vpop.f32.mrb[0].mxu0
  %4238 = vmatprep.mubr.f32.mxu0 0.0
  %4239 = vmatmul.mubr.f32.gmra.mrb[0].mxu0 %v3883
  %v4240 = vpop.f32.mrb[0].mxu0
  %v4241 = vadd.f32 0.0, %v4240
  %v4242 = vpop.f32.mrb[0].mxu0
  %4243 = vmatprep.mubr.f32.mxu0 0.0
  %4244 = vmatmul.mubr.f32.gmra.mrb[0].mxu0 %v3886
  %v4245 = vpop.f32.mrb[0].mxu0
  %v4246 = vadd.f32 0.0, %v4245
  %v4247 = vpop.f32.mrb[0].mxu0
  %4248 = vmatprep.mubr.f32.mxu0 0.0
  %4249 = vmatmul.mubr.f32.gmra.mrb[0].mxu0 %v3889
  %v4250 = vpop.f32.mrb[0].mxu0
  %v4251 = vadd.f32 0.0, %v4250
  %v4252 = vpop.f32.mrb[0].mxu0
  %4253 = vmatprep.mubr.f32.mxu0 0.0
  %4254 = vmatmul.mubr.f32.gmra.mrb[0].mxu0 %v3892
  %v4255 = vpop.f32.mrb[0].mxu0
  %v4256 = vadd.f32 0.0, %v4255
  %v4257 = vpop.f32.mrb[0].mxu0
  %4258 = vmatprep.mubr.f32.mxu0 0.0
  %4259 = vmatmul.mubr.f32.gmra.mrb[0].mxu0 %v3895
  %v4260 = vpop.f32.mrb[0].mxu0
  %v4261 = vadd.f32 0.0, %v4260
  %v4262 = vpop.f32.mrb[0].mxu0
  %4263 = vmatprep.mubr.f32.mxu0 0.0
  %4264 = vmatmul.mubr.f32.gmra.mrb[0].mxu0 %v3898
  %v4265 = vpop.f32.mrb[0].mxu0
  %v4266 = vadd.f32 0.0, %v4265
  %v4267 = vpop.f32.mrb[0].mxu0
  %4268 = vmatprep.mubr.f32.mxu0 0.0
  %4269 = vmatmul.mubr.f32.gmra.mrb[0].mxu0 %v3901
  %v4270 = vpop.f32.mrb[0].mxu0
  %v4271 = vadd.f32 0.0, %v4270
  %v4272 = vpop.f32.mrb[0].mxu0
  %4273 = vmatprep.mubr.f32.mxu0 0.0
  %4274 = vmatmul.mubr.f32.gmra.mrb[0].mxu0 %v3904
  %v4275 = vpop.f32.mrb[0].mxu0
  %v4276 = vadd.f32 0.0, %v4275
  %v4277 = vpop.f32.mrb[0].mxu0
  %4278 = vmatprep.mubr.f32.mxu0 0.0
  %4279 = vmatmul.mubr.f32.gmra.mrb[0].mxu0 %v3907
  %v4280 = vpop.f32.mrb[0].mxu0
  %v4281 = vadd.f32 0.0, %v4280
  %v4282 = vpop.f32.mrb[0].mxu0
  %4283 = vmatprep.mubr.f32.mxu0 0.0
  %4284 = vmatmul.mubr.f32.gmra.mrb[0].mxu0 %v3910
  %v4285 = vpop.f32.mrb[0].mxu0
  %v4286 = vadd.f32 0.0, %v4285
  %v4287 = vpop.f32.mrb[0].mxu0
  %4288 = vmatprep.mubr.f32.mxu0 0.0
  %4289 = vmatmul.mubr.f32.gmra.mrb[0].mxu0 %v3913
  %v4290 = vpop.f32.mrb[0].mxu0
  %v4291 = vadd.f32 0.0, %v4290
  %v4292 = vpop.f32.mrb[0].mxu0
  %4293 = vmatprep.mubr.f32.mxu0 0.0
  %4294 = vmatmul.mubr.f32.gmra.mrb[0].mxu0 %v3916
  %v4295 = vpop.f32.mrb[0].mxu0
  %v4296 = vadd.f32 0.0, %v4295
  %v4297 = vpop.f32.mrb[0].mxu0
  %4298 = vmatprep.mubr.f32.mxu0 0.0
  %4299 = vmatmul.mubr.f32.gmra.mrb[0].mxu0 %v3919
  %v4300 = vpop.f32.mrb[0].mxu0
  %v4301 = vadd.f32 0.0, %v4300
  %v4302 = vpop.f32.mrb[0].mxu0
  %4303 = vmatprep.mubr.f32.mxu0 0.0
  %4304 = vmatmul.mubr.f32.gmra.mrb[0].mxu0 %v3922
  %v4305 = vpop.f32.mrb[0].mxu0
  %v4306 = vadd.f32 0.0, %v4305
  %v4307 = vpop.f32.mrb[0].mxu0
  %4308 = vdwg.mxu0
  %v4309 = vadd.f32 %v3602, %v3991
  %v4310 = vadd.f32 %v3603, %v3996
  %v4311 = vadd.f32 %v3604, %v4001
  %v4312 = vadd.f32 %v3605, %v4006
  %v4313 = vadd.f32 %v3606, %v4011
  %v4314 = vadd.f32 %v3607, %v4016
  %v4315 = vadd.f32 %v3608, %v4021
  %v4316 = vadd.f32 %v3609, %v4026
  %v4317 = vadd.f32 %v3610, %v4031
  %v4318 = vadd.f32 %v3611, %v4036
  %v4319 = vadd.f32 %v3612, %v4041
  %v4320 = vadd.f32 %v3613, %v4046
  %v4321 = vadd.f32 %v3614, %v4051
  %v4322 = vadd.f32 %v3615, %v4056
  %v4323 = vadd.f32 %v3616, %v4061
  %v4324 = vadd.f32 %v3617, %v4066
  %v4325 = vadd.f32 %v3618, %v4071
  %v4326 = vadd.f32 %v3619, %v4076
  %v4327 = vadd.f32 %v3620, %v4081
  %v4328 = vadd.f32 %v3621, %v4086
  %v4329 = vadd.f32 %v3622, %v4091
  %v4330 = vadd.f32 %v3623, %v4096
  %v4331 = vadd.f32 %v3624, %v4101
  %v4332 = vadd.f32 %v3625, %v4106
  %v4333 = vadd.f32 %v3626, %v4111
  %v4334 = vadd.f32 %v3627, %v4116
  %v4335 = vadd.f32 %v3628, %v4121
  %v4336 = vadd.f32 %v3629, %v4126
  %v4337 = vadd.f32 %v3630, %v4131
  %v4338 = vadd.f32 %v3631, %v4136
  %v4339 = vadd.f32 %v3632, %v4141
  %v4340 = vadd.f32 %v3633, %v4146
  %v4341 = vadd.f32 %v3634, %v4151
  %v4342 = vadd.f32 %v3635, %v4156
  %v4343 = vadd.f32 %v3636, %v4161
  %v4344 = vadd.f32 %v3637, %v4166
  %v4345 = vadd.f32 %v3638, %v4171
  %v4346 = vadd.f32 %v3639, %v4176
  %v4347 = vadd.f32 %v3640, %v4181
  %v4348 = vadd.f32 %v3641, %v4186
  %v4349 = vadd.f32 %v3642, %v4191
  %v4350 = vadd.f32 %v3643, %v4196
  %v4351 = vadd.f32 %v3644, %v4201
  %v4352 = vadd.f32 %v3645, %v4206
  %v4353 = vadd.f32 %v3646, %v4211
  %v4354 = vadd.f32 %v3647, %v4216
  %v4355 = vadd.f32 %v3648, %v4221
  %v4356 = vadd.f32 %v3649, %v4226
  %v4357 = vadd.f32 %v3650, %v4231
  %v4358 = vadd.f32 %v3651, %v4236
  %v4359 = vadd.f32 %v3652, %v4241
  %v4360 = vadd.f32 %v3653, %v4246
  %v4361 = vadd.f32 %v3654, %v4251
  %v4362 = vadd.f32 %v3655, %v4256
  %v4363 = vadd.f32 %v3656, %v4261
  %v4364 = vadd.f32 %v3657, %v4266
  %v4365 = vadd.f32 %v3658, %v4271
  %v4366 = vadd.f32 %v3659, %v4276
  %v4367 = vadd.f32 %v3660, %v4281
  %v4368 = vadd.f32 %v3661, %v4286
  %v4369 = vadd.f32 %v3662, %v4291
  %v4370 = vadd.f32 %v3663, %v4296
  %v4371 = vadd.f32 %v3664, %v4301
  %v4372 = vadd.f32 %v3665, %v4306
  %s4373 = scalar_lea.vmem [#allocation2], 48
  %v4374 = vld [vmem:[%s4373] sm:$0xff]
  %v4375 = vld [vmem:[%s4373 + $0x8] sm:$0xff]
  %v4376 = vld [vmem:[%s4373 + $0x18] sm:$0xff]
  %v4377 = vld [vmem:[%s4373 + $0x20] sm:$0xff]
  %v4378 = vld [vmem:[%s4373 + $0x30] sm:$0xff]
  %v4379 = vld [vmem:[%s4373 + $0x38] sm:$0xff]
  %v4380 = vld [vmem:[%s4373 + $0x48] sm:$0xff]
  %v4381 = vld [vmem:[%s4373 + $0x50] sm:$0xff]
  %v4382 = vld [vmem:[%s4373 + $0x60] sm:$0xff]
  %v4383 = vld [vmem:[%s4373 + $0x68] sm:$0xff]
  %v4384 = vld [vmem:[%s4373 + $0x78] sm:$0xff]
  %v4385 = vld [vmem:[%s4373 + $0x80] sm:$0xff]
  %v4386 = vld [vmem:[%s4373 + $0x90] sm:$0xff]
  %v4387 = vld [vmem:[%s4373 + $0x98] sm:$0xff]
  %v4388 = vld [vmem:[%s4373 + $0xa8] sm:$0xff]
  %v4389 = vld [vmem:[%s4373 + $0xb0] sm:$0xff]
  %v4390 = vld [vmem:[%s4373 + $0xc0] sm:$0xff]
  %v4391 = vld [vmem:[%s4373 + $0xc8] sm:$0xff]
  %v4392 = vld [vmem:[%s4373 + $0xd8] sm:$0xff]
  %v4393 = vld [vmem:[%s4373 + $0xe0] sm:$0xff]
  %v4394 = vld [vmem:[%s4373 + $0xf0] sm:$0xff]
  %v4395 = vld [vmem:[%s4373 + $0xf8] sm:$0xff]
  %v4396 = vld [vmem:[%s4373 + $0x108] sm:$0xff]
  %v4397 = vld [vmem:[%s4373 + $0x110] sm:$0xff]
  %v4398 = vld [vmem:[%s4373 + $0x120] sm:$0xff]
  %v4399 = vld [vmem:[%s4373 + $0x128] sm:$0xff]
  %v4400 = vld [vmem:[%s4373 + $0x138] sm:$0xff]
  %v4401 = vld [vmem:[%s4373 + $0x140] sm:$0xff]
  %v4402 = vld [vmem:[%s4373 + $0x150] sm:$0xff]
  %v4403 = vld [vmem:[%s4373 + $0x158] sm:$0xff]
  %v4404 = vld [vmem:[%s4373 + $0x168] sm:$0xff]
  %v4405 = vld [vmem:[%s4373 + $0x170] sm:$0xff]
  %v4406 = vld [vmem:[%s4373 + $0x1b0] sm:$0xff]
  %v4407 = vld [vmem:[%s4373 + $0x1b8] sm:$0xff]
  %v4408 = vld [vmem:[%s4373 + $0x1c8] sm:$0xff]
  %v4409 = vld [vmem:[%s4373 + $0x1d0] sm:$0xff]
  %v4410 = vld [vmem:[%s4373 + $0x1e0] sm:$0xff]
  %v4411 = vld [vmem:[%s4373 + $0x1e8] sm:$0xff]
  %v4412 = vld [vmem:[%s4373 + $0x1f8] sm:$0xff]
  %v4413 = vld [vmem:[%s4373 + $0x200] sm:$0xff]
  %v4414 = vld [vmem:[%s4373 + $0x210] sm:$0xff]
  %v4415 = vld [vmem:[%s4373 + $0x218] sm:$0xff]
  %v4416 = vld [vmem:[%s4373 + $0x228] sm:$0xff]
  %v4417 = vld [vmem:[%s4373 + $0x230] sm:$0xff]
  %v4418 = vld [vmem:[%s4373 + $0x240] sm:$0xff]
  %v4419 = vld [vmem:[%s4373 + $0x248] sm:$0xff]
  %v4420 = vld [vmem:[%s4373 + $0x258] sm:$0xff]
  %v4421 = vld [vmem:[%s4373 + $0x260] sm:$0xff]
  %v4422 = vld [vmem:[%s4373 + $0x270] sm:$0xff]
  %v4423 = vld [vmem:[%s4373 + $0x278] sm:$0xff]
  %v4424 = vld [vmem:[%s4373 + $0x288] sm:$0xff]
  %v4425 = vld [vmem:[%s4373 + $0x290] sm:$0xff]
  %v4426 = vld [vmem:[%s4373 + $0x2a0] sm:$0xff]
  %v4427 = vld [vmem:[%s4373 + $0x2a8] sm:$0xff]
  %v4428 = vld [vmem:[%s4373 + $0x2b8] sm:$0xff]
  %v4429 = vld [vmem:[%s4373 + $0x2c0] sm:$0xff]
  %v4430 = vld [vmem:[%s4373 + $0x2d0] sm:$0xff]
  %v4431 = vld [vmem:[%s4373 + $0x2d8] sm:$0xff]
  %v4432 = vld [vmem:[%s4373 + $0x2e8] sm:$0xff]
  %v4433 = vld [vmem:[%s4373 + $0x2f0] sm:$0xff]
  %v4434 = vld [vmem:[%s4373 + $0x300] sm:$0xff]
  %v4435 = vld [vmem:[%s4373 + $0x308] sm:$0xff]
  %v4436 = vld [vmem:[%s4373 + $0x318] sm:$0xff]
  %v4437 = vld [vmem:[%s4373 + $0x320] sm:$0xff]
  %s4438 = scalar_lea.vmem %s1, 48
  %v4439 = vld [vmem:[%s4438] sm:$0xff]
  %v4441 = vsel %vm20, %v4374, 0
  %v4444 = vsel %vm20, %v4375, 0
  %v4447 = vsel %vm20, %v4376, 0
  %v4450 = vsel %vm20, %v4377, 0
  %v4453 = vsel %vm20, %v4378, 0
  %v4456 = vsel %vm20, %v4379, 0
  %v4459 = vsel %vm20, %v4380, 0
  %v4462 = vsel %vm20, %v4381, 0
  %v4465 = vsel %vm20, %v4382, 0
  %v4468 = vsel %vm20, %v4383, 0
  %v4471 = vsel %vm20, %v4384, 0
  %v4474 = vsel %vm20, %v4385, 0
  %v4477 = vsel %vm20, %v4386, 0
  %v4480 = vsel %vm20, %v4387, 0
  %v4483 = vsel %vm20, %v4388, 0
  %v4486 = vsel %vm20, %v4389, 0
  %v4489 = vsel %vm20, %v4390, 0
  %v4492 = vsel %vm20, %v4391, 0
  %v4495 = vsel %vm20, %v4392, 0
  %v4498 = vsel %vm20, %v4393, 0
  %v4501 = vsel %vm20, %v4394, 0
  %v4504 = vsel %vm20, %v4395, 0
  %v4507 = vsel %vm20, %v4396, 0
  %v4510 = vsel %vm20, %v4397, 0
  %v4513 = vsel %vm20, %v4398, 0
  %v4516 = vsel %vm20, %v4399, 0
  %v4519 = vsel %vm20, %v4400, 0
  %v4522 = vsel %vm20, %v4401, 0
  %v4525 = vsel %vm20, %v4402, 0
  %v4528 = vsel %vm20, %v4403, 0
  %v4531 = vsel %vm20, %v4404, 0
  %v4534 = vsel %vm20, %v4405, 0
  %v4537 = vsel %vm20, %v4406, 0
  %v4540 = vsel %vm20, %v4407, 0
  %v4543 = vsel %vm20, %v4408, 0
  %v4546 = vsel %vm20, %v4409, 0
  %v4549 = vsel %vm20, %v4410, 0
  %v4552 = vsel %vm20, %v4411, 0
  %v4555 = vsel %vm20, %v4412, 0
  %v4558 = vsel %vm20, %v4413, 0
  %v4561 = vsel %vm20, %v4414, 0
  %v4564 = vsel %vm20, %v4415, 0
  %v4567 = vsel %vm20, %v4416, 0
  %v4570 = vsel %vm20, %v4417, 0
  %v4573 = vsel %vm20, %v4418, 0
  %v4576 = vsel %vm20, %v4419, 0
  %v4579 = vsel %vm20, %v4420, 0
  %v4582 = vsel %vm20, %v4421, 0
  %v4585 = vsel %vm20, %v4422, 0
  %v4588 = vsel %vm20, %v4423, 0
  %v4591 = vsel %vm20, %v4424, 0
  %v4594 = vsel %vm20, %v4425, 0
  %v4597 = vsel %vm20, %v4426, 0
  %v4600 = vsel %vm20, %v4427, 0
  %v4603 = vsel %vm20, %v4428, 0
  %v4606 = vsel %vm20, %v4429, 0
  %v4609 = vsel %vm20, %v4430, 0
  %v4612 = vsel %vm20, %v4431, 0
  %v4615 = vsel %vm20, %v4432, 0
  %v4618 = vsel %vm20, %v4433, 0
  %v4621 = vsel %vm20, %v4434, 0
  %v4624 = vsel %vm20, %v4435, 0
  %v4627 = vsel %vm20, %v4436, 0
  %v4630 = vsel %vm20, %v4437, 0
  %4632 = vmatprep.subr.mxu0 0.0
  %4633 = vmatpush1.msra.mxu0 %v4439
  %4634 = vmatprep.subr.mxu0 0.0
  %4635 = vmatpush1.msra.mxu0 0.0
  %4636 = vmatprep.subr.mxu0 0.0
  %4637 = vmatpush1.msra.mxu0 0.0
  %4638 = vmatprep.subr.mxu0 0.0
  %4639 = vmatpush1.msra.mxu0 0.0
  %4640 = vmatprep.subr.mxu0 0.0
  %4641 = vmatpush1.msra.mxu0 0.0
  %4642 = vmatprep.subr.mxu0 0.0
  %4643 = vmatpush1.msra.mxu0 0.0
  %4644 = vmatprep.subr.mxu0 0.0
  %4645 = vmatpush1.msra.mxu0 0.0
  %4646 = vmatprep.subr.mxu0 0.0
  %4647 = vmatpush1.msra.mxu0 0.0
  %4648 = vmatprep.subr.mxu0 0.0
  %4649 = vmatpush1.msra.mxu0 0.0
  %4650 = vmatprep.subr.mxu0 0.0
  %4651 = vmatpush1.msra.mxu0 0.0
  %4652 = vmatprep.subr.mxu0 0.0
  %4653 = vmatpush1.msra.mxu0 0.0
  %4654 = vmatprep.subr.mxu0 0.0
  %4655 = vmatpush1.msra.mxu0 0.0
  %4656 = vmatprep.subr.mxu0 0.0
  %4657 = vmatpush1.msra.mxu0 0.0
  %4658 = vmatprep.subr.mxu0 0.0
  %4659 = vmatpush1.msra.mxu0 0.0
  %4660 = vmatprep.subr.mxu0 0.0
  %4661 = vmatpush1.msra.mxu0 0.0
  %4662 = vmatprep.subr.mxu0 0.0
  %4663 = vmatpush1.msra.mxu0 0.0
  %4664 = vmatprep.subr.mxu0 0.0
  %4665 = vmatpush1.msra.mxu0 0.0
  %4666 = vmatprep.subr.mxu0 0.0
  %4667 = vmatpush1.msra.mxu0 0.0
  %4668 = vmatprep.subr.mxu0 0.0
  %4669 = vmatpush1.msra.mxu0 0.0
  %4670 = vmatprep.subr.mxu0 0.0
  %4671 = vmatpush1.msra.mxu0 0.0
  %4672 = vmatprep.subr.mxu0 0.0
  %4673 = vmatpush1.msra.mxu0 0.0
  %4674 = vmatprep.subr.mxu0 0.0
  %4675 = vmatpush1.msra.mxu0 0.0
  %4676 = vmatprep.subr.mxu0 0.0
  %4677 = vmatpush1.msra.mxu0 0.0
  %4678 = vmatprep.subr.mxu0 0.0
  %4679 = vmatpush1.msra.mxu0 0.0
  %4680 = vmatprep.subr.mxu0 0.0
  %4681 = vmatpush1.msra.mxu0 0.0
  %4682 = vmatprep.subr.mxu0 0.0
  %4683 = vmatpush1.msra.mxu0 0.0
  %4684 = vmatprep.subr.mxu0 0.0
  %4685 = vmatpush1.msra.mxu0 0.0
  %4686 = vmatprep.subr.mxu0 0.0
  %4687 = vmatpush1.msra.mxu0 0.0
  %4688 = vmatprep.subr.mxu0 0.0
  %4689 = vmatpush1.msra.mxu0 0.0
  %4690 = vmatprep.subr.mxu0 0.0
  %4691 = vmatpush1.msra.mxu0 0.0
  %4692 = vmatprep.subr.mxu0 0.0
  %4693 = vmatpush1.msra.mxu0 0.0
  %4694 = vmatprep.subr.mxu0 0.0
  %4695 = vmatpush1.msra.mxu0 0.0
  %4696 = vmatprep.mubr.f32.mxu0 0.0
  %4697 = vmatmul.mubr.f32.gmra.mrb[0].mxu0 %v4441
  %v4698 = vpop.f32.mrb[0].mxu0
  %v4699 = vadd.f32 0.0, %v4698
  %v4700 = vpop.f32.mrb[0].mxu0
  %4701 = vmatprep.mubr.f32.mxu0 0.0
  %4702 = vmatmul.mubr.f32.gmra.mrb[0].mxu0 %v4444
  %v4703 = vpop.f32.mrb[0].mxu0
  %v4704 = vadd.f32 0.0, %v4703
  %v4705 = vpop.f32.mrb[0].mxu0
  %4706 = vmatprep.mubr.f32.mxu0 0.0
  %4707 = vmatmul.mubr.f32.gmra.mrb[0].mxu0 %v4447
  %v4708 = vpop.f32.mrb[0].mxu0
  %v4709 = vadd.f32 0.0, %v4708
  %v4710 = vpop.f32.mrb[0].mxu0
  %4711 = vmatprep.mubr.f32.mxu0 0.0
  %4712 = vmatmul.mubr.f32.gmra.mrb[0].mxu0 %v4450
  %v4713 = vpop.f32.mrb[0].mxu0
  %v4714 = vadd.f32 0.0, %v4713
  %v4715 = vpop.f32.mrb[0].mxu0
  %4716 = vmatprep.mubr.f32.mxu0 0.0
  %4717 = vmatmul.mubr.f32.gmra.mrb[0].mxu0 %v4453
  %v4718 = vpop.f32.mrb[0].mxu0
  %v4719 = vadd.f32 0.0, %v4718
  %v4720 = vpop.f32.mrb[0].mxu0
  %4721 = vmatprep.mubr.f32.mxu0 0.0
  %4722 = vmatmul.mubr.f32.gmra.mrb[0].mxu0 %v4456
  %v4723 = vpop.f32.mrb[0].mxu0
  %v4724 = vadd.f32 0.0, %v4723
  %v4725 = vpop.f32.mrb[0].mxu0
  %4726 = vmatprep.mubr.f32.mxu0 0.0
  %4727 = vmatmul.mubr.f32.gmra.mrb[0].mxu0 %v4459
  %v4728 = vpop.f32.mrb[0].mxu0
  %v4729 = vadd.f32 0.0, %v4728
  %v4730 = vpop.f32.mrb[0].mxu0
  %4731 = vmatprep.mubr.f32.mxu0 0.0
  %4732 = vmatmul.mubr.f32.gmra.mrb[0].mxu0 %v4462
  %v4733 = vpop.f32.mrb[0].mxu0
  %v4734 = vadd.f32 0.0, %v4733
  %v4735 = vpop.f32.mrb[0].mxu0
  %4736 = vmatprep.mubr.f32.mxu0 0.0
  %4737 = vmatmul.mubr.f32.gmra.mrb[0].mxu0 %v4465
  %v4738 = vpop.f32.mrb[0].mxu0
  %v4739 = vadd.f32 0.0, %v4738
  %v4740 = vpop.f32.mrb[0].mxu0
  %4741 = vmatprep.mubr.f32.mxu0 0.0
  %4742 = vmatmul.mubr.f32.gmra.mrb[0].mxu0 %v4468
  %v4743 = vpop.f32.mrb[0].mxu0
  %v4744 = vadd.f32 0.0, %v4743
  %v4745 = vpop.f32.mrb[0].mxu0
  %4746 = vmatprep.mubr.f32.mxu0 0.0
  %4747 = vmatmul.mubr.f32.gmra.mrb[0].mxu0 %v4471
  %v4748 = vpop.f32.mrb[0].mxu0
  %v4749 = vadd.f32 0.0, %v4748
  %v4750 = vpop.f32.mrb[0].mxu0
  %4751 = vmatprep.mubr.f32.mxu0 0.0
  %4752 = vmatmul.mubr.f32.gmra.mrb[0].mxu0 %v4474
  %v4753 = vpop.f32.mrb[0].mxu0
  %v4754 = vadd.f32 0.0, %v4753
  %v4755 = vpop.f32.mrb[0].mxu0
  %4756 = vmatprep.mubr.f32.mxu0 0.0
  %4757 = vmatmul.mubr.f32.gmra.mrb[0].mxu0 %v4477
  %v4758 = vpop.f32.mrb[0].mxu0
  %v4759 = vadd.f32 0.0, %v4758
  %v4760 = vpop.f32.mrb[0].mxu0
  %4761 = vmatprep.mubr.f32.mxu0 0.0
  %4762 = vmatmul.mubr.f32.gmra.mrb[0].mxu0 %v4480
  %v4763 = vpop.f32.mrb[0].mxu0
  %v4764 = vadd.f32 0.0, %v4763
  %v4765 = vpop.f32.mrb[0].mxu0
  %4766 = vmatprep.mubr.f32.mxu0 0.0
  %4767 = vmatmul.mubr.f32.gmra.mrb[0].mxu0 %v4483
  %v4768 = vpop.f32.mrb[0].mxu0
  %v4769 = vadd.f32 0.0, %v4768
  %v4770 = vpop.f32.mrb[0].mxu0
  %4771 = vmatprep.mubr.f32.mxu0 0.0
  %4772 = vmatmul.mubr.f32.gmra.mrb[0].mxu0 %v4486
  %v4773 = vpop.f32.mrb[0].mxu0
  %v4774 = vadd.f32 0.0, %v4773
  %v4775 = vpop.f32.mrb[0].mxu0
  %4776 = vmatprep.mubr.f32.mxu0 0.0
  %4777 = vmatmul.mubr.f32.gmra.mrb[0].mxu0 %v4489
  %v4778 = vpop.f32.mrb[0].mxu0
  %v4779 = vadd.f32 0.0, %v4778
  %v4780 = vpop.f32.mrb[0].mxu0
  %4781 = vmatprep.mubr.f32.mxu0 0.0
  %4782 = vmatmul.mubr.f32.gmra.mrb[0].mxu0 %v4492
  %v4783 = vpop.f32.mrb[0].mxu0
  %v4784 = vadd.f32 0.0, %v4783
  %v4785 = vpop.f32.mrb[0].mxu0
  %4786 = vmatprep.mubr.f32.mxu0 0.0
  %4787 = vmatmul.mubr.f32.gmra.mrb[0].mxu0 %v4495
  %v4788 = vpop.f32.mrb[0].mxu0
  %v4789 = vadd.f32 0.0, %v4788
  %v4790 = vpop.f32.mrb[0].mxu0
  %4791 = vmatprep.mubr.f32.mxu0 0.0
  %4792 = vmatmul.mubr.f32.gmra.mrb[0].mxu0 %v4498
  %v4793 = vpop.f32.mrb[0].mxu0
  %v4794 = vadd.f32 0.0, %v4793
  %v4795 = vpop.f32.mrb[0].mxu0
  %4796 = vmatprep.mubr.f32.mxu0 0.0
  %4797 = vmatmul.mubr.f32.gmra.mrb[0].mxu0 %v4501
  %v4798 = vpop.f32.mrb[0].mxu0
  %v4799 = vadd.f32 0.0, %v4798
  %v4800 = vpop.f32.mrb[0].mxu0
  %4801 = vmatprep.mubr.f32.mxu0 0.0
  %4802 = vmatmul.mubr.f32.gmra.mrb[0].mxu0 %v4504
  %v4803 = vpop.f32.mrb[0].mxu0
  %v4804 = vadd.f32 0.0, %v4803
  %v4805 = vpop.f32.mrb[0].mxu0
  %4806 = vmatprep.mubr.f32.mxu0 0.0
  %4807 = vmatmul.mubr.f32.gmra.mrb[0].mxu0 %v4507
  %v4808 = vpop.f32.mrb[0].mxu0
  %v4809 = vadd.f32 0.0, %v4808
  %v4810 = vpop.f32.mrb[0].mxu0
  %4811 = vmatprep.mubr.f32.mxu0 0.0
  %4812 = vmatmul.mubr.f32.gmra.mrb[0].mxu0 %v4510
  %v4813 = vpop.f32.mrb[0].mxu0
  %v4814 = vadd.f32 0.0, %v4813
  %v4815 = vpop.f32.mrb[0].mxu0
  %4816 = vmatprep.mubr.f32.mxu0 0.0
  %4817 = vmatmul.mubr.f32.gmra.mrb[0].mxu0 %v4513
  %v4818 = vpop.f32.mrb[0].mxu0
  %v4819 = vadd.f32 0.0, %v4818
  %v4820 = vpop.f32.mrb[0].mxu0
  %4821 = vmatprep.mubr.f32.mxu0 0.0
  %4822 = vmatmul.mubr.f32.gmra.mrb[0].mxu0 %v4516
  %v4823 = vpop.f32.mrb[0].mxu0
  %v4824 = vadd.f32 0.0, %v4823
  %v4825 = vpop.f32.mrb[0].mxu0
  %4826 = vmatprep.mubr.f32.mxu0 0.0
  %4827 = vmatmul.mubr.f32.gmra.mrb[0].mxu0 %v4519
  %v4828 = vpop.f32.mrb[0].mxu0
  %v4829 = vadd.f32 0.0, %v4828
  %v4830 = vpop.f32.mrb[0].mxu0
  %4831 = vmatprep.mubr.f32.mxu0 0.0
  %4832 = vmatmul.mubr.f32.gmra.mrb[0].mxu0 %v4522
  %v4833 = vpop.f32.mrb[0].mxu0
  %v4834 = vadd.f32 0.0, %v4833
  %v4835 = vpop.f32.mrb[0].mxu0
  %4836 = vmatprep.mubr.f32.mxu0 0.0
  %4837 = vmatmul.mubr.f32.gmra.mrb[0].mxu0 %v4525
  %v4838 = vpop.f32.mrb[0].mxu0
  %v4839 = vadd.f32 0.0, %v4838
  %v4840 = vpop.f32.mrb[0].mxu0
  %4841 = vmatprep.mubr.f32.mxu0 0.0
  %4842 = vmatmul.mubr.f32.gmra.mrb[0].mxu0 %v4528
  %v4843 = vpop.f32.mrb[0].mxu0
  %v4844 = vadd.f32 0.0, %v4843
  %v4845 = vpop.f32.mrb[0].mxu0
  %4846 = vmatprep.mubr.f32.mxu0 0.0
  %4847 = vmatmul.mubr.f32.gmra.mrb[0].mxu0 %v4531
  %v4848 = vpop.f32.mrb[0].mxu0
  %v4849 = vadd.f32 0.0, %v4848
  %v4850 = vpop.f32.mrb[0].mxu0
  %4851 = vmatprep.mubr.f32.mxu0 0.0
  %4852 = vmatmul.mubr.f32.gmra.mrb[0].mxu0 %v4534
  %v4853 = vpop.f32.mrb[0].mxu0
  %v4854 = vadd.f32 0.0, %v4853
  %v4855 = vpop.f32.mrb[0].mxu0
  %4856 = vmatprep.mubr.f32.mxu0 0.0
  %4857 = vmatmul.mubr.f32.gmra.mrb[0].mxu0 %v4537
  %v4858 = vpop.f32.mrb[0].mxu0
  %v4859 = vadd.f32 0.0, %v4858
  %v4860 = vpop.f32.mrb[0].mxu0
  %4861 = vmatprep.mubr.f32.mxu0 0.0
  %4862 = vmatmul.mubr.f32.gmra.mrb[0].mxu0 %v4540
  %v4863 = vpop.f32.mrb[0].mxu0
  %v4864 = vadd.f32 0.0, %v4863
  %v4865 = vpop.f32.mrb[0].mxu0
  %4866 = vmatprep.mubr.f32.mxu0 0.0
  %4867 = vmatmul.mubr.f32.gmra.mrb[0].mxu0 %v4543
  %v4868 = vpop.f32.mrb[0].mxu0
  %v4869 = vadd.f32 0.0, %v4868
  %v4870 = vpop.f32.mrb[0].mxu0
  %4871 = vmatprep.mubr.f32.mxu0 0.0
  %4872 = vmatmul.mubr.f32.gmra.mrb[0].mxu0 %v4546
  %v4873 = vpop.f32.mrb[0].mxu0
  %v4874 = vadd.f32 0.0, %v4873
  %v4875 = vpop.f32.mrb[0].mxu0
  %4876 = vmatprep.mubr.f32.mxu0 0.0
  %4877 = vmatmul.mubr.f32.gmra.mrb[0].mxu0 %v4549
  %v4878 = vpop.f32.mrb[0].mxu0
  %v4879 = vadd.f32 0.0, %v4878
  %v4880 = vpop.f32.mrb[0].mxu0
  %4881 = vmatprep.mubr.f32.mxu0 0.0
  %4882 = vmatmul.mubr.f32.gmra.mrb[0].mxu0 %v4552
  %v4883 = vpop.f32.mrb[0].mxu0
  %v4884 = vadd.f32 0.0, %v4883
  %v4885 = vpop.f32.mrb[0].mxu0
  %4886 = vmatprep.mubr.f32.mxu0 0.0
  %4887 = vmatmul.mubr.f32.gmra.mrb[0].mxu0 %v4555
  %v4888 = vpop.f32.mrb[0].mxu0
  %v4889 = vadd.f32 0.0, %v4888
  %v4890 = vpop.f32.mrb[0].mxu0
  %4891 = vmatprep.mubr.f32.mxu0 0.0
  %4892 = vmatmul.mubr.f32.gmra.mrb[0].mxu0 %v4558
  %v4893 = vpop.f32.mrb[0].mxu0
  %v4894 = vadd.f32 0.0, %v4893
  %v4895 = vpop.f32.mrb[0].mxu0
  %4896 = vmatprep.mubr.f32.mxu0 0.0
  %4897 = vmatmul.mubr.f32.gmra.mrb[0].mxu0 %v4561
  %v4898 = vpop.f32.mrb[0].mxu0
  %v4899 = vadd.f32 0.0, %v4898
  %v4900 = vpop.f32.mrb[0].mxu0
  %4901 = vmatprep.mubr.f32.mxu0 0.0
  %4902 = vmatmul.mubr.f32.gmra.mrb[0].mxu0 %v4564
  %v4903 = vpop.f32.mrb[0].mxu0
  %v4904 = vadd.f32 0.0, %v4903
  %v4905 = vpop.f32.mrb[0].mxu0
  %4906 = vmatprep.mubr.f32.mxu0 0.0
  %4907 = vmatmul.mubr.f32.gmra.mrb[0].mxu0 %v4567
  %v4908 = vpop.f32.mrb[0].mxu0
  %v4909 = vadd.f32 0.0, %v4908
  %v4910 = vpop.f32.mrb[0].mxu0
  %4911 = vmatprep.mubr.f32.mxu0 0.0
  %4912 = vmatmul.mubr.f32.gmra.mrb[0].mxu0 %v4570
  %v4913 = vpop.f32.mrb[0].mxu0
  %v4914 = vadd.f32 0.0, %v4913
  %v4915 = vpop.f32.mrb[0].mxu0
  %4916 = vmatprep.mubr.f32.mxu0 0.0
  %4917 = vmatmul.mubr.f32.gmra.mrb[0].mxu0 %v4573
  %v4918 = vpop.f32.mrb[0].mxu0
  %v4919 = vadd.f32 0.0, %v4918
  %v4920 = vpop.f32.mrb[0].mxu0
  %4921 = vmatprep.mubr.f32.mxu0 0.0
  %4922 = vmatmul.mubr.f32.gmra.mrb[0].mxu0 %v4576
  %v4923 = vpop.f32.mrb[0].mxu0
  %v4924 = vadd.f32 0.0, %v4923
  %v4925 = vpop.f32.mrb[0].mxu0
  %4926 = vmatprep.mubr.f32.mxu0 0.0
  %4927 = vmatmul.mubr.f32.gmra.mrb[0].mxu0 %v4579
  %v4928 = vpop.f32.mrb[0].mxu0
  %v4929 = vadd.f32 0.0, %v4928
  %v4930 = vpop.f32.mrb[0].mxu0
  %4931 = vmatprep.mubr.f32.mxu0 0.0
  %4932 = vmatmul.mubr.f32.gmra.mrb[0].mxu0 %v4582
  %v4933 = vpop.f32.mrb[0].mxu0
  %v4934 = vadd.f32 0.0, %v4933
  %v4935 = vpop.f32.mrb[0].mxu0
  %4936 = vmatprep.mubr.f32.mxu0 0.0
  %4937 = vmatmul.mubr.f32.gmra.mrb[0].mxu0 %v4585
  %v4938 = vpop.f32.mrb[0].mxu0
  %v4939 = vadd.f32 0.0, %v4938
  %v4940 = vpop.f32.mrb[0].mxu0
  %4941 = vmatprep.mubr.f32.mxu0 0.0
  %4942 = vmatmul.mubr.f32.gmra.mrb[0].mxu0 %v4588
  %v4943 = vpop.f32.mrb[0].mxu0
  %v4944 = vadd.f32 0.0, %v4943
  %v4945 = vpop.f32.mrb[0].mxu0
  %4946 = vmatprep.mubr.f32.mxu0 0.0
  %4947 = vmatmul.mubr.f32.gmra.mrb[0].mxu0 %v4591
  %v4948 = vpop.f32.mrb[0].mxu0
  %v4949 = vadd.f32 0.0, %v4948
  %v4950 = vpop.f32.mrb[0].mxu0
  %4951 = vmatprep.mubr.f32.mxu0 0.0
  %4952 = vmatmul.mubr.f32.gmra.mrb[0].mxu0 %v4594
  %v4953 = vpop.f32.mrb[0].mxu0
  %v4954 = vadd.f32 0.0, %v4953
  %v4955 = vpop.f32.mrb[0].mxu0
  %4956 = vmatprep.mubr.f32.mxu0 0.0
  %4957 = vmatmul.mubr.f32.gmra.mrb[0].mxu0 %v4597
  %v4958 = vpop.f32.mrb[0].mxu0
  %v4959 = vadd.f32 0.0, %v4958
  %v4960 = vpop.f32.mrb[0].mxu0
  %4961 = vmatprep.mubr.f32.mxu0 0.0
  %4962 = vmatmul.mubr.f32.gmra.mrb[0].mxu0 %v4600
  %v4963 = vpop.f32.mrb[0].mxu0
  %v4964 = vadd.f32 0.0, %v4963
  %v4965 = vpop.f32.mrb[0].mxu0
  %4966 = vmatprep.mubr.f32.mxu0 0.0
  %4967 = vmatmul.mubr.f32.gmra.mrb[0].mxu0 %v4603
  %v4968 = vpop.f32.mrb[0].mxu0
  %v4969 = vadd.f32 0.0, %v4968
  %v4970 = vpop.f32.mrb[0].mxu0
  %4971 = vmatprep.mubr.f32.mxu0 0.0
  %4972 = vmatmul.mubr.f32.gmra.mrb[0].mxu0 %v4606
  %v4973 = vpop.f32.mrb[0].mxu0
  %v4974 = vadd.f32 0.0, %v4973
  %v4975 = vpop.f32.mrb[0].mxu0
  %4976 = vmatprep.mubr.f32.mxu0 0.0
  %4977 = vmatmul.mubr.f32.gmra.mrb[0].mxu0 %v4609
  %v4978 = vpop.f32.mrb[0].mxu0
  %v4979 = vadd.f32 0.0, %v4978
  %v4980 = vpop.f32.mrb[0].mxu0
  %4981 = vmatprep.mubr.f32.mxu0 0.0
  %4982 = vmatmul.mubr.f32.gmra.mrb[0].mxu0 %v4612
  %v4983 = vpop.f32.mrb[0].mxu0
  %v4984 = vadd.f32 0.0, %v4983
  %v4985 = vpop.f32.mrb[0].mxu0
  %4986 = vmatprep.mubr.f32.mxu0 0.0
  %4987 = vmatmul.mubr.f32.gmra.mrb[0].mxu0 %v4615
  %v4988 = vpop.f32.mrb[0].mxu0
  %v4989 = vadd.f32 0.0, %v4988
  %v4990 = vpop.f32.mrb[0].mxu0
  %4991 = vmatprep.mubr.f32.mxu0 0.0
  %4992 = vmatmul.mubr.f32.gmra.mrb[0].mxu0 %v4618
  %v4993 = vpop.f32.mrb[0].mxu0
  %v4994 = vadd.f32 0.0, %v4993
  %v4995 = vpop.f32.mrb[0].mxu0
  %4996 = vmatprep.mubr.f32.mxu0 0.0
  %4997 = vmatmul.mubr.f32.gmra.mrb[0].mxu0 %v4621
  %v4998 = vpop.f32.mrb[0].mxu0
  %v4999 = vadd.f32 0.0, %v4998
  %v5000 = vpop.f32.mrb[0].mxu0
  %5001 = vmatprep.mubr.f32.mxu0 0.0
  %5002 = vmatmul.mubr.f32.gmra.mrb[0].mxu0 %v4624
  %v5003 = vpop.f32.mrb[0].mxu0
  %v5004 = vadd.f32 0.0, %v5003
  %v5005 = vpop.f32.mrb[0].mxu0
  %5006 = vmatprep.mubr.f32.mxu0 0.0
  %5007 = vmatmul.mubr.f32.gmra.mrb[0].mxu0 %v4627
  %v5008 = vpop.f32.mrb[0].mxu0
  %v5009 = vadd.f32 0.0, %v5008
  %v5010 = vpop.f32.mrb[0].mxu0
  %5011 = vmatprep.mubr.f32.mxu0 0.0
  %5012 = vmatmul.mubr.f32.gmra.mrb[0].mxu0 %v4630
  %v5013 = vpop.f32.mrb[0].mxu0
  %v5014 = vadd.f32 0.0, %v5013
  %v5015 = vpop.f32.mrb[0].mxu0
  %5016 = vdwg.mxu0
  %v5017 = vadd.f32 %v4309, %v4699
  %v5018 = vadd.f32 %v4310, %v4704
  %v5019 = vadd.f32 %v4311, %v4709
  %v5020 = vadd.f32 %v4312, %v4714
  %v5021 = vadd.f32 %v4313, %v4719
  %v5022 = vadd.f32 %v4314, %v4724
  %v5023 = vadd.f32 %v4315, %v4729
  %v5024 = vadd.f32 %v4316, %v4734
  %v5025 = vadd.f32 %v4317, %v4739
  %v5026 = vadd.f32 %v4318, %v4744
  %v5027 = vadd.f32 %v4319, %v4749
  %v5028 = vadd.f32 %v4320, %v4754
  %v5029 = vadd.f32 %v4321, %v4759
  %v5030 = vadd.f32 %v4322, %v4764
  %v5031 = vadd.f32 %v4323, %v4769
  %v5032 = vadd.f32 %v4324, %v4774
  %v5033 = vadd.f32 %v4325, %v4779
  %v5034 = vadd.f32 %v4326, %v4784
  %v5035 = vadd.f32 %v4327, %v4789
  %v5036 = vadd.f32 %v4328, %v4794
  %v5037 = vadd.f32 %v4329, %v4799
  %v5038 = vadd.f32 %v4330, %v4804
  %v5039 = vadd.f32 %v4331, %v4809
  %v5040 = vadd.f32 %v4332, %v4814
  %v5041 = vadd.f32 %v4333, %v4819
  %v5042 = vadd.f32 %v4334, %v4824
  %v5043 = vadd.f32 %v4335, %v4829
  %v5044 = vadd.f32 %v4336, %v4834
  %v5045 = vadd.f32 %v4337, %v4839
  %v5046 = vadd.f32 %v4338, %v4844
  %v5047 = vadd.f32 %v4339, %v4849
  %v5048 = vadd.f32 %v4340, %v4854
  %v5049 = vadd.f32 %v4341, %v4859
  %v5050 = vadd.f32 %v4342, %v4864
  %v5051 = vadd.f32 %v4343, %v4869
  %v5052 = vadd.f32 %v4344, %v4874
  %v5053 = vadd.f32 %v4345, %v4879
  %v5054 = vadd.f32 %v4346, %v4884
  %v5055 = vadd.f32 %v4347, %v4889
  %v5056 = vadd.f32 %v4348, %v4894
  %v5057 = vadd.f32 %v4349, %v4899
  %v5058 = vadd.f32 %v4350, %v4904
  %v5059 = vadd.f32 %v4351, %v4909
  %v5060 = vadd.f32 %v4352, %v4914
  %v5061 = vadd.f32 %v4353, %v4919
  %v5062 = vadd.f32 %v4354, %v4924
  %v5063 = vadd.f32 %v4355, %v4929
  %v5064 = vadd.f32 %v4356, %v4934
  %v5065 = vadd.f32 %v4357, %v4939
  %v5066 = vadd.f32 %v4358, %v4944
  %v5067 = vadd.f32 %v4359, %v4949
  %v5068 = vadd.f32 %v4360, %v4954
  %v5069 = vadd.f32 %v4361, %v4959
  %v5070 = vadd.f32 %v4362, %v4964
  %v5071 = vadd.f32 %v4363, %v4969
  %v5072 = vadd.f32 %v4364, %v4974
  %v5073 = vadd.f32 %v4365, %v4979
  %v5074 = vadd.f32 %v4366, %v4984
  %v5075 = vadd.f32 %v4367, %v4989
  %v5076 = vadd.f32 %v4368, %v4994
  %v5077 = vadd.f32 %v4369, %v4999
  %v5078 = vadd.f32 %v4370, %v5004
  %v5079 = vadd.f32 %v4371, %v5009
  %v5080 = vadd.f32 %v4372, %v5014
  %v5081 = vld [vmem:[%s4373 + $0x1] sm:$0xff]
  %v5082 = vld [vmem:[%s4373 + $0x9] sm:$0xff]
  %v5083 = vld [vmem:[%s4373 + $0x19] sm:$0xff]
  %v5084 = vld [vmem:[%s4373 + $0x21] sm:$0xff]
  %v5085 = vld [vmem:[%s4373 + $0x31] sm:$0xff]
  %v5086 = vld [vmem:[%s4373 + $0x39] sm:$0xff]
  %v5087 = vld [vmem:[%s4373 + $0x49] sm:$0xff]
  %v5088 = vld [vmem:[%s4373 + $0x51] sm:$0xff]
  %v5089 = vld [vmem:[%s4373 + $0x61] sm:$0xff]
  %v5090 = vld [vmem:[%s4373 + $0x69] sm:$0xff]
  %v5091 = vld [vmem:[%s4373 + $0x79] sm:$0xff]
  %v5092 = vld [vmem:[%s4373 + $0x81] sm:$0xff]
  %v5093 = vld [vmem:[%s4373 + $0x91] sm:$0xff]
  %v5094 = vld [vmem:[%s4373 + $0x99] sm:$0xff]
  %v5095 = vld [vmem:[%s4373 + $0xa9] sm:$0xff]
  %v5096 = vld [vmem:[%s4373 + $0xb1] sm:$0xff]
  %v5097 = vld [vmem:[%s4373 + $0xc1] sm:$0xff]
  %v5098 = vld [vmem:[%s4373 + $0xc9] sm:$0xff]
  %v5099 = vld [vmem:[%s4373 + $0xd9] sm:$0xff]
  %v5100 = vld [vmem:[%s4373 + $0xe1] sm:$0xff]
  %v5101 = vld [vmem:[%s4373 + $0xf1] sm:$0xff]
  %v5102 = vld [vmem:[%s4373 + $0xf9] sm:$0xff]
  %v5103 = vld [vmem:[%s4373 + $0x109] sm:$0xff]
  %v5104 = vld [vmem:[%s4373 + $0x111] sm:$0xff]
  %v5105 = vld [vmem:[%s4373 + $0x121] sm:$0xff]
  %v5106 = vld [vmem:[%s4373 + $0x129] sm:$0xff]
  %v5107 = vld [vmem:[%s4373 + $0x139] sm:$0xff]
  %v5108 = vld [vmem:[%s4373 + $0x141] sm:$0xff]
  %v5109 = vld [vmem:[%s4373 + $0x151] sm:$0xff]
  %v5110 = vld [vmem:[%s4373 + $0x159] sm:$0xff]
  %v5111 = vld [vmem:[%s4373 + $0x169] sm:$0xff]
  %v5112 = vld [vmem:[%s4373 + $0x171] sm:$0xff]
  %v5113 = vld [vmem:[%s4373 + $0x1b1] sm:$0xff]
  %v5114 = vld [vmem:[%s4373 + $0x1b9] sm:$0xff]
  %v5115 = vld [vmem:[%s4373 + $0x1c9] sm:$0xff]
  %v5116 = vld [vmem:[%s4373 + $0x1d1] sm:$0xff]
  %v5117 = vld [vmem:[%s4373 + $0x1e1] sm:$0xff]
  %v5118 = vld [vmem:[%s4373 + $0x1e9] sm:$0xff]
  %v5119 = vld [vmem:[%s4373 + $0x1f9] sm:$0xff]
  %v5120 = vld [vmem:[%s4373 + $0x201] sm:$0xff]
  %v5121 = vld [vmem:[%s4373 + $0x211] sm:$0xff]
  %v5122 = vld [vmem:[%s4373 + $0x219] sm:$0xff]
  %v5123 = vld [vmem:[%s4373 + $0x229] sm:$0xff]
  %v5124 = vld [vmem:[%s4373 + $0x231] sm:$0xff]
  %v5125 = vld [vmem:[%s4373 + $0x241] sm:$0xff]
  %v5126 = vld [vmem:[%s4373 + $0x249] sm:$0xff]
  %v5127 = vld [vmem:[%s4373 + $0x259] sm:$0xff]
  %v5128 = vld [vmem:[%s4373 + $0x261] sm:$0xff]
  %v5129 = vld [vmem:[%s4373 + $0x271] sm:$0xff]
  %v5130 = vld [vmem:[%s4373 + $0x279] sm:$0xff]
  %v5131 = vld [vmem:[%s4373 + $0x289] sm:$0xff]
  %v5132 = vld [vmem:[%s4373 + $0x291] sm:$0xff]
  %v5133 = vld [vmem:[%s4373 + $0x2a1] sm:$0xff]
  %v5134 = vld [vmem:[%s4373 + $0x2a9] sm:$0xff]
  %v5135 = vld [vmem:[%s4373 + $0x2b9] sm:$0xff]
  %v5136 = vld [vmem:[%s4373 + $0x2c1] sm:$0xff]
  %v5137 = vld [vmem:[%s4373 + $0x2d1] sm:$0xff]
  %v5138 = vld [vmem:[%s4373 + $0x2d9] sm:$0xff]
  %v5139 = vld [vmem:[%s4373 + $0x2e9] sm:$0xff]
  %v5140 = vld [vmem:[%s4373 + $0x2f1] sm:$0xff]
  %v5141 = vld [vmem:[%s4373 + $0x301] sm:$0xff]
  %v5142 = vld [vmem:[%s4373 + $0x309] sm:$0xff]
  %v5143 = vld [vmem:[%s4373 + $0x319] sm:$0xff]
  %v5144 = vld [vmem:[%s4373 + $0x321] sm:$0xff]
  %s5145 = scalar_lea.vmem %s1, 56
  %v5146 = vld [vmem:[%s5145] sm:$0xff]
  %v5148 = vsel %vm20, %v5081, 0
  %v5151 = vsel %vm20, %v5082, 0
  %v5154 = vsel %vm20, %v5083, 0
  %v5157 = vsel %vm20, %v5084, 0
  %v5160 = vsel %vm20, %v5085, 0
  %v5163 = vsel %vm20, %v5086, 0
  %v5166 = vsel %vm20, %v5087, 0
  %v5169 = vsel %vm20, %v5088, 0
  %v5172 = vsel %vm20, %v5089, 0
  %v5175 = vsel %vm20, %v5090, 0
  %v5178 = vsel %vm20, %v5091, 0
  %v5181 = vsel %vm20, %v5092, 0
  %v5184 = vsel %vm20, %v5093, 0
  %v5187 = vsel %vm20, %v5094, 0
  %v5190 = vsel %vm20, %v5095, 0
  %v5193 = vsel %vm20, %v5096, 0
  %v5196 = vsel %vm20, %v5097, 0
  %v5199 = vsel %vm20, %v5098, 0
  %v5202 = vsel %vm20, %v5099, 0
  %v5205 = vsel %vm20, %v5100, 0
  %v5208 = vsel %vm20, %v5101, 0
  %v5211 = vsel %vm20, %v5102, 0
  %v5214 = vsel %vm20, %v5103, 0
  %v5217 = vsel %vm20, %v5104, 0
  %v5220 = vsel %vm20, %v5105, 0
  %v5223 = vsel %vm20, %v5106, 0
  %v5226 = vsel %vm20, %v5107, 0
  %v5229 = vsel %vm20, %v5108, 0
  %v5232 = vsel %vm20, %v5109, 0
  %v5235 = vsel %vm20, %v5110, 0
  %v5238 = vsel %vm20, %v5111, 0
  %v5241 = vsel %vm20, %v5112, 0
  %v5244 = vsel %vm20, %v5113, 0
  %v5247 = vsel %vm20, %v5114, 0
  %v5250 = vsel %vm20, %v5115, 0
  %v5253 = vsel %vm20, %v5116, 0
  %v5256 = vsel %vm20, %v5117, 0
  %v5259 = vsel %vm20, %v5118, 0
  %v5262 = vsel %vm20, %v5119, 0
  %v5265 = vsel %vm20, %v5120, 0
  %v5268 = vsel %vm20, %v5121, 0
  %v5271 = vsel %vm20, %v5122, 0
  %v5274 = vsel %vm20, %v5123, 0
  %v5277 = vsel %vm20, %v5124, 0
  %v5280 = vsel %vm20, %v5125, 0
  %v5283 = vsel %vm20, %v5126, 0
  %v5286 = vsel %vm20, %v5127, 0
  %v5289 = vsel %vm20, %v5128, 0
  %v5292 = vsel %vm20, %v5129, 0
  %v5295 = vsel %vm20, %v5130, 0
  %v5298 = vsel %vm20, %v5131, 0
  %v5301 = vsel %vm20, %v5132, 0
  %v5304 = vsel %vm20, %v5133, 0
  %v5307 = vsel %vm20, %v5134, 0
  %v5310 = vsel %vm20, %v5135, 0
  %v5313 = vsel %vm20, %v5136, 0
  %v5316 = vsel %vm20, %v5137, 0
  %v5319 = vsel %vm20, %v5138, 0
  %v5322 = vsel %vm20, %v5139, 0
  %v5325 = vsel %vm20, %v5140, 0
  %v5328 = vsel %vm20, %v5141, 0
  %v5331 = vsel %vm20, %v5142, 0
  %v5334 = vsel %vm20, %v5143, 0
  %v5337 = vsel %vm20, %v5144, 0
  %5339 = vmatprep.subr.mxu0 0.0
  %5340 = vmatpush1.msra.mxu0 %v5146
  %5341 = vmatprep.subr.mxu0 0.0
  %5342 = vmatpush1.msra.mxu0 0.0
  %5343 = vmatprep.subr.mxu0 0.0
  %5344 = vmatpush1.msra.mxu0 0.0
  %5345 = vmatprep.subr.mxu0 0.0
  %5346 = vmatpush1.msra.mxu0 0.0
  %5347 = vmatprep.subr.mxu0 0.0
  %5348 = vmatpush1.msra.mxu0 0.0
  %5349 = vmatprep.subr.mxu0 0.0
  %5350 = vmatpush1.msra.mxu0 0.0
  %5351 = vmatprep.subr.mxu0 0.0
  %5352 = vmatpush1.msra.mxu0 0.0
  %5353 = vmatprep.subr.mxu0 0.0
  %5354 = vmatpush1.msra.mxu0 0.0
  %5355 = vmatprep.subr.mxu0 0.0
  %5356 = vmatpush1.msra.mxu0 0.0
  %5357 = vmatprep.subr.mxu0 0.0
  %5358 = vmatpush1.msra.mxu0 0.0
  %5359 = vmatprep.subr.mxu0 0.0
  %5360 = vmatpush1.msra.mxu0 0.0
  %5361 = vmatprep.subr.mxu0 0.0
  %5362 = vmatpush1.msra.mxu0 0.0
  %5363 = vmatprep.subr.mxu0 0.0
  %5364 = vmatpush1.msra.mxu0 0.0
  %5365 = vmatprep.subr.mxu0 0.0
  %5366 = vmatpush1.msra.mxu0 0.0
  %5367 = vmatprep.subr.mxu0 0.0
  %5368 = vmatpush1.msra.mxu0 0.0
  %5369 = vmatprep.subr.mxu0 0.0
  %5370 = vmatpush1.msra.mxu0 0.0
  %5371 = vmatprep.subr.mxu0 0.0
  %5372 = vmatpush1.msra.mxu0 0.0
  %5373 = vmatprep.subr.mxu0 0.0
  %5374 = vmatpush1.msra.mxu0 0.0
  %5375 = vmatprep.subr.mxu0 0.0
  %5376 = vmatpush1.msra.mxu0 0.0
  %5377 = vmatprep.subr.mxu0 0.0
  %5378 = vmatpush1.msra.mxu0 0.0
  %5379 = vmatprep.subr.mxu0 0.0
  %5380 = vmatpush1.msra.mxu0 0.0
  %5381 = vmatprep.subr.mxu0 0.0
  %5382 = vmatpush1.msra.mxu0 0.0
  %5383 = vmatprep.subr.mxu0 0.0
  %5384 = vmatpush1.msra.mxu0 0.0
  %5385 = vmatprep.subr.mxu0 0.0
  %5386 = vmatpush1.msra.mxu0 0.0
  %5387 = vmatprep.subr.mxu0 0.0
  %5388 = vmatpush1.msra.mxu0 0.0
  %5389 = vmatprep.subr.mxu0 0.0
  %5390 = vmatpush1.msra.mxu0 0.0
  %5391 = vmatprep.subr.mxu0 0.0
  %5392 = vmatpush1.msra.mxu0 0.0
  %5393 = vmatprep.subr.mxu0 0.0
  %5394 = vmatpush1.msra.mxu0 0.0
  %5395 = vmatprep.subr.mxu0 0.0
  %5396 = vmatpush1.msra.mxu0 0.0
  %5397 = vmatprep.subr.mxu0 0.0
  %5398 = vmatpush1.msra.mxu0 0.0
  %5399 = vmatprep.subr.mxu0 0.0
  %5400 = vmatpush1.msra.mxu0 0.0
  %5401 = vmatprep.subr.mxu0 0.0
  %5402 = vmatpush1.msra.mxu0 0.0
  %5403 = vmatprep.mubr.f32.mxu0 0.0
  %5404 = vmatmul.mubr.f32.gmra.mrb[0].mxu0 %v5148
  %v5405 = vpop.f32.mrb[0].mxu0
  %v5406 = vadd.f32 0.0, %v5405
  %v5407 = vpop.f32.mrb[0].mxu0
  %5408 = vmatprep.mubr.f32.mxu0 0.0
  %5409 = vmatmul.mubr.f32.gmra.mrb[0].mxu0 %v5151
  %v5410 = vpop.f32.mrb[0].mxu0
  %v5411 = vadd.f32 0.0, %v5410
  %v5412 = vpop.f32.mrb[0].mxu0
  %5413 = vmatprep.mubr.f32.mxu0 0.0
  %5414 = vmatmul.mubr.f32.gmra.mrb[0].mxu0 %v5154
  %v5415 = vpop.f32.mrb[0].mxu0
  %v5416 = vadd.f32 0.0, %v5415
  %v5417 = vpop.f32.mrb[0].mxu0
  %5418 = vmatprep.mubr.f32.mxu0 0.0
  %5419 = vmatmul.mubr.f32.gmra.mrb[0].mxu0 %v5157
  %v5420 = vpop.f32.mrb[0].mxu0
  %v5421 = vadd.f32 0.0, %v5420
  %v5422 = vpop.f32.mrb[0].mxu0
  %5423 = vmatprep.mubr.f32.mxu0 0.0
  %5424 = vmatmul.mubr.f32.gmra.mrb[0].mxu0 %v5160
  %v5425 = vpop.f32.mrb[0].mxu0
  %v5426 = vadd.f32 0.0, %v5425
  %v5427 = vpop.f32.mrb[0].mxu0
  %5428 = vmatprep.mubr.f32.mxu0 0.0
  %5429 = vmatmul.mubr.f32.gmra.mrb[0].mxu0 %v5163
  %v5430 = vpop.f32.mrb[0].mxu0
  %v5431 = vadd.f32 0.0, %v5430
  %v5432 = vpop.f32.mrb[0].mxu0
  %5433 = vmatprep.mubr.f32.mxu0 0.0
  %5434 = vmatmul.mubr.f32.gmra.mrb[0].mxu0 %v5166
  %v5435 = vpop.f32.mrb[0].mxu0
  %v5436 = vadd.f32 0.0, %v5435
  %v5437 = vpop.f32.mrb[0].mxu0
  %5438 = vmatprep.mubr.f32.mxu0 0.0
  %5439 = vmatmul.mubr.f32.gmra.mrb[0].mxu0 %v5169
  %v5440 = vpop.f32.mrb[0].mxu0
  %v5441 = vadd.f32 0.0, %v5440
  %v5442 = vpop.f32.mrb[0].mxu0
  %5443 = vmatprep.mubr.f32.mxu0 0.0
  %5444 = vmatmul.mubr.f32.gmra.mrb[0].mxu0 %v5172
  %v5445 = vpop.f32.mrb[0].mxu0
  %v5446 = vadd.f32 0.0, %v5445
  %v5447 = vpop.f32.mrb[0].mxu0
  %5448 = vmatprep.mubr.f32.mxu0 0.0
  %5449 = vmatmul.mubr.f32.gmra.mrb[0].mxu0 %v5175
  %v5450 = vpop.f32.mrb[0].mxu0
  %v5451 = vadd.f32 0.0, %v5450
  %v5452 = vpop.f32.mrb[0].mxu0
  %5453 = vmatprep.mubr.f32.mxu0 0.0
  %5454 = vmatmul.mubr.f32.gmra.mrb[0].mxu0 %v5178
  %v5455 = vpop.f32.mrb[0].mxu0
  %v5456 = vadd.f32 0.0, %v5455
  %v5457 = vpop.f32.mrb[0].mxu0
  %5458 = vmatprep.mubr.f32.mxu0 0.0
  %5459 = vmatmul.mubr.f32.gmra.mrb[0].mxu0 %v5181
  %v5460 = vpop.f32.mrb[0].mxu0
  %v5461 = vadd.f32 0.0, %v5460
  %v5462 = vpop.f32.mrb[0].mxu0
  %5463 = vmatprep.mubr.f32.mxu0 0.0
  %5464 = vmatmul.mubr.f32.gmra.mrb[0].mxu0 %v5184
  %v5465 = vpop.f32.mrb[0].mxu0
  %v5466 = vadd.f32 0.0, %v5465
  %v5467 = vpop.f32.mrb[0].mxu0
  %5468 = vmatprep.mubr.f32.mxu0 0.0
  %5469 = vmatmul.mubr.f32.gmra.mrb[0].mxu0 %v5187
  %v5470 = vpop.f32.mrb[0].mxu0
  %v5471 = vadd.f32 0.0, %v5470
  %v5472 = vpop.f32.mrb[0].mxu0
  %5473 = vmatprep.mubr.f32.mxu0 0.0
  %5474 = vmatmul.mubr.f32.gmra.mrb[0].mxu0 %v5190
  %v5475 = vpop.f32.mrb[0].mxu0
  %v5476 = vadd.f32 0.0, %v5475
  %v5477 = vpop.f32.mrb[0].mxu0
  %5478 = vmatprep.mubr.f32.mxu0 0.0
  %5479 = vmatmul.mubr.f32.gmra.mrb[0].mxu0 %v5193
  %v5480 = vpop.f32.mrb[0].mxu0
  %v5481 = vadd.f32 0.0, %v5480
  %v5482 = vpop.f32.mrb[0].mxu0
  %5483 = vmatprep.mubr.f32.mxu0 0.0
  %5484 = vmatmul.mubr.f32.gmra.mrb[0].mxu0 %v5196
  %v5485 = vpop.f32.mrb[0].mxu0
  %v5486 = vadd.f32 0.0, %v5485
  %v5487 = vpop.f32.mrb[0].mxu0
  %5488 = vmatprep.mubr.f32.mxu0 0.0
  %5489 = vmatmul.mubr.f32.gmra.mrb[0].mxu0 %v5199
  %v5490 = vpop.f32.mrb[0].mxu0
  %v5491 = vadd.f32 0.0, %v5490
  %v5492 = vpop.f32.mrb[0].mxu0
  %5493 = vmatprep.mubr.f32.mxu0 0.0
  %5494 = vmatmul.mubr.f32.gmra.mrb[0].mxu0 %v5202
  %v5495 = vpop.f32.mrb[0].mxu0
  %v5496 = vadd.f32 0.0, %v5495
  %v5497 = vpop.f32.mrb[0].mxu0
  %5498 = vmatprep.mubr.f32.mxu0 0.0
  %5499 = vmatmul.mubr.f32.gmra.mrb[0].mxu0 %v5205
  %v5500 = vpop.f32.mrb[0].mxu0
  %v5501 = vadd.f32 0.0, %v5500
  %v5502 = vpop.f32.mrb[0].mxu0
  %5503 = vmatprep.mubr.f32.mxu0 0.0
  %5504 = vmatmul.mubr.f32.gmra.mrb[0].mxu0 %v5208
  %v5505 = vpop.f32.mrb[0].mxu0
  %v5506 = vadd.f32 0.0, %v5505
  %v5507 = vpop.f32.mrb[0].mxu0
  %5508 = vmatprep.mubr.f32.mxu0 0.0
  %5509 = vmatmul.mubr.f32.gmra.mrb[0].mxu0 %v5211
  %v5510 = vpop.f32.mrb[0].mxu0
  %v5511 = vadd.f32 0.0, %v5510
  %v5512 = vpop.f32.mrb[0].mxu0
  %5513 = vmatprep.mubr.f32.mxu0 0.0
  %5514 = vmatmul.mubr.f32.gmra.mrb[0].mxu0 %v5214
  %v5515 = vpop.f32.mrb[0].mxu0
  %v5516 = vadd.f32 0.0, %v5515
  %v5517 = vpop.f32.mrb[0].mxu0
  %5518 = vmatprep.mubr.f32.mxu0 0.0
  %5519 = vmatmul.mubr.f32.gmra.mrb[0].mxu0 %v5217
  %v5520 = vpop.f32.mrb[0].mxu0
  %v5521 = vadd.f32 0.0, %v5520
  %v5522 = vpop.f32.mrb[0].mxu0
  %5523 = vmatprep.mubr.f32.mxu0 0.0
  %5524 = vmatmul.mubr.f32.gmra.mrb[0].mxu0 %v5220
  %v5525 = vpop.f32.mrb[0].mxu0
  %v5526 = vadd.f32 0.0, %v5525
  %v5527 = vpop.f32.mrb[0].mxu0
  %5528 = vmatprep.mubr.f32.mxu0 0.0
  %5529 = vmatmul.mubr.f32.gmra.mrb[0].mxu0 %v5223
  %v5530 = vpop.f32.mrb[0].mxu0
  %v5531 = vadd.f32 0.0, %v5530
  %v5532 = vpop.f32.mrb[0].mxu0
  %5533 = vmatprep.mubr.f32.mxu0 0.0
  %5534 = vmatmul.mubr.f32.gmra.mrb[0].mxu0 %v5226
  %v5535 = vpop.f32.mrb[0].mxu0
  %v5536 = vadd.f32 0.0, %v5535
  %v5537 = vpop.f32.mrb[0].mxu0
  %5538 = vmatprep.mubr.f32.mxu0 0.0
  %5539 = vmatmul.mubr.f32.gmra.mrb[0].mxu0 %v5229
  %v5540 = vpop.f32.mrb[0].mxu0
  %v5541 = vadd.f32 0.0, %v5540
  %v5542 = vpop.f32.mrb[0].mxu0
  %5543 = vmatprep.mubr.f32.mxu0 0.0
  %5544 = vmatmul.mubr.f32.gmra.mrb[0].mxu0 %v5232
  %v5545 = vpop.f32.mrb[0].mxu0
  %v5546 = vadd.f32 0.0, %v5545
  %v5547 = vpop.f32.mrb[0].mxu0
  %5548 = vmatprep.mubr.f32.mxu0 0.0
  %5549 = vmatmul.mubr.f32.gmra.mrb[0].mxu0 %v5235
  %v5550 = vpop.f32.mrb[0].mxu0
  %v5551 = vadd.f32 0.0, %v5550
  %v5552 = vpop.f32.mrb[0].mxu0
  %5553 = vmatprep.mubr.f32.mxu0 0.0
  %5554 = vmatmul.mubr.f32.gmra.mrb[0].mxu0 %v5238
  %v5555 = vpop.f32.mrb[0].mxu0
  %v5556 = vadd.f32 0.0, %v5555
  %v5557 = vpop.f32.mrb[0].mxu0
  %5558 = vmatprep.mubr.f32.mxu0 0.0
  %5559 = vmatmul.mubr.f32.gmra.mrb[0].mxu0 %v5241
  %v5560 = vpop.f32.mrb[0].mxu0
  %v5561 = vadd.f32 0.0, %v5560
  %v5562 = vpop.f32.mrb[0].mxu0
  %5563 = vmatprep.mubr.f32.mxu0 0.0
  %5564 = vmatmul.mubr.f32.gmra.mrb[0].mxu0 %v5244
  %v5565 = vpop.f32.mrb[0].mxu0
  %v5566 = vadd.f32 0.0, %v5565
  %v5567 = vpop.f32.mrb[0].mxu0
  %5568 = vmatprep.mubr.f32.mxu0 0.0
  %5569 = vmatmul.mubr.f32.gmra.mrb[0].mxu0 %v5247
  %v5570 = vpop.f32.mrb[0].mxu0
  %v5571 = vadd.f32 0.0, %v5570
  %v5572 = vpop.f32.mrb[0].mxu0
  %5573 = vmatprep.mubr.f32.mxu0 0.0
  %5574 = vmatmul.mubr.f32.gmra.mrb[0].mxu0 %v5250
  %v5575 = vpop.f32.mrb[0].mxu0
  %v5576 = vadd.f32 0.0, %v5575
  %v5577 = vpop.f32.mrb[0].mxu0
  %5578 = vmatprep.mubr.f32.mxu0 0.0
  %5579 = vmatmul.mubr.f32.gmra.mrb[0].mxu0 %v5253
  %v5580 = vpop.f32.mrb[0].mxu0
  %v5581 = vadd.f32 0.0, %v5580
  %v5582 = vpop.f32.mrb[0].mxu0
  %5583 = vmatprep.mubr.f32.mxu0 0.0
  %5584 = vmatmul.mubr.f32.gmra.mrb[0].mxu0 %v5256
  %v5585 = vpop.f32.mrb[0].mxu0
  %v5586 = vadd.f32 0.0, %v5585
  %v5587 = vpop.f32.mrb[0].mxu0
  %5588 = vmatprep.mubr.f32.mxu0 0.0
  %5589 = vmatmul.mubr.f32.gmra.mrb[0].mxu0 %v5259
  %v5590 = vpop.f32.mrb[0].mxu0
  %v5591 = vadd.f32 0.0, %v5590
  %v5592 = vpop.f32.mrb[0].mxu0
  %5593 = vmatprep.mubr.f32.mxu0 0.0
  %5594 = vmatmul.mubr.f32.gmra.mrb[0].mxu0 %v5262
  %v5595 = vpop.f32.mrb[0].mxu0
  %v5596 = vadd.f32 0.0, %v5595
  %v5597 = vpop.f32.mrb[0].mxu0
  %5598 = vmatprep.mubr.f32.mxu0 0.0
  %5599 = vmatmul.mubr.f32.gmra.mrb[0].mxu0 %v5265
  %v5600 = vpop.f32.mrb[0].mxu0
  %v5601 = vadd.f32 0.0, %v5600
  %v5602 = vpop.f32.mrb[0].mxu0
  %5603 = vmatprep.mubr.f32.mxu0 0.0
  %5604 = vmatmul.mubr.f32.gmra.mrb[0].mxu0 %v5268
  %v5605 = vpop.f32.mrb[0].mxu0
  %v5606 = vadd.f32 0.0, %v5605
  %v5607 = vpop.f32.mrb[0].mxu0
  %5608 = vmatprep.mubr.f32.mxu0 0.0
  %5609 = vmatmul.mubr.f32.gmra.mrb[0].mxu0 %v5271
  %v5610 = vpop.f32.mrb[0].mxu0
  %v5611 = vadd.f32 0.0, %v5610
  %v5612 = vpop.f32.mrb[0].mxu0
  %5613 = vmatprep.mubr.f32.mxu0 0.0
  %5614 = vmatmul.mubr.f32.gmra.mrb[0].mxu0 %v5274
  %v5615 = vpop.f32.mrb[0].mxu0
  %v5616 = vadd.f32 0.0, %v5615
  %v5617 = vpop.f32.mrb[0].mxu0
  %5618 = vmatprep.mubr.f32.mxu0 0.0
  %5619 = vmatmul.mubr.f32.gmra.mrb[0].mxu0 %v5277
  %v5620 = vpop.f32.mrb[0].mxu0
  %v5621 = vadd.f32 0.0, %v5620
  %v5622 = vpop.f32.mrb[0].mxu0
  %5623 = vmatprep.mubr.f32.mxu0 0.0
  %5624 = vmatmul.mubr.f32.gmra.mrb[0].mxu0 %v5280
  %v5625 = vpop.f32.mrb[0].mxu0
  %v5626 = vadd.f32 0.0, %v5625
  %v5627 = vpop.f32.mrb[0].mxu0
  %5628 = vmatprep.mubr.f32.mxu0 0.0
  %5629 = vmatmul.mubr.f32.gmra.mrb[0].mxu0 %v5283
  %v5630 = vpop.f32.mrb[0].mxu0
  %v5631 = vadd.f32 0.0, %v5630
  %v5632 = vpop.f32.mrb[0].mxu0
  %5633 = vmatprep.mubr.f32.mxu0 0.0
  %5634 = vmatmul.mubr.f32.gmra.mrb[0].mxu0 %v5286
  %v5635 = vpop.f32.mrb[0].mxu0
  %v5636 = vadd.f32 0.0, %v5635
  %v5637 = vpop.f32.mrb[0].mxu0
  %5638 = vmatprep.mubr.f32.mxu0 0.0
  %5639 = vmatmul.mubr.f32.gmra.mrb[0].mxu0 %v5289
  %v5640 = vpop.f32.mrb[0].mxu0
  %v5641 = vadd.f32 0.0, %v5640
  %v5642 = vpop.f32.mrb[0].mxu0
  %5643 = vmatprep.mubr.f32.mxu0 0.0
  %5644 = vmatmul.mubr.f32.gmra.mrb[0].mxu0 %v5292
  %v5645 = vpop.f32.mrb[0].mxu0
  %v5646 = vadd.f32 0.0, %v5645
  %v5647 = vpop.f32.mrb[0].mxu0
  %5648 = vmatprep.mubr.f32.mxu0 0.0
  %5649 = vmatmul.mubr.f32.gmra.mrb[0].mxu0 %v5295
  %v5650 = vpop.f32.mrb[0].mxu0
  %v5651 = vadd.f32 0.0, %v5650
  %v5652 = vpop.f32.mrb[0].mxu0
  %5653 = vmatprep.mubr.f32.mxu0 0.0
  %5654 = vmatmul.mubr.f32.gmra.mrb[0].mxu0 %v5298
  %v5655 = vpop.f32.mrb[0].mxu0
  %v5656 = vadd.f32 0.0, %v5655
  %v5657 = vpop.f32.mrb[0].mxu0
  %5658 = vmatprep.mubr.f32.mxu0 0.0
  %5659 = vmatmul.mubr.f32.gmra.mrb[0].mxu0 %v5301
  %v5660 = vpop.f32.mrb[0].mxu0
  %v5661 = vadd.f32 0.0, %v5660
  %v5662 = vpop.f32.mrb[0].mxu0
  %5663 = vmatprep.mubr.f32.mxu0 0.0
  %5664 = vmatmul.mubr.f32.gmra.mrb[0].mxu0 %v5304
  %v5665 = vpop.f32.mrb[0].mxu0
  %v5666 = vadd.f32 0.0, %v5665
  %v5667 = vpop.f32.mrb[0].mxu0
  %5668 = vmatprep.mubr.f32.mxu0 0.0
  %5669 = vmatmul.mubr.f32.gmra.mrb[0].mxu0 %v5307
  %v5670 = vpop.f32.mrb[0].mxu0
  %v5671 = vadd.f32 0.0, %v5670
  %v5672 = vpop.f32.mrb[0].mxu0
  %5673 = vmatprep.mubr.f32.mxu0 0.0
  %5674 = vmatmul.mubr.f32.gmra.mrb[0].mxu0 %v5310
  %v5675 = vpop.f32.mrb[0].mxu0
  %v5676 = vadd.f32 0.0, %v5675
  %v5677 = vpop.f32.mrb[0].mxu0
  %5678 = vmatprep.mubr.f32.mxu0 0.0
  %5679 = vmatmul.mubr.f32.gmra.mrb[0].mxu0 %v5313
  %v5680 = vpop.f32.mrb[0].mxu0
  %v5681 = vadd.f32 0.0, %v5680
  %v5682 = vpop.f32.mrb[0].mxu0
  %5683 = vmatprep.mubr.f32.mxu0 0.0
  %5684 = vmatmul.mubr.f32.gmra.mrb[0].mxu0 %v5316
  %v5685 = vpop.f32.mrb[0].mxu0
  %v5686 = vadd.f32 0.0, %v5685
  %v5687 = vpop.f32.mrb[0].mxu0
  %5688 = vmatprep.mubr.f32.mxu0 0.0
  %5689 = vmatmul.mubr.f32.gmra.mrb[0].mxu0 %v5319
  %v5690 = vpop.f32.mrb[0].mxu0
  %v5691 = vadd.f32 0.0, %v5690
  %v5692 = vpop.f32.mrb[0].mxu0
  %5693 = vmatprep.mubr.f32.mxu0 0.0
  %5694 = vmatmul.mubr.f32.gmra.mrb[0].mxu0 %v5322
  %v5695 = vpop.f32.mrb[0].mxu0
  %v5696 = vadd.f32 0.0, %v5695
  %v5697 = vpop.f32.mrb[0].mxu0
  %5698 = vmatprep.mubr.f32.mxu0 0.0
  %5699 = vmatmul.mubr.f32.gmra.mrb[0].mxu0 %v5325
  %v5700 = vpop.f32.mrb[0].mxu0
  %v5701 = vadd.f32 0.0, %v5700
  %v5702 = vpop.f32.mrb[0].mxu0
  %5703 = vmatprep.mubr.f32.mxu0 0.0
  %5704 = vmatmul.mubr.f32.gmra.mrb[0].mxu0 %v5328
  %v5705 = vpop.f32.mrb[0].mxu0
  %v5706 = vadd.f32 0.0, %v5705
  %v5707 = vpop.f32.mrb[0].mxu0
  %5708 = vmatprep.mubr.f32.mxu0 0.0
  %5709 = vmatmul.mubr.f32.gmra.mrb[0].mxu0 %v5331
  %v5710 = vpop.f32.mrb[0].mxu0
  %v5711 = vadd.f32 0.0, %v5710
  %v5712 = vpop.f32.mrb[0].mxu0
  %5713 = vmatprep.mubr.f32.mxu0 0.0
  %5714 = vmatmul.mubr.f32.gmra.mrb[0].mxu0 %v5334
  %v5715 = vpop.f32.mrb[0].mxu0
  %v5716 = vadd.f32 0.0, %v5715
  %v5717 = vpop.f32.mrb[0].mxu0
  %5718 = vmatprep.mubr.f32.mxu0 0.0
  %5719 = vmatmul.mubr.f32.gmra.mrb[0].mxu0 %v5337
  %v5720 = vpop.f32.mrb[0].mxu0
  %v5721 = vadd.f32 0.0, %v5720
  %v5722 = vpop.f32.mrb[0].mxu0
  %5723 = vdwg.mxu0
  %v5724 = vadd.f32 %v5017, %v5406
  %v5725 = vadd.f32 %v5018, %v5411
  %v5726 = vadd.f32 %v5019, %v5416
  %v5727 = vadd.f32 %v5020, %v5421
  %v5728 = vadd.f32 %v5021, %v5426
  %v5729 = vadd.f32 %v5022, %v5431
  %v5730 = vadd.f32 %v5023, %v5436
  %v5731 = vadd.f32 %v5024, %v5441
  %v5732 = vadd.f32 %v5025, %v5446
  %v5733 = vadd.f32 %v5026, %v5451
  %v5734 = vadd.f32 %v5027, %v5456
  %v5735 = vadd.f32 %v5028, %v5461
  %v5736 = vadd.f32 %v5029, %v5466
  %v5737 = vadd.f32 %v5030, %v5471
  %v5738 = vadd.f32 %v5031, %v5476
  %v5739 = vadd.f32 %v5032, %v5481
  %v5740 = vadd.f32 %v5033, %v5486
  %v5741 = vadd.f32 %v5034, %v5491
  %v5742 = vadd.f32 %v5035, %v5496
  %v5743 = vadd.f32 %v5036, %v5501
  %v5744 = vadd.f32 %v5037, %v5506
  %v5745 = vadd.f32 %v5038, %v5511
  %v5746 = vadd.f32 %v5039, %v5516
  %v5747 = vadd.f32 %v5040, %v5521
  %v5748 = vadd.f32 %v5041, %v5526
  %v5749 = vadd.f32 %v5042, %v5531
  %v5750 = vadd.f32 %v5043, %v5536
  %v5751 = vadd.f32 %v5044, %v5541
  %v5752 = vadd.f32 %v5045, %v5546
  %v5753 = vadd.f32 %v5046, %v5551
  %v5754 = vadd.f32 %v5047, %v5556
  %v5755 = vadd.f32 %v5048, %v5561
  %v5756 = vadd.f32 %v5049, %v5566
  %v5757 = vadd.f32 %v5050, %v5571
  %v5758 = vadd.f32 %v5051, %v5576
  %v5759 = vadd.f32 %v5052, %v5581
  %v5760 = vadd.f32 %v5053, %v5586
  %v5761 = vadd.f32 %v5054, %v5591
  %v5762 = vadd.f32 %v5055, %v5596
  %v5763 = vadd.f32 %v5056, %v5601
  %v5764 = vadd.f32 %v5057, %v5606
  %v5765 = vadd.f32 %v5058, %v5611
  %v5766 = vadd.f32 %v5059, %v5616
  %v5767 = vadd.f32 %v5060, %v5621
  %v5768 = vadd.f32 %v5061, %v5626
  %v5769 = vadd.f32 %v5062, %v5631
  %v5770 = vadd.f32 %v5063, %v5636
  %v5771 = vadd.f32 %v5064, %v5641
  %v5772 = vadd.f32 %v5065, %v5646
  %v5773 = vadd.f32 %v5066, %v5651
  %v5774 = vadd.f32 %v5067, %v5656
  %v5775 = vadd.f32 %v5068, %v5661
  %v5776 = vadd.f32 %v5069, %v5666
  %v5777 = vadd.f32 %v5070, %v5671
  %v5778 = vadd.f32 %v5071, %v5676
  %v5779 = vadd.f32 %v5072, %v5681
  %v5780 = vadd.f32 %v5073, %v5686
  %v5781 = vadd.f32 %v5074, %v5691
  %v5782 = vadd.f32 %v5075, %v5696
  %v5783 = vadd.f32 %v5076, %v5701
  %v5784 = vadd.f32 %v5077, %v5706
  %v5785 = vadd.f32 %v5078, %v5711
  %v5786 = vadd.f32 %v5079, %v5716
  %v5787 = vadd.f32 %v5080, %v5721
  %v5788 = vld [vmem:[%s4373 + $0x2] sm:$0xff]
  %v5789 = vld [vmem:[%s4373 + $0xa] sm:$0xff]
  %v5790 = vld [vmem:[%s4373 + $0x1a] sm:$0xff]
  %v5791 = vld [vmem:[%s4373 + $0x22] sm:$0xff]
  %v5792 = vld [vmem:[%s4373 + $0x32] sm:$0xff]
  %v5793 = vld [vmem:[%s4373 + $0x3a] sm:$0xff]
  %v5794 = vld [vmem:[%s4373 + $0x4a] sm:$0xff]
  %v5795 = vld [vmem:[%s4373 + $0x52] sm:$0xff]
  %v5796 = vld [vmem:[%s4373 + $0x62] sm:$0xff]
  %v5797 = vld [vmem:[%s4373 + $0x6a] sm:$0xff]
  %v5798 = vld [vmem:[%s4373 + $0x7a] sm:$0xff]
  %v5799 = vld [vmem:[%s4373 + $0x82] sm:$0xff]
  %v5800 = vld [vmem:[%s4373 + $0x92] sm:$0xff]
  %v5801 = vld [vmem:[%s4373 + $0x9a] sm:$0xff]
  %v5802 = vld [vmem:[%s4373 + $0xaa] sm:$0xff]
  %v5803 = vld [vmem:[%s4373 + $0xb2] sm:$0xff]
  %v5804 = vld [vmem:[%s4373 + $0xc2] sm:$0xff]
  %v5805 = vld [vmem:[%s4373 + $0xca] sm:$0xff]
  %v5806 = vld [vmem:[%s4373 + $0xda] sm:$0xff]
  %v5807 = vld [vmem:[%s4373 + $0xe2] sm:$0xff]
  %v5808 = vld [vmem:[%s4373 + $0xf2] sm:$0xff]
  %v5809 = vld [vmem:[%s4373 + $0xfa] sm:$0xff]
  %v5810 = vld [vmem:[%s4373 + $0x10a] sm:$0xff]
  %v5811 = vld [vmem:[%s4373 + $0x112] sm:$0xff]
  %v5812 = vld [vmem:[%s4373 + $0x122] sm:$0xff]
  %v5813 = vld [vmem:[%s4373 + $0x12a] sm:$0xff]
  %v5814 = vld [vmem:[%s4373 + $0x13a] sm:$0xff]
  %v5815 = vld [vmem:[%s4373 + $0x142] sm:$0xff]
  %v5816 = vld [vmem:[%s4373 + $0x152] sm:$0xff]
  %v5817 = vld [vmem:[%s4373 + $0x15a] sm:$0xff]
  %v5818 = vld [vmem:[%s4373 + $0x16a] sm:$0xff]
  %v5819 = vld [vmem:[%s4373 + $0x172] sm:$0xff]
  %v5820 = vld [vmem:[%s4373 + $0x1b2] sm:$0xff]
  %v5821 = vld [vmem:[%s4373 + $0x1ba] sm:$0xff]
  %v5822 = vld [vmem:[%s4373 + $0x1ca] sm:$0xff]
  %v5823 = vld [vmem:[%s4373 + $0x1d2] sm:$0xff]
  %v5824 = vld [vmem:[%s4373 + $0x1e2] sm:$0xff]
  %v5825 = vld [vmem:[%s4373 + $0x1ea] sm:$0xff]
  %v5826 = vld [vmem:[%s4373 + $0x1fa] sm:$0xff]
  %v5827 = vld [vmem:[%s4373 + $0x202] sm:$0xff]
  %v5828 = vld [vmem:[%s4373 + $0x212] sm:$0xff]
  %v5829 = vld [vmem:[%s4373 + $0x21a] sm:$0xff]
  %v5830 = vld [vmem:[%s4373 + $0x22a] sm:$0xff]
  %v5831 = vld [vmem:[%s4373 + $0x232] sm:$0xff]
  %v5832 = vld [vmem:[%s4373 + $0x242] sm:$0xff]
  %v5833 = vld [vmem:[%s4373 + $0x24a] sm:$0xff]
  %v5834 = vld [vmem:[%s4373 + $0x25a] sm:$0xff]
  %v5835 = vld [vmem:[%s4373 + $0x262] sm:$0xff]
  %v5836 = vld [vmem:[%s4373 + $0x272] sm:$0xff]
  %v5837 = vld [vmem:[%s4373 + $0x27a] sm:$0xff]
  %v5838 = vld [vmem:[%s4373 + $0x28a] sm:$0xff]
  %v5839 = vld [vmem:[%s4373 + $0x292] sm:$0xff]
  %v5840 = vld [vmem:[%s4373 + $0x2a2] sm:$0xff]
  %v5841 = vld [vmem:[%s4373 + $0x2aa] sm:$0xff]
  %v5842 = vld [vmem:[%s4373 + $0x2ba] sm:$0xff]
  %v5843 = vld [vmem:[%s4373 + $0x2c2] sm:$0xff]
  %v5844 = vld [vmem:[%s4373 + $0x2d2] sm:$0xff]
  %v5845 = vld [vmem:[%s4373 + $0x2da] sm:$0xff]
  %v5846 = vld [vmem:[%s4373 + $0x2ea] sm:$0xff]
  %v5847 = vld [vmem:[%s4373 + $0x2f2] sm:$0xff]
  %v5848 = vld [vmem:[%s4373 + $0x302] sm:$0xff]
  %v5849 = vld [vmem:[%s4373 + $0x30a] sm:$0xff]
  %v5850 = vld [vmem:[%s4373 + $0x31a] sm:$0xff]
  %v5851 = vld [vmem:[%s4373 + $0x322] sm:$0xff]
  %s5852 = scalar_lea.vmem %s1, 64
  %v5853 = vld [vmem:[%s5852] sm:$0xff]
  %v5855 = vsel %vm20, %v5788, 0
  %v5858 = vsel %vm20, %v5789, 0
  %v5861 = vsel %vm20, %v5790, 0
  %v5864 = vsel %vm20, %v5791, 0
  %v5867 = vsel %vm20, %v5792, 0
  %v5870 = vsel %vm20, %v5793, 0
  %v5873 = vsel %vm20, %v5794, 0
  %v5876 = vsel %vm20, %v5795, 0
  %v5879 = vsel %vm20, %v5796, 0
  %v5882 = vsel %vm20, %v5797, 0
  %v5885 = vsel %vm20, %v5798, 0
  %v5888 = vsel %vm20, %v5799, 0
  %v5891 = vsel %vm20, %v5800, 0
  %v5894 = vsel %vm20, %v5801, 0
  %v5897 = vsel %vm20, %v5802, 0
  %v5900 = vsel %vm20, %v5803, 0
  %v5903 = vsel %vm20, %v5804, 0
  %v5906 = vsel %vm20, %v5805, 0
  %v5909 = vsel %vm20, %v5806, 0
  %v5912 = vsel %vm20, %v5807, 0
  %v5915 = vsel %vm20, %v5808, 0
  %v5918 = vsel %vm20, %v5809, 0
  %v5921 = vsel %vm20, %v5810, 0
  %v5924 = vsel %vm20, %v5811, 0
  %v5927 = vsel %vm20, %v5812, 0
  %v5930 = vsel %vm20, %v5813, 0
  %v5933 = vsel %vm20, %v5814, 0
  %v5936 = vsel %vm20, %v5815, 0
  %v5939 = vsel %vm20, %v5816, 0
  %v5942 = vsel %vm20, %v5817, 0
  %v5945 = vsel %vm20, %v5818, 0
  %v5948 = vsel %vm20, %v5819, 0
  %v5951 = vsel %vm20, %v5820, 0
  %v5954 = vsel %vm20, %v5821, 0
  %v5957 = vsel %vm20, %v5822, 0
  %v5960 = vsel %vm20, %v5823, 0
  %v5963 = vsel %vm20, %v5824, 0
  %v5966 = vsel %vm20, %v5825, 0
  %v5969 = vsel %vm20, %v5826, 0
  %v5972 = vsel %vm20, %v5827, 0
  %v5975 = vsel %vm20, %v5828, 0
  %v5978 = vsel %vm20, %v5829, 0
  %v5981 = vsel %vm20, %v5830, 0
  %v5984 = vsel %vm20, %v5831, 0
  %v5987 = vsel %vm20, %v5832, 0
  %v5990 = vsel %vm20, %v5833, 0
  %v5993 = vsel %vm20, %v5834, 0
  %v5996 = vsel %vm20, %v5835, 0
  %v5999 = vsel %vm20, %v5836, 0
  %v6002 = vsel %vm20, %v5837, 0
  %v6005 = vsel %vm20, %v5838, 0
  %v6008 = vsel %vm20, %v5839, 0
  %v6011 = vsel %vm20, %v5840, 0
  %v6014 = vsel %vm20, %v5841, 0
  %v6017 = vsel %vm20, %v5842, 0
  %v6020 = vsel %vm20, %v5843, 0
  %v6023 = vsel %vm20, %v5844, 0
  %v6026 = vsel %vm20, %v5845, 0
  %v6029 = vsel %vm20, %v5846, 0
  %v6032 = vsel %vm20, %v5847, 0
  %v6035 = vsel %vm20, %v5848, 0
  %v6038 = vsel %vm20, %v5849, 0
  %v6041 = vsel %vm20, %v5850, 0
  %v6044 = vsel %vm20, %v5851, 0
  %6046 = vmatprep.subr.mxu0 0.0
  %6047 = vmatpush1.msra.mxu0 %v5853
  %6048 = vmatprep.subr.mxu0 0.0
  %6049 = vmatpush1.msra.mxu0 0.0
  %6050 = vmatprep.subr.mxu0 0.0
  %6051 = vmatpush1.msra.mxu0 0.0
  %6052 = vmatprep.subr.mxu0 0.0
  %6053 = vmatpush1.msra.mxu0 0.0
  %6054 = vmatprep.subr.mxu0 0.0
  %6055 = vmatpush1.msra.mxu0 0.0
  %6056 = vmatprep.subr.mxu0 0.0
  %6057 = vmatpush1.msra.mxu0 0.0
  %6058 = vmatprep.subr.mxu0 0.0
  %6059 = vmatpush1.msra.mxu0 0.0
  %6060 = vmatprep.subr.mxu0 0.0
  %6061 = vmatpush1.msra.mxu0 0.0
  %6062 = vmatprep.subr.mxu0 0.0
  %6063 = vmatpush1.msra.mxu0 0.0
  %6064 = vmatprep.subr.mxu0 0.0
  %6065 = vmatpush1.msra.mxu0 0.0
  %6066 = vmatprep.subr.mxu0 0.0
  %6067 = vmatpush1.msra.mxu0 0.0
  %6068 = vmatprep.subr.mxu0 0.0
  %6069 = vmatpush1.msra.mxu0 0.0
  %6070 = vmatprep.subr.mxu0 0.0
  %6071 = vmatpush1.msra.mxu0 0.0
  %6072 = vmatprep.subr.mxu0 0.0
  %6073 = vmatpush1.msra.mxu0 0.0
  %6074 = vmatprep.subr.mxu0 0.0
  %6075 = vmatpush1.msra.mxu0 0.0
  %6076 = vmatprep.subr.mxu0 0.0
  %6077 = vmatpush1.msra.mxu0 0.0
  %6078 = vmatprep.subr.mxu0 0.0
  %6079 = vmatpush1.msra.mxu0 0.0
  %6080 = vmatprep.subr.mxu0 0.0
  %6081 = vmatpush1.msra.mxu0 0.0
  %6082 = vmatprep.subr.mxu0 0.0
  %6083 = vmatpush1.msra.mxu0 0.0
  %6084 = vmatprep.subr.mxu0 0.0
  %6085 = vmatpush1.msra.mxu0 0.0
  %6086 = vmatprep.subr.mxu0 0.0
  %6087 = vmatpush1.msra.mxu0 0.0
  %6088 = vmatprep.subr.mxu0 0.0
  %6089 = vmatpush1.msra.mxu0 0.0
  %6090 = vmatprep.subr.mxu0 0.0
  %6091 = vmatpush1.msra.mxu0 0.0
  %6092 = vmatprep.subr.mxu0 0.0
  %6093 = vmatpush1.msra.mxu0 0.0
  %6094 = vmatprep.subr.mxu0 0.0
  %6095 = vmatpush1.msra.mxu0 0.0
  %6096 = vmatprep.subr.mxu0 0.0
  %6097 = vmatpush1.msra.mxu0 0.0
  %6098 = vmatprep.subr.mxu0 0.0
  %6099 = vmatpush1.msra.mxu0 0.0
  %6100 = vmatprep.subr.mxu0 0.0
  %6101 = vmatpush1.msra.mxu0 0.0
  %6102 = vmatprep.subr.mxu0 0.0
  %6103 = vmatpush1.msra.mxu0 0.0
  %6104 = vmatprep.subr.mxu0 0.0
  %6105 = vmatpush1.msra.mxu0 0.0
  %6106 = vmatprep.subr.mxu0 0.0
  %6107 = vmatpush1.msra.mxu0 0.0
  %6108 = vmatprep.subr.mxu0 0.0
  %6109 = vmatpush1.msra.mxu0 0.0
  %6110 = vmatprep.mubr.f32.mxu0 0.0
  %6111 = vmatmul.mubr.f32.gmra.mrb[0].mxu0 %v5855
  %v6112 = vpop.f32.mrb[0].mxu0
  %v6113 = vadd.f32 0.0, %v6112
  %v6114 = vpop.f32.mrb[0].mxu0
  %6115 = vmatprep.mubr.f32.mxu0 0.0
  %6116 = vmatmul.mubr.f32.gmra.mrb[0].mxu0 %v5858
  %v6117 = vpop.f32.mrb[0].mxu0
  %v6118 = vadd.f32 0.0, %v6117
  %v6119 = vpop.f32.mrb[0].mxu0
  %6120 = vmatprep.mubr.f32.mxu0 0.0
  %6121 = vmatmul.mubr.f32.gmra.mrb[0].mxu0 %v5861
  %v6122 = vpop.f32.mrb[0].mxu0
  %v6123 = vadd.f32 0.0, %v6122
  %v6124 = vpop.f32.mrb[0].mxu0
  %6125 = vmatprep.mubr.f32.mxu0 0.0
  %6126 = vmatmul.mubr.f32.gmra.mrb[0].mxu0 %v5864
  %v6127 = vpop.f32.mrb[0].mxu0
  %v6128 = vadd.f32 0.0, %v6127
  %v6129 = vpop.f32.mrb[0].mxu0
  %6130 = vmatprep.mubr.f32.mxu0 0.0
  %6131 = vmatmul.mubr.f32.gmra.mrb[0].mxu0 %v5867
  %v6132 = vpop.f32.mrb[0].mxu0
  %v6133 = vadd.f32 0.0, %v6132
  %v6134 = vpop.f32.mrb[0].mxu0
  %6135 = vmatprep.mubr.f32.mxu0 0.0
  %6136 = vmatmul.mubr.f32.gmra.mrb[0].mxu0 %v5870
  %v6137 = vpop.f32.mrb[0].mxu0
  %v6138 = vadd.f32 0.0, %v6137
  %v6139 = vpop.f32.mrb[0].mxu0
  %6140 = vmatprep.mubr.f32.mxu0 0.0
  %6141 = vmatmul.mubr.f32.gmra.mrb[0].mxu0 %v5873
  %v6142 = vpop.f32.mrb[0].mxu0
  %v6143 = vadd.f32 0.0, %v6142
  %v6144 = vpop.f32.mrb[0].mxu0
  %6145 = vmatprep.mubr.f32.mxu0 0.0
  %6146 = vmatmul.mubr.f32.gmra.mrb[0].mxu0 %v5876
  %v6147 = vpop.f32.mrb[0].mxu0
  %v6148 = vadd.f32 0.0, %v6147
  %v6149 = vpop.f32.mrb[0].mxu0
  %6150 = vmatprep.mubr.f32.mxu0 0.0
  %6151 = vmatmul.mubr.f32.gmra.mrb[0].mxu0 %v5879
  %v6152 = vpop.f32.mrb[0].mxu0
  %v6153 = vadd.f32 0.0, %v6152
  %v6154 = vpop.f32.mrb[0].mxu0
  %6155 = vmatprep.mubr.f32.mxu0 0.0
  %6156 = vmatmul.mubr.f32.gmra.mrb[0].mxu0 %v5882
  %v6157 = vpop.f32.mrb[0].mxu0
  %v6158 = vadd.f32 0.0, %v6157
  %v6159 = vpop.f32.mrb[0].mxu0
  %6160 = vmatprep.mubr.f32.mxu0 0.0
  %6161 = vmatmul.mubr.f32.gmra.mrb[0].mxu0 %v5885
  %v6162 = vpop.f32.mrb[0].mxu0
  %v6163 = vadd.f32 0.0, %v6162
  %v6164 = vpop.f32.mrb[0].mxu0
  %6165 = vmatprep.mubr.f32.mxu0 0.0
  %6166 = vmatmul.mubr.f32.gmra.mrb[0].mxu0 %v5888
  %v6167 = vpop.f32.mrb[0].mxu0
  %v6168 = vadd.f32 0.0, %v6167
  %v6169 = vpop.f32.mrb[0].mxu0
  %6170 = vmatprep.mubr.f32.mxu0 0.0
  %6171 = vmatmul.mubr.f32.gmra.mrb[0].mxu0 %v5891
  %v6172 = vpop.f32.mrb[0].mxu0
  %v6173 = vadd.f32 0.0, %v6172
  %v6174 = vpop.f32.mrb[0].mxu0
  %6175 = vmatprep.mubr.f32.mxu0 0.0
  %6176 = vmatmul.mubr.f32.gmra.mrb[0].mxu0 %v5894
  %v6177 = vpop.f32.mrb[0].mxu0
  %v6178 = vadd.f32 0.0, %v6177
  %v6179 = vpop.f32.mrb[0].mxu0
  %6180 = vmatprep.mubr.f32.mxu0 0.0
  %6181 = vmatmul.mubr.f32.gmra.mrb[0].mxu0 %v5897
  %v6182 = vpop.f32.mrb[0].mxu0
  %v6183 = vadd.f32 0.0, %v6182
  %v6184 = vpop.f32.mrb[0].mxu0
  %6185 = vmatprep.mubr.f32.mxu0 0.0
  %6186 = vmatmul.mubr.f32.gmra.mrb[0].mxu0 %v5900
  %v6187 = vpop.f32.mrb[0].mxu0
  %v6188 = vadd.f32 0.0, %v6187
  %v6189 = vpop.f32.mrb[0].mxu0
  %6190 = vmatprep.mubr.f32.mxu0 0.0
  %6191 = vmatmul.mubr.f32.gmra.mrb[0].mxu0 %v5903
  %v6192 = vpop.f32.mrb[0].mxu0
  %v6193 = vadd.f32 0.0, %v6192
  %v6194 = vpop.f32.mrb[0].mxu0
  %6195 = vmatprep.mubr.f32.mxu0 0.0
  %6196 = vmatmul.mubr.f32.gmra.mrb[0].mxu0 %v5906
  %v6197 = vpop.f32.mrb[0].mxu0
  %v6198 = vadd.f32 0.0, %v6197
  %v6199 = vpop.f32.mrb[0].mxu0
  %6200 = vmatprep.mubr.f32.mxu0 0.0
  %6201 = vmatmul.mubr.f32.gmra.mrb[0].mxu0 %v5909
  %v6202 = vpop.f32.mrb[0].mxu0
  %v6203 = vadd.f32 0.0, %v6202
  %v6204 = vpop.f32.mrb[0].mxu0
  %6205 = vmatprep.mubr.f32.mxu0 0.0
  %6206 = vmatmul.mubr.f32.gmra.mrb[0].mxu0 %v5912
  %v6207 = vpop.f32.mrb[0].mxu0
  %v6208 = vadd.f32 0.0, %v6207
  %v6209 = vpop.f32.mrb[0].mxu0
  %6210 = vmatprep.mubr.f32.mxu0 0.0
  %6211 = vmatmul.mubr.f32.gmra.mrb[0].mxu0 %v5915
  %v6212 = vpop.f32.mrb[0].mxu0
  %v6213 = vadd.f32 0.0, %v6212
  %v6214 = vpop.f32.mrb[0].mxu0
  %6215 = vmatprep.mubr.f32.mxu0 0.0
  %6216 = vmatmul.mubr.f32.gmra.mrb[0].mxu0 %v5918
  %v6217 = vpop.f32.mrb[0].mxu0
  %v6218 = vadd.f32 0.0, %v6217
  %v6219 = vpop.f32.mrb[0].mxu0
  %6220 = vmatprep.mubr.f32.mxu0 0.0
  %6221 = vmatmul.mubr.f32.gmra.mrb[0].mxu0 %v5921
  %v6222 = vpop.f32.mrb[0].mxu0
  %v6223 = vadd.f32 0.0, %v6222
  %v6224 = vpop.f32.mrb[0].mxu0
  %6225 = vmatprep.mubr.f32.mxu0 0.0
  %6226 = vmatmul.mubr.f32.gmra.mrb[0].mxu0 %v5924
  %v6227 = vpop.f32.mrb[0].mxu0
  %v6228 = vadd.f32 0.0, %v6227
  %v6229 = vpop.f32.mrb[0].mxu0
  %6230 = vmatprep.mubr.f32.mxu0 0.0
  %6231 = vmatmul.mubr.f32.gmra.mrb[0].mxu0 %v5927
  %v6232 = vpop.f32.mrb[0].mxu0
  %v6233 = vadd.f32 0.0, %v6232
  %v6234 = vpop.f32.mrb[0].mxu0
  %6235 = vmatprep.mubr.f32.mxu0 0.0
  %6236 = vmatmul.mubr.f32.gmra.mrb[0].mxu0 %v5930
  %v6237 = vpop.f32.mrb[0].mxu0
  %v6238 = vadd.f32 0.0, %v6237
  %v6239 = vpop.f32.mrb[0].mxu0
  %6240 = vmatprep.mubr.f32.mxu0 0.0
  %6241 = vmatmul.mubr.f32.gmra.mrb[0].mxu0 %v5933
  %v6242 = vpop.f32.mrb[0].mxu0
  %v6243 = vadd.f32 0.0, %v6242
  %v6244 = vpop.f32.mrb[0].mxu0
  %6245 = vmatprep.mubr.f32.mxu0 0.0
  %6246 = vmatmul.mubr.f32.gmra.mrb[0].mxu0 %v5936
  %v6247 = vpop.f32.mrb[0].mxu0
  %v6248 = vadd.f32 0.0, %v6247
  %v6249 = vpop.f32.mrb[0].mxu0
  %6250 = vmatprep.mubr.f32.mxu0 0.0
  %6251 = vmatmul.mubr.f32.gmra.mrb[0].mxu0 %v5939
  %v6252 = vpop.f32.mrb[0].mxu0
  %v6253 = vadd.f32 0.0, %v6252
  %v6254 = vpop.f32.mrb[0].mxu0
  %6255 = vmatprep.mubr.f32.mxu0 0.0
  %6256 = vmatmul.mubr.f32.gmra.mrb[0].mxu0 %v5942
  %v6257 = vpop.f32.mrb[0].mxu0
  %v6258 = vadd.f32 0.0, %v6257
  %v6259 = vpop.f32.mrb[0].mxu0
  %6260 = vmatprep.mubr.f32.mxu0 0.0
  %6261 = vmatmul.mubr.f32.gmra.mrb[0].mxu0 %v5945
  %v6262 = vpop.f32.mrb[0].mxu0
  %v6263 = vadd.f32 0.0, %v6262
  %v6264 = vpop.f32.mrb[0].mxu0
  %6265 = vmatprep.mubr.f32.mxu0 0.0
  %6266 = vmatmul.mubr.f32.gmra.mrb[0].mxu0 %v5948
  %v6267 = vpop.f32.mrb[0].mxu0
  %v6268 = vadd.f32 0.0, %v6267
  %v6269 = vpop.f32.mrb[0].mxu0
  %6270 = vmatprep.mubr.f32.mxu0 0.0
  %6271 = vmatmul.mubr.f32.gmra.mrb[0].mxu0 %v5951
  %v6272 = vpop.f32.mrb[0].mxu0
  %v6273 = vadd.f32 0.0, %v6272
  %v6274 = vpop.f32.mrb[0].mxu0
  %6275 = vmatprep.mubr.f32.mxu0 0.0
  %6276 = vmatmul.mubr.f32.gmra.mrb[0].mxu0 %v5954
  %v6277 = vpop.f32.mrb[0].mxu0
  %v6278 = vadd.f32 0.0, %v6277
  %v6279 = vpop.f32.mrb[0].mxu0
  %6280 = vmatprep.mubr.f32.mxu0 0.0
  %6281 = vmatmul.mubr.f32.gmra.mrb[0].mxu0 %v5957
  %v6282 = vpop.f32.mrb[0].mxu0
  %v6283 = vadd.f32 0.0, %v6282
  %v6284 = vpop.f32.mrb[0].mxu0
  %6285 = vmatprep.mubr.f32.mxu0 0.0
  %6286 = vmatmul.mubr.f32.gmra.mrb[0].mxu0 %v5960
  %v6287 = vpop.f32.mrb[0].mxu0
  %v6288 = vadd.f32 0.0, %v6287
  %v6289 = vpop.f32.mrb[0].mxu0
  %6290 = vmatprep.mubr.f32.mxu0 0.0
  %6291 = vmatmul.mubr.f32.gmra.mrb[0].mxu0 %v5963
  %v6292 = vpop.f32.mrb[0].mxu0
  %v6293 = vadd.f32 0.0, %v6292
  %v6294 = vpop.f32.mrb[0].mxu0
  %6295 = vmatprep.mubr.f32.mxu0 0.0
  %6296 = vmatmul.mubr.f32.gmra.mrb[0].mxu0 %v5966
  %v6297 = vpop.f32.mrb[0].mxu0
  %v6298 = vadd.f32 0.0, %v6297
  %v6299 = vpop.f32.mrb[0].mxu0
  %6300 = vmatprep.mubr.f32.mxu0 0.0
  %6301 = vmatmul.mubr.f32.gmra.mrb[0].mxu0 %v5969
  %v6302 = vpop.f32.mrb[0].mxu0
  %v6303 = vadd.f32 0.0, %v6302
  %v6304 = vpop.f32.mrb[0].mxu0
  %6305 = vmatprep.mubr.f32.mxu0 0.0
  %6306 = vmatmul.mubr.f32.gmra.mrb[0].mxu0 %v5972
  %v6307 = vpop.f32.mrb[0].mxu0
  %v6308 = vadd.f32 0.0, %v6307
  %v6309 = vpop.f32.mrb[0].mxu0
  %6310 = vmatprep.mubr.f32.mxu0 0.0
  %6311 = vmatmul.mubr.f32.gmra.mrb[0].mxu0 %v5975
  %v6312 = vpop.f32.mrb[0].mxu0
  %v6313 = vadd.f32 0.0, %v6312
  %v6314 = vpop.f32.mrb[0].mxu0
  %6315 = vmatprep.mubr.f32.mxu0 0.0
  %6316 = vmatmul.mubr.f32.gmra.mrb[0].mxu0 %v5978
  %v6317 = vpop.f32.mrb[0].mxu0
  %v6318 = vadd.f32 0.0, %v6317
  %v6319 = vpop.f32.mrb[0].mxu0
  %6320 = vmatprep.mubr.f32.mxu0 0.0
  %6321 = vmatmul.mubr.f32.gmra.mrb[0].mxu0 %v5981
  %v6322 = vpop.f32.mrb[0].mxu0
  %v6323 = vadd.f32 0.0, %v6322
  %v6324 = vpop.f32.mrb[0].mxu0
  %6325 = vmatprep.mubr.f32.mxu0 0.0
  %6326 = vmatmul.mubr.f32.gmra.mrb[0].mxu0 %v5984
  %v6327 = vpop.f32.mrb[0].mxu0
  %v6328 = vadd.f32 0.0, %v6327
  %v6329 = vpop.f32.mrb[0].mxu0
  %6330 = vmatprep.mubr.f32.mxu0 0.0
  %6331 = vmatmul.mubr.f32.gmra.mrb[0].mxu0 %v5987
  %v6332 = vpop.f32.mrb[0].mxu0
  %v6333 = vadd.f32 0.0, %v6332
  %v6334 = vpop.f32.mrb[0].mxu0
  %6335 = vmatprep.mubr.f32.mxu0 0.0
  %6336 = vmatmul.mubr.f32.gmra.mrb[0].mxu0 %v5990
  %v6337 = vpop.f32.mrb[0].mxu0
  %v6338 = vadd.f32 0.0, %v6337
  %v6339 = vpop.f32.mrb[0].mxu0
  %6340 = vmatprep.mubr.f32.mxu0 0.0
  %6341 = vmatmul.mubr.f32.gmra.mrb[0].mxu0 %v5993
  %v6342 = vpop.f32.mrb[0].mxu0
  %v6343 = vadd.f32 0.0, %v6342
  %v6344 = vpop.f32.mrb[0].mxu0
  %6345 = vmatprep.mubr.f32.mxu0 0.0
  %6346 = vmatmul.mubr.f32.gmra.mrb[0].mxu0 %v5996
  %v6347 = vpop.f32.mrb[0].mxu0
  %v6348 = vadd.f32 0.0, %v6347
  %v6349 = vpop.f32.mrb[0].mxu0
  %6350 = vmatprep.mubr.f32.mxu0 0.0
  %6351 = vmatmul.mubr.f32.gmra.mrb[0].mxu0 %v5999
  %v6352 = vpop.f32.mrb[0].mxu0
  %v6353 = vadd.f32 0.0, %v6352
  %v6354 = vpop.f32.mrb[0].mxu0
  %6355 = vmatprep.mubr.f32.mxu0 0.0
  %6356 = vmatmul.mubr.f32.gmra.mrb[0].mxu0 %v6002
  %v6357 = vpop.f32.mrb[0].mxu0
  %v6358 = vadd.f32 0.0, %v6357
  %v6359 = vpop.f32.mrb[0].mxu0
  %6360 = vmatprep.mubr.f32.mxu0 0.0
  %6361 = vmatmul.mubr.f32.gmra.mrb[0].mxu0 %v6005
  %v6362 = vpop.f32.mrb[0].mxu0
  %v6363 = vadd.f32 0.0, %v6362
  %v6364 = vpop.f32.mrb[0].mxu0
  %6365 = vmatprep.mubr.f32.mxu0 0.0
  %6366 = vmatmul.mubr.f32.gmra.mrb[0].mxu0 %v6008
  %v6367 = vpop.f32.mrb[0].mxu0
  %v6368 = vadd.f32 0.0, %v6367
  %v6369 = vpop.f32.mrb[0].mxu0
  %6370 = vmatprep.mubr.f32.mxu0 0.0
  %6371 = vmatmul.mubr.f32.gmra.mrb[0].mxu0 %v6011
  %v6372 = vpop.f32.mrb[0].mxu0
  %v6373 = vadd.f32 0.0, %v6372
  %v6374 = vpop.f32.mrb[0].mxu0
  %6375 = vmatprep.mubr.f32.mxu0 0.0
  %6376 = vmatmul.mubr.f32.gmra.mrb[0].mxu0 %v6014
  %v6377 = vpop.f32.mrb[0].mxu0
  %v6378 = vadd.f32 0.0, %v6377
  %v6379 = vpop.f32.mrb[0].mxu0
  %6380 = vmatprep.mubr.f32.mxu0 0.0
  %6381 = vmatmul.mubr.f32.gmra.mrb[0].mxu0 %v6017
  %v6382 = vpop.f32.mrb[0].mxu0
  %v6383 = vadd.f32 0.0, %v6382
  %v6384 = vpop.f32.mrb[0].mxu0
  %6385 = vmatprep.mubr.f32.mxu0 0.0
  %6386 = vmatmul.mubr.f32.gmra.mrb[0].mxu0 %v6020
  %v6387 = vpop.f32.mrb[0].mxu0
  %v6388 = vadd.f32 0.0, %v6387
  %v6389 = vpop.f32.mrb[0].mxu0
  %6390 = vmatprep.mubr.f32.mxu0 0.0
  %6391 = vmatmul.mubr.f32.gmra.mrb[0].mxu0 %v6023
  %v6392 = vpop.f32.mrb[0].mxu0
  %v6393 = vadd.f32 0.0, %v6392
  %v6394 = vpop.f32.mrb[0].mxu0
  %6395 = vmatprep.mubr.f32.mxu0 0.0
  %6396 = vmatmul.mubr.f32.gmra.mrb[0].mxu0 %v6026
  %v6397 = vpop.f32.mrb[0].mxu0
  %v6398 = vadd.f32 0.0, %v6397
  %v6399 = vpop.f32.mrb[0].mxu0
  %6400 = vmatprep.mubr.f32.mxu0 0.0
  %6401 = vmatmul.mubr.f32.gmra.mrb[0].mxu0 %v6029
  %v6402 = vpop.f32.mrb[0].mxu0
  %v6403 = vadd.f32 0.0, %v6402
  %v6404 = vpop.f32.mrb[0].mxu0
  %6405 = vmatprep.mubr.f32.mxu0 0.0
  %6406 = vmatmul.mubr.f32.gmra.mrb[0].mxu0 %v6032
  %v6407 = vpop.f32.mrb[0].mxu0
  %v6408 = vadd.f32 0.0, %v6407
  %v6409 = vpop.f32.mrb[0].mxu0
  %6410 = vmatprep.mubr.f32.mxu0 0.0
  %6411 = vmatmul.mubr.f32.gmra.mrb[0].mxu0 %v6035
  %v6412 = vpop.f32.mrb[0].mxu0
  %v6413 = vadd.f32 0.0, %v6412
  %v6414 = vpop.f32.mrb[0].mxu0
  %6415 = vmatprep.mubr.f32.mxu0 0.0
  %6416 = vmatmul.mubr.f32.gmra.mrb[0].mxu0 %v6038
  %v6417 = vpop.f32.mrb[0].mxu0
  %v6418 = vadd.f32 0.0, %v6417
  %v6419 = vpop.f32.mrb[0].mxu0
  %6420 = vmatprep.mubr.f32.mxu0 0.0
  %6421 = vmatmul.mubr.f32.gmra.mrb[0].mxu0 %v6041
  %v6422 = vpop.f32.mrb[0].mxu0
  %v6423 = vadd.f32 0.0, %v6422
  %v6424 = vpop.f32.mrb[0].mxu0
  %6425 = vmatprep.mubr.f32.mxu0 0.0
  %6426 = vmatmul.mubr.f32.gmra.mrb[0].mxu0 %v6044
  %v6427 = vpop.f32.mrb[0].mxu0
  %v6428 = vadd.f32 0.0, %v6427
  %v6429 = vpop.f32.mrb[0].mxu0
  %6430 = vdwg.mxu0
  %v6431 = vadd.f32 %v5724, %v6113
  %v6432 = vadd.f32 %v5725, %v6118
  %v6433 = vadd.f32 %v5726, %v6123
  %v6434 = vadd.f32 %v5727, %v6128
  %v6435 = vadd.f32 %v5728, %v6133
  %v6436 = vadd.f32 %v5729, %v6138
  %v6437 = vadd.f32 %v5730, %v6143
  %v6438 = vadd.f32 %v5731, %v6148
  %v6439 = vadd.f32 %v5732, %v6153
  %v6440 = vadd.f32 %v5733, %v6158
  %v6441 = vadd.f32 %v5734, %v6163
  %v6442 = vadd.f32 %v5735, %v6168
  %v6443 = vadd.f32 %v5736, %v6173
  %v6444 = vadd.f32 %v5737, %v6178
  %v6445 = vadd.f32 %v5738, %v6183
  %v6446 = vadd.f32 %v5739, %v6188
  %v6447 = vadd.f32 %v5740, %v6193
  %v6448 = vadd.f32 %v5741, %v6198
  %v6449 = vadd.f32 %v5742, %v6203
  %v6450 = vadd.f32 %v5743, %v6208
  %v6451 = vadd.f32 %v5744, %v6213
  %v6452 = vadd.f32 %v5745, %v6218
  %v6453 = vadd.f32 %v5746, %v6223
  %v6454 = vadd.f32 %v5747, %v6228
  %v6455 = vadd.f32 %v5748, %v6233
  %v6456 = vadd.f32 %v5749, %v6238
  %v6457 = vadd.f32 %v5750, %v6243
  %v6458 = vadd.f32 %v5751, %v6248
  %v6459 = vadd.f32 %v5752, %v6253
  %v6460 = vadd.f32 %v5753, %v6258
  %v6461 = vadd.f32 %v5754, %v6263
  %v6462 = vadd.f32 %v5755, %v6268
  %v6463 = vadd.f32 %v5756, %v6273
  %v6464 = vadd.f32 %v5757, %v6278
  %v6465 = vadd.f32 %v5758, %v6283
  %v6466 = vadd.f32 %v5759, %v6288
  %v6467 = vadd.f32 %v5760, %v6293
  %v6468 = vadd.f32 %v5761, %v6298
  %v6469 = vadd.f32 %v5762, %v6303
  %v6470 = vadd.f32 %v5763, %v6308
  %v6471 = vadd.f32 %v5764, %v6313
  %v6472 = vadd.f32 %v5765, %v6318
  %v6473 = vadd.f32 %v5766, %v6323
  %v6474 = vadd.f32 %v5767, %v6328
  %v6475 = vadd.f32 %v5768, %v6333
  %v6476 = vadd.f32 %v5769, %v6338
  %v6477 = vadd.f32 %v5770, %v6343
  %v6478 = vadd.f32 %v5771, %v6348
  %v6479 = vadd.f32 %v5772, %v6353
  %v6480 = vadd.f32 %v5773, %v6358
  %v6481 = vadd.f32 %v5774, %v6363
  %v6482 = vadd.f32 %v5775, %v6368
  %v6483 = vadd.f32 %v5776, %v6373
  %v6484 = vadd.f32 %v5777, %v6378
  %v6485 = vadd.f32 %v5778, %v6383
  %v6486 = vadd.f32 %v5779, %v6388
  %v6487 = vadd.f32 %v5780, %v6393
  %v6488 = vadd.f32 %v5781, %v6398
  %v6489 = vadd.f32 %v5782, %v6403
  %v6490 = vadd.f32 %v5783, %v6408
  %v6491 = vadd.f32 %v5784, %v6413
  %v6492 = vadd.f32 %v5785, %v6418
  %v6493 = vadd.f32 %v5786, %v6423
  %v6494 = vadd.f32 %v5787, %v6428
  %v6495 = vld [vmem:[%s2] sm:$0x1]
  %v6497 = vlaneseq
  %v6498 = vshrl.u32 %v6497, 7
  %v6499 = vsub.s32 0, %v6498
  %v6500 = vrot.slane %v6495, %v6499
  %v6502 = vadd.f32 %v6431, %v6500
  %v6503 = vadd.f32 %v6432, %v6500
  %v6504 = vadd.f32 %v6433, %v6500
  %v6505 = vadd.f32 %v6434, %v6500
  %v6506 = vadd.f32 %v6435, %v6500
  %v6507 = vadd.f32 %v6436, %v6500
  %v6508 = vadd.f32 %v6437, %v6500
  %v6509 = vadd.f32 %v6438, %v6500
  %v6510 = vadd.f32 %v6439, %v6500
  %v6511 = vadd.f32 %v6440, %v6500
  %v6512 = vadd.f32 %v6441, %v6500
  %v6513 = vadd.f32 %v6442, %v6500
  %v6514 = vadd.f32 %v6443, %v6500
  %v6515 = vadd.f32 %v6444, %v6500
  %v6516 = vadd.f32 %v6445, %v6500
  %v6517 = vadd.f32 %v6446, %v6500
  %v6518 = vadd.f32 %v6447, %v6500
  %v6519 = vadd.f32 %v6448, %v6500
  %v6520 = vadd.f32 %v6449, %v6500
  %v6521 = vadd.f32 %v6450, %v6500
  %v6522 = vadd.f32 %v6451, %v6500
  %v6523 = vadd.f32 %v6452, %v6500
  %v6524 = vadd.f32 %v6453, %v6500
  %v6525 = vadd.f32 %v6454, %v6500
  %v6526 = vadd.f32 %v6455, %v6500
  %v6527 = vadd.f32 %v6456, %v6500
  %v6528 = vadd.f32 %v6457, %v6500
  %v6529 = vadd.f32 %v6458, %v6500
  %v6530 = vadd.f32 %v6459, %v6500
  %v6531 = vadd.f32 %v6460, %v6500
  %v6532 = vadd.f32 %v6461, %v6500
  %v6533 = vadd.f32 %v6462, %v6500
  %v6534 = vadd.f32 %v6463, %v6500
  %v6535 = vadd.f32 %v6464, %v6500
  %v6536 = vadd.f32 %v6465, %v6500
  %v6537 = vadd.f32 %v6466, %v6500
  %v6538 = vadd.f32 %v6467, %v6500
  %v6539 = vadd.f32 %v6468, %v6500
  %v6540 = vadd.f32 %v6469, %v6500
  %v6541 = vadd.f32 %v6470, %v6500
  %v6542 = vadd.f32 %v6471, %v6500
  %v6543 = vadd.f32 %v6472, %v6500
  %v6544 = vadd.f32 %v6473, %v6500
  %v6545 = vadd.f32 %v6474, %v6500
  %v6546 = vadd.f32 %v6475, %v6500
  %v6547 = vadd.f32 %v6476, %v6500
  %v6548 = vadd.f32 %v6477, %v6500
  %v6549 = vadd.f32 %v6478, %v6500
  %v6550 = vadd.f32 %v6479, %v6500
  %v6551 = vadd.f32 %v6480, %v6500
  %v6552 = vadd.f32 %v6481, %v6500
  %v6553 = vadd.f32 %v6482, %v6500
  %v6554 = vadd.f32 %v6483, %v6500
  %v6555 = vadd.f32 %v6484, %v6500
  %v6556 = vadd.f32 %v6485, %v6500
  %v6557 = vadd.f32 %v6486, %v6500
  %v6558 = vadd.f32 %v6487, %v6500
  %v6559 = vadd.f32 %v6488, %v6500
  %v6560 = vadd.f32 %v6489, %v6500
  %v6561 = vadd.f32 %v6490, %v6500
  %v6562 = vadd.f32 %v6491, %v6500
  %v6563 = vadd.f32 %v6492, %v6500
  %v6564 = vadd.f32 %v6493, %v6500
  %v6565 = vadd.f32 %v6494, %v6500
  %v6566 = vmax.f32 %v6502, 0.0
  %v6567 = vmax.f32 %v6503, 0.0
  %v6568 = vmax.f32 %v6504, 0.0
  %v6569 = vmax.f32 %v6505, 0.0
  %v6570 = vmax.f32 %v6506, 0.0
  %v6571 = vmax.f32 %v6507, 0.0
  %v6572 = vmax.f32 %v6508, 0.0
  %v6573 = vmax.f32 %v6509, 0.0
  %v6574 = vmax.f32 %v6510, 0.0
  %v6575 = vmax.f32 %v6511, 0.0
  %v6576 = vmax.f32 %v6512, 0.0
  %v6577 = vmax.f32 %v6513, 0.0
  %v6578 = vmax.f32 %v6514, 0.0
  %v6579 = vmax.f32 %v6515, 0.0
  %v6580 = vmax.f32 %v6516, 0.0
  %v6581 = vmax.f32 %v6517, 0.0
  %v6582 = vmax.f32 %v6518, 0.0
  %v6583 = vmax.f32 %v6519, 0.0
  %v6584 = vmax.f32 %v6520, 0.0
  %v6585 = vmax.f32 %v6521, 0.0
  %v6586 = vmax.f32 %v6522, 0.0
  %v6587 = vmax.f32 %v6523, 0.0
  %v6588 = vmax.f32 %v6524, 0.0
  %v6589 = vmax.f32 %v6525, 0.0
  %v6590 = vmax.f32 %v6526, 0.0
  %v6591 = vmax.f32 %v6527, 0.0
  %v6592 = vmax.f32 %v6528, 0.0
  %v6593 = vmax.f32 %v6529, 0.0
  %v6594 = vmax.f32 %v6530, 0.0
  %v6595 = vmax.f32 %v6531, 0.0
  %v6596 = vmax.f32 %v6532, 0.0
  %v6597 = vmax.f32 %v6533, 0.0
  %v6598 = vmax.f32 %v6534, 0.0
  %v6599 = vmax.f32 %v6535, 0.0
  %v6600 = vmax.f32 %v6536, 0.0
  %v6601 = vmax.f32 %v6537, 0.0
  %v6602 = vmax.f32 %v6538, 0.0
  %v6603 = vmax.f32 %v6539, 0.0
  %v6604 = vmax.f32 %v6540, 0.0
  %v6605 = vmax.f32 %v6541, 0.0
  %v6606 = vmax.f32 %v6542, 0.0
  %v6607 = vmax.f32 %v6543, 0.0
  %v6608 = vmax.f32 %v6544, 0.0
  %v6609 = vmax.f32 %v6545, 0.0
  %v6610 = vmax.f32 %v6546, 0.0
  %v6611 = vmax.f32 %v6547, 0.0
  %v6612 = vmax.f32 %v6548, 0.0
  %v6613 = vmax.f32 %v6549, 0.0
  %v6614 = vmax.f32 %v6550, 0.0
  %v6615 = vmax.f32 %v6551, 0.0
  %v6616 = vmax.f32 %v6552, 0.0
  %v6617 = vmax.f32 %v6553, 0.0
  %v6618 = vmax.f32 %v6554, 0.0
  %v6619 = vmax.f32 %v6555, 0.0
  %v6620 = vmax.f32 %v6556, 0.0
  %v6621 = vmax.f32 %v6557, 0.0
  %v6622 = vmax.f32 %v6558, 0.0
  %v6623 = vmax.f32 %v6559, 0.0
  %v6624 = vmax.f32 %v6560, 0.0
  %v6625 = vmax.f32 %v6561, 0.0
  %v6626 = vmax.f32 %v6562, 0.0
  %v6627 = vmax.f32 %v6563, 0.0
  %v6628 = vmax.f32 %v6564, 0.0
  %v6629 = vmax.f32 %v6565, 0.0
  %6630 = vst.msk [vmem:[#allocation3] sm:$0xff] %vm20, %v6566
  %6631 = vst.msk [vmem:[#allocation3 + $0x8] sm:$0xff] %vm20, %v6567
  %6632 = vst.msk [vmem:[#allocation3 + $0x10] sm:$0xff] %vm20, %v6568
  %6633 = vst.msk [vmem:[#allocation3 + $0x18] sm:$0xff] %vm20, %v6569
  %6634 = vst.msk [vmem:[#allocation3 + $0x20] sm:$0xff] %vm20, %v6570
  %6635 = vst.msk [vmem:[#allocation3 + $0x28] sm:$0xff] %vm20, %v6571
  %6636 = vst.msk [vmem:[#allocation3 + $0x30] sm:$0xff] %vm20, %v6572
  %6637 = vst.msk [vmem:[#allocation3 + $0x38] sm:$0xff] %vm20, %v6573
  %6638 = vst.msk [vmem:[#allocation3 + $0x40] sm:$0xff] %vm20, %v6574
  %6639 = vst.msk [vmem:[#allocation3 + $0x48] sm:$0xff] %vm20, %v6575
  %6640 = vst.msk [vmem:[#allocation3 + $0x50] sm:$0xff] %vm20, %v6576
  %6641 = vst.msk [vmem:[#allocation3 + $0x58] sm:$0xff] %vm20, %v6577
  %6642 = vst.msk [vmem:[#allocation3 + $0x60] sm:$0xff] %vm20, %v6578
  %6643 = vst.msk [vmem:[#allocation3 + $0x68] sm:$0xff] %vm20, %v6579
  %6644 = vst.msk [vmem:[#allocation3 + $0x70] sm:$0xff] %vm20, %v6580
  %6645 = vst.msk [vmem:[#allocation3 + $0x78] sm:$0xff] %vm20, %v6581
  %6646 = vst.msk [vmem:[#allocation3 + $0x80] sm:$0xff] %vm20, %v6582
  %6647 = vst.msk [vmem:[#allocation3 + $0x88] sm:$0xff] %vm20, %v6583
  %6648 = vst.msk [vmem:[#allocation3 + $0x90] sm:$0xff] %vm20, %v6584
  %6649 = vst.msk [vmem:[#allocation3 + $0x98] sm:$0xff] %vm20, %v6585
  %6650 = vst.msk [vmem:[#allocation3 + $0xa0] sm:$0xff] %vm20, %v6586
  %6651 = vst.msk [vmem:[#allocation3 + $0xa8] sm:$0xff] %vm20, %v6587
  %6652 = vst.msk [vmem:[#allocation3 + $0xb0] sm:$0xff] %vm20, %v6588
  %6653 = vst.msk [vmem:[#allocation3 + $0xb8] sm:$0xff] %vm20, %v6589
  %6654 = vst.msk [vmem:[#allocation3 + $0xc0] sm:$0xff] %vm20, %v6590
  %6655 = vst.msk [vmem:[#allocation3 + $0xc8] sm:$0xff] %vm20, %v6591
  %6656 = vst.msk [vmem:[#allocation3 + $0xd0] sm:$0xff] %vm20, %v6592
  %6657 = vst.msk [vmem:[#allocation3 + $0xd8] sm:$0xff] %vm20, %v6593
  %6658 = vst.msk [vmem:[#allocation3 + $0xe0] sm:$0xff] %vm20, %v6594
  %6659 = vst.msk [vmem:[#allocation3 + $0xe8] sm:$0xff] %vm20, %v6595
  %6660 = vst.msk [vmem:[#allocation3 + $0xf0] sm:$0xff] %vm20, %v6596
  %6661 = vst.msk [vmem:[#allocation3 + $0xf8] sm:$0xff] %vm20, %v6597
  %6662 = vst.msk [vmem:[#allocation3 + $0x100] sm:$0xff] %vm20, %v6598
  %6663 = vst.msk [vmem:[#allocation3 + $0x108] sm:$0xff] %vm20, %v6599
  %6664 = vst.msk [vmem:[#allocation3 + $0x110] sm:$0xff] %vm20, %v6600
  %6665 = vst.msk [vmem:[#allocation3 + $0x118] sm:$0xff] %vm20, %v6601
  %6666 = vst.msk [vmem:[#allocation3 + $0x120] sm:$0xff] %vm20, %v6602
  %6667 = vst.msk [vmem:[#allocation3 + $0x128] sm:$0xff] %vm20, %v6603
  %6668 = vst.msk [vmem:[#allocation3 + $0x130] sm:$0xff] %vm20, %v6604
  %6669 = vst.msk [vmem:[#allocation3 + $0x138] sm:$0xff] %vm20, %v6605
  %6670 = vst.msk [vmem:[#allocation3 + $0x140] sm:$0xff] %vm20, %v6606
  %6671 = vst.msk [vmem:[#allocation3 + $0x148] sm:$0xff] %vm20, %v6607
  %6672 = vst.msk [vmem:[#allocation3 + $0x150] sm:$0xff] %vm20, %v6608
  %6673 = vst.msk [vmem:[#allocation3 + $0x158] sm:$0xff] %vm20, %v6609
  %6674 = vst.msk [vmem:[#allocation3 + $0x160] sm:$0xff] %vm20, %v6610
  %6675 = vst.msk [vmem:[#allocation3 + $0x168] sm:$0xff] %vm20, %v6611
  %6676 = vst.msk [vmem:[#allocation3 + $0x170] sm:$0xff] %vm20, %v6612
  %6677 = vst.msk [vmem:[#allocation3 + $0x178] sm:$0xff] %vm20, %v6613
  %6678 = vst.msk [vmem:[#allocation3 + $0x180] sm:$0xff] %vm20, %v6614
  %6679 = vst.msk [vmem:[#allocation3 + $0x188] sm:$0xff] %vm20, %v6615
  %6680 = vst.msk [vmem:[#allocation3 + $0x190] sm:$0xff] %vm20, %v6616
  %6681 = vst.msk [vmem:[#allocation3 + $0x198] sm:$0xff] %vm20, %v6617
  %6682 = vst.msk [vmem:[#allocation3 + $0x1a0] sm:$0xff] %vm20, %v6618
  %6683 = vst.msk [vmem:[#allocation3 + $0x1a8] sm:$0xff] %vm20, %v6619
  %6684 = vst.msk [vmem:[#allocation3 + $0x1b0] sm:$0xff] %vm20, %v6620
  %6685 = vst.msk [vmem:[#allocation3 + $0x1b8] sm:$0xff] %vm20, %v6621
  %6686 = vst.msk [vmem:[#allocation3 + $0x1c0] sm:$0xff] %vm20, %v6622
  %6687 = vst.msk [vmem:[#allocation3 + $0x1c8] sm:$0xff] %vm20, %v6623
  %6688 = vst.msk [vmem:[#allocation3 + $0x1d0] sm:$0xff] %vm20, %v6624
  %6689 = vst.msk [vmem:[#allocation3 + $0x1d8] sm:$0xff] %vm20, %v6625
  %6690 = vst.msk [vmem:[#allocation3 + $0x1e0] sm:$0xff] %vm20, %v6626
  %6691 = vst.msk [vmem:[#allocation3 + $0x1e8] sm:$0xff] %vm20, %v6627
  %6692 = vst.msk [vmem:[#allocation3 + $0x1f0] sm:$0xff] %vm20, %v6628
  %6693 = vst.msk [vmem:[#allocation3 + $0x1f8] sm:$0xff] %vm20, %v6629
  %v6694 = vld [vmem:[#allocation3] ss:$2 sm:$0xff]
  %s6695 = scalar_lea.vmem [#allocation3], 16
  %v6696 = vld [vmem:[%s6695] ss:$2 sm:$0xff]
  %s6697 = scalar_lea.vmem [#allocation3], 32
  %v6698 = vld [vmem:[%s6697] ss:$2 sm:$0xff]
  %s6699 = scalar_lea.vmem [#allocation3], 48
  %v6700 = vld [vmem:[%s6699] ss:$2 sm:$0xff]
  %s6701 = scalar_lea.vmem [#allocation3], 64
  %v6702 = vld [vmem:[%s6701] ss:$2 sm:$0xff]
  %s6703 = scalar_lea.vmem [#allocation3], 80
  %v6704 = vld [vmem:[%s6703] ss:$2 sm:$0xff]
  %s6705 = scalar_lea.vmem [#allocation3], 96
  %v6706 = vld [vmem:[%s6705] ss:$2 sm:$0xff]
  %s6707 = scalar_lea.vmem [#allocation3], 112
  %v6708 = vld [vmem:[%s6707] ss:$2 sm:$0xff]
  %s6709 = scalar_lea.vmem [#allocation3], 128
  %v6710 = vld [vmem:[%s6709] ss:$2 sm:$0xff]
  %s6711 = scalar_lea.vmem [#allocation3], 144
  %v6712 = vld [vmem:[%s6711] ss:$2 sm:$0xff]
  %s6713 = scalar_lea.vmem [#allocation3], 160
  %v6714 = vld [vmem:[%s6713] ss:$2 sm:$0xff]
  %s6715 = scalar_lea.vmem [#allocation3], 176
  %v6716 = vld [vmem:[%s6715] ss:$2 sm:$0xff]
  %s6717 = scalar_lea.vmem [#allocation3], 192
  %v6718 = vld [vmem:[%s6717] ss:$2 sm:$0xff]
  %s6719 = scalar_lea.vmem [#allocation3], 208
  %v6720 = vld [vmem:[%s6719] ss:$2 sm:$0xff]
  %s6721 = scalar_lea.vmem [#allocation3], 224
  %v6722 = vld [vmem:[%s6721] ss:$2 sm:$0xff]
  %s6723 = scalar_lea.vmem [#allocation3], 240
  %v6724 = vld [vmem:[%s6723] ss:$2 sm:$0xff]
  %s6725 = scalar_lea.vmem [#allocation3], 256
  %v6726 = vld [vmem:[%s6725] ss:$2 sm:$0xff]
  %s6727 = scalar_lea.vmem [#allocation3], 272
  %v6728 = vld [vmem:[%s6727] ss:$2 sm:$0xff]
  %s6729 = scalar_lea.vmem [#allocation3], 288
  %v6730 = vld [vmem:[%s6729] ss:$2 sm:$0xff]
  %s6731 = scalar_lea.vmem [#allocation3], 304
  %v6732 = vld [vmem:[%s6731] ss:$2 sm:$0xff]
  %s6733 = scalar_lea.vmem [#allocation3], 320
  %v6734 = vld [vmem:[%s6733] ss:$2 sm:$0xff]
  %s6735 = scalar_lea.vmem [#allocation3], 336
  %v6736 = vld [vmem:[%s6735] ss:$2 sm:$0xff]
  %s6737 = scalar_lea.vmem [#allocation3], 352
  %v6738 = vld [vmem:[%s6737] ss:$2 sm:$0xff]
  %s6739 = scalar_lea.vmem [#allocation3], 368
  %v6740 = vld [vmem:[%s6739] ss:$2 sm:$0xff]
  %s6741 = scalar_lea.vmem [#allocation3], 384
  %v6742 = vld [vmem:[%s6741] ss:$2 sm:$0xff]
  %s6743 = scalar_lea.vmem [#allocation3], 400
  %v6744 = vld [vmem:[%s6743] ss:$2 sm:$0xff]
  %s6745 = scalar_lea.vmem [#allocation3], 416
  %v6746 = vld [vmem:[%s6745] ss:$2 sm:$0xff]
  %s6747 = scalar_lea.vmem [#allocation3], 432
  %v6748 = vld [vmem:[%s6747] ss:$2 sm:$0xff]
  %s6749 = scalar_lea.vmem [#allocation3], 448
  %v6750 = vld [vmem:[%s6749] ss:$2 sm:$0xff]
  %s6751 = scalar_lea.vmem [#allocation3], 464
  %v6752 = vld [vmem:[%s6751] ss:$2 sm:$0xff]
  %s6753 = scalar_lea.vmem [#allocation3], 480
  %v6754 = vld [vmem:[%s6753] ss:$2 sm:$0xff]
  %s6755 = scalar_lea.vmem [#allocation3], 496
  %v6756 = vld [vmem:[%s6755] ss:$2 sm:$0xff]
  %s6757 = scalar_lea.vmem [#allocation3], 1
  %v6758 = vld [vmem:[%s6757] ss:$2 sm:$0xff]
  %s6759 = scalar_lea.vmem [#allocation3], 17
  %v6760 = vld [vmem:[%s6759] ss:$2 sm:$0xff]
  %s6761 = scalar_lea.vmem [#allocation3], 33
  %v6762 = vld [vmem:[%s6761] ss:$2 sm:$0xff]
  %s6763 = scalar_lea.vmem [#allocation3], 49
  %v6764 = vld [vmem:[%s6763] ss:$2 sm:$0xff]
  %s6765 = scalar_lea.vmem [#allocation3], 65
  %v6766 = vld [vmem:[%s6765] ss:$2 sm:$0xff]
  %s6767 = scalar_lea.vmem [#allocation3], 81
  %v6768 = vld [vmem:[%s6767] ss:$2 sm:$0xff]
  %s6769 = scalar_lea.vmem [#allocation3], 97
  %v6770 = vld [vmem:[%s6769] ss:$2 sm:$0xff]
  %s6771 = scalar_lea.vmem [#allocation3], 113
  %v6772 = vld [vmem:[%s6771] ss:$2 sm:$0xff]
  %s6773 = scalar_lea.vmem [#allocation3], 129
  %v6774 = vld [vmem:[%s6773] ss:$2 sm:$0xff]
  %s6775 = scalar_lea.vmem [#allocation3], 145
  %v6776 = vld [vmem:[%s6775] ss:$2 sm:$0xff]
  %s6777 = scalar_lea.vmem [#allocation3], 161
  %v6778 = vld [vmem:[%s6777] ss:$2 sm:$0xff]
  %s6779 = scalar_lea.vmem [#allocation3], 177
  %v6780 = vld [vmem:[%s6779] ss:$2 sm:$0xff]
  %s6781 = scalar_lea.vmem [#allocation3], 193
  %v6782 = vld [vmem:[%s6781] ss:$2 sm:$0xff]
  %s6783 = scalar_lea.vmem [#allocation3], 209
  %v6784 = vld [vmem:[%s6783] ss:$2 sm:$0xff]
  %s6785 = scalar_lea.vmem [#allocation3], 225
  %v6786 = vld [vmem:[%s6785] ss:$2 sm:$0xff]
  %s6787 = scalar_lea.vmem [#allocation3], 241
  %v6788 = vld [vmem:[%s6787] ss:$2 sm:$0xff]
  %s6789 = scalar_lea.vmem [#allocation3], 257
  %v6790 = vld [vmem:[%s6789] ss:$2 sm:$0xff]
  %s6791 = scalar_lea.vmem [#allocation3], 273
  %v6792 = vld [vmem:[%s6791] ss:$2 sm:$0xff]
  %s6793 = scalar_lea.vmem [#allocation3], 289
  %v6794 = vld [vmem:[%s6793] ss:$2 sm:$0xff]
  %s6795 = scalar_lea.vmem [#allocation3], 305
  %v6796 = vld [vmem:[%s6795] ss:$2 sm:$0xff]
  %s6797 = scalar_lea.vmem [#allocation3], 321
  %v6798 = vld [vmem:[%s6797] ss:$2 sm:$0xff]
  %s6799 = scalar_lea.vmem [#allocation3], 337
  %v6800 = vld [vmem:[%s6799] ss:$2 sm:$0xff]
  %s6801 = scalar_lea.vmem [#allocation3], 353
  %v6802 = vld [vmem:[%s6801] ss:$2 sm:$0xff]
  %s6803 = scalar_lea.vmem [#allocation3], 369
  %v6804 = vld [vmem:[%s6803] ss:$2 sm:$0xff]
  %s6805 = scalar_lea.vmem [#allocation3], 385
  %v6806 = vld [vmem:[%s6805] ss:$2 sm:$0xff]
  %s6807 = scalar_lea.vmem [#allocation3], 401
  %v6808 = vld [vmem:[%s6807] ss:$2 sm:$0xff]
  %s6809 = scalar_lea.vmem [#allocation3], 417
  %v6810 = vld [vmem:[%s6809] ss:$2 sm:$0xff]
  %s6811 = scalar_lea.vmem [#allocation3], 433
  %v6812 = vld [vmem:[%s6811] ss:$2 sm:$0xff]
  %s6813 = scalar_lea.vmem [#allocation3], 449
  %v6814 = vld [vmem:[%s6813] ss:$2 sm:$0xff]
  %s6815 = scalar_lea.vmem [#allocation3], 465
  %v6816 = vld [vmem:[%s6815] ss:$2 sm:$0xff]
  %s6817 = scalar_lea.vmem [#allocation3], 481
  %v6818 = vld [vmem:[%s6817] ss:$2 sm:$0xff]
  %s6819 = scalar_lea.vmem [#allocation3], 497
  %v6820 = vld [vmem:[%s6819] ss:$2 sm:$0xff]
  %v6821 = vmax.f32 %v6694, %v6758
  %v6822 = vmax.f32 %v6696, %v6760
  %v6823 = vmax.f32 %v6698, %v6762
  %v6824 = vmax.f32 %v6700, %v6764
  %v6825 = vmax.f32 %v6702, %v6766
  %v6826 = vmax.f32 %v6704, %v6768
  %v6827 = vmax.f32 %v6706, %v6770
  %v6828 = vmax.f32 %v6708, %v6772
  %v6829 = vmax.f32 %v6710, %v6774
  %v6830 = vmax.f32 %v6712, %v6776
  %v6831 = vmax.f32 %v6714, %v6778
  %v6832 = vmax.f32 %v6716, %v6780
  %v6833 = vmax.f32 %v6718, %v6782
  %v6834 = vmax.f32 %v6720, %v6784
  %v6835 = vmax.f32 %v6722, %v6786
  %v6836 = vmax.f32 %v6724, %v6788
  %v6837 = vmax.f32 %v6726, %v6790
  %v6838 = vmax.f32 %v6728, %v6792
  %v6839 = vmax.f32 %v6730, %v6794
  %v6840 = vmax.f32 %v6732, %v6796
  %v6841 = vmax.f32 %v6734, %v6798
  %v6842 = vmax.f32 %v6736, %v6800
  %v6843 = vmax.f32 %v6738, %v6802
  %v6844 = vmax.f32 %v6740, %v6804
  %v6845 = vmax.f32 %v6742, %v6806
  %v6846 = vmax.f32 %v6744, %v6808
  %v6847 = vmax.f32 %v6746, %v6810
  %v6848 = vmax.f32 %v6748, %v6812
  %v6849 = vmax.f32 %v6750, %v6814
  %v6850 = vmax.f32 %v6752, %v6816
  %v6851 = vmax.f32 %v6754, %v6818
  %v6852 = vmax.f32 %v6756, %v6820
  %6853 = vst.msk [vmem:[#allocation4] sm:$0xff] %vm20, %v6821
  %6854 = vst.msk [vmem:[#allocation4 + $0x8] sm:$0xff] %vm20, %v6822
  %6855 = vst.msk [vmem:[#allocation4 + $0x10] sm:$0xff] %vm20, %v6823
  %6856 = vst.msk [vmem:[#allocation4 + $0x18] sm:$0xff] %vm20, %v6824
  %6857 = vst.msk [vmem:[#allocation4 + $0x20] sm:$0xff] %vm20, %v6825
  %6858 = vst.msk [vmem:[#allocation4 + $0x28] sm:$0xff] %vm20, %v6826
  %6859 = vst.msk [vmem:[#allocation4 + $0x30] sm:$0xff] %vm20, %v6827
  %6860 = vst.msk [vmem:[#allocation4 + $0x38] sm:$0xff] %vm20, %v6828
  %6861 = vst.msk [vmem:[#allocation4 + $0x40] sm:$0xff] %vm20, %v6829
  %6862 = vst.msk [vmem:[#allocation4 + $0x48] sm:$0xff] %vm20, %v6830
  %6863 = vst.msk [vmem:[#allocation4 + $0x50] sm:$0xff] %vm20, %v6831
  %6864 = vst.msk [vmem:[#allocation4 + $0x58] sm:$0xff] %vm20, %v6832
  %6865 = vst.msk [vmem:[#allocation4 + $0x60] sm:$0xff] %vm20, %v6833
  %6866 = vst.msk [vmem:[#allocation4 + $0x68] sm:$0xff] %vm20, %v6834
  %6867 = vst.msk [vmem:[#allocation4 + $0x70] sm:$0xff] %vm20, %v6835
  %6868 = vst.msk [vmem:[#allocation4 + $0x78] sm:$0xff] %vm20, %v6836
  %6869 = vst.msk [vmem:[#allocation4 + $0x80] sm:$0xff] %vm20, %v6837
  %6870 = vst.msk [vmem:[#allocation4 + $0x88] sm:$0xff] %vm20, %v6838
  %6871 = vst.msk [vmem:[#allocation4 + $0x90] sm:$0xff] %vm20, %v6839
  %6872 = vst.msk [vmem:[#allocation4 + $0x98] sm:$0xff] %vm20, %v6840
  %6873 = vst.msk [vmem:[#allocation4 + $0xa0] sm:$0xff] %vm20, %v6841
  %6874 = vst.msk [vmem:[#allocation4 + $0xa8] sm:$0xff] %vm20, %v6842
  %6875 = vst.msk [vmem:[#allocation4 + $0xb0] sm:$0xff] %vm20, %v6843
  %6876 = vst.msk [vmem:[#allocation4 + $0xb8] sm:$0xff] %vm20, %v6844
  %6877 = vst.msk [vmem:[#allocation4 + $0xc0] sm:$0xff] %vm20, %v6845
  %6878 = vst.msk [vmem:[#allocation4 + $0xc8] sm:$0xff] %vm20, %v6846
  %6879 = vst.msk [vmem:[#allocation4 + $0xd0] sm:$0xff] %vm20, %v6847
  %6880 = vst.msk [vmem:[#allocation4 + $0xd8] sm:$0xff] %vm20, %v6848
  %6881 = vst.msk [vmem:[#allocation4 + $0xe0] sm:$0xff] %vm20, %v6849
  %6882 = vst.msk [vmem:[#allocation4 + $0xe8] sm:$0xff] %vm20, %v6850
  %6883 = vst.msk [vmem:[#allocation4 + $0xf0] sm:$0xff] %vm20, %v6851
  %6884 = vst.msk [vmem:[#allocation4 + $0xf8] sm:$0xff] %vm20, %v6852
  %v6885 = vld [vmem:[#allocation4] sm:$0xff]
  %v6886 = vld [vmem:[#allocation4 + $0x10] sm:$0xff]
  %v6887 = vld [vmem:[#allocation4 + $0x20] sm:$0xff]
  %v6888 = vld [vmem:[#allocation4 + $0x30] sm:$0xff]
  %v6889 = vld [vmem:[#allocation4 + $0x40] sm:$0xff]
  %v6890 = vld [vmem:[#allocation4 + $0x50] sm:$0xff]
  %v6891 = vld [vmem:[#allocation4 + $0x60] sm:$0xff]
  %v6892 = vld [vmem:[#allocation4 + $0x70] sm:$0xff]
  %v6893 = vld [vmem:[#allocation4 + $0x80] sm:$0xff]
  %v6894 = vld [vmem:[#allocation4 + $0x90] sm:$0xff]
  %v6895 = vld [vmem:[#allocation4 + $0xa0] sm:$0xff]
  %v6896 = vld [vmem:[#allocation4 + $0xb0] sm:$0xff]
  %v6897 = vld [vmem:[#allocation4 + $0xc0] sm:$0xff]
  %v6898 = vld [vmem:[#allocation4 + $0xd0] sm:$0xff]
  %v6899 = vld [vmem:[#allocation4 + $0xe0] sm:$0xff]
  %v6900 = vld [vmem:[#allocation4 + $0xf0] sm:$0xff]
  %s6901 = scalar_lea.vmem [#allocation4], 8
  %v6902 = vld [vmem:[%s6901] sm:$0xff]
  %v6903 = vld [vmem:[%s6901 + $0x10] sm:$0xff]
  %v6904 = vld [vmem:[%s6901 + $0x20] sm:$0xff]
  %v6905 = vld [vmem:[%s6901 + $0x30] sm:$0xff]
  %v6906 = vld [vmem:[%s6901 + $0x40] sm:$0xff]
  %v6907 = vld [vmem:[%s6901 + $0x50] sm:$0xff]
  %v6908 = vld [vmem:[%s6901 + $0x60] sm:$0xff]
  %v6909 = vld [vmem:[%s6901 + $0x70] sm:$0xff]
  %v6910 = vld [vmem:[%s6901 + $0x80] sm:$0xff]
  %v6911 = vld [vmem:[%s6901 + $0x90] sm:$0xff]
  %v6912 = vld [vmem:[%s6901 + $0xa0] sm:$0xff]
  %v6913 = vld [vmem:[%s6901 + $0xb0] sm:$0xff]
  %v6914 = vld [vmem:[%s6901 + $0xc0] sm:$0xff]
  %v6915 = vld [vmem:[%s6901 + $0xd0] sm:$0xff]
  %v6916 = vld [vmem:[%s6901 + $0xe0] sm:$0xff]
  %v6917 = vld [vmem:[%s6901 + $0xf0] sm:$0xff]
  %v6918 = vmax.f32 %v6885, %v6902
  %v6919 = vmax.f32 %v6886, %v6903
  %v6920 = vmax.f32 %v6887, %v6904
  %v6921 = vmax.f32 %v6888, %v6905
  %v6922 = vmax.f32 %v6889, %v6906
  %v6923 = vmax.f32 %v6890, %v6907
  %v6924 = vmax.f32 %v6891, %v6908
  %v6925 = vmax.f32 %v6892, %v6909
  %v6926 = vmax.f32 %v6893, %v6910
  %v6927 = vmax.f32 %v6894, %v6911
  %v6928 = vmax.f32 %v6895, %v6912
  %v6929 = vmax.f32 %v6896, %v6913
  %v6930 = vmax.f32 %v6897, %v6914
  %v6931 = vmax.f32 %v6898, %v6915
  %v6932 = vmax.f32 %v6899, %v6916
  %v6933 = vmax.f32 %v6900, %v6917
  %6934 = vst.msk [vmem:[#allocation5] sm:$0xff] %vm20, 0.0
  %6935 = vst.msk [vmem:[#allocation5 + $0x8] sm:$0x3] %vm23, 0.0
  %6936 = vst.msk [vmem:[#allocation5 + $0x10] sm:$0xff] %vm20, 0.0
  %6937 = vst.msk [vmem:[#allocation5 + $0x18] sm:$0x3] %vm23, 0.0
  %6938 = vst.msk [vmem:[#allocation5 + $0x20] sm:$0xff] %vm20, 0.0
  %6939 = vst.msk [vmem:[#allocation5 + $0x28] sm:$0x3] %vm23, 0.0
  %6940 = vst.msk [vmem:[#allocation5 + $0x30] sm:$0xff] %vm20, 0.0
  %6941 = vst.msk [vmem:[#allocation5 + $0x38] sm:$0x3] %vm23, 0.0
  %6942 = vst.msk [vmem:[#allocation5 + $0x40] sm:$0xff] %vm20, 0.0
  %6943 = vst.msk [vmem:[#allocation5 + $0x48] sm:$0x3] %vm23, 0.0
  %6944 = vst.msk [vmem:[#allocation5 + $0x50] sm:$0xff] %vm20, 0.0
  %6945 = vst.msk [vmem:[#allocation5 + $0x58] sm:$0x3] %vm23, 0.0
  %6946 = vst.msk [vmem:[#allocation5 + $0x60] sm:$0xff] %vm20, 0.0
  %6947 = vst.msk [vmem:[#allocation5 + $0x68] sm:$0x3] %vm23, 0.0
  %6948 = vst.msk [vmem:[#allocation5 + $0x70] sm:$0xff] %vm20, 0.0
  %6949 = vst.msk [vmem:[#allocation5 + $0x78] sm:$0x3] %vm23, 0.0
  %6950 = vst.msk [vmem:[#allocation5 + $0x80] sm:$0xff] %vm20, 0.0
  %6951 = vst.msk [vmem:[#allocation5 + $0x88] sm:$0x3] %vm23, 0.0
  %6952 = vst.msk [vmem:[#allocation5 + $0x90] sm:$0xff] %vm20, 0.0
  %6953 = vst.msk [vmem:[#allocation5 + $0x98] sm:$0x3] %vm23, 0.0
  %6954 = vst.msk [vmem:[#allocation5 + $0xa0] sm:$0xff] %vm20, 0.0
  %6955 = vst.msk [vmem:[#allocation5 + $0xa8] sm:$0x3] %vm23, 0.0
  %6956 = vst.msk [vmem:[#allocation5 + $0xb0] sm:$0xff] %vm20, 0.0
  %6957 = vst.msk [vmem:[#allocation5 + $0xb8] sm:$0x3] %vm23, 0.0
  %6958 = vst.msk [vmem:[#allocation5 + $0xc0] sm:$0xff] %vm20, 0.0
  %6959 = vst.msk [vmem:[#allocation5 + $0xc8] sm:$0x3] %vm23, 0.0
  %6960 = vst.msk [vmem:[#allocation5 + $0xd0] sm:$0xff] %vm20, 0.0
  %6961 = vst.msk [vmem:[#allocation5 + $0xd8] sm:$0x3] %vm23, 0.0
  %6962 = vst.msk [vmem:[#allocation5 + $0xe0] sm:$0xff] %vm20, 0.0
  %6963 = vst.msk [vmem:[#allocation5 + $0xe8] sm:$0x3] %vm23, 0.0
  %6964 = vst.msk [vmem:[#allocation5 + $0xf0] sm:$0xff] %vm20, 0.0
  %6965 = vst.msk [vmem:[#allocation5 + $0xf8] sm:$0x3] %vm23, 0.0
  %6966 = vst.msk [vmem:[#allocation5 + $0x100] sm:$0xff] %vm20, 0.0
  %6967 = vst.msk [vmem:[#allocation5 + $0x108] sm:$0x3] %vm23, 0.0
  %6968 = vst.msk [vmem:[#allocation5 + $0x110] sm:$0xff] %vm20, 0.0
  %6969 = vst.msk [vmem:[#allocation5 + $0x118] sm:$0x3] %vm23, 0.0
  %6970 = vst.msk [vmem:[#allocation5 + $0x120] sm:$0xff] %vm20, 0.0
  %6971 = vst.msk [vmem:[#allocation5 + $0x128] sm:$0x3] %vm23, 0.0
  %6972 = vst.msk [vmem:[#allocation5 + $0x130] sm:$0xff] %vm20, 0.0
  %6973 = vst.msk [vmem:[#allocation5 + $0x138] sm:$0x3] %vm23, 0.0
  %s6974 = scalar_lea.vmem [#allocation5], 16
  %6975 = vst.msk [vmem:[%s6974 + $0x1] sm:$0xff] %vm20, %v6918
  %6976 = vst.msk [vmem:[%s6974 + $0x11] sm:$0xff] %vm20, %v6919
  %6977 = vst.msk [vmem:[%s6974 + $0x21] sm:$0xff] %vm20, %v6920
  %6978 = vst.msk [vmem:[%s6974 + $0x31] sm:$0xff] %vm20, %v6921
  %6979 = vst.msk [vmem:[%s6974 + $0x41] sm:$0xff] %vm20, %v6922
  %6980 = vst.msk [vmem:[%s6974 + $0x51] sm:$0xff] %vm20, %v6923
  %6981 = vst.msk [vmem:[%s6974 + $0x61] sm:$0xff] %vm20, %v6924
  %6982 = vst.msk [vmem:[%s6974 + $0x71] sm:$0xff] %vm20, %v6925
  %6983 = vst.msk [vmem:[%s6974 + $0xa1] sm:$0xff] %vm20, %v6926
  %6984 = vst.msk [vmem:[%s6974 + $0xb1] sm:$0xff] %vm20, %v6927
  %6985 = vst.msk [vmem:[%s6974 + $0xc1] sm:$0xff] %vm20, %v6928
  %6986 = vst.msk [vmem:[%s6974 + $0xd1] sm:$0xff] %vm20, %v6929
  %6987 = vst.msk [vmem:[%s6974 + $0xe1] sm:$0xff] %vm20, %v6930
  %6988 = vst.msk [vmem:[%s6974 + $0xf1] sm:$0xff] %vm20, %v6931
  %6989 = vst.msk [vmem:[%s6974 + $0x101] sm:$0xff] %vm20, %v6932
  %6990 = vst.msk [vmem:[%s6974 + $0x111] sm:$0xff] %vm20, %v6933
  %v6991 = vld [vmem:[#allocation5] sm:$0xff]
  %v6992 = vld [vmem:[#allocation5 + $0x10] sm:$0xff]
  %v6993 = vld [vmem:[#allocation5 + $0x20] sm:$0xff]
  %v6994 = vld [vmem:[#allocation5 + $0x30] sm:$0xff]
  %v6995 = vld [vmem:[#allocation5 + $0x40] sm:$0xff]
  %v6996 = vld [vmem:[#allocation5 + $0x50] sm:$0xff]
  %v6997 = vld [vmem:[#allocation5 + $0x60] sm:$0xff]
  %v6998 = vld [vmem:[#allocation5 + $0x70] sm:$0xff]
  %v6999 = vld [vmem:[#allocation5 + $0xa0] sm:$0xff]
  %v7000 = vld [vmem:[#allocation5 + $0xb0] sm:$0xff]
  %v7001 = vld [vmem:[#allocation5 + $0xc0] sm:$0xff]
  %v7002 = vld [vmem:[#allocation5 + $0xd0] sm:$0xff]
  %v7003 = vld [vmem:[#allocation5 + $0xe0] sm:$0xff]
  %v7004 = vld [vmem:[#allocation5 + $0xf0] sm:$0xff]
  %v7005 = vld [vmem:[#allocation5 + $0x100] sm:$0xff]
  %v7006 = vld [vmem:[#allocation5 + $0x110] sm:$0xff]
  %v7007 = vld [vmem:[%s3] sm:$0xff]
  %v7008 = vld [vmem:[#allocation5 + $0x1] sm:$0xff]
  %v7009 = vld [vmem:[#allocation5 + $0x11] sm:$0xff]
  %v7010 = vld [vmem:[#allocation5 + $0x21] sm:$0xff]
  %v7011 = vld [vmem:[#allocation5 + $0x31] sm:$0xff]
  %v7012 = vld [vmem:[#allocation5 + $0x41] sm:$0xff]
  %v7013 = vld [vmem:[#allocation5 + $0x51] sm:$0xff]
  %v7014 = vld [vmem:[#allocation5 + $0x61] sm:$0xff]
  %v7015 = vld [vmem:[#allocation5 + $0x71] sm:$0xff]
  %v7016 = vld [vmem:[#allocation5 + $0xa1] sm:$0xff]
  %v7017 = vld [vmem:[#allocation5 + $0xb1] sm:$0xff]
  %v7018 = vld [vmem:[#allocation5 + $0xc1] sm:$0xff]
  %v7019 = vld [vmem:[#allocation5 + $0xd1] sm:$0xff]
  %v7020 = vld [vmem:[#allocation5 + $0xe1] sm:$0xff]
  %v7021 = vld [vmem:[#allocation5 + $0xf1] sm:$0xff]
  %v7022 = vld [vmem:[#allocation5 + $0x101] sm:$0xff]
  %v7023 = vld [vmem:[#allocation5 + $0x111] sm:$0xff]
  %s7024 = scalar_lea.vmem %s3, 8
  %v7025 = vld [vmem:[%s7024] sm:$0xff]
  %v7027 = vsel %vm20, %v7008, 0
  %v7030 = vsel %vm20, %v7009, 0
  %v7033 = vsel %vm20, %v7010, 0
  %v7036 = vsel %vm20, %v7011, 0
  %v7039 = vsel %vm20, %v7012, 0
  %v7042 = vsel %vm20, %v7013, 0
  %v7045 = vsel %vm20, %v7014, 0
  %v7048 = vsel %vm20, %v7015, 0
  %v7051 = vsel %vm20, %v7016, 0
  %v7054 = vsel %vm20, %v7017, 0
  %v7057 = vsel %vm20, %v7018, 0
  %v7060 = vsel %vm20, %v7019, 0
  %v7063 = vsel %vm20, %v7020, 0
  %v7066 = vsel %vm20, %v7021, 0
  %v7069 = vsel %vm20, %v7022, 0
  %v7072 = vsel %vm20, %v7023, 0
  %7074 = vmatprep.subr.mxu0 0.0
  %7075 = vmatpush1.msra.mxu0 %v7025
  %7076 = vmatprep.subr.mxu0 0.0
  %7077 = vmatpush1.msra.mxu0 0.0
  %7078 = vmatprep.subr.mxu0 0.0
  %7079 = vmatpush1.msra.mxu0 0.0
  %7080 = vmatprep.subr.mxu0 0.0
  %7081 = vmatpush1.msra.mxu0 0.0
  %7082 = vmatprep.subr.mxu0 0.0
  %7083 = vmatpush1.msra.mxu0 0.0
  %7084 = vmatprep.subr.mxu0 0.0
  %7085 = vmatpush1.msra.mxu0 0.0
  %7086 = vmatprep.subr.mxu0 0.0
  %7087 = vmatpush1.msra.mxu0 0.0
  %7088 = vmatprep.subr.mxu0 0.0
  %7089 = vmatpush1.msra.mxu0 0.0
  %7090 = vmatprep.subr.mxu0 0.0
  %7091 = vmatpush1.msra.mxu0 0.0
  %7092 = vmatprep.subr.mxu0 0.0
  %7093 = vmatpush1.msra.mxu0 0.0
  %7094 = vmatprep.subr.mxu0 0.0
  %7095 = vmatpush1.msra.mxu0 0.0
  %7096 = vmatprep.subr.mxu0 0.0
  %7097 = vmatpush1.msra.mxu0 0.0
  %7098 = vmatprep.subr.mxu0 0.0
  %7099 = vmatpush1.msra.mxu0 0.0
  %7100 = vmatprep.subr.mxu0 0.0
  %7101 = vmatpush1.msra.mxu0 0.0
  %7102 = vmatprep.subr.mxu0 0.0
  %7103 = vmatpush1.msra.mxu0 0.0
  %7104 = vmatprep.subr.mxu0 0.0
  %7105 = vmatpush1.msra.mxu0 0.0
  %7106 = vmatprep.subr.mxu0 0.0
  %7107 = vmatpush1.msra.mxu0 0.0
  %7108 = vmatprep.subr.mxu0 0.0
  %7109 = vmatpush1.msra.mxu0 0.0
  %7110 = vmatprep.subr.mxu0 0.0
  %7111 = vmatpush1.msra.mxu0 0.0
  %7112 = vmatprep.subr.mxu0 0.0
  %7113 = vmatpush1.msra.mxu0 0.0
  %7114 = vmatprep.subr.mxu0 0.0
  %7115 = vmatpush1.msra.mxu0 0.0
  %7116 = vmatprep.subr.mxu0 0.0
  %7117 = vmatpush1.msra.mxu0 0.0
  %7118 = vmatprep.subr.mxu0 0.0
  %7119 = vmatpush1.msra.mxu0 0.0
  %7120 = vmatprep.subr.mxu0 0.0
  %7121 = vmatpush1.msra.mxu0 0.0
  %7122 = vmatprep.subr.mxu0 0.0
  %7123 = vmatpush1.msra.mxu0 0.0
  %7124 = vmatprep.subr.mxu0 0.0
  %7125 = vmatpush1.msra.mxu0 0.0
  %7126 = vmatprep.subr.mxu0 0.0
  %7127 = vmatpush1.msra.mxu0 0.0
  %7128 = vmatprep.subr.mxu0 0.0
  %7129 = vmatpush1.msra.mxu0 0.0
  %7130 = vmatprep.subr.mxu0 0.0
  %7131 = vmatpush1.msra.mxu0 0.0
  %7132 = vmatprep.subr.mxu0 0.0
  %7133 = vmatpush1.msra.mxu0 0.0
  %7134 = vmatprep.subr.mxu0 0.0
  %7135 = vmatpush1.msra.mxu0 0.0
  %7136 = vmatprep.subr.mxu0 0.0
  %7137 = vmatpush1.msra.mxu0 0.0
  %7138 = vmatprep.mubr.f32.mxu0 0.0
  %7139 = vmatmul.mubr.f32.gmra.mrb[0].mxu0 %v7027
  %v7140 = vpop.f32.mrb[0].mxu0
  %v7141 = vadd.f32 0.0, %v7140
  %v7142 = vpop.f32.mrb[0].mxu0
  %7143 = vmatprep.mubr.f32.mxu0 0.0
  %7144 = vmatmul.mubr.f32.gmra.mrb[0].mxu0 %v7030
  %v7145 = vpop.f32.mrb[0].mxu0
  %v7146 = vadd.f32 0.0, %v7145
  %v7147 = vpop.f32.mrb[0].mxu0
  %7148 = vmatprep.mubr.f32.mxu0 0.0
  %7149 = vmatmul.mubr.f32.gmra.mrb[0].mxu0 %v7033
  %v7150 = vpop.f32.mrb[0].mxu0
  %v7151 = vadd.f32 0.0, %v7150
  %v7152 = vpop.f32.mrb[0].mxu0
  %7153 = vmatprep.mubr.f32.mxu0 0.0
  %7154 = vmatmul.mubr.f32.gmra.mrb[0].mxu0 %v7036
  %v7155 = vpop.f32.mrb[0].mxu0
  %v7156 = vadd.f32 0.0, %v7155
  %v7157 = vpop.f32.mrb[0].mxu0
  %7158 = vmatprep.mubr.f32.mxu0 0.0
  %7159 = vmatmul.mubr.f32.gmra.mrb[0].mxu0 %v7039
  %v7160 = vpop.f32.mrb[0].mxu0
  %v7161 = vadd.f32 0.0, %v7160
  %v7162 = vpop.f32.mrb[0].mxu0
  %7163 = vmatprep.mubr.f32.mxu0 0.0
  %7164 = vmatmul.mubr.f32.gmra.mrb[0].mxu0 %v7042
  %v7165 = vpop.f32.mrb[0].mxu0
  %v7166 = vadd.f32 0.0, %v7165
  %v7167 = vpop.f32.mrb[0].mxu0
  %7168 = vmatprep.mubr.f32.mxu0 0.0
  %7169 = vmatmul.mubr.f32.gmra.mrb[0].mxu0 %v7045
  %v7170 = vpop.f32.mrb[0].mxu0
  %v7171 = vadd.f32 0.0, %v7170
  %v7172 = vpop.f32.mrb[0].mxu0
  %7173 = vmatprep.mubr.f32.mxu0 0.0
  %7174 = vmatmul.mubr.f32.gmra.mrb[0].mxu0 %v7048
  %v7175 = vpop.f32.mrb[0].mxu0
  %v7176 = vadd.f32 0.0, %v7175
  %v7177 = vpop.f32.mrb[0].mxu0
  %7178 = vmatprep.mubr.f32.mxu0 0.0
  %7179 = vmatmul.mubr.f32.gmra.mrb[0].mxu0 %v7051
  %v7180 = vpop.f32.mrb[0].mxu0
  %v7181 = vadd.f32 0.0, %v7180
  %v7182 = vpop.f32.mrb[0].mxu0
  %7183 = vmatprep.mubr.f32.mxu0 0.0
  %7184 = vmatmul.mubr.f32.gmra.mrb[0].mxu0 %v7054
  %v7185 = vpop.f32.mrb[0].mxu0
  %v7186 = vadd.f32 0.0, %v7185
  %v7187 = vpop.f32.mrb[0].mxu0
  %7188 = vmatprep.mubr.f32.mxu0 0.0
  %7189 = vmatmul.mubr.f32.gmra.mrb[0].mxu0 %v7057
  %v7190 = vpop.f32.mrb[0].mxu0
  %v7191 = vadd.f32 0.0, %v7190
  %v7192 = vpop.f32.mrb[0].mxu0
  %7193 = vmatprep.mubr.f32.mxu0 0.0
  %7194 = vmatmul.mubr.f32.gmra.mrb[0].mxu0 %v7060
  %v7195 = vpop.f32.mrb[0].mxu0
  %v7196 = vadd.f32 0.0, %v7195
  %v7197 = vpop.f32.mrb[0].mxu0
  %7198 = vmatprep.mubr.f32.mxu0 0.0
  %7199 = vmatmul.mubr.f32.gmra.mrb[0].mxu0 %v7063
  %v7200 = vpop.f32.mrb[0].mxu0
  %v7201 = vadd.f32 0.0, %v7200
  %v7202 = vpop.f32.mrb[0].mxu0
  %7203 = vmatprep.mubr.f32.mxu0 0.0
  %7204 = vmatmul.mubr.f32.gmra.mrb[0].mxu0 %v7066
  %v7205 = vpop.f32.mrb[0].mxu0
  %v7206 = vadd.f32 0.0, %v7205
  %v7207 = vpop.f32.mrb[0].mxu0
  %7208 = vmatprep.mubr.f32.mxu0 0.0
  %7209 = vmatmul.mubr.f32.gmra.mrb[0].mxu0 %v7069
  %v7210 = vpop.f32.mrb[0].mxu0
  %v7211 = vadd.f32 0.0, %v7210
  %v7212 = vpop.f32.mrb[0].mxu0
  %7213 = vmatprep.mubr.f32.mxu0 0.0
  %7214 = vmatmul.mubr.f32.gmra.mrb[0].mxu0 %v7072
  %v7215 = vpop.f32.mrb[0].mxu0
  %v7216 = vadd.f32 0.0, %v7215
  %v7217 = vpop.f32.mrb[0].mxu0
  %7218 = vdwg.mxu0
  %v7220 = vsel %vm20, %v6991, 0
  %v7223 = vsel %vm20, %v6992, 0
  %v7226 = vsel %vm20, %v6993, 0
  %v7229 = vsel %vm20, %v6994, 0
  %v7232 = vsel %vm20, %v6995, 0
  %v7235 = vsel %vm20, %v6996, 0
  %v7238 = vsel %vm20, %v6997, 0
  %v7241 = vsel %vm20, %v6998, 0
  %v7244 = vsel %vm20, %v6999, 0
  %v7247 = vsel %vm20, %v7000, 0
  %v7250 = vsel %vm20, %v7001, 0
  %v7253 = vsel %vm20, %v7002, 0
  %v7256 = vsel %vm20, %v7003, 0
  %v7259 = vsel %vm20, %v7004, 0
  %v7262 = vsel %vm20, %v7005, 0
  %v7265 = vsel %vm20, %v7006, 0
  %7267 = vmatprep.subr.mxu0 0.0
  %7268 = vmatpush1.msra.mxu0 %v7007
  %7269 = vmatprep.subr.mxu0 0.0
  %7270 = vmatpush1.msra.mxu0 0.0
  %7271 = vmatprep.subr.mxu0 0.0
  %7272 = vmatpush1.msra.mxu0 0.0
  %7273 = vmatprep.subr.mxu0 0.0
  %7274 = vmatpush1.msra.mxu0 0.0
  %7275 = vmatprep.subr.mxu0 0.0
  %7276 = vmatpush1.msra.mxu0 0.0
  %7277 = vmatprep.subr.mxu0 0.0
  %7278 = vmatpush1.msra.mxu0 0.0
  %7279 = vmatprep.subr.mxu0 0.0
  %7280 = vmatpush1.msra.mxu0 0.0
  %7281 = vmatprep.subr.mxu0 0.0
  %7282 = vmatpush1.msra.mxu0 0.0
  %7283 = vmatprep.subr.mxu0 0.0
  %7284 = vmatpush1.msra.mxu0 0.0
  %7285 = vmatprep.subr.mxu0 0.0
  %7286 = vmatpush1.msra.mxu0 0.0
  %7287 = vmatprep.subr.mxu0 0.0
  %7288 = vmatpush1.msra.mxu0 0.0
  %7289 = vmatprep.subr.mxu0 0.0
  %7290 = vmatpush1.msra.mxu0 0.0
  %7291 = vmatprep.subr.mxu0 0.0
  %7292 = vmatpush1.msra.mxu0 0.0
  %7293 = vmatprep.subr.mxu0 0.0
  %7294 = vmatpush1.msra.mxu0 0.0
  %7295 = vmatprep.subr.mxu0 0.0
  %7296 = vmatpush1.msra.mxu0 0.0
  %7297 = vmatprep.subr.mxu0 0.0
  %7298 = vmatpush1.msra.mxu0 0.0
  %7299 = vmatprep.subr.mxu0 0.0
  %7300 = vmatpush1.msra.mxu0 0.0
  %7301 = vmatprep.subr.mxu0 0.0
  %7302 = vmatpush1.msra.mxu0 0.0
  %7303 = vmatprep.subr.mxu0 0.0
  %7304 = vmatpush1.msra.mxu0 0.0
  %7305 = vmatprep.subr.mxu0 0.0
  %7306 = vmatpush1.msra.mxu0 0.0
  %7307 = vmatprep.subr.mxu0 0.0
  %7308 = vmatpush1.msra.mxu0 0.0
  %7309 = vmatprep.subr.mxu0 0.0
  %7310 = vmatpush1.msra.mxu0 0.0
  %7311 = vmatprep.subr.mxu0 0.0
  %7312 = vmatpush1.msra.mxu0 0.0
  %7313 = vmatprep.subr.mxu0 0.0
  %7314 = vmatpush1.msra.mxu0 0.0
  %7315 = vmatprep.subr.mxu0 0.0
  %7316 = vmatpush1.msra.mxu0 0.0
  %7317 = vmatprep.subr.mxu0 0.0
  %7318 = vmatpush1.msra.mxu0 0.0
  %7319 = vmatprep.subr.mxu0 0.0
  %7320 = vmatpush1.msra.mxu0 0.0
  %7321 = vmatprep.subr.mxu0 0.0
  %7322 = vmatpush1.msra.mxu0 0.0
  %7323 = vmatprep.subr.mxu0 0.0
  %7324 = vmatpush1.msra.mxu0 0.0
  %7325 = vmatprep.subr.mxu0 0.0
  %7326 = vmatpush1.msra.mxu0 0.0
  %7327 = vmatprep.subr.mxu0 0.0
  %7328 = vmatpush1.msra.mxu0 0.0
  %7329 = vmatprep.subr.mxu0 0.0
  %7330 = vmatpush1.msra.mxu0 0.0
  %7331 = vmatprep.mubr.f32.mxu0 0.0
  %7332 = vmatmul.mubr.f32.gmra.mrb[0].mxu0 %v7220
  %v7333 = vpop.f32.mrb[0].mxu0
  %v7334 = vadd.f32 %v7141, %v7333
  %v7335 = vpop.f32.mrb[0].mxu0
  %7336 = vmatprep.mubr.f32.mxu0 0.0
  %7337 = vmatmul.mubr.f32.gmra.mrb[0].mxu0 %v7223
  %v7338 = vpop.f32.mrb[0].mxu0
  %v7339 = vadd.f32 %v7146, %v7338
  %v7340 = vpop.f32.mrb[0].mxu0
  %7341 = vmatprep.mubr.f32.mxu0 0.0
  %7342 = vmatmul.mubr.f32.gmra.mrb[0].mxu0 %v7226
  %v7343 = vpop.f32.mrb[0].mxu0
  %v7344 = vadd.f32 %v7151, %v7343
  %v7345 = vpop.f32.mrb[0].mxu0
  %7346 = vmatprep.mubr.f32.mxu0 0.0
  %7347 = vmatmul.mubr.f32.gmra.mrb[0].mxu0 %v7229
  %v7348 = vpop.f32.mrb[0].mxu0
  %v7349 = vadd.f32 %v7156, %v7348
  %v7350 = vpop.f32.mrb[0].mxu0
  %7351 = vmatprep.mubr.f32.mxu0 0.0
  %7352 = vmatmul.mubr.f32.gmra.mrb[0].mxu0 %v7232
  %v7353 = vpop.f32.mrb[0].mxu0
  %v7354 = vadd.f32 %v7161, %v7353
  %v7355 = vpop.f32.mrb[0].mxu0
  %7356 = vmatprep.mubr.f32.mxu0 0.0
  %7357 = vmatmul.mubr.f32.gmra.mrb[0].mxu0 %v7235
  %v7358 = vpop.f32.mrb[0].mxu0
  %v7359 = vadd.f32 %v7166, %v7358
  %v7360 = vpop.f32.mrb[0].mxu0
  %7361 = vmatprep.mubr.f32.mxu0 0.0
  %7362 = vmatmul.mubr.f32.gmra.mrb[0].mxu0 %v7238
  %v7363 = vpop.f32.mrb[0].mxu0
  %v7364 = vadd.f32 %v7171, %v7363
  %v7365 = vpop.f32.mrb[0].mxu0
  %7366 = vmatprep.mubr.f32.mxu0 0.0
  %7367 = vmatmul.mubr.f32.gmra.mrb[0].mxu0 %v7241
  %v7368 = vpop.f32.mrb[0].mxu0
  %v7369 = vadd.f32 %v7176, %v7368
  %v7370 = vpop.f32.mrb[0].mxu0
  %7371 = vmatprep.mubr.f32.mxu0 0.0
  %7372 = vmatmul.mubr.f32.gmra.mrb[0].mxu0 %v7244
  %v7373 = vpop.f32.mrb[0].mxu0
  %v7374 = vadd.f32 %v7181, %v7373
  %v7375 = vpop.f32.mrb[0].mxu0
  %7376 = vmatprep.mubr.f32.mxu0 0.0
  %7377 = vmatmul.mubr.f32.gmra.mrb[0].mxu0 %v7247
  %v7378 = vpop.f32.mrb[0].mxu0
  %v7379 = vadd.f32 %v7186, %v7378
  %v7380 = vpop.f32.mrb[0].mxu0
  %7381 = vmatprep.mubr.f32.mxu0 0.0
  %7382 = vmatmul.mubr.f32.gmra.mrb[0].mxu0 %v7250
  %v7383 = vpop.f32.mrb[0].mxu0
  %v7384 = vadd.f32 %v7191, %v7383
  %v7385 = vpop.f32.mrb[0].mxu0
  %7386 = vmatprep.mubr.f32.mxu0 0.0
  %7387 = vmatmul.mubr.f32.gmra.mrb[0].mxu0 %v7253
  %v7388 = vpop.f32.mrb[0].mxu0
  %v7389 = vadd.f32 %v7196, %v7388
  %v7390 = vpop.f32.mrb[0].mxu0
  %7391 = vmatprep.mubr.f32.mxu0 0.0
  %7392 = vmatmul.mubr.f32.gmra.mrb[0].mxu0 %v7256
  %v7393 = vpop.f32.mrb[0].mxu0
  %v7394 = vadd.f32 %v7201, %v7393
  %v7395 = vpop.f32.mrb[0].mxu0
  %7396 = vmatprep.mubr.f32.mxu0 0.0
  %7397 = vmatmul.mubr.f32.gmra.mrb[0].mxu0 %v7259
  %v7398 = vpop.f32.mrb[0].mxu0
  %v7399 = vadd.f32 %v7206, %v7398
  %v7400 = vpop.f32.mrb[0].mxu0
  %7401 = vmatprep.mubr.f32.mxu0 0.0
  %7402 = vmatmul.mubr.f32.gmra.mrb[0].mxu0 %v7262
  %v7403 = vpop.f32.mrb[0].mxu0
  %v7404 = vadd.f32 %v7211, %v7403
  %v7405 = vpop.f32.mrb[0].mxu0
  %7406 = vmatprep.mubr.f32.mxu0 0.0
  %7407 = vmatmul.mubr.f32.gmra.mrb[0].mxu0 %v7265
  %v7408 = vpop.f32.mrb[0].mxu0
  %v7409 = vadd.f32 %v7216, %v7408
  %v7410 = vpop.f32.mrb[0].mxu0
  %7411 = vdwg.mxu0
  %v7412 = vld [vmem:[#allocation5 + $0x2] sm:$0xff]
  %v7413 = vld [vmem:[#allocation5 + $0x12] sm:$0xff]
  %v7414 = vld [vmem:[#allocation5 + $0x22] sm:$0xff]
  %v7415 = vld [vmem:[#allocation5 + $0x32] sm:$0xff]
  %v7416 = vld [vmem:[#allocation5 + $0x42] sm:$0xff]
  %v7417 = vld [vmem:[#allocation5 + $0x52] sm:$0xff]
  %v7418 = vld [vmem:[#allocation5 + $0x62] sm:$0xff]
  %v7419 = vld [vmem:[#allocation5 + $0x72] sm:$0xff]
  %v7420 = vld [vmem:[#allocation5 + $0xa2] sm:$0xff]
  %v7421 = vld [vmem:[#allocation5 + $0xb2] sm:$0xff]
  %v7422 = vld [vmem:[#allocation5 + $0xc2] sm:$0xff]
  %v7423 = vld [vmem:[#allocation5 + $0xd2] sm:$0xff]
  %v7424 = vld [vmem:[#allocation5 + $0xe2] sm:$0xff]
  %v7425 = vld [vmem:[#allocation5 + $0xf2] sm:$0xff]
  %v7426 = vld [vmem:[#allocation5 + $0x102] sm:$0xff]
  %v7427 = vld [vmem:[#allocation5 + $0x112] sm:$0xff]
  %s7428 = scalar_lea.vmem %s3, 16
  %v7429 = vld [vmem:[%s7428] sm:$0xff]
  %v7431 = vsel %vm20, %v7412, 0
  %v7434 = vsel %vm20, %v7413, 0
  %v7437 = vsel %vm20, %v7414, 0
  %v7440 = vsel %vm20, %v7415, 0
  %v7443 = vsel %vm20, %v7416, 0
  %v7446 = vsel %vm20, %v7417, 0
  %v7449 = vsel %vm20, %v7418, 0
  %v7452 = vsel %vm20, %v7419, 0
  %v7455 = vsel %vm20, %v7420, 0
  %v7458 = vsel %vm20, %v7421, 0
  %v7461 = vsel %vm20, %v7422, 0
  %v7464 = vsel %vm20, %v7423, 0
  %v7467 = vsel %vm20, %v7424, 0
  %v7470 = vsel %vm20, %v7425, 0
  %v7473 = vsel %vm20, %v7426, 0
  %v7476 = vsel %vm20, %v7427, 0
  %7478 = vmatprep.subr.mxu0 0.0
  %7479 = vmatpush1.msra.mxu0 %v7429
  %7480 = vmatprep.subr.mxu0 0.0
  %7481 = vmatpush1.msra.mxu0 0.0
  %7482 = vmatprep.subr.mxu0 0.0
  %7483 = vmatpush1.msra.mxu0 0.0
  %7484 = vmatprep.subr.mxu0 0.0
  %7485 = vmatpush1.msra.mxu0 0.0
  %7486 = vmatprep.subr.mxu0 0.0
  %7487 = vmatpush1.msra.mxu0 0.0
  %7488 = vmatprep.subr.mxu0 0.0
  %7489 = vmatpush1.msra.mxu0 0.0
  %7490 = vmatprep.subr.mxu0 0.0
  %7491 = vmatpush1.msra.mxu0 0.0
  %7492 = vmatprep.subr.mxu0 0.0
  %7493 = vmatpush1.msra.mxu0 0.0
  %7494 = vmatprep.subr.mxu0 0.0
  %7495 = vmatpush1.msra.mxu0 0.0
  %7496 = vmatprep.subr.mxu0 0.0
  %7497 = vmatpush1.msra.mxu0 0.0
  %7498 = vmatprep.subr.mxu0 0.0
  %7499 = vmatpush1.msra.mxu0 0.0
  %7500 = vmatprep.subr.mxu0 0.0
  %7501 = vmatpush1.msra.mxu0 0.0
  %7502 = vmatprep.subr.mxu0 0.0
  %7503 = vmatpush1.msra.mxu0 0.0
  %7504 = vmatprep.subr.mxu0 0.0
  %7505 = vmatpush1.msra.mxu0 0.0
  %7506 = vmatprep.subr.mxu0 0.0
  %7507 = vmatpush1.msra.mxu0 0.0
  %7508 = vmatprep.subr.mxu0 0.0
  %7509 = vmatpush1.msra.mxu0 0.0
  %7510 = vmatprep.subr.mxu0 0.0
  %7511 = vmatpush1.msra.mxu0 0.0
  %7512 = vmatprep.subr.mxu0 0.0
  %7513 = vmatpush1.msra.mxu0 0.0
  %7514 = vmatprep.subr.mxu0 0.0
  %7515 = vmatpush1.msra.mxu0 0.0
  %7516 = vmatprep.subr.mxu0 0.0
  %7517 = vmatpush1.msra.mxu0 0.0
  %7518 = vmatprep.subr.mxu0 0.0
  %7519 = vmatpush1.msra.mxu0 0.0
  %7520 = vmatprep.subr.mxu0 0.0
  %7521 = vmatpush1.msra.mxu0 0.0
  %7522 = vmatprep.subr.mxu0 0.0
  %7523 = vmatpush1.msra.mxu0 0.0
  %7524 = vmatprep.subr.mxu0 0.0
  %7525 = vmatpush1.msra.mxu0 0.0
  %7526 = vmatprep.subr.mxu0 0.0
  %7527 = vmatpush1.msra.mxu0 0.0
  %7528 = vmatprep.subr.mxu0 0.0
  %7529 = vmatpush1.msra.mxu0 0.0
  %7530 = vmatprep.subr.mxu0 0.0
  %7531 = vmatpush1.msra.mxu0 0.0
  %7532 = vmatprep.subr.mxu0 0.0
  %7533 = vmatpush1.msra.mxu0 0.0
  %7534 = vmatprep.subr.mxu0 0.0
  %7535 = vmatpush1.msra.mxu0 0.0
  %7536 = vmatprep.subr.mxu0 0.0
  %7537 = vmatpush1.msra.mxu0 0.0
  %7538 = vmatprep.subr.mxu0 0.0
  %7539 = vmatpush1.msra.mxu0 0.0
  %7540 = vmatprep.subr.mxu0 0.0
  %7541 = vmatpush1.msra.mxu0 0.0
  %7542 = vmatprep.mubr.f32.mxu0 0.0
  %7543 = vmatmul.mubr.f32.gmra.mrb[0].mxu0 %v7431
  %v7544 = vpop.f32.mrb[0].mxu0
  %v7545 = vadd.f32 0.0, %v7544
  %v7546 = vpop.f32.mrb[0].mxu0
  %7547 = vmatprep.mubr.f32.mxu0 0.0
  %7548 = vmatmul.mubr.f32.gmra.mrb[0].mxu0 %v7434
  %v7549 = vpop.f32.mrb[0].mxu0
  %v7550 = vadd.f32 0.0, %v7549
  %v7551 = vpop.f32.mrb[0].mxu0
  %7552 = vmatprep.mubr.f32.mxu0 0.0
  %7553 = vmatmul.mubr.f32.gmra.mrb[0].mxu0 %v7437
  %v7554 = vpop.f32.mrb[0].mxu0
  %v7555 = vadd.f32 0.0, %v7554
  %v7556 = vpop.f32.mrb[0].mxu0
  %7557 = vmatprep.mubr.f32.mxu0 0.0
  %7558 = vmatmul.mubr.f32.gmra.mrb[0].mxu0 %v7440
  %v7559 = vpop.f32.mrb[0].mxu0
  %v7560 = vadd.f32 0.0, %v7559
  %v7561 = vpop.f32.mrb[0].mxu0
  %7562 = vmatprep.mubr.f32.mxu0 0.0
  %7563 = vmatmul.mubr.f32.gmra.mrb[0].mxu0 %v7443
  %v7564 = vpop.f32.mrb[0].mxu0
  %v7565 = vadd.f32 0.0, %v7564
  %v7566 = vpop.f32.mrb[0].mxu0
  %7567 = vmatprep.mubr.f32.mxu0 0.0
  %7568 = vmatmul.mubr.f32.gmra.mrb[0].mxu0 %v7446
  %v7569 = vpop.f32.mrb[0].mxu0
  %v7570 = vadd.f32 0.0, %v7569
  %v7571 = vpop.f32.mrb[0].mxu0
  %7572 = vmatprep.mubr.f32.mxu0 0.0
  %7573 = vmatmul.mubr.f32.gmra.mrb[0].mxu0 %v7449
  %v7574 = vpop.f32.mrb[0].mxu0
  %v7575 = vadd.f32 0.0, %v7574
  %v7576 = vpop.f32.mrb[0].mxu0
  %7577 = vmatprep.mubr.f32.mxu0 0.0
  %7578 = vmatmul.mubr.f32.gmra.mrb[0].mxu0 %v7452
  %v7579 = vpop.f32.mrb[0].mxu0
  %v7580 = vadd.f32 0.0, %v7579
  %v7581 = vpop.f32.mrb[0].mxu0
  %7582 = vmatprep.mubr.f32.mxu0 0.0
  %7583 = vmatmul.mubr.f32.gmra.mrb[0].mxu0 %v7455
  %v7584 = vpop.f32.mrb[0].mxu0
  %v7585 = vadd.f32 0.0, %v7584
  %v7586 = vpop.f32.mrb[0].mxu0
  %7587 = vmatprep.mubr.f32.mxu0 0.0
  %7588 = vmatmul.mubr.f32.gmra.mrb[0].mxu0 %v7458
  %v7589 = vpop.f32.mrb[0].mxu0
  %v7590 = vadd.f32 0.0, %v7589
  %v7591 = vpop.f32.mrb[0].mxu0
  %7592 = vmatprep.mubr.f32.mxu0 0.0
  %7593 = vmatmul.mubr.f32.gmra.mrb[0].mxu0 %v7461
  %v7594 = vpop.f32.mrb[0].mxu0
  %v7595 = vadd.f32 0.0, %v7594
  %v7596 = vpop.f32.mrb[0].mxu0
  %7597 = vmatprep.mubr.f32.mxu0 0.0
  %7598 = vmatmul.mubr.f32.gmra.mrb[0].mxu0 %v7464
  %v7599 = vpop.f32.mrb[0].mxu0
  %v7600 = vadd.f32 0.0, %v7599
  %v7601 = vpop.f32.mrb[0].mxu0
  %7602 = vmatprep.mubr.f32.mxu0 0.0
  %7603 = vmatmul.mubr.f32.gmra.mrb[0].mxu0 %v7467
  %v7604 = vpop.f32.mrb[0].mxu0
  %v7605 = vadd.f32 0.0, %v7604
  %v7606 = vpop.f32.mrb[0].mxu0
  %7607 = vmatprep.mubr.f32.mxu0 0.0
  %7608 = vmatmul.mubr.f32.gmra.mrb[0].mxu0 %v7470
  %v7609 = vpop.f32.mrb[0].mxu0
  %v7610 = vadd.f32 0.0, %v7609
  %v7611 = vpop.f32.mrb[0].mxu0
  %7612 = vmatprep.mubr.f32.mxu0 0.0
  %7613 = vmatmul.mubr.f32.gmra.mrb[0].mxu0 %v7473
  %v7614 = vpop.f32.mrb[0].mxu0
  %v7615 = vadd.f32 0.0, %v7614
  %v7616 = vpop.f32.mrb[0].mxu0
  %7617 = vmatprep.mubr.f32.mxu0 0.0
  %7618 = vmatmul.mubr.f32.gmra.mrb[0].mxu0 %v7476
  %v7619 = vpop.f32.mrb[0].mxu0
  %v7620 = vadd.f32 0.0, %v7619
  %v7621 = vpop.f32.mrb[0].mxu0
  %7622 = vdwg.mxu0
  %v7623 = vadd.f32 %v7334, %v7545
  %v7624 = vadd.f32 %v7339, %v7550
  %v7625 = vadd.f32 %v7344, %v7555
  %v7626 = vadd.f32 %v7349, %v7560
  %v7627 = vadd.f32 %v7354, %v7565
  %v7628 = vadd.f32 %v7359, %v7570
  %v7629 = vadd.f32 %v7364, %v7575
  %v7630 = vadd.f32 %v7369, %v7580
  %v7631 = vadd.f32 %v7374, %v7585
  %v7632 = vadd.f32 %v7379, %v7590
  %v7633 = vadd.f32 %v7384, %v7595
  %v7634 = vadd.f32 %v7389, %v7600
  %v7635 = vadd.f32 %v7394, %v7605
  %v7636 = vadd.f32 %v7399, %v7610
  %v7637 = vadd.f32 %v7404, %v7615
  %v7638 = vadd.f32 %v7409, %v7620
  %v7639 = vld [vmem:[%s6974] sm:$0xff]
  %v7640 = vld [vmem:[%s6974 + $0x10] sm:$0xff]
  %v7641 = vld [vmem:[%s6974 + $0x20] sm:$0xff]
  %v7642 = vld [vmem:[%s6974 + $0x30] sm:$0xff]
  %v7643 = vld [vmem:[%s6974 + $0x40] sm:$0xff]
  %v7644 = vld [vmem:[%s6974 + $0x50] sm:$0xff]
  %v7645 = vld [vmem:[%s6974 + $0x60] sm:$0xff]
  %v7646 = vld [vmem:[%s6974 + $0x70] sm:$0xff]
  %v7647 = vld [vmem:[%s6974 + $0xa0] sm:$0xff]
  %v7648 = vld [vmem:[%s6974 + $0xb0] sm:$0xff]
  %v7649 = vld [vmem:[%s6974 + $0xc0] sm:$0xff]
  %v7650 = vld [vmem:[%s6974 + $0xd0] sm:$0xff]
  %v7651 = vld [vmem:[%s6974 + $0xe0] sm:$0xff]
  %v7652 = vld [vmem:[%s6974 + $0xf0] sm:$0xff]
  %v7653 = vld [vmem:[%s6974 + $0x100] sm:$0xff]
  %v7654 = vld [vmem:[%s6974 + $0x110] sm:$0xff]
  %s7655 = scalar_lea.vmem %s3, 24
  %v7656 = vld [vmem:[%s7655] sm:$0xff]
  %v7658 = vsel %vm20, %v7639, 0
  %v7661 = vsel %vm20, %v7640, 0
  %v7664 = vsel %vm20, %v7641, 0
  %v7667 = vsel %vm20, %v7642, 0
  %v7670 = vsel %vm20, %v7643, 0
  %v7673 = vsel %vm20, %v7644, 0
  %v7676 = vsel %vm20, %v7645, 0
  %v7679 = vsel %vm20, %v7646, 0
  %v7682 = vsel %vm20, %v7647, 0
  %v7685 = vsel %vm20, %v7648, 0
  %v7688 = vsel %vm20, %v7649, 0
  %v7691 = vsel %vm20, %v7650, 0
  %v7694 = vsel %vm20, %v7651, 0
  %v7697 = vsel %vm20, %v7652, 0
  %v7700 = vsel %vm20, %v7653, 0
  %v7703 = vsel %vm20, %v7654, 0
  %7705 = vmatprep.subr.mxu0 0.0
  %7706 = vmatpush1.msra.mxu0 %v7656
  %7707 = vmatprep.subr.mxu0 0.0
  %7708 = vmatpush1.msra.mxu0 0.0
  %7709 = vmatprep.subr.mxu0 0.0
  %7710 = vmatpush1.msra.mxu0 0.0
  %7711 = vmatprep.subr.mxu0 0.0
  %7712 = vmatpush1.msra.mxu0 0.0
  %7713 = vmatprep.subr.mxu0 0.0
  %7714 = vmatpush1.msra.mxu0 0.0
  %7715 = vmatprep.subr.mxu0 0.0
  %7716 = vmatpush1.msra.mxu0 0.0
  %7717 = vmatprep.subr.mxu0 0.0
  %7718 = vmatpush1.msra.mxu0 0.0
  %7719 = vmatprep.subr.mxu0 0.0
  %7720 = vmatpush1.msra.mxu0 0.0
  %7721 = vmatprep.subr.mxu0 0.0
  %7722 = vmatpush1.msra.mxu0 0.0
  %7723 = vmatprep.subr.mxu0 0.0
  %7724 = vmatpush1.msra.mxu0 0.0
  %7725 = vmatprep.subr.mxu0 0.0
  %7726 = vmatpush1.msra.mxu0 0.0
  %7727 = vmatprep.subr.mxu0 0.0
  %7728 = vmatpush1.msra.mxu0 0.0
  %7729 = vmatprep.subr.mxu0 0.0
  %7730 = vmatpush1.msra.mxu0 0.0
  %7731 = vmatprep.subr.mxu0 0.0
  %7732 = vmatpush1.msra.mxu0 0.0
  %7733 = vmatprep.subr.mxu0 0.0
  %7734 = vmatpush1.msra.mxu0 0.0
  %7735 = vmatprep.subr.mxu0 0.0
  %7736 = vmatpush1.msra.mxu0 0.0
  %7737 = vmatprep.subr.mxu0 0.0
  %7738 = vmatpush1.msra.mxu0 0.0
  %7739 = vmatprep.subr.mxu0 0.0
  %7740 = vmatpush1.msra.mxu0 0.0
  %7741 = vmatprep.subr.mxu0 0.0
  %7742 = vmatpush1.msra.mxu0 0.0
  %7743 = vmatprep.subr.mxu0 0.0
  %7744 = vmatpush1.msra.mxu0 0.0
  %7745 = vmatprep.subr.mxu0 0.0
  %7746 = vmatpush1.msra.mxu0 0.0
  %7747 = vmatprep.subr.mxu0 0.0
  %7748 = vmatpush1.msra.mxu0 0.0
  %7749 = vmatprep.subr.mxu0 0.0
  %7750 = vmatpush1.msra.mxu0 0.0
  %7751 = vmatprep.subr.mxu0 0.0
  %7752 = vmatpush1.msra.mxu0 0.0
  %7753 = vmatprep.subr.mxu0 0.0
  %7754 = vmatpush1.msra.mxu0 0.0
  %7755 = vmatprep.subr.mxu0 0.0
  %7756 = vmatpush1.msra.mxu0 0.0
  %7757 = vmatprep.subr.mxu0 0.0
  %7758 = vmatpush1.msra.mxu0 0.0
  %7759 = vmatprep.subr.mxu0 0.0
  %7760 = vmatpush1.msra.mxu0 0.0
  %7761 = vmatprep.subr.mxu0 0.0
  %7762 = vmatpush1.msra.mxu0 0.0
  %7763 = vmatprep.subr.mxu0 0.0
  %7764 = vmatpush1.msra.mxu0 0.0
  %7765 = vmatprep.subr.mxu0 0.0
  %7766 = vmatpush1.msra.mxu0 0.0
  %7767 = vmatprep.subr.mxu0 0.0
  %7768 = vmatpush1.msra.mxu0 0.0
  %7769 = vmatprep.mubr.f32.mxu0 0.0
  %7770 = vmatmul.mubr.f32.gmra.mrb[0].mxu0 %v7658
  %v7771 = vpop.f32.mrb[0].mxu0
  %v7772 = vadd.f32 0.0, %v7771
  %v7773 = vpop.f32.mrb[0].mxu0
  %7774 = vmatprep.mubr.f32.mxu0 0.0
  %7775 = vmatmul.mubr.f32.gmra.mrb[0].mxu0 %v7661
  %v7776 = vpop.f32.mrb[0].mxu0
  %v7777 = vadd.f32 0.0, %v7776
  %v7778 = vpop.f32.mrb[0].mxu0
  %7779 = vmatprep.mubr.f32.mxu0 0.0
  %7780 = vmatmul.mubr.f32.gmra.mrb[0].mxu0 %v7664
  %v7781 = vpop.f32.mrb[0].mxu0
  %v7782 = vadd.f32 0.0, %v7781
  %v7783 = vpop.f32.mrb[0].mxu0
  %7784 = vmatprep.mubr.f32.mxu0 0.0
  %7785 = vmatmul.mubr.f32.gmra.mrb[0].mxu0 %v7667
  %v7786 = vpop.f32.mrb[0].mxu0
  %v7787 = vadd.f32 0.0, %v7786
  %v7788 = vpop.f32.mrb[0].mxu0
  %7789 = vmatprep.mubr.f32.mxu0 0.0
  %7790 = vmatmul.mubr.f32.gmra.mrb[0].mxu0 %v7670
  %v7791 = vpop.f32.mrb[0].mxu0
  %v7792 = vadd.f32 0.0, %v7791
  %v7793 = vpop.f32.mrb[0].mxu0
  %7794 = vmatprep.mubr.f32.mxu0 0.0
  %7795 = vmatmul.mubr.f32.gmra.mrb[0].mxu0 %v7673
  %v7796 = vpop.f32.mrb[0].mxu0
  %v7797 = vadd.f32 0.0, %v7796
  %v7798 = vpop.f32.mrb[0].mxu0
  %7799 = vmatprep.mubr.f32.mxu0 0.0
  %7800 = vmatmul.mubr.f32.gmra.mrb[0].mxu0 %v7676
  %v7801 = vpop.f32.mrb[0].mxu0
  %v7802 = vadd.f32 0.0, %v7801
  %v7803 = vpop.f32.mrb[0].mxu0
  %7804 = vmatprep.mubr.f32.mxu0 0.0
  %7805 = vmatmul.mubr.f32.gmra.mrb[0].mxu0 %v7679
  %v7806 = vpop.f32.mrb[0].mxu0
  %v7807 = vadd.f32 0.0, %v7806
  %v7808 = vpop.f32.mrb[0].mxu0
  %7809 = vmatprep.mubr.f32.mxu0 0.0
  %7810 = vmatmul.mubr.f32.gmra.mrb[0].mxu0 %v7682
  %v7811 = vpop.f32.mrb[0].mxu0
  %v7812 = vadd.f32 0.0, %v7811
  %v7813 = vpop.f32.mrb[0].mxu0
  %7814 = vmatprep.mubr.f32.mxu0 0.0
  %7815 = vmatmul.mubr.f32.gmra.mrb[0].mxu0 %v7685
  %v7816 = vpop.f32.mrb[0].mxu0
  %v7817 = vadd.f32 0.0, %v7816
  %v7818 = vpop.f32.mrb[0].mxu0
  %7819 = vmatprep.mubr.f32.mxu0 0.0
  %7820 = vmatmul.mubr.f32.gmra.mrb[0].mxu0 %v7688
  %v7821 = vpop.f32.mrb[0].mxu0
  %v7822 = vadd.f32 0.0, %v7821
  %v7823 = vpop.f32.mrb[0].mxu0
  %7824 = vmatprep.mubr.f32.mxu0 0.0
  %7825 = vmatmul.mubr.f32.gmra.mrb[0].mxu0 %v7691
  %v7826 = vpop.f32.mrb[0].mxu0
  %v7827 = vadd.f32 0.0, %v7826
  %v7828 = vpop.f32.mrb[0].mxu0
  %7829 = vmatprep.mubr.f32.mxu0 0.0
  %7830 = vmatmul.mubr.f32.gmra.mrb[0].mxu0 %v7694
  %v7831 = vpop.f32.mrb[0].mxu0
  %v7832 = vadd.f32 0.0, %v7831
  %v7833 = vpop.f32.mrb[0].mxu0
  %7834 = vmatprep.mubr.f32.mxu0 0.0
  %7835 = vmatmul.mubr.f32.gmra.mrb[0].mxu0 %v7697
  %v7836 = vpop.f32.mrb[0].mxu0
  %v7837 = vadd.f32 0.0, %v7836
  %v7838 = vpop.f32.mrb[0].mxu0
  %7839 = vmatprep.mubr.f32.mxu0 0.0
  %7840 = vmatmul.mubr.f32.gmra.mrb[0].mxu0 %v7700
  %v7841 = vpop.f32.mrb[0].mxu0
  %v7842 = vadd.f32 0.0, %v7841
  %v7843 = vpop.f32.mrb[0].mxu0
  %7844 = vmatprep.mubr.f32.mxu0 0.0
  %7845 = vmatmul.mubr.f32.gmra.mrb[0].mxu0 %v7703
  %v7846 = vpop.f32.mrb[0].mxu0
  %v7847 = vadd.f32 0.0, %v7846
  %v7848 = vpop.f32.mrb[0].mxu0
  %7849 = vdwg.mxu0
  %v7850 = vadd.f32 %v7623, %v7772
  %v7851 = vadd.f32 %v7624, %v7777
  %v7852 = vadd.f32 %v7625, %v7782
  %v7853 = vadd.f32 %v7626, %v7787
  %v7854 = vadd.f32 %v7627, %v7792
  %v7855 = vadd.f32 %v7628, %v7797
  %v7856 = vadd.f32 %v7629, %v7802
  %v7857 = vadd.f32 %v7630, %v7807
  %v7858 = vadd.f32 %v7631, %v7812
  %v7859 = vadd.f32 %v7632, %v7817
  %v7860 = vadd.f32 %v7633, %v7822
  %v7861 = vadd.f32 %v7634, %v7827
  %v7862 = vadd.f32 %v7635, %v7832
  %v7863 = vadd.f32 %v7636, %v7837
  %v7864 = vadd.f32 %v7637, %v7842
  %v7865 = vadd.f32 %v7638, %v7847
  %v7866 = vld [vmem:[%s6974 + $0x1] sm:$0xff]
  %v7867 = vld [vmem:[%s6974 + $0x11] sm:$0xff]
  %v7868 = vld [vmem:[%s6974 + $0x21] sm:$0xff]
  %v7869 = vld [vmem:[%s6974 + $0x31] sm:$0xff]
  %v7870 = vld [vmem:[%s6974 + $0x41] sm:$0xff]
  %v7871 = vld [vmem:[%s6974 + $0x51] sm:$0xff]
  %v7872 = vld [vmem:[%s6974 + $0x61] sm:$0xff]
  %v7873 = vld [vmem:[%s6974 + $0x71] sm:$0xff]
  %v7874 = vld [vmem:[%s6974 + $0xa1] sm:$0xff]
  %v7875 = vld [vmem:[%s6974 + $0xb1] sm:$0xff]
  %v7876 = vld [vmem:[%s6974 + $0xc1] sm:$0xff]
  %v7877 = vld [vmem:[%s6974 + $0xd1] sm:$0xff]
  %v7878 = vld [vmem:[%s6974 + $0xe1] sm:$0xff]
  %v7879 = vld [vmem:[%s6974 + $0xf1] sm:$0xff]
  %v7880 = vld [vmem:[%s6974 + $0x101] sm:$0xff]
  %v7881 = vld [vmem:[%s6974 + $0x111] sm:$0xff]
  %s7882 = scalar_lea.vmem %s3, 32
  %v7883 = vld [vmem:[%s7882] sm:$0xff]
  %v7885 = vsel %vm20, %v7866, 0
  %v7888 = vsel %vm20, %v7867, 0
  %v7891 = vsel %vm20, %v7868, 0
  %v7894 = vsel %vm20, %v7869, 0
  %v7897 = vsel %vm20, %v7870, 0
  %v7900 = vsel %vm20, %v7871, 0
  %v7903 = vsel %vm20, %v7872, 0
  %v7906 = vsel %vm20, %v7873, 0
  %v7909 = vsel %vm20, %v7874, 0
  %v7912 = vsel %vm20, %v7875, 0
  %v7915 = vsel %vm20, %v7876, 0
  %v7918 = vsel %vm20, %v7877, 0
  %v7921 = vsel %vm20, %v7878, 0
  %v7924 = vsel %vm20, %v7879, 0
  %v7927 = vsel %vm20, %v7880, 0
  %v7930 = vsel %vm20, %v7881, 0
  %7932 = vmatprep.subr.mxu0 0.0
  %7933 = vmatpush1.msra.mxu0 %v7883
  %7934 = vmatprep.subr.mxu0 0.0
  %7935 = vmatpush1.msra.mxu0 0.0
  %7936 = vmatprep.subr.mxu0 0.0
  %7937 = vmatpush1.msra.mxu0 0.0
  %7938 = vmatprep.subr.mxu0 0.0
  %7939 = vmatpush1.msra.mxu0 0.0
  %7940 = vmatprep.subr.mxu0 0.0
  %7941 = vmatpush1.msra.mxu0 0.0
  %7942 = vmatprep.subr.mxu0 0.0
  %7943 = vmatpush1.msra.mxu0 0.0
  %7944 = vmatprep.subr.mxu0 0.0
  %7945 = vmatpush1.msra.mxu0 0.0
  %7946 = vmatprep.subr.mxu0 0.0
  %7947 = vmatpush1.msra.mxu0 0.0
  %7948 = vmatprep.subr.mxu0 0.0
  %7949 = vmatpush1.msra.mxu0 0.0
  %7950 = vmatprep.subr.mxu0 0.0
  %7951 = vmatpush1.msra.mxu0 0.0
  %7952 = vmatprep.subr.mxu0 0.0
  %7953 = vmatpush1.msra.mxu0 0.0
  %7954 = vmatprep.subr.mxu0 0.0
  %7955 = vmatpush1.msra.mxu0 0.0
  %7956 = vmatprep.subr.mxu0 0.0
  %7957 = vmatpush1.msra.mxu0 0.0
  %7958 = vmatprep.subr.mxu0 0.0
  %7959 = vmatpush1.msra.mxu0 0.0
  %7960 = vmatprep.subr.mxu0 0.0
  %7961 = vmatpush1.msra.mxu0 0.0
  %7962 = vmatprep.subr.mxu0 0.0
  %7963 = vmatpush1.msra.mxu0 0.0
  %7964 = vmatprep.subr.mxu0 0.0
  %7965 = vmatpush1.msra.mxu0 0.0
  %7966 = vmatprep.subr.mxu0 0.0
  %7967 = vmatpush1.msra.mxu0 0.0
  %7968 = vmatprep.subr.mxu0 0.0
  %7969 = vmatpush1.msra.mxu0 0.0
  %7970 = vmatprep.subr.mxu0 0.0
  %7971 = vmatpush1.msra.mxu0 0.0
  %7972 = vmatprep.subr.mxu0 0.0
  %7973 = vmatpush1.msra.mxu0 0.0
  %7974 = vmatprep.subr.mxu0 0.0
  %7975 = vmatpush1.msra.mxu0 0.0
  %7976 = vmatprep.subr.mxu0 0.0
  %7977 = vmatpush1.msra.mxu0 0.0
  %7978 = vmatprep.subr.mxu0 0.0
  %7979 = vmatpush1.msra.mxu0 0.0
  %7980 = vmatprep.subr.mxu0 0.0
  %7981 = vmatpush1.msra.mxu0 0.0
  %7982 = vmatprep.subr.mxu0 0.0
  %7983 = vmatpush1.msra.mxu0 0.0
  %7984 = vmatprep.subr.mxu0 0.0
  %7985 = vmatpush1.msra.mxu0 0.0
  %7986 = vmatprep.subr.mxu0 0.0
  %7987 = vmatpush1.msra.mxu0 0.0
  %7988 = vmatprep.subr.mxu0 0.0
  %7989 = vmatpush1.msra.mxu0 0.0
  %7990 = vmatprep.subr.mxu0 0.0
  %7991 = vmatpush1.msra.mxu0 0.0
  %7992 = vmatprep.subr.mxu0 0.0
  %7993 = vmatpush1.msra.mxu0 0.0
  %7994 = vmatprep.subr.mxu0 0.0
  %7995 = vmatpush1.msra.mxu0 0.0
  %7996 = vmatprep.mubr.f32.mxu0 0.0
  %7997 = vmatmul.mubr.f32.gmra.mrb[0].mxu0 %v7885
  %v7998 = vpop.f32.mrb[0].mxu0
  %v7999 = vadd.f32 0.0, %v7998
  %v8000 = vpop.f32.mrb[0].mxu0
  %8001 = vmatprep.mubr.f32.mxu0 0.0
  %8002 = vmatmul.mubr.f32.gmra.mrb[0].mxu0 %v7888
  %v8003 = vpop.f32.mrb[0].mxu0
  %v8004 = vadd.f32 0.0, %v8003
  %v8005 = vpop.f32.mrb[0].mxu0
  %8006 = vmatprep.mubr.f32.mxu0 0.0
  %8007 = vmatmul.mubr.f32.gmra.mrb[0].mxu0 %v7891
  %v8008 = vpop.f32.mrb[0].mxu0
  %v8009 = vadd.f32 0.0, %v8008
  %v8010 = vpop.f32.mrb[0].mxu0
  %8011 = vmatprep.mubr.f32.mxu0 0.0
  %8012 = vmatmul.mubr.f32.gmra.mrb[0].mxu0 %v7894
  %v8013 = vpop.f32.mrb[0].mxu0
  %v8014 = vadd.f32 0.0, %v8013
  %v8015 = vpop.f32.mrb[0].mxu0
  %8016 = vmatprep.mubr.f32.mxu0 0.0
  %8017 = vmatmul.mubr.f32.gmra.mrb[0].mxu0 %v7897
  %v8018 = vpop.f32.mrb[0].mxu0
  %v8019 = vadd.f32 0.0, %v8018
  %v8020 = vpop.f32.mrb[0].mxu0
  %8021 = vmatprep.mubr.f32.mxu0 0.0
  %8022 = vmatmul.mubr.f32.gmra.mrb[0].mxu0 %v7900
  %v8023 = vpop.f32.mrb[0].mxu0
  %v8024 = vadd.f32 0.0, %v8023
  %v8025 = vpop.f32.mrb[0].mxu0
  %8026 = vmatprep.mubr.f32.mxu0 0.0
  %8027 = vmatmul.mubr.f32.gmra.mrb[0].mxu0 %v7903
  %v8028 = vpop.f32.mrb[0].mxu0
  %v8029 = vadd.f32 0.0, %v8028
  %v8030 = vpop.f32.mrb[0].mxu0
  %8031 = vmatprep.mubr.f32.mxu0 0.0
  %8032 = vmatmul.mubr.f32.gmra.mrb[0].mxu0 %v7906
  %v8033 = vpop.f32.mrb[0].mxu0
  %v8034 = vadd.f32 0.0, %v8033
  %v8035 = vpop.f32.mrb[0].mxu0
  %8036 = vmatprep.mubr.f32.mxu0 0.0
  %8037 = vmatmul.mubr.f32.gmra.mrb[0].mxu0 %v7909
  %v8038 = vpop.f32.mrb[0].mxu0
  %v8039 = vadd.f32 0.0, %v8038
  %v8040 = vpop.f32.mrb[0].mxu0
  %8041 = vmatprep.mubr.f32.mxu0 0.0
  %8042 = vmatmul.mubr.f32.gmra.mrb[0].mxu0 %v7912
  %v8043 = vpop.f32.mrb[0].mxu0
  %v8044 = vadd.f32 0.0, %v8043
  %v8045 = vpop.f32.mrb[0].mxu0
  %8046 = vmatprep.mubr.f32.mxu0 0.0
  %8047 = vmatmul.mubr.f32.gmra.mrb[0].mxu0 %v7915
  %v8048 = vpop.f32.mrb[0].mxu0
  %v8049 = vadd.f32 0.0, %v8048
  %v8050 = vpop.f32.mrb[0].mxu0
  %8051 = vmatprep.mubr.f32.mxu0 0.0
  %8052 = vmatmul.mubr.f32.gmra.mrb[0].mxu0 %v7918
  %v8053 = vpop.f32.mrb[0].mxu0
  %v8054 = vadd.f32 0.0, %v8053
  %v8055 = vpop.f32.mrb[0].mxu0
  %8056 = vmatprep.mubr.f32.mxu0 0.0
  %8057 = vmatmul.mubr.f32.gmra.mrb[0].mxu0 %v7921
  %v8058 = vpop.f32.mrb[0].mxu0
  %v8059 = vadd.f32 0.0, %v8058
  %v8060 = vpop.f32.mrb[0].mxu0
  %8061 = vmatprep.mubr.f32.mxu0 0.0
  %8062 = vmatmul.mubr.f32.gmra.mrb[0].mxu0 %v7924
  %v8063 = vpop.f32.mrb[0].mxu0
  %v8064 = vadd.f32 0.0, %v8063
  %v8065 = vpop.f32.mrb[0].mxu0
  %8066 = vmatprep.mubr.f32.mxu0 0.0
  %8067 = vmatmul.mubr.f32.gmra.mrb[0].mxu0 %v7927
  %v8068 = vpop.f32.mrb[0].mxu0
  %v8069 = vadd.f32 0.0, %v8068
  %v8070 = vpop.f32.mrb[0].mxu0
  %8071 = vmatprep.mubr.f32.mxu0 0.0
  %8072 = vmatmul.mubr.f32.gmra.mrb[0].mxu0 %v7930
  %v8073 = vpop.f32.mrb[0].mxu0
  %v8074 = vadd.f32 0.0, %v8073
  %v8075 = vpop.f32.mrb[0].mxu0
  %8076 = vdwg.mxu0
  %v8077 = vadd.f32 %v7850, %v7999
  %v8078 = vadd.f32 %v7851, %v8004
  %v8079 = vadd.f32 %v7852, %v8009
  %v8080 = vadd.f32 %v7853, %v8014
  %v8081 = vadd.f32 %v7854, %v8019
  %v8082 = vadd.f32 %v7855, %v8024
  %v8083 = vadd.f32 %v7856, %v8029
  %v8084 = vadd.f32 %v7857, %v8034
  %v8085 = vadd.f32 %v7858, %v8039
  %v8086 = vadd.f32 %v7859, %v8044
  %v8087 = vadd.f32 %v7860, %v8049
  %v8088 = vadd.f32 %v7861, %v8054
  %v8089 = vadd.f32 %v7862, %v8059
  %v8090 = vadd.f32 %v7863, %v8064
  %v8091 = vadd.f32 %v7864, %v8069
  %v8092 = vadd.f32 %v7865, %v8074
  %v8093 = vld [vmem:[%s6974 + $0x2] sm:$0xff]
  %v8094 = vld [vmem:[%s6974 + $0x12] sm:$0xff]
  %v8095 = vld [vmem:[%s6974 + $0x22] sm:$0xff]
  %v8096 = vld [vmem:[%s6974 + $0x32] sm:$0xff]
  %v8097 = vld [vmem:[%s6974 + $0x42] sm:$0xff]
  %v8098 = vld [vmem:[%s6974 + $0x52] sm:$0xff]
  %v8099 = vld [vmem:[%s6974 + $0x62] sm:$0xff]
  %v8100 = vld [vmem:[%s6974 + $0x72] sm:$0xff]
  %v8101 = vld [vmem:[%s6974 + $0xa2] sm:$0xff]
  %v8102 = vld [vmem:[%s6974 + $0xb2] sm:$0xff]
  %v8103 = vld [vmem:[%s6974 + $0xc2] sm:$0xff]
  %v8104 = vld [vmem:[%s6974 + $0xd2] sm:$0xff]
  %v8105 = vld [vmem:[%s6974 + $0xe2] sm:$0xff]
  %v8106 = vld [vmem:[%s6974 + $0xf2] sm:$0xff]
  %v8107 = vld [vmem:[%s6974 + $0x102] sm:$0xff]
  %v8108 = vld [vmem:[%s6974 + $0x112] sm:$0xff]
  %s8109 = scalar_lea.vmem %s3, 40
  %v8110 = vld [vmem:[%s8109] sm:$0xff]
  %v8112 = vsel %vm20, %v8093, 0
  %v8115 = vsel %vm20, %v8094, 0
  %v8118 = vsel %vm20, %v8095, 0
  %v8121 = vsel %vm20, %v8096, 0
  %v8124 = vsel %vm20, %v8097, 0
  %v8127 = vsel %vm20, %v8098, 0
  %v8130 = vsel %vm20, %v8099, 0
  %v8133 = vsel %vm20, %v8100, 0
  %v8136 = vsel %vm20, %v8101, 0
  %v8139 = vsel %vm20, %v8102, 0
  %v8142 = vsel %vm20, %v8103, 0
  %v8145 = vsel %vm20, %v8104, 0
  %v8148 = vsel %vm20, %v8105, 0
  %v8151 = vsel %vm20, %v8106, 0
  %v8154 = vsel %vm20, %v8107, 0
  %v8157 = vsel %vm20, %v8108, 0
  %8159 = vmatprep.subr.mxu0 0.0
  %8160 = vmatpush1.msra.mxu0 %v8110
  %8161 = vmatprep.subr.mxu0 0.0
  %8162 = vmatpush1.msra.mxu0 0.0
  %8163 = vmatprep.subr.mxu0 0.0
  %8164 = vmatpush1.msra.mxu0 0.0
  %8165 = vmatprep.subr.mxu0 0.0
  %8166 = vmatpush1.msra.mxu0 0.0
  %8167 = vmatprep.subr.mxu0 0.0
  %8168 = vmatpush1.msra.mxu0 0.0
  %8169 = vmatprep.subr.mxu0 0.0
  %8170 = vmatpush1.msra.mxu0 0.0
  %8171 = vmatprep.subr.mxu0 0.0
  %8172 = vmatpush1.msra.mxu0 0.0
  %8173 = vmatprep.subr.mxu0 0.0
  %8174 = vmatpush1.msra.mxu0 0.0
  %8175 = vmatprep.subr.mxu0 0.0
  %8176 = vmatpush1.msra.mxu0 0.0
  %8177 = vmatprep.subr.mxu0 0.0
  %8178 = vmatpush1.msra.mxu0 0.0
  %8179 = vmatprep.subr.mxu0 0.0
  %8180 = vmatpush1.msra.mxu0 0.0
  %8181 = vmatprep.subr.mxu0 0.0
  %8182 = vmatpush1.msra.mxu0 0.0
  %8183 = vmatprep.subr.mxu0 0.0
  %8184 = vmatpush1.msra.mxu0 0.0
  %8185 = vmatprep.subr.mxu0 0.0
  %8186 = vmatpush1.msra.mxu0 0.0
  %8187 = vmatprep.subr.mxu0 0.0
  %8188 = vmatpush1.msra.mxu0 0.0
  %8189 = vmatprep.subr.mxu0 0.0
  %8190 = vmatpush1.msra.mxu0 0.0
  %8191 = vmatprep.subr.mxu0 0.0
  %8192 = vmatpush1.msra.mxu0 0.0
  %8193 = vmatprep.subr.mxu0 0.0
  %8194 = vmatpush1.msra.mxu0 0.0
  %8195 = vmatprep.subr.mxu0 0.0
  %8196 = vmatpush1.msra.mxu0 0.0
  %8197 = vmatprep.subr.mxu0 0.0
  %8198 = vmatpush1.msra.mxu0 0.0
  %8199 = vmatprep.subr.mxu0 0.0
  %8200 = vmatpush1.msra.mxu0 0.0
  %8201 = vmatprep.subr.mxu0 0.0
  %8202 = vmatpush1.msra.mxu0 0.0
  %8203 = vmatprep.subr.mxu0 0.0
  %8204 = vmatpush1.msra.mxu0 0.0
  %8205 = vmatprep.subr.mxu0 0.0
  %8206 = vmatpush1.msra.mxu0 0.0
  %8207 = vmatprep.subr.mxu0 0.0
  %8208 = vmatpush1.msra.mxu0 0.0
  %8209 = vmatprep.subr.mxu0 0.0
  %8210 = vmatpush1.msra.mxu0 0.0
  %8211 = vmatprep.subr.mxu0 0.0
  %8212 = vmatpush1.msra.mxu0 0.0
  %8213 = vmatprep.subr.mxu0 0.0
  %8214 = vmatpush1.msra.mxu0 0.0
  %8215 = vmatprep.subr.mxu0 0.0
  %8216 = vmatpush1.msra.mxu0 0.0
  %8217 = vmatprep.subr.mxu0 0.0
  %8218 = vmatpush1.msra.mxu0 0.0
  %8219 = vmatprep.subr.mxu0 0.0
  %8220 = vmatpush1.msra.mxu0 0.0
  %8221 = vmatprep.subr.mxu0 0.0
  %8222 = vmatpush1.msra.mxu0 0.0
  %8223 = vmatprep.mubr.f32.mxu0 0.0
  %8224 = vmatmul.mubr.f32.gmra.mrb[0].mxu0 %v8112
  %v8225 = vpop.f32.mrb[0].mxu0
  %v8226 = vadd.f32 0.0, %v8225
  %v8227 = vpop.f32.mrb[0].mxu0
  %8228 = vmatprep.mubr.f32.mxu0 0.0
  %8229 = vmatmul.mubr.f32.gmra.mrb[0].mxu0 %v8115
  %v8230 = vpop.f32.mrb[0].mxu0
  %v8231 = vadd.f32 0.0, %v8230
  %v8232 = vpop.f32.mrb[0].mxu0
  %8233 = vmatprep.mubr.f32.mxu0 0.0
  %8234 = vmatmul.mubr.f32.gmra.mrb[0].mxu0 %v8118
  %v8235 = vpop.f32.mrb[0].mxu0
  %v8236 = vadd.f32 0.0, %v8235
  %v8237 = vpop.f32.mrb[0].mxu0
  %8238 = vmatprep.mubr.f32.mxu0 0.0
  %8239 = vmatmul.mubr.f32.gmra.mrb[0].mxu0 %v8121
  %v8240 = vpop.f32.mrb[0].mxu0
  %v8241 = vadd.f32 0.0, %v8240
  %v8242 = vpop.f32.mrb[0].mxu0
  %8243 = vmatprep.mubr.f32.mxu0 0.0
  %8244 = vmatmul.mubr.f32.gmra.mrb[0].mxu0 %v8124
  %v8245 = vpop.f32.mrb[0].mxu0
  %v8246 = vadd.f32 0.0, %v8245
  %v8247 = vpop.f32.mrb[0].mxu0
  %8248 = vmatprep.mubr.f32.mxu0 0.0
  %8249 = vmatmul.mubr.f32.gmra.mrb[0].mxu0 %v8127
  %v8250 = vpop.f32.mrb[0].mxu0
  %v8251 = vadd.f32 0.0, %v8250
  %v8252 = vpop.f32.mrb[0].mxu0
  %8253 = vmatprep.mubr.f32.mxu0 0.0
  %8254 = vmatmul.mubr.f32.gmra.mrb[0].mxu0 %v8130
  %v8255 = vpop.f32.mrb[0].mxu0
  %v8256 = vadd.f32 0.0, %v8255
  %v8257 = vpop.f32.mrb[0].mxu0
  %8258 = vmatprep.mubr.f32.mxu0 0.0
  %8259 = vmatmul.mubr.f32.gmra.mrb[0].mxu0 %v8133
  %v8260 = vpop.f32.mrb[0].mxu0
  %v8261 = vadd.f32 0.0, %v8260
  %v8262 = vpop.f32.mrb[0].mxu0
  %8263 = vmatprep.mubr.f32.mxu0 0.0
  %8264 = vmatmul.mubr.f32.gmra.mrb[0].mxu0 %v8136
  %v8265 = vpop.f32.mrb[0].mxu0
  %v8266 = vadd.f32 0.0, %v8265
  %v8267 = vpop.f32.mrb[0].mxu0
  %8268 = vmatprep.mubr.f32.mxu0 0.0
  %8269 = vmatmul.mubr.f32.gmra.mrb[0].mxu0 %v8139
  %v8270 = vpop.f32.mrb[0].mxu0
  %v8271 = vadd.f32 0.0, %v8270
  %v8272 = vpop.f32.mrb[0].mxu0
  %8273 = vmatprep.mubr.f32.mxu0 0.0
  %8274 = vmatmul.mubr.f32.gmra.mrb[0].mxu0 %v8142
  %v8275 = vpop.f32.mrb[0].mxu0
  %v8276 = vadd.f32 0.0, %v8275
  %v8277 = vpop.f32.mrb[0].mxu0
  %8278 = vmatprep.mubr.f32.mxu0 0.0
  %8279 = vmatmul.mubr.f32.gmra.mrb[0].mxu0 %v8145
  %v8280 = vpop.f32.mrb[0].mxu0
  %v8281 = vadd.f32 0.0, %v8280
  %v8282 = vpop.f32.mrb[0].mxu0
  %8283 = vmatprep.mubr.f32.mxu0 0.0
  %8284 = vmatmul.mubr.f32.gmra.mrb[0].mxu0 %v8148
  %v8285 = vpop.f32.mrb[0].mxu0
  %v8286 = vadd.f32 0.0, %v8285
  %v8287 = vpop.f32.mrb[0].mxu0
  %8288 = vmatprep.mubr.f32.mxu0 0.0
  %8289 = vmatmul.mubr.f32.gmra.mrb[0].mxu0 %v8151
  %v8290 = vpop.f32.mrb[0].mxu0
  %v8291 = vadd.f32 0.0, %v8290
  %v8292 = vpop.f32.mrb[0].mxu0
  %8293 = vmatprep.mubr.f32.mxu0 0.0
  %8294 = vmatmul.mubr.f32.gmra.mrb[0].mxu0 %v8154
  %v8295 = vpop.f32.mrb[0].mxu0
  %v8296 = vadd.f32 0.0, %v8295
  %v8297 = vpop.f32.mrb[0].mxu0
  %8298 = vmatprep.mubr.f32.mxu0 0.0
  %8299 = vmatmul.mubr.f32.gmra.mrb[0].mxu0 %v8157
  %v8300 = vpop.f32.mrb[0].mxu0
  %v8301 = vadd.f32 0.0, %v8300
  %v8302 = vpop.f32.mrb[0].mxu0
  %8303 = vdwg.mxu0
  %v8304 = vadd.f32 %v8077, %v8226
  %v8305 = vadd.f32 %v8078, %v8231
  %v8306 = vadd.f32 %v8079, %v8236
  %v8307 = vadd.f32 %v8080, %v8241
  %v8308 = vadd.f32 %v8081, %v8246
  %v8309 = vadd.f32 %v8082, %v8251
  %v8310 = vadd.f32 %v8083, %v8256
  %v8311 = vadd.f32 %v8084, %v8261
  %v8312 = vadd.f32 %v8085, %v8266
  %v8313 = vadd.f32 %v8086, %v8271
  %v8314 = vadd.f32 %v8087, %v8276
  %v8315 = vadd.f32 %v8088, %v8281
  %v8316 = vadd.f32 %v8089, %v8286
  %v8317 = vadd.f32 %v8090, %v8291
  %v8318 = vadd.f32 %v8091, %v8296
  %v8319 = vadd.f32 %v8092, %v8301
  %s8320 = scalar_lea.vmem [#allocation5], 32
  %v8321 = vld [vmem:[%s8320] sm:$0xff]
  %v8322 = vld [vmem:[%s8320 + $0x10] sm:$0xff]
  %v8323 = vld [vmem:[%s8320 + $0x20] sm:$0xff]
  %v8324 = vld [vmem:[%s8320 + $0x30] sm:$0xff]
  %v8325 = vld [vmem:[%s8320 + $0x40] sm:$0xff]
  %v8326 = vld [vmem:[%s8320 + $0x50] sm:$0xff]
  %v8327 = vld [vmem:[%s8320 + $0x60] sm:$0xff]
  %v8328 = vld [vmem:[%s8320 + $0x70] sm:$0xff]
  %v8329 = vld [vmem:[%s8320 + $0xa0] sm:$0xff]
  %v8330 = vld [vmem:[%s8320 + $0xb0] sm:$0xff]
  %v8331 = vld [vmem:[%s8320 + $0xc0] sm:$0xff]
  %v8332 = vld [vmem:[%s8320 + $0xd0] sm:$0xff]
  %v8333 = vld [vmem:[%s8320 + $0xe0] sm:$0xff]
  %v8334 = vld [vmem:[%s8320 + $0xf0] sm:$0xff]
  %v8335 = vld [vmem:[%s8320 + $0x100] sm:$0xff]
  %v8336 = vld [vmem:[%s8320 + $0x110] sm:$0xff]
  %s8337 = scalar_lea.vmem %s3, 48
  %v8338 = vld [vmem:[%s8337] sm:$0xff]
  %v8340 = vsel %vm20, %v8321, 0
  %v8343 = vsel %vm20, %v8322, 0
  %v8346 = vsel %vm20, %v8323, 0
  %v8349 = vsel %vm20, %v8324, 0
  %v8352 = vsel %vm20, %v8325, 0
  %v8355 = vsel %vm20, %v8326, 0
  %v8358 = vsel %vm20, %v8327, 0
  %v8361 = vsel %vm20, %v8328, 0
  %v8364 = vsel %vm20, %v8329, 0
  %v8367 = vsel %vm20, %v8330, 0
  %v8370 = vsel %vm20, %v8331, 0
  %v8373 = vsel %vm20, %v8332, 0
  %v8376 = vsel %vm20, %v8333, 0
  %v8379 = vsel %vm20, %v8334, 0
  %v8382 = vsel %vm20, %v8335, 0
  %v8385 = vsel %vm20, %v8336, 0
  %8387 = vmatprep.subr.mxu0 0.0
  %8388 = vmatpush1.msra.mxu0 %v8338
  %8389 = vmatprep.subr.mxu0 0.0
  %8390 = vmatpush1.msra.mxu0 0.0
  %8391 = vmatprep.subr.mxu0 0.0
  %8392 = vmatpush1.msra.mxu0 0.0
  %8393 = vmatprep.subr.mxu0 0.0
  %8394 = vmatpush1.msra.mxu0 0.0
  %8395 = vmatprep.subr.mxu0 0.0
  %8396 = vmatpush1.msra.mxu0 0.0
  %8397 = vmatprep.subr.mxu0 0.0
  %8398 = vmatpush1.msra.mxu0 0.0
  %8399 = vmatprep.subr.mxu0 0.0
  %8400 = vmatpush1.msra.mxu0 0.0
  %8401 = vmatprep.subr.mxu0 0.0
  %8402 = vmatpush1.msra.mxu0 0.0
  %8403 = vmatprep.subr.mxu0 0.0
  %8404 = vmatpush1.msra.mxu0 0.0
  %8405 = vmatprep.subr.mxu0 0.0
  %8406 = vmatpush1.msra.mxu0 0.0
  %8407 = vmatprep.subr.mxu0 0.0
  %8408 = vmatpush1.msra.mxu0 0.0
  %8409 = vmatprep.subr.mxu0 0.0
  %8410 = vmatpush1.msra.mxu0 0.0
  %8411 = vmatprep.subr.mxu0 0.0
  %8412 = vmatpush1.msra.mxu0 0.0
  %8413 = vmatprep.subr.mxu0 0.0
  %8414 = vmatpush1.msra.mxu0 0.0
  %8415 = vmatprep.subr.mxu0 0.0
  %8416 = vmatpush1.msra.mxu0 0.0
  %8417 = vmatprep.subr.mxu0 0.0
  %8418 = vmatpush1.msra.mxu0 0.0
  %8419 = vmatprep.subr.mxu0 0.0
  %8420 = vmatpush1.msra.mxu0 0.0
  %8421 = vmatprep.subr.mxu0 0.0
  %8422 = vmatpush1.msra.mxu0 0.0
  %8423 = vmatprep.subr.mxu0 0.0
  %8424 = vmatpush1.msra.mxu0 0.0
  %8425 = vmatprep.subr.mxu0 0.0
  %8426 = vmatpush1.msra.mxu0 0.0
  %8427 = vmatprep.subr.mxu0 0.0
  %8428 = vmatpush1.msra.mxu0 0.0
  %8429 = vmatprep.subr.mxu0 0.0
  %8430 = vmatpush1.msra.mxu0 0.0
  %8431 = vmatprep.subr.mxu0 0.0
  %8432 = vmatpush1.msra.mxu0 0.0
  %8433 = vmatprep.subr.mxu0 0.0
  %8434 = vmatpush1.msra.mxu0 0.0
  %8435 = vmatprep.subr.mxu0 0.0
  %8436 = vmatpush1.msra.mxu0 0.0
  %8437 = vmatprep.subr.mxu0 0.0
  %8438 = vmatpush1.msra.mxu0 0.0
  %8439 = vmatprep.subr.mxu0 0.0
  %8440 = vmatpush1.msra.mxu0 0.0
  %8441 = vmatprep.subr.mxu0 0.0
  %8442 = vmatpush1.msra.mxu0 0.0
  %8443 = vmatprep.subr.mxu0 0.0
  %8444 = vmatpush1.msra.mxu0 0.0
  %8445 = vmatprep.subr.mxu0 0.0
  %8446 = vmatpush1.msra.mxu0 0.0
  %8447 = vmatprep.subr.mxu0 0.0
  %8448 = vmatpush1.msra.mxu0 0.0
  %8449 = vmatprep.subr.mxu0 0.0
  %8450 = vmatpush1.msra.mxu0 0.0
  %8451 = vmatprep.mubr.f32.mxu0 0.0
  %8452 = vmatmul.mubr.f32.gmra.mrb[0].mxu0 %v8340
  %v8453 = vpop.f32.mrb[0].mxu0
  %v8454 = vadd.f32 0.0, %v8453
  %v8455 = vpop.f32.mrb[0].mxu0
  %8456 = vmatprep.mubr.f32.mxu0 0.0
  %8457 = vmatmul.mubr.f32.gmra.mrb[0].mxu0 %v8343
  %v8458 = vpop.f32.mrb[0].mxu0
  %v8459 = vadd.f32 0.0, %v8458
  %v8460 = vpop.f32.mrb[0].mxu0
  %8461 = vmatprep.mubr.f32.mxu0 0.0
  %8462 = vmatmul.mubr.f32.gmra.mrb[0].mxu0 %v8346
  %v8463 = vpop.f32.mrb[0].mxu0
  %v8464 = vadd.f32 0.0, %v8463
  %v8465 = vpop.f32.mrb[0].mxu0
  %8466 = vmatprep.mubr.f32.mxu0 0.0
  %8467 = vmatmul.mubr.f32.gmra.mrb[0].mxu0 %v8349
  %v8468 = vpop.f32.mrb[0].mxu0
  %v8469 = vadd.f32 0.0, %v8468
  %v8470 = vpop.f32.mrb[0].mxu0
  %8471 = vmatprep.mubr.f32.mxu0 0.0
  %8472 = vmatmul.mubr.f32.gmra.mrb[0].mxu0 %v8352
  %v8473 = vpop.f32.mrb[0].mxu0
  %v8474 = vadd.f32 0.0, %v8473
  %v8475 = vpop.f32.mrb[0].mxu0
  %8476 = vmatprep.mubr.f32.mxu0 0.0
  %8477 = vmatmul.mubr.f32.gmra.mrb[0].mxu0 %v8355
  %v8478 = vpop.f32.mrb[0].mxu0
  %v8479 = vadd.f32 0.0, %v8478
  %v8480 = vpop.f32.mrb[0].mxu0
  %8481 = vmatprep.mubr.f32.mxu0 0.0
  %8482 = vmatmul.mubr.f32.gmra.mrb[0].mxu0 %v8358
  %v8483 = vpop.f32.mrb[0].mxu0
  %v8484 = vadd.f32 0.0, %v8483
  %v8485 = vpop.f32.mrb[0].mxu0
  %8486 = vmatprep.mubr.f32.mxu0 0.0
  %8487 = vmatmul.mubr.f32.gmra.mrb[0].mxu0 %v8361
  %v8488 = vpop.f32.mrb[0].mxu0
  %v8489 = vadd.f32 0.0, %v8488
  %v8490 = vpop.f32.mrb[0].mxu0
  %8491 = vmatprep.mubr.f32.mxu0 0.0
  %8492 = vmatmul.mubr.f32.gmra.mrb[0].mxu0 %v8364
  %v8493 = vpop.f32.mrb[0].mxu0
  %v8494 = vadd.f32 0.0, %v8493
  %v8495 = vpop.f32.mrb[0].mxu0
  %8496 = vmatprep.mubr.f32.mxu0 0.0
  %8497 = vmatmul.mubr.f32.gmra.mrb[0].mxu0 %v8367
  %v8498 = vpop.f32.mrb[0].mxu0
  %v8499 = vadd.f32 0.0, %v8498
  %v8500 = vpop.f32.mrb[0].mxu0
  %8501 = vmatprep.mubr.f32.mxu0 0.0
  %8502 = vmatmul.mubr.f32.gmra.mrb[0].mxu0 %v8370
  %v8503 = vpop.f32.mrb[0].mxu0
  %v8504 = vadd.f32 0.0, %v8503
  %v8505 = vpop.f32.mrb[0].mxu0
  %8506 = vmatprep.mubr.f32.mxu0 0.0
  %8507 = vmatmul.mubr.f32.gmra.mrb[0].mxu0 %v8373
  %v8508 = vpop.f32.mrb[0].mxu0
  %v8509 = vadd.f32 0.0, %v8508
  %v8510 = vpop.f32.mrb[0].mxu0
  %8511 = vmatprep.mubr.f32.mxu0 0.0
  %8512 = vmatmul.mubr.f32.gmra.mrb[0].mxu0 %v8376
  %v8513 = vpop.f32.mrb[0].mxu0
  %v8514 = vadd.f32 0.0, %v8513
  %v8515 = vpop.f32.mrb[0].mxu0
  %8516 = vmatprep.mubr.f32.mxu0 0.0
  %8517 = vmatmul.mubr.f32.gmra.mrb[0].mxu0 %v8379
  %v8518 = vpop.f32.mrb[0].mxu0
  %v8519 = vadd.f32 0.0, %v8518
  %v8520 = vpop.f32.mrb[0].mxu0
  %8521 = vmatprep.mubr.f32.mxu0 0.0
  %8522 = vmatmul.mubr.f32.gmra.mrb[0].mxu0 %v8382
  %v8523 = vpop.f32.mrb[0].mxu0
  %v8524 = vadd.f32 0.0, %v8523
  %v8525 = vpop.f32.mrb[0].mxu0
  %8526 = vmatprep.mubr.f32.mxu0 0.0
  %8527 = vmatmul.mubr.f32.gmra.mrb[0].mxu0 %v8385
  %v8528 = vpop.f32.mrb[0].mxu0
  %v8529 = vadd.f32 0.0, %v8528
  %v8530 = vpop.f32.mrb[0].mxu0
  %8531 = vdwg.mxu0
  %v8532 = vadd.f32 %v8304, %v8454
  %v8533 = vadd.f32 %v8305, %v8459
  %v8534 = vadd.f32 %v8306, %v8464
  %v8535 = vadd.f32 %v8307, %v8469
  %v8536 = vadd.f32 %v8308, %v8474
  %v8537 = vadd.f32 %v8309, %v8479
  %v8538 = vadd.f32 %v8310, %v8484
  %v8539 = vadd.f32 %v8311, %v8489
  %v8540 = vadd.f32 %v8312, %v8494
  %v8541 = vadd.f32 %v8313, %v8499
  %v8542 = vadd.f32 %v8314, %v8504
  %v8543 = vadd.f32 %v8315, %v8509
  %v8544 = vadd.f32 %v8316, %v8514
  %v8545 = vadd.f32 %v8317, %v8519
  %v8546 = vadd.f32 %v8318, %v8524
  %v8547 = vadd.f32 %v8319, %v8529
  %v8548 = vld [vmem:[%s8320 + $0x1] sm:$0xff]
  %v8549 = vld [vmem:[%s8320 + $0x11] sm:$0xff]
  %v8550 = vld [vmem:[%s8320 + $0x21] sm:$0xff]
  %v8551 = vld [vmem:[%s8320 + $0x31] sm:$0xff]
  %v8552 = vld [vmem:[%s8320 + $0x41] sm:$0xff]
  %v8553 = vld [vmem:[%s8320 + $0x51] sm:$0xff]
  %v8554 = vld [vmem:[%s8320 + $0x61] sm:$0xff]
  %v8555 = vld [vmem:[%s8320 + $0x71] sm:$0xff]
  %v8556 = vld [vmem:[%s8320 + $0xa1] sm:$0xff]
  %v8557 = vld [vmem:[%s8320 + $0xb1] sm:$0xff]
  %v8558 = vld [vmem:[%s8320 + $0xc1] sm:$0xff]
  %v8559 = vld [vmem:[%s8320 + $0xd1] sm:$0xff]
  %v8560 = vld [vmem:[%s8320 + $0xe1] sm:$0xff]
  %v8561 = vld [vmem:[%s8320 + $0xf1] sm:$0xff]
  %v8562 = vld [vmem:[%s8320 + $0x101] sm:$0xff]
  %v8563 = vld [vmem:[%s8320 + $0x111] sm:$0xff]
  %s8564 = scalar_lea.vmem %s3, 56
  %v8565 = vld [vmem:[%s8564] sm:$0xff]
  %v8567 = vsel %vm20, %v8548, 0
  %v8570 = vsel %vm20, %v8549, 0
  %v8573 = vsel %vm20, %v8550, 0
  %v8576 = vsel %vm20, %v8551, 0
  %v8579 = vsel %vm20, %v8552, 0
  %v8582 = vsel %vm20, %v8553, 0
  %v8585 = vsel %vm20, %v8554, 0
  %v8588 = vsel %vm20, %v8555, 0
  %v8591 = vsel %vm20, %v8556, 0
  %v8594 = vsel %vm20, %v8557, 0
  %v8597 = vsel %vm20, %v8558, 0
  %v8600 = vsel %vm20, %v8559, 0
  %v8603 = vsel %vm20, %v8560, 0
  %v8606 = vsel %vm20, %v8561, 0
  %v8609 = vsel %vm20, %v8562, 0
  %v8612 = vsel %vm20, %v8563, 0
  %8614 = vmatprep.subr.mxu0 0.0
  %8615 = vmatpush1.msra.mxu0 %v8565
  %8616 = vmatprep.subr.mxu0 0.0
  %8617 = vmatpush1.msra.mxu0 0.0
  %8618 = vmatprep.subr.mxu0 0.0
  %8619 = vmatpush1.msra.mxu0 0.0
  %8620 = vmatprep.subr.mxu0 0.0
  %8621 = vmatpush1.msra.mxu0 0.0
  %8622 = vmatprep.subr.mxu0 0.0
  %8623 = vmatpush1.msra.mxu0 0.0
  %8624 = vmatprep.subr.mxu0 0.0
  %8625 = vmatpush1.msra.mxu0 0.0
  %8626 = vmatprep.subr.mxu0 0.0
  %8627 = vmatpush1.msra.mxu0 0.0
  %8628 = vmatprep.subr.mxu0 0.0
  %8629 = vmatpush1.msra.mxu0 0.0
  %8630 = vmatprep.subr.mxu0 0.0
  %8631 = vmatpush1.msra.mxu0 0.0
  %8632 = vmatprep.subr.mxu0 0.0
  %8633 = vmatpush1.msra.mxu0 0.0
  %8634 = vmatprep.subr.mxu0 0.0
  %8635 = vmatpush1.msra.mxu0 0.0
  %8636 = vmatprep.subr.mxu0 0.0
  %8637 = vmatpush1.msra.mxu0 0.0
  %8638 = vmatprep.subr.mxu0 0.0
  %8639 = vmatpush1.msra.mxu0 0.0
  %8640 = vmatprep.subr.mxu0 0.0
  %8641 = vmatpush1.msra.mxu0 0.0
  %8642 = vmatprep.subr.mxu0 0.0
  %8643 = vmatpush1.msra.mxu0 0.0
  %8644 = vmatprep.subr.mxu0 0.0
  %8645 = vmatpush1.msra.mxu0 0.0
  %8646 = vmatprep.subr.mxu0 0.0
  %8647 = vmatpush1.msra.mxu0 0.0
  %8648 = vmatprep.subr.mxu0 0.0
  %8649 = vmatpush1.msra.mxu0 0.0
  %8650 = vmatprep.subr.mxu0 0.0
  %8651 = vmatpush1.msra.mxu0 0.0
  %8652 = vmatprep.subr.mxu0 0.0
  %8653 = vmatpush1.msra.mxu0 0.0
  %8654 = vmatprep.subr.mxu0 0.0
  %8655 = vmatpush1.msra.mxu0 0.0
  %8656 = vmatprep.subr.mxu0 0.0
  %8657 = vmatpush1.msra.mxu0 0.0
  %8658 = vmatprep.subr.mxu0 0.0
  %8659 = vmatpush1.msra.mxu0 0.0
  %8660 = vmatprep.subr.mxu0 0.0
  %8661 = vmatpush1.msra.mxu0 0.0
  %8662 = vmatprep.subr.mxu0 0.0
  %8663 = vmatpush1.msra.mxu0 0.0
  %8664 = vmatprep.subr.mxu0 0.0
  %8665 = vmatpush1.msra.mxu0 0.0
  %8666 = vmatprep.subr.mxu0 0.0
  %8667 = vmatpush1.msra.mxu0 0.0
  %8668 = vmatprep.subr.mxu0 0.0
  %8669 = vmatpush1.msra.mxu0 0.0
  %8670 = vmatprep.subr.mxu0 0.0
  %8671 = vmatpush1.msra.mxu0 0.0
  %8672 = vmatprep.subr.mxu0 0.0
  %8673 = vmatpush1.msra.mxu0 0.0
  %8674 = vmatprep.subr.mxu0 0.0
  %8675 = vmatpush1.msra.mxu0 0.0
  %8676 = vmatprep.subr.mxu0 0.0
  %8677 = vmatpush1.msra.mxu0 0.0
  %8678 = vmatprep.mubr.f32.mxu0 0.0
  %8679 = vmatmul.mubr.f32.gmra.mrb[0].mxu0 %v8567
  %v8680 = vpop.f32.mrb[0].mxu0
  %v8681 = vadd.f32 0.0, %v8680
  %v8682 = vpop.f32.mrb[0].mxu0
  %8683 = vmatprep.mubr.f32.mxu0 0.0
  %8684 = vmatmul.mubr.f32.gmra.mrb[0].mxu0 %v8570
  %v8685 = vpop.f32.mrb[0].mxu0
  %v8686 = vadd.f32 0.0, %v8685
  %v8687 = vpop.f32.mrb[0].mxu0
  %8688 = vmatprep.mubr.f32.mxu0 0.0
  %8689 = vmatmul.mubr.f32.gmra.mrb[0].mxu0 %v8573
  %v8690 = vpop.f32.mrb[0].mxu0
  %v8691 = vadd.f32 0.0, %v8690
  %v8692 = vpop.f32.mrb[0].mxu0
  %8693 = vmatprep.mubr.f32.mxu0 0.0
  %8694 = vmatmul.mubr.f32.gmra.mrb[0].mxu0 %v8576
  %v8695 = vpop.f32.mrb[0].mxu0
  %v8696 = vadd.f32 0.0, %v8695
  %v8697 = vpop.f32.mrb[0].mxu0
  %8698 = vmatprep.mubr.f32.mxu0 0.0
  %8699 = vmatmul.mubr.f32.gmra.mrb[0].mxu0 %v8579
  %v8700 = vpop.f32.mrb[0].mxu0
  %v8701 = vadd.f32 0.0, %v8700
  %v8702 = vpop.f32.mrb[0].mxu0
  %8703 = vmatprep.mubr.f32.mxu0 0.0
  %8704 = vmatmul.mubr.f32.gmra.mrb[0].mxu0 %v8582
  %v8705 = vpop.f32.mrb[0].mxu0
  %v8706 = vadd.f32 0.0, %v8705
  %v8707 = vpop.f32.mrb[0].mxu0
  %8708 = vmatprep.mubr.f32.mxu0 0.0
  %8709 = vmatmul.mubr.f32.gmra.mrb[0].mxu0 %v8585
  %v8710 = vpop.f32.mrb[0].mxu0
  %v8711 = vadd.f32 0.0, %v8710
  %v8712 = vpop.f32.mrb[0].mxu0
  %8713 = vmatprep.mubr.f32.mxu0 0.0
  %8714 = vmatmul.mubr.f32.gmra.mrb[0].mxu0 %v8588
  %v8715 = vpop.f32.mrb[0].mxu0
  %v8716 = vadd.f32 0.0, %v8715
  %v8717 = vpop.f32.mrb[0].mxu0
  %8718 = vmatprep.mubr.f32.mxu0 0.0
  %8719 = vmatmul.mubr.f32.gmra.mrb[0].mxu0 %v8591
  %v8720 = vpop.f32.mrb[0].mxu0
  %v8721 = vadd.f32 0.0, %v8720
  %v8722 = vpop.f32.mrb[0].mxu0
  %8723 = vmatprep.mubr.f32.mxu0 0.0
  %8724 = vmatmul.mubr.f32.gmra.mrb[0].mxu0 %v8594
  %v8725 = vpop.f32.mrb[0].mxu0
  %v8726 = vadd.f32 0.0, %v8725
  %v8727 = vpop.f32.mrb[0].mxu0
  %8728 = vmatprep.mubr.f32.mxu0 0.0
  %8729 = vmatmul.mubr.f32.gmra.mrb[0].mxu0 %v8597
  %v8730 = vpop.f32.mrb[0].mxu0
  %v8731 = vadd.f32 0.0, %v8730
  %v8732 = vpop.f32.mrb[0].mxu0
  %8733 = vmatprep.mubr.f32.mxu0 0.0
  %8734 = vmatmul.mubr.f32.gmra.mrb[0].mxu0 %v8600
  %v8735 = vpop.f32.mrb[0].mxu0
  %v8736 = vadd.f32 0.0, %v8735
  %v8737 = vpop.f32.mrb[0].mxu0
  %8738 = vmatprep.mubr.f32.mxu0 0.0
  %8739 = vmatmul.mubr.f32.gmra.mrb[0].mxu0 %v8603
  %v8740 = vpop.f32.mrb[0].mxu0
  %v8741 = vadd.f32 0.0, %v8740
  %v8742 = vpop.f32.mrb[0].mxu0
  %8743 = vmatprep.mubr.f32.mxu0 0.0
  %8744 = vmatmul.mubr.f32.gmra.mrb[0].mxu0 %v8606
  %v8745 = vpop.f32.mrb[0].mxu0
  %v8746 = vadd.f32 0.0, %v8745
  %v8747 = vpop.f32.mrb[0].mxu0
  %8748 = vmatprep.mubr.f32.mxu0 0.0
  %8749 = vmatmul.mubr.f32.gmra.mrb[0].mxu0 %v8609
  %v8750 = vpop.f32.mrb[0].mxu0
  %v8751 = vadd.f32 0.0, %v8750
  %v8752 = vpop.f32.mrb[0].mxu0
  %8753 = vmatprep.mubr.f32.mxu0 0.0
  %8754 = vmatmul.mubr.f32.gmra.mrb[0].mxu0 %v8612
  %v8755 = vpop.f32.mrb[0].mxu0
  %v8756 = vadd.f32 0.0, %v8755
  %v8757 = vpop.f32.mrb[0].mxu0
  %8758 = vdwg.mxu0
  %v8759 = vadd.f32 %v8532, %v8681
  %v8760 = vadd.f32 %v8533, %v8686
  %v8761 = vadd.f32 %v8534, %v8691
  %v8762 = vadd.f32 %v8535, %v8696
  %v8763 = vadd.f32 %v8536, %v8701
  %v8764 = vadd.f32 %v8537, %v8706
  %v8765 = vadd.f32 %v8538, %v8711
  %v8766 = vadd.f32 %v8539, %v8716
  %v8767 = vadd.f32 %v8540, %v8721
  %v8768 = vadd.f32 %v8541, %v8726
  %v8769 = vadd.f32 %v8542, %v8731
  %v8770 = vadd.f32 %v8543, %v8736
  %v8771 = vadd.f32 %v8544, %v8741
  %v8772 = vadd.f32 %v8545, %v8746
  %v8773 = vadd.f32 %v8546, %v8751
  %v8774 = vadd.f32 %v8547, %v8756
  %v8775 = vld [vmem:[%s8320 + $0x2] sm:$0xff]
  %v8776 = vld [vmem:[%s8320 + $0x12] sm:$0xff]
  %v8777 = vld [vmem:[%s8320 + $0x22] sm:$0xff]
  %v8778 = vld [vmem:[%s8320 + $0x32] sm:$0xff]
  %v8779 = vld [vmem:[%s8320 + $0x42] sm:$0xff]
  %v8780 = vld [vmem:[%s8320 + $0x52] sm:$0xff]
  %v8781 = vld [vmem:[%s8320 + $0x62] sm:$0xff]
  %v8782 = vld [vmem:[%s8320 + $0x72] sm:$0xff]
  %v8783 = vld [vmem:[%s8320 + $0xa2] sm:$0xff]
  %v8784 = vld [vmem:[%s8320 + $0xb2] sm:$0xff]
  %v8785 = vld [vmem:[%s8320 + $0xc2] sm:$0xff]
  %v8786 = vld [vmem:[%s8320 + $0xd2] sm:$0xff]
  %v8787 = vld [vmem:[%s8320 + $0xe2] sm:$0xff]
  %v8788 = vld [vmem:[%s8320 + $0xf2] sm:$0xff]
  %v8789 = vld [vmem:[%s8320 + $0x102] sm:$0xff]
  %v8790 = vld [vmem:[%s8320 + $0x112] sm:$0xff]
  %s8791 = scalar_lea.vmem %s3, 64
  %v8792 = vld [vmem:[%s8791] sm:$0xff]
  %v8794 = vsel %vm20, %v8775, 0
  %v8797 = vsel %vm20, %v8776, 0
  %v8800 = vsel %vm20, %v8777, 0
  %v8803 = vsel %vm20, %v8778, 0
  %v8806 = vsel %vm20, %v8779, 0
  %v8809 = vsel %vm20, %v8780, 0
  %v8812 = vsel %vm20, %v8781, 0
  %v8815 = vsel %vm20, %v8782, 0
  %v8818 = vsel %vm20, %v8783, 0
  %v8821 = vsel %vm20, %v8784, 0
  %v8824 = vsel %vm20, %v8785, 0
  %v8827 = vsel %vm20, %v8786, 0
  %v8830 = vsel %vm20, %v8787, 0
  %v8833 = vsel %vm20, %v8788, 0
  %v8836 = vsel %vm20, %v8789, 0
  %v8839 = vsel %vm20, %v8790, 0
  %8841 = vmatprep.subr.mxu0 0.0
  %8842 = vmatpush1.msra.mxu0 %v8792
  %8843 = vmatprep.subr.mxu0 0.0
  %8844 = vmatpush1.msra.mxu0 0.0
  %8845 = vmatprep.subr.mxu0 0.0
  %8846 = vmatpush1.msra.mxu0 0.0
  %8847 = vmatprep.subr.mxu0 0.0
  %8848 = vmatpush1.msra.mxu0 0.0
  %8849 = vmatprep.subr.mxu0 0.0
  %8850 = vmatpush1.msra.mxu0 0.0
  %8851 = vmatprep.subr.mxu0 0.0
  %8852 = vmatpush1.msra.mxu0 0.0
  %8853 = vmatprep.subr.mxu0 0.0
  %8854 = vmatpush1.msra.mxu0 0.0
  %8855 = vmatprep.subr.mxu0 0.0
  %8856 = vmatpush1.msra.mxu0 0.0
  %8857 = vmatprep.subr.mxu0 0.0
  %8858 = vmatpush1.msra.mxu0 0.0
  %8859 = vmatprep.subr.mxu0 0.0
  %8860 = vmatpush1.msra.mxu0 0.0
  %8861 = vmatprep.subr.mxu0 0.0
  %8862 = vmatpush1.msra.mxu0 0.0
  %8863 = vmatprep.subr.mxu0 0.0
  %8864 = vmatpush1.msra.mxu0 0.0
  %8865 = vmatprep.subr.mxu0 0.0
  %8866 = vmatpush1.msra.mxu0 0.0
  %8867 = vmatprep.subr.mxu0 0.0
  %8868 = vmatpush1.msra.mxu0 0.0
  %8869 = vmatprep.subr.mxu0 0.0
  %8870 = vmatpush1.msra.mxu0 0.0
  %8871 = vmatprep.subr.mxu0 0.0
  %8872 = vmatpush1.msra.mxu0 0.0
  %8873 = vmatprep.subr.mxu0 0.0
  %8874 = vmatpush1.msra.mxu0 0.0
  %8875 = vmatprep.subr.mxu0 0.0
  %8876 = vmatpush1.msra.mxu0 0.0
  %8877 = vmatprep.subr.mxu0 0.0
  %8878 = vmatpush1.msra.mxu0 0.0
  %8879 = vmatprep.subr.mxu0 0.0
  %8880 = vmatpush1.msra.mxu0 0.0
  %8881 = vmatprep.subr.mxu0 0.0
  %8882 = vmatpush1.msra.mxu0 0.0
  %8883 = vmatprep.subr.mxu0 0.0
  %8884 = vmatpush1.msra.mxu0 0.0
  %8885 = vmatprep.subr.mxu0 0.0
  %8886 = vmatpush1.msra.mxu0 0.0
  %8887 = vmatprep.subr.mxu0 0.0
  %8888 = vmatpush1.msra.mxu0 0.0
  %8889 = vmatprep.subr.mxu0 0.0
  %8890 = vmatpush1.msra.mxu0 0.0
  %8891 = vmatprep.subr.mxu0 0.0
  %8892 = vmatpush1.msra.mxu0 0.0
  %8893 = vmatprep.subr.mxu0 0.0
  %8894 = vmatpush1.msra.mxu0 0.0
  %8895 = vmatprep.subr.mxu0 0.0
  %8896 = vmatpush1.msra.mxu0 0.0
  %8897 = vmatprep.subr.mxu0 0.0
  %8898 = vmatpush1.msra.mxu0 0.0
  %8899 = vmatprep.subr.mxu0 0.0
  %8900 = vmatpush1.msra.mxu0 0.0
  %8901 = vmatprep.subr.mxu0 0.0
  %8902 = vmatpush1.msra.mxu0 0.0
  %8903 = vmatprep.subr.mxu0 0.0
  %8904 = vmatpush1.msra.mxu0 0.0
  %8905 = vmatprep.mubr.f32.mxu0 0.0
  %8906 = vmatmul.mubr.f32.gmra.mrb[0].mxu0 %v8794
  %v8907 = vpop.f32.mrb[0].mxu0
  %v8908 = vadd.f32 0.0, %v8907
  %v8909 = vpop.f32.mrb[0].mxu0
  %8910 = vmatprep.mubr.f32.mxu0 0.0
  %8911 = vmatmul.mubr.f32.gmra.mrb[0].mxu0 %v8797
  %v8912 = vpop.f32.mrb[0].mxu0
  %v8913 = vadd.f32 0.0, %v8912
  %v8914 = vpop.f32.mrb[0].mxu0
  %8915 = vmatprep.mubr.f32.mxu0 0.0
  %8916 = vmatmul.mubr.f32.gmra.mrb[0].mxu0 %v8800
  %v8917 = vpop.f32.mrb[0].mxu0
  %v8918 = vadd.f32 0.0, %v8917
  %v8919 = vpop.f32.mrb[0].mxu0
  %8920 = vmatprep.mubr.f32.mxu0 0.0
  %8921 = vmatmul.mubr.f32.gmra.mrb[0].mxu0 %v8803
  %v8922 = vpop.f32.mrb[0].mxu0
  %v8923 = vadd.f32 0.0, %v8922
  %v8924 = vpop.f32.mrb[0].mxu0
  %8925 = vmatprep.mubr.f32.mxu0 0.0
  %8926 = vmatmul.mubr.f32.gmra.mrb[0].mxu0 %v8806
  %v8927 = vpop.f32.mrb[0].mxu0
  %v8928 = vadd.f32 0.0, %v8927
  %v8929 = vpop.f32.mrb[0].mxu0
  %8930 = vmatprep.mubr.f32.mxu0 0.0
  %8931 = vmatmul.mubr.f32.gmra.mrb[0].mxu0 %v8809
  %v8932 = vpop.f32.mrb[0].mxu0
  %v8933 = vadd.f32 0.0, %v8932
  %v8934 = vpop.f32.mrb[0].mxu0
  %8935 = vmatprep.mubr.f32.mxu0 0.0
  %8936 = vmatmul.mubr.f32.gmra.mrb[0].mxu0 %v8812
  %v8937 = vpop.f32.mrb[0].mxu0
  %v8938 = vadd.f32 0.0, %v8937
  %v8939 = vpop.f32.mrb[0].mxu0
  %8940 = vmatprep.mubr.f32.mxu0 0.0
  %8941 = vmatmul.mubr.f32.gmra.mrb[0].mxu0 %v8815
  %v8942 = vpop.f32.mrb[0].mxu0
  %v8943 = vadd.f32 0.0, %v8942
  %v8944 = vpop.f32.mrb[0].mxu0
  %8945 = vmatprep.mubr.f32.mxu0 0.0
  %8946 = vmatmul.mubr.f32.gmra.mrb[0].mxu0 %v8818
  %v8947 = vpop.f32.mrb[0].mxu0
  %v8948 = vadd.f32 0.0, %v8947
  %v8949 = vpop.f32.mrb[0].mxu0
  %8950 = vmatprep.mubr.f32.mxu0 0.0
  %8951 = vmatmul.mubr.f32.gmra.mrb[0].mxu0 %v8821
  %v8952 = vpop.f32.mrb[0].mxu0
  %v8953 = vadd.f32 0.0, %v8952
  %v8954 = vpop.f32.mrb[0].mxu0
  %8955 = vmatprep.mubr.f32.mxu0 0.0
  %8956 = vmatmul.mubr.f32.gmra.mrb[0].mxu0 %v8824
  %v8957 = vpop.f32.mrb[0].mxu0
  %v8958 = vadd.f32 0.0, %v8957
  %v8959 = vpop.f32.mrb[0].mxu0
  %8960 = vmatprep.mubr.f32.mxu0 0.0
  %8961 = vmatmul.mubr.f32.gmra.mrb[0].mxu0 %v8827
  %v8962 = vpop.f32.mrb[0].mxu0
  %v8963 = vadd.f32 0.0, %v8962
  %v8964 = vpop.f32.mrb[0].mxu0
  %8965 = vmatprep.mubr.f32.mxu0 0.0
  %8966 = vmatmul.mubr.f32.gmra.mrb[0].mxu0 %v8830
  %v8967 = vpop.f32.mrb[0].mxu0
  %v8968 = vadd.f32 0.0, %v8967
  %v8969 = vpop.f32.mrb[0].mxu0
  %8970 = vmatprep.mubr.f32.mxu0 0.0
  %8971 = vmatmul.mubr.f32.gmra.mrb[0].mxu0 %v8833
  %v8972 = vpop.f32.mrb[0].mxu0
  %v8973 = vadd.f32 0.0, %v8972
  %v8974 = vpop.f32.mrb[0].mxu0
  %8975 = vmatprep.mubr.f32.mxu0 0.0
  %8976 = vmatmul.mubr.f32.gmra.mrb[0].mxu0 %v8836
  %v8977 = vpop.f32.mrb[0].mxu0
  %v8978 = vadd.f32 0.0, %v8977
  %v8979 = vpop.f32.mrb[0].mxu0
  %8980 = vmatprep.mubr.f32.mxu0 0.0
  %8981 = vmatmul.mubr.f32.gmra.mrb[0].mxu0 %v8839
  %v8982 = vpop.f32.mrb[0].mxu0
  %v8983 = vadd.f32 0.0, %v8982
  %v8984 = vpop.f32.mrb[0].mxu0
  %8985 = vdwg.mxu0
  %v8986 = vadd.f32 %v8759, %v8908
  %v8987 = vadd.f32 %v8760, %v8913
  %v8988 = vadd.f32 %v8761, %v8918
  %v8989 = vadd.f32 %v8762, %v8923
  %v8990 = vadd.f32 %v8763, %v8928
  %v8991 = vadd.f32 %v8764, %v8933
  %v8992 = vadd.f32 %v8765, %v8938
  %v8993 = vadd.f32 %v8766, %v8943
  %v8994 = vadd.f32 %v8767, %v8948
  %v8995 = vadd.f32 %v8768, %v8953
  %v8996 = vadd.f32 %v8769, %v8958
  %v8997 = vadd.f32 %v8770, %v8963
  %v8998 = vadd.f32 %v8771, %v8968
  %v8999 = vadd.f32 %v8772, %v8973
  %v9000 = vadd.f32 %v8773, %v8978
  %v9001 = vadd.f32 %v8774, %v8983
  %v9002 = vld [vmem:[%s4] sm:$0x1]
  %v9004 = vlaneseq
  %v9005 = vshrl.u32 %v9004, 7
  %v9006 = vsub.s32 0, %v9005
  %v9007 = vrot.slane %v9002, %v9006
  %v9009 = vadd.f32 %v8986, %v9007
  %v9010 = vadd.f32 %v8987, %v9007
  %v9011 = vadd.f32 %v8988, %v9007
  %v9012 = vadd.f32 %v8989, %v9007
  %v9013 = vadd.f32 %v8990, %v9007
  %v9014 = vadd.f32 %v8991, %v9007
  %v9015 = vadd.f32 %v8992, %v9007
  %v9016 = vadd.f32 %v8993, %v9007
  %v9017 = vadd.f32 %v8994, %v9007
  %v9018 = vadd.f32 %v8995, %v9007
  %v9019 = vadd.f32 %v8996, %v9007
  %v9020 = vadd.f32 %v8997, %v9007
  %v9021 = vadd.f32 %v8998, %v9007
  %v9022 = vadd.f32 %v8999, %v9007
  %v9023 = vadd.f32 %v9000, %v9007
  %v9024 = vadd.f32 %v9001, %v9007
  %v9025 = vsel %vm20, %v9009, -inf
  %9026 = vmax.xlane.f32.xlu0 %v9025
  %v9027 = vpop.xlane.xlu0 %9026
  %v9028 = vsel %vm20, %v9010, -inf
  %9029 = vmax.xlane.f32.xlu0 %v9028
  %v9030 = vpop.xlane.xlu0 %9029
  %v9031 = vsel %vm20, %v9011, -inf
  %9032 = vmax.xlane.f32.xlu0 %v9031
  %v9033 = vpop.xlane.xlu0 %9032
  %v9034 = vsel %vm20, %v9012, -inf
  %9035 = vmax.xlane.f32.xlu0 %v9034
  %v9036 = vpop.xlane.xlu0 %9035
  %v9037 = vsel %vm20, %v9013, -inf
  %9038 = vmax.xlane.f32.xlu0 %v9037
  %v9039 = vpop.xlane.xlu0 %9038
  %v9040 = vsel %vm20, %v9014, -inf
  %9041 = vmax.xlane.f32.xlu0 %v9040
  %v9042 = vpop.xlane.xlu0 %9041
  %v9043 = vsel %vm20, %v9015, -inf
  %9044 = vmax.xlane.f32.xlu0 %v9043
  %v9045 = vpop.xlane.xlu0 %9044
  %v9046 = vsel %vm20, %v9016, -inf
  %9047 = vmax.xlane.f32.xlu0 %v9046
  %v9048 = vpop.xlane.xlu0 %9047
  %v9049 = vsel %vm20, %v9017, -inf
  %9050 = vmax.xlane.f32.xlu0 %v9049
  %v9051 = vpop.xlane.xlu0 %9050
  %v9052 = vsel %vm20, %v9018, -inf
  %9053 = vmax.xlane.f32.xlu0 %v9052
  %v9054 = vpop.xlane.xlu0 %9053
  %v9055 = vsel %vm20, %v9019, -inf
  %9056 = vmax.xlane.f32.xlu0 %v9055
  %v9057 = vpop.xlane.xlu0 %9056
  %v9058 = vsel %vm20, %v9020, -inf
  %9059 = vmax.xlane.f32.xlu0 %v9058
  %v9060 = vpop.xlane.xlu0 %9059
  %v9061 = vsel %vm20, %v9021, -inf
  %9062 = vmax.xlane.f32.xlu0 %v9061
  %v9063 = vpop.xlane.xlu0 %9062
  %v9064 = vsel %vm20, %v9022, -inf
  %9065 = vmax.xlane.f32.xlu0 %v9064
  %v9066 = vpop.xlane.xlu0 %9065
  %v9067 = vsel %vm20, %v9023, -inf
  %9068 = vmax.xlane.f32.xlu0 %v9067
  %v9069 = vpop.xlane.xlu0 %9068
  %v9070 = vsel %vm20, %v9024, -inf
  %9071 = vmax.xlane.f32.xlu0 %v9070
  %v9072 = vpop.xlane.xlu0 %9071
  %v9073 = vsub.f32 %v9009, %v9027
  %v9074 = vsub.f32 %v9010, %v9030
  %v9075 = vsub.f32 %v9011, %v9033
  %v9076 = vsub.f32 %v9012, %v9036
  %v9077 = vsub.f32 %v9013, %v9039
  %v9078 = vsub.f32 %v9014, %v9042
  %v9079 = vsub.f32 %v9015, %v9045
  %v9080 = vsub.f32 %v9016, %v9048
  %v9081 = vsub.f32 %v9017, %v9051
  %v9082 = vsub.f32 %v9018, %v9054
  %v9083 = vsub.f32 %v9019, %v9057
  %v9084 = vsub.f32 %v9020, %v9060
  %v9085 = vsub.f32 %v9021, %v9063
  %v9086 = vsub.f32 %v9022, %v9066
  %v9087 = vsub.f32 %v9023, %v9069
  %v9088 = vsub.f32 %v9024, %v9072
  %v9089 = vmul.f32 %v9073, 1.442695
  %v9090 = vpow.pop %v9089
  %v9091 = vmul.f32 %v9074, 1.442695
  %v9092 = vpow.pop %v9091
  %v9093 = vmul.f32 %v9075, 1.442695
  %v9094 = vpow.pop %v9093
  %v9095 = vmul.f32 %v9076, 1.442695
  %v9096 = vpow.pop %v9095
  %v9097 = vmul.f32 %v9077, 1.442695
  %v9098 = vpow.pop %v9097
  %v9099 = vmul.f32 %v9078, 1.442695
  %v9100 = vpow.pop %v9099
  %v9101 = vmul.f32 %v9079, 1.442695
  %v9102 = vpow.pop %v9101
  %v9103 = vmul.f32 %v9080, 1.442695
  %v9104 = vpow.pop %v9103
  %v9105 = vmul.f32 %v9081, 1.442695
  %v9106 = vpow.pop %v9105
  %v9107 = vmul.f32 %v9082, 1.442695
  %v9108 = vpow.pop %v9107
  %v9109 = vmul.f32 %v9083, 1.442695
  %v9110 = vpow.pop %v9109
  %v9111 = vmul.f32 %v9084, 1.442695
  %v9112 = vpow.pop %v9111
  %v9113 = vmul.f32 %v9085, 1.442695
  %v9114 = vpow.pop %v9113
  %v9115 = vmul.f32 %v9086, 1.442695
  %v9116 = vpow.pop %v9115
  %v9117 = vmul.f32 %v9087, 1.442695
  %v9118 = vpow.pop %v9117
  %v9119 = vmul.f32 %v9088, 1.442695
  %v9120 = vpow.pop %v9119
  %v9121 = vsel %vm20, %v9090, 0.0
  %9122 = vadd.xlane.f32.xlu0 %v9121
  %v9123 = vpop.xlane.xlu0 %9122
  %v9124 = vsel %vm20, %v9092, 0.0
  %9125 = vadd.xlane.f32.xlu0 %v9124
  %v9126 = vpop.xlane.xlu0 %9125
  %v9127 = vsel %vm20, %v9094, 0.0
  %9128 = vadd.xlane.f32.xlu0 %v9127
  %v9129 = vpop.xlane.xlu0 %9128
  %v9130 = vsel %vm20, %v9096, 0.0
  %9131 = vadd.xlane.f32.xlu0 %v9130
  %v9132 = vpop.xlane.xlu0 %9131
  %v9133 = vsel %vm20, %v9098, 0.0
  %9134 = vadd.xlane.f32.xlu0 %v9133
  %v9135 = vpop.xlane.xlu0 %9134
  %v9136 = vsel %vm20, %v9100, 0.0
  %9137 = vadd.xlane.f32.xlu0 %v9136
  %v9138 = vpop.xlane.xlu0 %9137
  %v9139 = vsel %vm20, %v9102, 0.0
  %9140 = vadd.xlane.f32.xlu0 %v9139
  %v9141 = vpop.xlane.xlu0 %9140
  %v9142 = vsel %vm20, %v9104, 0.0
  %9143 = vadd.xlane.f32.xlu0 %v9142
  %v9144 = vpop.xlane.xlu0 %9143
  %v9145 = vsel %vm20, %v9106, 0.0
  %9146 = vadd.xlane.f32.xlu0 %v9145
  %v9147 = vpop.xlane.xlu0 %9146
  %v9148 = vsel %vm20, %v9108, 0.0
  %9149 = vadd.xlane.f32.xlu0 %v9148
  %v9150 = vpop.xlane.xlu0 %9149
  %v9151 = vsel %vm20, %v9110, 0.0
  %9152 = vadd.xlane.f32.xlu0 %v9151
  %v9153 = vpop.xlane.xlu0 %9152
  %v9154 = vsel %vm20, %v9112, 0.0
  %9155 = vadd.xlane.f32.xlu0 %v9154
  %v9156 = vpop.xlane.xlu0 %9155
  %v9157 = vsel %vm20, %v9114, 0.0
  %9158 = vadd.xlane.f32.xlu0 %v9157
  %v9159 = vpop.xlane.xlu0 %9158
  %v9160 = vsel %vm20, %v9116, 0.0
  %9161 = vadd.xlane.f32.xlu0 %v9160
  %v9162 = vpop.xlane.xlu0 %9161
  %v9163 = vsel %vm20, %v9118, 0.0
  %9164 = vadd.xlane.f32.xlu0 %v9163
  %v9165 = vpop.xlane.xlu0 %9164
  %v9166 = vsel %vm20, %v9120, 0.0
  %9167 = vadd.xlane.f32.xlu0 %v9166
  %v9168 = vpop.xlane.xlu0 %9167
  %v9169 = vrcp.pop %v9123
  %v9170 = vrcp.pop %v9126
  %v9171 = vrcp.pop %v9129
  %v9172 = vrcp.pop %v9132
  %v9173 = vrcp.pop %v9135
  %v9174 = vrcp.pop %v9138
  %v9175 = vrcp.pop %v9141
  %v9176 = vrcp.pop %v9144
  %v9177 = vrcp.pop %v9147
  %v9178 = vrcp.pop %v9150
  %v9179 = vrcp.pop %v9153
  %v9180 = vrcp.pop %v9156
  %v9181 = vrcp.pop %v9159
  %v9182 = vrcp.pop %v9162
  %v9183 = vrcp.pop %v9165
  %v9184 = vrcp.pop %v9168
  %v9185 = vmul.f32 %v9090, %v9169
  %v9186 = vmul.f32 %v9092, %v9170
  %v9187 = vmul.f32 %v9094, %v9171
  %v9188 = vmul.f32 %v9096, %v9172
  %v9189 = vmul.f32 %v9098, %v9173
  %v9190 = vmul.f32 %v9100, %v9174
  %v9191 = vmul.f32 %v9102, %v9175
  %v9192 = vmul.f32 %v9104, %v9176
  %v9193 = vmul.f32 %v9106, %v9177
  %v9194 = vmul.f32 %v9108, %v9178
  %v9195 = vmul.f32 %v9110, %v9179
  %v9196 = vmul.f32 %v9112, %v9180
  %v9197 = vmul.f32 %v9114, %v9181
  %v9198 = vmul.f32 %v9116, %v9182
  %v9199 = vmul.f32 %v9118, %v9183
  %v9200 = vmul.f32 %v9120, %v9184
  %9201 = vxpose.xlu0.b32.start [1/16] %v9185, 128
  %9202 = vxpose.xlu0.b32.cont [2/16] %v9186, 128
  %9203 = vxpose.xlu0.b32.cont [3/16] %v9187, 128
  %9204 = vxpose.xlu0.b32.cont [4/16] %v9188, 128
  %9205 = vxpose.xlu0.b32.cont [5/16] %v9189, 128
  %9206 = vxpose.xlu0.b32.cont [6/16] %v9190, 128
  %9207 = vxpose.xlu0.b32.cont [7/16] %v9191, 128
  %9208 = vxpose.xlu0.b32.cont [8/16] %v9192, 128
  %9209 = vxpose.xlu0.b32.cont [9/16] %v9193, 128
  %9210 = vxpose.xlu0.b32.cont [10/16] %v9194, 128
  %9211 = vxpose.xlu0.b32.cont [11/16] %v9195, 128
  %9212 = vxpose.xlu0.b32.cont [12/16] %v9196, 128
  %9213 = vxpose.xlu0.b32.cont [13/16] %v9197, 128
  %9214 = vxpose.xlu0.b32.cont [14/16] %v9198, 128
  %9215 = vxpose.xlu0.b32.cont [15/16] %v9199, 128
  %9216 = vxpose.xlu0.b32.end [16/16] %v9200, 128
  %v9217 = vpop.trf.xlu0
  %v9218 = vpop.trf.xlu0
  %v9219 = vpop.trf.xlu0
  %v9220 = vpop.trf.xlu0
  %v9221 = vpop.trf.xlu0
  %v9222 = vpop.trf.xlu0
  %v9223 = vpop.trf.xlu0
  %v9224 = vpop.trf.xlu0
  %v9225 = vpop.trf.xlu0
  %v9226 = vpop.trf.xlu0
  %v9227 = vpop.trf.xlu0
  %v9228 = vpop.trf.xlu0
  %v9229 = vpop.trf.xlu0
  %v9230 = vpop.trf.xlu0
  %v9231 = vpop.trf.xlu0
  %v9232 = vpop.trf.xlu0
  %9233 = vst [vmem:[%s5] sm:$0xff] %v9217
  // Predicated region
  $region22: #{cnn_forward.1} parent=0 // pred_check
    _
  $region23: #{cnn_forward.1} parent=0 // pred_check_branch
    %9235 = sbr.rel (0) target = $region25
  $region24: #{cnn_forward.1} parent=0 // pred_region
    _
  $region25: #{cnn_forward.1} parent=0 // pred_fallthru
    _
  // Predicated region
  $region26: #{cnn_forward.1} parent=0 // pred_check
    _
  $region27: #{cnn_forward.1} parent=0 // pred_check_branch
    %9237 = sbr.rel (0) target = $region29
  $region28: #{cnn_forward.1} parent=0 // pred_region
    _
  $region29: #{cnn_forward.1} parent=0 // pred_fallthru
    _

</llo_original>
